<compile_context>
chip_gen: v5e
topology: v5e:2x2
jax: 0.10.0
libtpu: 0.0.40
codegen_flags: <defaults>
</compile_context>

<pallas_src>
import math
import functools

import jax
import jax.numpy as jnp
from jax import lax
from jax.experimental import pallas as pl
from jax.experimental.pallas import tpu as pltpu

# Plain Python float (NOT a jnp array) so it is embedded as an immediate in the
# kernels instead of being captured as a traced constant.
NEG_INF = -1e30  # stand-in for float('-inf'); avoids NaN on fully-masked rows


# ----------------------------- in-kernel helpers -----------------------------

def _mm(x, w_bf16):
    """bf16 MXU matmul with f32 accumulation; x is f32/bf16, w already bf16."""
    return jnp.dot(x.astype(jnp.bfloat16), w_bf16,
                   preferred_element_type=jnp.float32)


def _softmax(s):
    s = s - jnp.max(s, axis=-1, keepdims=True)
    p = jnp.exp(s)
    return p * pl.reciprocal(jnp.sum(p, axis=-1, keepdims=True), approx=True)


def _layer_norm(x, w, b):
    mu = jnp.mean(x, axis=-1, keepdims=True)
    var = jnp.mean((x - mu) ** 2, axis=-1, keepdims=True)
    return (x - mu) * lax.rsqrt(var + 1e-5) * w + b


def _mha_core(q, k, v, scale, num_heads, head_dim, mask_add=None, want_probs=False):
    """q:(Lq,E), k/v:(Lk,E) f32 projections -> (Lq,E) context (lane-dense).

    Per-head static loop with lane slices; optional head-averaged probabilities
    (only requested for decoder cross-attention)."""
    ctxs = []
    prob_sum = None
    for h in range(num_heads):
        sl = slice(h * head_dim, (h + 1) * head_dim)
        qh = q[:, sl].astype(jnp.bfloat16)
        kh = k[:, sl].astype(jnp.bfloat16)
        vh = v[:, sl].astype(jnp.bfloat16)
        s = lax.dot_general(qh, kh, (((1,), (1,)), ((), ())),
                            preferred_element_type=jnp.float32) * scale
        if mask_add is not None:
            s = s + mask_add
        p = _softmax(s)                                      # (Lq, Lk) f32
        ctxs.append(jnp.dot(p.astype(jnp.bfloat16), vh,
                            preferred_element_type=jnp.float32))
        if want_probs:
            prob_sum = p if prob_sum is None else prob_sum + p
    ctx = jnp.concatenate(ctxs, axis=-1)                     # (Lq, E) lane-dense
    if want_probs:
        return ctx, prob_sum * (1.0 / num_heads)
    return ctx, None


# ----------------------------- fused layer kernels -----------------------------

def _encoder_layer_kernel(x_ref, wqkv_ref, bqkv_ref, wo_ref, bo_ref,
                          ln1w_ref, ln1b_ref,
                          w1_ref, b1_ref, w2_ref, b2_ref,
                          ln2w_ref, ln2b_ref,
                          o_ref, *, num_heads):
    E = x_ref.shape[-1]
    Dh = E // num_heads
    scale = 1.0 / math.sqrt(Dh)

    x = x_ref[0]                                             # (S, E) f32

    # --- self attention (no mask, no attention-weight output) ---
    qkv = _mm(x, wqkv_ref[...]) + bqkv_ref[...]              # (S, 3E)
    q, k, v = qkv[:, :E], qkv[:, E:2 * E], qkv[:, 2 * E:]
    ctx, _ = _mha_core(q, k, v, scale, num_heads, Dh)
    attn_out = _mm(ctx, wo_ref[...]) + bo_ref[...]
    x2 = _layer_norm(attn_out + x, ln1w_ref[...], ln1b_ref[...])

    # --- feed-forward (covers the reference's kernel-size-1 Conv1d FF) ---
    h = jnp.maximum(_mm(x2, w1_ref[...]) + b1_ref[...], 0.0)
    ff = _mm(h, w2_ref[...]) + b2_ref[...]
    o_ref[0] = _layer_norm(ff + x2, ln2w_ref[...], ln2b_ref[...])


def _decoder_layer_kernel(y_ref, mem_ref, pad_ref,
                          sa_wqkv_ref, sa_bqkv_ref, sa_wo_ref, sa_bo_ref,
                          ln1w_ref, ln1b_ref,
                          ca_wq_ref, ca_bq_ref, ca_wkv_ref, ca_bkv_ref,
                          ca_wo_ref, ca_bo_ref,
                          ln2w_ref, ln2b_ref,
                          w1_ref, b1_ref, w2_ref, b2_ref,
                          ln3w_ref, ln3b_ref,
                          o_ref, a_ref, *, num_heads):
    E = y_ref.shape[-1]
    L = y_ref.shape[1]
    Dh = E // num_heads
    scale = 1.0 / math.sqrt(Dh)

    y = y_ref[0]                                             # (L, E) f32
    mem = mem_ref[0]                                         # (S, E) f32

    # --- masked self-attention: causal mask generated in-kernel + key pad mask ---
    qkv = _mm(y, sa_wqkv_ref[...]) + sa_bqkv_ref[...]        # (L, 3E)
    q, k, v = qkv[:, :E], qkv[:, E:2 * E], qkv[:, 2 * E:]
    row = lax.broadcasted_iota(jnp.int32, (L, L), 0)
    col = lax.broadcasted_iota(jnp.int32, (L, L), 1)
    causal = jnp.where(col > row, jnp.float32(NEG_INF), jnp.float32(0.0))
    mask = causal + pad_ref[0]                               # (L, L)
    ctx, _ = _mha_core(q, k, v, scale, num_heads, Dh, mask_add=mask)
    sa_out = _mm(ctx, sa_wo_ref[...]) + sa_bo_ref[...]
    y2 = _layer_norm(sa_out + y, ln1w_ref[...], ln1b_ref[...])

    # --- cross-attention over encoder memory (head-averaged weights returned) ---
    qc = _mm(y2, ca_wq_ref[...]) + ca_bq_ref[...]            # (L, E)
    kv = _mm(mem, ca_wkv_ref[...]) + ca_bkv_ref[...]         # (S, 2E)
    kc, vc = kv[:, :E], kv[:, E:]
    ctx_c, probs = _mha_core(qc, kc, vc, scale, num_heads, Dh, want_probs=True)
    ca_out = _mm(ctx_c, ca_wo_ref[...]) + ca_bo_ref[...]
    y3 = _layer_norm(ca_out + y2, ln2w_ref[...], ln2b_ref[...])

    # --- feed-forward ---
    h = jnp.maximum(_mm(y3, w1_ref[...]) + b1_ref[...], 0.0)
    ff = _mm(h, w2_ref[...]) + b2_ref[...]
    o_ref[0] = _layer_norm(ff + y3, ln3w_ref[...], ln3b_ref[...])
    a_ref[0] = probs                                         # (L, S)


def _predictor_kernel(x_ref, w_ref, o_ref):
    # bias-free predictor: no zero-bias DMA, no VPU add over the logits tile
    o_ref[...] = jnp.dot(x_ref[...].astype(jnp.bfloat16), w_ref[...],
                         preferred_element_type=jnp.float32)


# ----------------------------- pallas_call wrappers -----------------------------

def encoder_layer(x, lp, num_heads):
    B, S, E = x.shape
    F = lp['ff_w1_t'].shape[1]
    full = lambda b: (0, 0)
    return pl.pallas_call(
        functools.partial(_encoder_layer_kernel, num_heads=num_heads),
        out_shape=jax.ShapeDtypeStruct((B, S, E), jnp.float32),
        grid=(B,),
        in_specs=[
            pl.BlockSpec((1, S, E), lambda b: (b, 0, 0)),
            pl.BlockSpec((E, 3 * E), full),
            pl.BlockSpec((1, 3 * E), full),
            pl.BlockSpec((E, E), full),
            pl.BlockSpec((1, E), full),
            pl.BlockSpec((1, E), full),
            pl.BlockSpec((1, E), full),
            pl.BlockSpec((E, F), full),
            pl.BlockSpec((1, F), full),
            pl.BlockSpec((F, E), full),
            pl.BlockSpec((1, E), full),
            pl.BlockSpec((1, E), full),
            pl.BlockSpec((1, E), full),
        ],
        out_specs=pl.BlockSpec((1, S, E), lambda b: (b, 0, 0)),
        compiler_params=pltpu.CompilerParams(dimension_semantics=("parallel",)),
    )(x, lp['wqkv_t'], lp['bqkv'], lp['wo_t'], lp['bo'],
      lp['ln1_w'], lp['ln1_b'],
      lp['ff_w1_t'], lp['ff_b1'], lp['ff_w2_t'], lp['ff_b2'],
      lp['ln2_w'], lp['ln2_b'])


def decoder_layer(y, memory, pad_add, lp, num_heads):
    B, L, E = y.shape
    S = memory.shape[1]
    F = lp['ff_w1_t'].shape[1]
    full = lambda b: (0, 0)
    batch3 = lambda b: (b, 0, 0)
    return pl.pallas_call(
        functools.partial(_decoder_layer_kernel, num_heads=num_heads),
        out_shape=(jax.ShapeDtypeStruct((B, L, E), jnp.float32),
                   jax.ShapeDtypeStruct((B, L, S), jnp.float32)),
        grid=(B,),
        in_specs=[
            pl.BlockSpec((1, L, E), batch3),
            pl.BlockSpec((1, S, E), batch3),
            pl.BlockSpec((1, 1, L), batch3),
            pl.BlockSpec((E, 3 * E), full), pl.BlockSpec((1, 3 * E), full),
            pl.BlockSpec((E, E), full), pl.BlockSpec((1, E), full),
            pl.BlockSpec((1, E), full), pl.BlockSpec((1, E), full),
            pl.BlockSpec((E, E), full), pl.BlockSpec((1, E), full),
            pl.BlockSpec((E, 2 * E), full), pl.BlockSpec((1, 2 * E), full),
            pl.BlockSpec((E, E), full), pl.BlockSpec((1, E), full),
            pl.BlockSpec((1, E), full), pl.BlockSpec((1, E), full),
            pl.BlockSpec((E, F), full), pl.BlockSpec((1, F), full),
            pl.BlockSpec((F, E), full), pl.BlockSpec((1, E), full),
            pl.BlockSpec((1, E), full), pl.BlockSpec((1, E), full),
        ],
        out_specs=(pl.BlockSpec((1, L, E), batch3),
                   pl.BlockSpec((1, L, S), batch3)),
        compiler_params=pltpu.CompilerParams(dimension_semantics=("parallel",)),
    )(y, memory, pad_add,
      lp['sa_wqkv_t'], lp['sa_bqkv'], lp['sa_wo_t'], lp['sa_bo'],
      lp['ln1_w'], lp['ln1_b'],
      lp['ca_wq_t'], lp['ca_bq'], lp['ca_wkv_t'], lp['ca_bkv'],
      lp['ca_wo_t'], lp['ca_bo'],
      lp['ln2_w'], lp['ln2_b'],
      lp['ff_w1_t'], lp['ff_b1'], lp['ff_w2_t'], lp['ff_b2'],
      lp['ln3_w'], lp['ln3_b'])


def predictor(x, w_t):
    """Bias-free logits: x (N, E) @ w_t (E, V), row-tiled parallel grid."""
    N, E = x.shape
    V = w_t.shape[1]
    tn = 8 if N % 8 == 0 else N
    return pl.pallas_call(
        _predictor_kernel,
        out_shape=jax.ShapeDtypeStruct((N, V), jnp.float32),
        grid=(N // tn,),
        in_specs=[pl.BlockSpec((tn, E), lambda i: (i, 0)),
                  pl.BlockSpec((E, V), lambda i: (0, 0))],
        out_specs=pl.BlockSpec((tn, V), lambda i: (i, 0)),
        compiler_params=pltpu.CompilerParams(dimension_semantics=("parallel",)),
    )(x, w_t)


# ----------------------------- params / glue (plain JAX) -----------------------------

def make_positional_encoding(max_len, d_model):
    position = jnp.arange(max_len, dtype=jnp.float32)[:, None]
    div_term = jnp.exp(-jnp.arange(0, d_model, 2, dtype=jnp.float32)
                       * (math.log(10000.0) / d_model))
    pe = jnp.zeros((max_len, d_model), jnp.float32)
    pe = pe.at[:, 0::2].set(jnp.sin(position * div_term))
    pe = pe.at[:, 1::2].set(jnp.cos(position * div_term))
    return pe


def init_params(key, cfg):
    d = cfg['d_model']
    V = cfg['vocab_size']
    keys = iter(jax.random.split(key, 512))

    def dense(din, dout):
        # weights stored bf16 (MXU inputs); biases / LN params stay f32
        return (0.02 * jax.random.normal(next(keys), (din, dout), jnp.float32)
                ).astype(jnp.bfloat16)

    def zeros(n):
        return jnp.zeros((1, n), jnp.float32)

    def ones(n):
        return jnp.ones((1, n), jnp.float32)

    def enc_layer():
        F = cfg['enc_ff_dim']
        return dict(
            wqkv_t=dense(d, 3 * d), bqkv=zeros(3 * d),
            wo_t=dense(d, d), bo=zeros(d),
            ln1_w=ones(d), ln1_b=zeros(d),
            ff_w1_t=dense(d, F), ff_b1=zeros(F),
            ff_w2_t=dense(F, d), ff_b2=zeros(d),
            ln2_w=ones(d), ln2_b=zeros(d))

    def dec_layer():
        F = cfg['dec_ff_dim']
        return dict(
            sa_wqkv_t=dense(d, 3 * d), sa_bqkv=zeros(3 * d),
            sa_wo_t=dense(d, d), sa_bo=zeros(d),
            ln1_w=ones(d), ln1_b=zeros(d),
            ca_wq_t=dense(d, d), ca_bq=zeros(d),
            ca_wkv_t=dense(d, 2 * d), ca_bkv=zeros(2 * d),
            ca_wo_t=dense(d, d), ca_bo=zeros(d),
            ln2_w=ones(d), ln2_b=zeros(d),
            ff_w1_t=dense(d, F), ff_b1=zeros(F),
            ff_w2_t=dense(F, d), ff_b2=zeros(d),
            ln3_w=ones(d), ln3_b=zeros(d))

    emb = 0.02 * jax.random.normal(next(keys), (V, d), jnp.float32)
    emb = emb.at[cfg['pad_id']].set(0.0)  # nn.Embedding padding_idx row is zero

    return dict(
        encoder_layers=[enc_layer() for _ in range(cfg['enc_n_layers'])],
        decoder_layers=[dec_layer() for _ in range(cfg['dec_n_layers'])],
        embedding=emb,
        pe=make_positional_encoding(cfg['max_len'], d),
        predictor_t=dense(d, V),  # predictor has bias=False
    )


def transformer_forward(params, images, captions, *, cfg):
    """images: (B, img_encode_size, d_model) float32; captions: (B, L) int32."""
    B, S_img, d = images.shape
    L = captions.shape[1]

    # ----- Encoder -----
    # The reference runs on images.permute(1, 0, 2) (time-major); we keep a
    # batch-major (B, S, d) layout internally, which is mathematically identical.
    x = images.astype(jnp.float32)
    for lp in params['encoder_layers']:
        x = encoder_layer(x, lp, cfg['enc_n_heads'])
    memory = x                                                   # (B, S_img, d)

    # ----- Decoder -----
    pad_add = jnp.where(captions == cfg['pad_id'],
                        jnp.float32(NEG_INF), jnp.float32(0.0))[:, None, :]  # (B, 1, L)

    emb = jnp.take(params['embedding'], captions, axis=0)        # (B, L, d)
    # NOTE: the reference PositionalEncoding adds pe[:, :x.size(1)] to the
    # (seq, batch, d) tensor, i.e. the PE is sliced/indexed by the *batch* axis.
    # Reproduced faithfully: in batch-major layout that means pe[b] is added to
    # every position of batch element b.
    y = emb * math.sqrt(d) + params['pe'][:B][:, None, :]
    # dropout -> identity (eval)

    attns_all = []
    for lp in params['decoder_layers']:
        y, attn = decoder_layer(y, memory, pad_add, lp, cfg['dec_n_heads'])
        attns_all.append(attn)
    attns_all = jnp.stack(attns_all)                     # (dec_n_layers, B, L, S_img)

    # ----- Predictor (bias=False); output is already (B, L, V) in batch-major -----
    logits = predictor(y.reshape(B * L, d), params['predictor_t'])
    predictions = logits.reshape(B, L, cfg['vocab_size'])
    return predictions, attns_all


# ----------------------------- main -----------------------------

if __name__ == "__main__":
    cfg = dict(vocab_size=64, d_model=32, img_encode_size=16,
               enc_ff_dim=64, dec_ff_dim=64,
               enc_n_layers=2, dec_n_layers=2,
               enc_n_heads=4, dec_n_heads=4,
               max_len=16, dropout=0.1, pad_id=0)

    key = jax.random.PRNGKey(0)
    pkey, ikey, ckey = jax.random.split(key, 3)
    params = init_params(pkey, cfg)

    B, L = 2, 8
    images = jax.random.normal(ikey, (B, cfg['img_encode_size'], cfg['d_model']),
                               jnp.float32)
    # tokens drawn from [1, vocab) so no row is fully padded (pad_id = 0)
    captions = jax.random.randint(ckey, (B, L), 1, cfg['vocab_size'], dtype=jnp.int32)

    fwd = jax.jit(functools.partial(transformer_forward, cfg=cfg))
    preds, attns = fwd(params, images, captions)
    jax.block_until_ready((preds, attns))

    assert preds.shape == (B, L, cfg['vocab_size'])
    assert attns.shape == (cfg['dec_n_layers'], B, L, cfg['img_encode_size'])
    assert jnp.all(jnp.isfinite(preds)) and jnp.all(jnp.isfinite(attns))
    print("KERNEL_OK")
</pallas_src>

<mosaic_0001>
module attributes {stable_mosaic.version = 11 : i64} {
  func.func @_encoder_layer_kernel(%arg0: i32, %arg1: memref<1x16x32xf32, #tpu.memory_space<vmem>>, %arg2: memref<32x96xbf16, #tpu.memory_space<vmem>>, %arg3: memref<1x96xf32, #tpu.memory_space<vmem>>, %arg4: memref<32x32xbf16, #tpu.memory_space<vmem>>, %arg5: memref<1x32xf32, #tpu.memory_space<vmem>>, %arg6: memref<1x32xf32, #tpu.memory_space<vmem>>, %arg7: memref<1x32xf32, #tpu.memory_space<vmem>>, %arg8: memref<32x64xbf16, #tpu.memory_space<vmem>>, %arg9: memref<1x64xf32, #tpu.memory_space<vmem>>, %arg10: memref<64x32xbf16, #tpu.memory_space<vmem>>, %arg11: memref<1x32xf32, #tpu.memory_space<vmem>>, %arg12: memref<1x32xf32, #tpu.memory_space<vmem>>, %arg13: memref<1x32xf32, #tpu.memory_space<vmem>>, %arg14: memref<1x16x32xf32, #tpu.memory_space<vmem>>) attributes {dimension_semantics = [#tpu.dimension_semantics<parallel>], iteration_bounds = array<i64: 2>, scalar_prefetch = 0 : i64, scratch_operands = 0 : i64, tpu.core_type = #tpu.core_type<tc>, window_params = [{transform_indices = @transform_0, window_bounds = array<i64: 1, 16, 32>}, {pipeline_mode = #tpu.pipeline_mode<synchronous>, transform_indices = @transform_1, window_bounds = array<i64: 32, 96>}, {pipeline_mode = #tpu.pipeline_mode<synchronous>, transform_indices = @transform_2, window_bounds = array<i64: 1, 96>}, {pipeline_mode = #tpu.pipeline_mode<synchronous>, transform_indices = @transform_3, window_bounds = array<i64: 32, 32>}, {pipeline_mode = #tpu.pipeline_mode<synchronous>, transform_indices = @transform_4, window_bounds = array<i64: 1, 32>}, {pipeline_mode = #tpu.pipeline_mode<synchronous>, transform_indices = @transform_5, window_bounds = array<i64: 1, 32>}, {pipeline_mode = #tpu.pipeline_mode<synchronous>, transform_indices = @transform_6, window_bounds = array<i64: 1, 32>}, {pipeline_mode = #tpu.pipeline_mode<synchronous>, transform_indices = @transform_7, window_bounds = array<i64: 32, 64>}, {pipeline_mode = #tpu.pipeline_mode<synchronous>, transform_indices = @transform_8, window_bounds = array<i64: 1, 64>}, {pipeline_mode = #tpu.pipeline_mode<synchronous>, transform_indices = @transform_9, window_bounds = array<i64: 64, 32>}, {pipeline_mode = #tpu.pipeline_mode<synchronous>, transform_indices = @transform_10, window_bounds = array<i64: 1, 32>}, {pipeline_mode = #tpu.pipeline_mode<synchronous>, transform_indices = @transform_11, window_bounds = array<i64: 1, 32>}, {pipeline_mode = #tpu.pipeline_mode<synchronous>, transform_indices = @transform_12, window_bounds = array<i64: 1, 32>}, {transform_indices = @transform_13, window_bounds = array<i64: 1, 16, 32>}]} {
    %c0 = arith.constant 0 : index
    %c0_0 = arith.constant 0 : index
    %c0_1 = arith.constant 0 : index
    %0 = vector.load %arg1[%c0, %c0_0, %c0_1] : memref<1x16x32xf32, #tpu.memory_space<vmem>>, vector<1x16x32xf32>
    %1 = vector.shape_cast %0 : vector<1x16x32xf32> to vector<16x32xf32>
    %c0_2 = arith.constant 0 : index
    %c0_3 = arith.constant 0 : index
    %2 = vector.load %arg2[%c0_2, %c0_3] : memref<32x96xbf16, #tpu.memory_space<vmem>>, vector<32x96xbf16>
    %3 = arith.truncf %1 : vector<16x32xf32> to vector<16x32xbf16>
    %cst = arith.constant dense<0.000000e+00> : vector<16x96xf32>
    %4 = tpu.matmul %3, %2, %cst {dimension_numbers = #tpu.dot_dimension_numbers<[1], [0], [0], [1], [0, 0, 1, 1], [], []>} : vector<16x32xbf16>, vector<32x96xbf16>, vector<16x96xf32> -> vector<16x96xf32>
    %c0_4 = arith.constant 0 : index
    %c0_5 = arith.constant 0 : index
    %5 = vector.load %arg3[%c0_4, %c0_5] : memref<1x96xf32, #tpu.memory_space<vmem>>, vector<1x96xf32>
    %6 = vector.broadcast %5 : vector<1x96xf32> to vector<16x96xf32>
    %7 = arith.addf %4, %6 : vector<16x96xf32>
    %8 = vector.extract_strided_slice %7 {offsets = [0, 0], sizes = [16, 32], strides = [1, 1]} : vector<16x96xf32> to vector<16x32xf32>
    %9 = vector.extract_strided_slice %7 {offsets = [0, 32], sizes = [16, 32], strides = [1, 1]} : vector<16x96xf32> to vector<16x32xf32>
    %10 = vector.extract_strided_slice %7 {offsets = [0, 64], sizes = [16, 32], strides = [1, 1]} : vector<16x96xf32> to vector<16x32xf32>
    %11 = vector.extract_strided_slice %8 {offsets = [0, 0], sizes = [16, 8], strides = [1, 1]} : vector<16x32xf32> to vector<16x8xf32>
    %12 = arith.truncf %11 : vector<16x8xf32> to vector<16x8xbf16>
    %13 = vector.extract_strided_slice %9 {offsets = [0, 0], sizes = [16, 8], strides = [1, 1]} : vector<16x32xf32> to vector<16x8xf32>
    %14 = arith.truncf %13 : vector<16x8xf32> to vector<16x8xbf16>
    %15 = vector.extract_strided_slice %10 {offsets = [0, 0], sizes = [16, 8], strides = [1, 1]} : vector<16x32xf32> to vector<16x8xf32>
    %16 = arith.truncf %15 : vector<16x8xf32> to vector<16x8xbf16>
    %cst_6 = arith.constant dense<0.000000e+00> : vector<16x16xf32>
    %17 = tpu.matmul %12, %14, %cst_6 {dimension_numbers = #tpu.dot_dimension_numbers<[1], [1], [0], [0], [0, 0, 1, 0], [], []>} : vector<16x8xbf16>, vector<16x8xbf16>, vector<16x16xf32> -> vector<16x16xf32>
    %cst_7 = arith.constant 0.353553385 : f32
    %18 = vector.broadcast %cst_7 : f32 to vector<16x16xf32>
    %19 = arith.mulf %17, %18 : vector<16x16xf32>
    %cst_8 = arith.constant dense<0xFF800000> : vector<16xf32>
    %20 = vector.multi_reduction <maximumf>, %19, %cst_8 [1] : vector<16x16xf32> to vector<16xf32>
    %21 = vector.shape_cast %20 : vector<16xf32> to vector<16x1xf32>
    %22 = vector.broadcast %21 : vector<16x1xf32> to vector<16x16xf32>
    %23 = arith.subf %19, %22 : vector<16x16xf32>
    %24 = math.exp %23 : vector<16x16xf32>
    %cst_9 = arith.constant dense<0.000000e+00> : vector<16xf32>
    %25 = vector.multi_reduction <add>, %24, %cst_9 [1] : vector<16x16xf32> to vector<16xf32>
    %26 = vector.shape_cast %25 : vector<16xf32> to vector<16x1xf32>
    %27 = tpu.reciprocal %26 {approx = true} : vector<16x1xf32> -> vector<16x1xf32>
    %28 = vector.broadcast %27 : vector<16x1xf32> to vector<16x16xf32>
    %29 = arith.mulf %24, %28 : vector<16x16xf32>
    %30 = arith.truncf %29 : vector<16x16xf32> to vector<16x16xbf16>
    %cst_10 = arith.constant dense<0.000000e+00> : vector<16x8xf32>
    %31 = tpu.matmul %30, %16, %cst_10 {dimension_numbers = #tpu.dot_dimension_numbers<[1], [0], [0], [1], [0, 0, 1, 1], [], []>} : vector<16x16xbf16>, vector<16x8xbf16>, vector<16x8xf32> -> vector<16x8xf32>
    %32 = vector.extract_strided_slice %8 {offsets = [0, 8], sizes = [16, 8], strides = [1, 1]} : vector<16x32xf32> to vector<16x8xf32>
    %33 = arith.truncf %32 : vector<16x8xf32> to vector<16x8xbf16>
    %34 = vector.extract_strided_slice %9 {offsets = [0, 8], sizes = [16, 8], strides = [1, 1]} : vector<16x32xf32> to vector<16x8xf32>
    %35 = arith.truncf %34 : vector<16x8xf32> to vector<16x8xbf16>
    %36 = vector.extract_strided_slice %10 {offsets = [0, 8], sizes = [16, 8], strides = [1, 1]} : vector<16x32xf32> to vector<16x8xf32>
    %37 = arith.truncf %36 : vector<16x8xf32> to vector<16x8xbf16>
    %cst_11 = arith.constant dense<0.000000e+00> : vector<16x16xf32>
    %38 = tpu.matmul %33, %35, %cst_11 {dimension_numbers = #tpu.dot_dimension_numbers<[1], [1], [0], [0], [0, 0, 1, 0], [], []>} : vector<16x8xbf16>, vector<16x8xbf16>, vector<16x16xf32> -> vector<16x16xf32>
    %cst_12 = arith.constant 0.353553385 : f32
    %39 = vector.broadcast %cst_12 : f32 to vector<16x16xf32>
    %40 = arith.mulf %38, %39 : vector<16x16xf32>
    %cst_13 = arith.constant dense<0xFF800000> : vector<16xf32>
    %41 = vector.multi_reduction <maximumf>, %40, %cst_13 [1] : vector<16x16xf32> to vector<16xf32>
    %42 = vector.shape_cast %41 : vector<16xf32> to vector<16x1xf32>
    %43 = vector.broadcast %42 : vector<16x1xf32> to vector<16x16xf32>
    %44 = arith.subf %40, %43 : vector<16x16xf32>
    %45 = math.exp %44 : vector<16x16xf32>
    %cst_14 = arith.constant dense<0.000000e+00> : vector<16xf32>
    %46 = vector.multi_reduction <add>, %45, %cst_14 [1] : vector<16x16xf32> to vector<16xf32>
    %47 = vector.shape_cast %46 : vector<16xf32> to vector<16x1xf32>
    %48 = tpu.reciprocal %47 {approx = true} : vector<16x1xf32> -> vector<16x1xf32>
    %49 = vector.broadcast %48 : vector<16x1xf32> to vector<16x16xf32>
    %50 = arith.mulf %45, %49 : vector<16x16xf32>
    %51 = arith.truncf %50 : vector<16x16xf32> to vector<16x16xbf16>
    %cst_15 = arith.constant dense<0.000000e+00> : vector<16x8xf32>
    %52 = tpu.matmul %51, %37, %cst_15 {dimension_numbers = #tpu.dot_dimension_numbers<[1], [0], [0], [1], [0, 0, 1, 1], [], []>} : vector<16x16xbf16>, vector<16x8xbf16>, vector<16x8xf32> -> vector<16x8xf32>
    %53 = vector.extract_strided_slice %8 {offsets = [0, 16], sizes = [16, 8], strides = [1, 1]} : vector<16x32xf32> to vector<16x8xf32>
    %54 = arith.truncf %53 : vector<16x8xf32> to vector<16x8xbf16>
    %55 = vector.extract_strided_slice %9 {offsets = [0, 16], sizes = [16, 8], strides = [1, 1]} : vector<16x32xf32> to vector<16x8xf32>
    %56 = arith.truncf %55 : vector<16x8xf32> to vector<16x8xbf16>
    %57 = vector.extract_strided_slice %10 {offsets = [0, 16], sizes = [16, 8], strides = [1, 1]} : vector<16x32xf32> to vector<16x8xf32>
    %58 = arith.truncf %57 : vector<16x8xf32> to vector<16x8xbf16>
    %cst_16 = arith.constant dense<0.000000e+00> : vector<16x16xf32>
    %59 = tpu.matmul %54, %56, %cst_16 {dimension_numbers = #tpu.dot_dimension_numbers<[1], [1], [0], [0], [0, 0, 1, 0], [], []>} : vector<16x8xbf16>, vector<16x8xbf16>, vector<16x16xf32> -> vector<16x16xf32>
    %cst_17 = arith.constant 0.353553385 : f32
    %60 = vector.broadcast %cst_17 : f32 to vector<16x16xf32>
    %61 = arith.mulf %59, %60 : vector<16x16xf32>
    %cst_18 = arith.constant dense<0xFF800000> : vector<16xf32>
    %62 = vector.multi_reduction <maximumf>, %61, %cst_18 [1] : vector<16x16xf32> to vector<16xf32>
    %63 = vector.shape_cast %62 : vector<16xf32> to vector<16x1xf32>
    %64 = vector.broadcast %63 : vector<16x1xf32> to vector<16x16xf32>
    %65 = arith.subf %61, %64 : vector<16x16xf32>
    %66 = math.exp %65 : vector<16x16xf32>
    %cst_19 = arith.constant dense<0.000000e+00> : vector<16xf32>
    %67 = vector.multi_reduction <add>, %66, %cst_19 [1] : vector<16x16xf32> to vector<16xf32>
    %68 = vector.shape_cast %67 : vector<16xf32> to vector<16x1xf32>
    %69 = tpu.reciprocal %68 {approx = true} : vector<16x1xf32> -> vector<16x1xf32>
    %70 = vector.broadcast %69 : vector<16x1xf32> to vector<16x16xf32>
    %71 = arith.mulf %66, %70 : vector<16x16xf32>
    %72 = arith.truncf %71 : vector<16x16xf32> to vector<16x16xbf16>
    %cst_20 = arith.constant dense<0.000000e+00> : vector<16x8xf32>
    %73 = tpu.matmul %72, %58, %cst_20 {dimension_numbers = #tpu.dot_dimension_numbers<[1], [0], [0], [1], [0, 0, 1, 1], [], []>} : vector<16x16xbf16>, vector<16x8xbf16>, vector<16x8xf32> -> vector<16x8xf32>
    %74 = vector.extract_strided_slice %8 {offsets = [0, 24], sizes = [16, 8], strides = [1, 1]} : vector<16x32xf32> to vector<16x8xf32>
    %75 = arith.truncf %74 : vector<16x8xf32> to vector<16x8xbf16>
    %76 = vector.extract_strided_slice %9 {offsets = [0, 24], sizes = [16, 8], strides = [1, 1]} : vector<16x32xf32> to vector<16x8xf32>
    %77 = arith.truncf %76 : vector<16x8xf32> to vector<16x8xbf16>
    %78 = vector.extract_strided_slice %10 {offsets = [0, 24], sizes = [16, 8], strides = [1, 1]} : vector<16x32xf32> to vector<16x8xf32>
    %79 = arith.truncf %78 : vector<16x8xf32> to vector<16x8xbf16>
    %cst_21 = arith.constant dense<0.000000e+00> : vector<16x16xf32>
    %80 = tpu.matmul %75, %77, %cst_21 {dimension_numbers = #tpu.dot_dimension_numbers<[1], [1], [0], [0], [0, 0, 1, 0], [], []>} : vector<16x8xbf16>, vector<16x8xbf16>, vector<16x16xf32> -> vector<16x16xf32>
    %cst_22 = arith.constant 0.353553385 : f32
    %81 = vector.broadcast %cst_22 : f32 to vector<16x16xf32>
    %82 = arith.mulf %80, %81 : vector<16x16xf32>
    %cst_23 = arith.constant dense<0xFF800000> : vector<16xf32>
    %83 = vector.multi_reduction <maximumf>, %82, %cst_23 [1] : vector<16x16xf32> to vector<16xf32>
    %84 = vector.shape_cast %83 : vector<16xf32> to vector<16x1xf32>
    %85 = vector.broadcast %84 : vector<16x1xf32> to vector<16x16xf32>
    %86 = arith.subf %82, %85 : vector<16x16xf32>
    %87 = math.exp %86 : vector<16x16xf32>
    %cst_24 = arith.constant dense<0.000000e+00> : vector<16xf32>
    %88 = vector.multi_reduction <add>, %87, %cst_24 [1] : vector<16x16xf32> to vector<16xf32>
    %89 = vector.shape_cast %88 : vector<16xf32> to vector<16x1xf32>
    %90 = tpu.reciprocal %89 {approx = true} : vector<16x1xf32> -> vector<16x1xf32>
    %91 = vector.broadcast %90 : vector<16x1xf32> to vector<16x16xf32>
    %92 = arith.mulf %87, %91 : vector<16x16xf32>
    %93 = arith.truncf %92 : vector<16x16xf32> to vector<16x16xbf16>
    %cst_25 = arith.constant dense<0.000000e+00> : vector<16x8xf32>
    %94 = tpu.matmul %93, %79, %cst_25 {dimension_numbers = #tpu.dot_dimension_numbers<[1], [0], [0], [1], [0, 0, 1, 1], [], []>} : vector<16x16xbf16>, vector<16x8xbf16>, vector<16x8xf32> -> vector<16x8xf32>
    %95 = tpu.concatenate %31, %52, %73, %94 in 1 : vector<16x8xf32>, vector<16x8xf32>, vector<16x8xf32>, vector<16x8xf32> -> vector<16x32xf32>
    %c0_26 = arith.constant 0 : index
    %c0_27 = arith.constant 0 : index
    %96 = vector.load %arg4[%c0_26, %c0_27] : memref<32x32xbf16, #tpu.memory_space<vmem>>, vector<32x32xbf16>
    %97 = arith.truncf %95 : vector<16x32xf32> to vector<16x32xbf16>
    %cst_28 = arith.constant dense<0.000000e+00> : vector<16x32xf32>
    %98 = tpu.matmul %97, %96, %cst_28 {dimension_numbers = #tpu.dot_dimension_numbers<[1], [0], [0], [1], [0, 0, 1, 1], [], []>} : vector<16x32xbf16>, vector<32x32xbf16>, vector<16x32xf32> -> vector<16x32xf32>
    %c0_29 = arith.constant 0 : index
    %c0_30 = arith.constant 0 : index
    %99 = vector.load %arg5[%c0_29, %c0_30] : memref<1x32xf32, #tpu.memory_space<vmem>>, vector<1x32xf32>
    %100 = vector.broadcast %99 : vector<1x32xf32> to vector<16x32xf32>
    %101 = arith.addf %98, %100 : vector<16x32xf32>
    %102 = arith.addf %101, %1 : vector<16x32xf32>
    %c0_31 = arith.constant 0 : index
    %c0_32 = arith.constant 0 : index
    %103 = vector.load %arg6[%c0_31, %c0_32] : memref<1x32xf32, #tpu.memory_space<vmem>>, vector<1x32xf32>
    %c0_33 = arith.constant 0 : index
    %c0_34 = arith.constant 0 : index
    %104 = vector.load %arg7[%c0_33, %c0_34] : memref<1x32xf32, #tpu.memory_space<vmem>>, vector<1x32xf32>
    %cst_35 = arith.constant dense<0.000000e+00> : vector<16xf32>
    %105 = vector.multi_reduction <add>, %102, %cst_35 [1] : vector<16x32xf32> to vector<16xf32>
    %106 = vector.shape_cast %105 : vector<16xf32> to vector<16x1xf32>
    %cst_36 = arith.constant 3.200000e+01 : f32
    %107 = vector.broadcast %cst_36 : f32 to vector<16x1xf32>
    %108 = arith.divf %106, %107 : vector<16x1xf32>
    %109 = vector.broadcast %108 : vector<16x1xf32> to vector<16x32xf32>
    %110 = arith.subf %102, %109 : vector<16x32xf32>
    %111 = arith.mulf %110, %110 : vector<16x32xf32>
    %cst_37 = arith.constant dense<0.000000e+00> : vector<16xf32>
    %112 = vector.multi_reduction <add>, %111, %cst_37 [1] : vector<16x32xf32> to vector<16xf32>
    %113 = vector.shape_cast %112 : vector<16xf32> to vector<16x1xf32>
    %cst_38 = arith.constant 3.200000e+01 : f32
    %114 = vector.broadcast %cst_38 : f32 to vector<16x1xf32>
    %115 = arith.divf %113, %114 : vector<16x1xf32>
    %116 = vector.broadcast %108 : vector<16x1xf32> to vector<16x32xf32>
    %117 = arith.subf %102, %116 : vector<16x32xf32>
    %cst_39 = arith.constant 9.99999974E-6 : f32
    %118 = vector.broadcast %cst_39 : f32 to vector<16x1xf32>
    %119 = arith.addf %115, %118 : vector<16x1xf32>
    %120 = math.rsqrt %119 : vector<16x1xf32>
    %121 = vector.broadcast %120 : vector<16x1xf32> to vector<16x32xf32>
    %122 = arith.mulf %117, %121 : vector<16x32xf32>
    %123 = vector.broadcast %103 : vector<1x32xf32> to vector<16x32xf32>
    %124 = arith.mulf %122, %123 : vector<16x32xf32>
    %125 = vector.broadcast %104 : vector<1x32xf32> to vector<16x32xf32>
    %126 = arith.addf %124, %125 : vector<16x32xf32>
    %c0_40 = arith.constant 0 : index
    %c0_41 = arith.constant 0 : index
    %127 = vector.load %arg8[%c0_40, %c0_41] : memref<32x64xbf16, #tpu.memory_space<vmem>>, vector<32x64xbf16>
    %128 = arith.truncf %126 : vector<16x32xf32> to vector<16x32xbf16>
    %cst_42 = arith.constant dense<0.000000e+00> : vector<16x64xf32>
    %129 = tpu.matmul %128, %127, %cst_42 {dimension_numbers = #tpu.dot_dimension_numbers<[1], [0], [0], [1], [0, 0, 1, 1], [], []>} : vector<16x32xbf16>, vector<32x64xbf16>, vector<16x64xf32> -> vector<16x64xf32>
    %c0_43 = arith.constant 0 : index
    %c0_44 = arith.constant 0 : index
    %130 = vector.load %arg9[%c0_43, %c0_44] : memref<1x64xf32, #tpu.memory_space<vmem>>, vector<1x64xf32>
    %131 = vector.broadcast %130 : vector<1x64xf32> to vector<16x64xf32>
    %132 = arith.addf %129, %131 : vector<16x64xf32>
    %cst_45 = arith.constant 0.000000e+00 : f32
    %133 = vector.broadcast %cst_45 : f32 to vector<16x64xf32>
    %134 = arith.maximumf %132, %133 : vector<16x64xf32>
    %c0_46 = arith.constant 0 : index
    %c0_47 = arith.constant 0 : index
    %135 = vector.load %arg10[%c0_46, %c0_47] : memref<64x32xbf16, #tpu.memory_space<vmem>>, vector<64x32xbf16>
    %136 = arith.truncf %134 : vector<16x64xf32> to vector<16x64xbf16>
    %cst_48 = arith.constant dense<0.000000e+00> : vector<16x32xf32>
    %137 = tpu.matmul %136, %135, %cst_48 {dimension_numbers = #tpu.dot_dimension_numbers<[1], [0], [0], [1], [0, 0, 1, 1], [], []>} : vector<16x64xbf16>, vector<64x32xbf16>, vector<16x32xf32> -> vector<16x32xf32>
    %c0_49 = arith.constant 0 : index
    %c0_50 = arith.constant 0 : index
    %138 = vector.load %arg11[%c0_49, %c0_50] : memref<1x32xf32, #tpu.memory_space<vmem>>, vector<1x32xf32>
    %139 = vector.broadcast %138 : vector<1x32xf32> to vector<16x32xf32>
    %140 = arith.addf %137, %139 : vector<16x32xf32>
    %141 = arith.addf %140, %126 : vector<16x32xf32>
    %c0_51 = arith.constant 0 : index
    %c0_52 = arith.constant 0 : index
    %142 = vector.load %arg12[%c0_51, %c0_52] : memref<1x32xf32, #tpu.memory_space<vmem>>, vector<1x32xf32>
    %c0_53 = arith.constant 0 : index
    %c0_54 = arith.constant 0 : index
    %143 = vector.load %arg13[%c0_53, %c0_54] : memref<1x32xf32, #tpu.memory_space<vmem>>, vector<1x32xf32>
    %cst_55 = arith.constant dense<0.000000e+00> : vector<16xf32>
    %144 = vector.multi_reduction <add>, %141, %cst_55 [1] : vector<16x32xf32> to vector<16xf32>
    %145 = vector.shape_cast %144 : vector<16xf32> to vector<16x1xf32>
    %cst_56 = arith.constant 3.200000e+01 : f32
    %146 = vector.broadcast %cst_56 : f32 to vector<16x1xf32>
    %147 = arith.divf %145, %146 : vector<16x1xf32>
    %148 = vector.broadcast %147 : vector<16x1xf32> to vector<16x32xf32>
    %149 = arith.subf %141, %148 : vector<16x32xf32>
    %150 = arith.mulf %149, %149 : vector<16x32xf32>
    %cst_57 = arith.constant dense<0.000000e+00> : vector<16xf32>
    %151 = vector.multi_reduction <add>, %150, %cst_57 [1] : vector<16x32xf32> to vector<16xf32>
    %152 = vector.shape_cast %151 : vector<16xf32> to vector<16x1xf32>
    %cst_58 = arith.constant 3.200000e+01 : f32
    %153 = vector.broadcast %cst_58 : f32 to vector<16x1xf32>
    %154 = arith.divf %152, %153 : vector<16x1xf32>
    %155 = vector.broadcast %147 : vector<16x1xf32> to vector<16x32xf32>
    %156 = arith.subf %141, %155 : vector<16x32xf32>
    %cst_59 = arith.constant 9.99999974E-6 : f32
    %157 = vector.broadcast %cst_59 : f32 to vector<16x1xf32>
    %158 = arith.addf %154, %157 : vector<16x1xf32>
    %159 = math.rsqrt %158 : vector<16x1xf32>
    %160 = vector.broadcast %159 : vector<16x1xf32> to vector<16x32xf32>
    %161 = arith.mulf %156, %160 : vector<16x32xf32>
    %162 = vector.broadcast %142 : vector<1x32xf32> to vector<16x32xf32>
    %163 = arith.mulf %161, %162 : vector<16x32xf32>
    %164 = vector.broadcast %143 : vector<1x32xf32> to vector<16x32xf32>
    %165 = arith.addf %163, %164 : vector<16x32xf32>
    %c0_60 = arith.constant 0 : index
    %c0_61 = arith.constant 0 : index
    %c0_62 = arith.constant 0 : index
    %166 = vector.load %arg14[%c0_60, %c0_61, %c0_62] : memref<1x16x32xf32, #tpu.memory_space<vmem>>, vector<1x16x32xf32>
    %167 = vector.shape_cast %166 : vector<1x16x32xf32> to vector<16x32xf32>
    %168 = vector.shape_cast %165 : vector<16x32xf32> to vector<1x16x32xf32>
    tpu.vector_store %arg14[%c0_60, %c0_61, %c0_62], %168 {strides = array<i32>} : memref<1x16x32xf32, #tpu.memory_space<vmem>>, vector<1x16x32xf32>,
    return
  }
  func.func @transform_0(%arg0: i32) -> (i32, i32, i32) {
    %c0_i32 = arith.constant 0 : i32
    %c0_i32_0 = arith.constant 0 : i32
    %c0_i32_1 = arith.constant 0 : i32
    return %arg0, %c0_i32, %c0_i32_0 : i32, i32, i32
  }
  func.func @transform_1(%arg0: i32) -> (i32, i32) {
    %c0_i32 = arith.constant 0 : i32
    %c0_i32_0 = arith.constant 0 : i32
    %c0_i32_1 = arith.constant 0 : i32
    return %c0_i32, %c0_i32_0 : i32, i32
  }
  func.func @transform_2(%arg0: i32) -> (i32, i32) {
    %c0_i32 = arith.constant 0 : i32
    %c0_i32_0 = arith.constant 0 : i32
    %c0_i32_1 = arith.constant 0 : i32
    return %c0_i32, %c0_i32_0 : i32, i32
  }
  func.func @transform_3(%arg0: i32) -> (i32, i32) {
    %c0_i32 = arith.constant 0 : i32
    %c0_i32_0 = arith.constant 0 : i32
    %c0_i32_1 = arith.constant 0 : i32
    return %c0_i32, %c0_i32_0 : i32, i32
  }
  func.func @transform_4(%arg0: i32) -> (i32, i32) {
    %c0_i32 = arith.constant 0 : i32
    %c0_i32_0 = arith.constant 0 : i32
    %c0_i32_1 = arith.constant 0 : i32
    return %c0_i32, %c0_i32_0 : i32, i32
  }
  func.func @transform_5(%arg0: i32) -> (i32, i32) {
    %c0_i32 = arith.constant 0 : i32
    %c0_i32_0 = arith.constant 0 : i32
    %c0_i32_1 = arith.constant 0 : i32
    return %c0_i32, %c0_i32_0 : i32, i32
  }
  func.func @transform_6(%arg0: i32) -> (i32, i32) {
    %c0_i32 = arith.constant 0 : i32
    %c0_i32_0 = arith.constant 0 : i32
    %c0_i32_1 = arith.constant 0 : i32
    return %c0_i32, %c0_i32_0 : i32, i32
  }
  func.func @transform_7(%arg0: i32) -> (i32, i32) {
    %c0_i32 = arith.constant 0 : i32
    %c0_i32_0 = arith.constant 0 : i32
    %c0_i32_1 = arith.constant 0 : i32
    return %c0_i32, %c0_i32_0 : i32, i32
  }
  func.func @transform_8(%arg0: i32) -> (i32, i32) {
    %c0_i32 = arith.constant 0 : i32
    %c0_i32_0 = arith.constant 0 : i32
    %c0_i32_1 = arith.constant 0 : i32
    return %c0_i32, %c0_i32_0 : i32, i32
  }
  func.func @transform_9(%arg0: i32) -> (i32, i32) {
    %c0_i32 = arith.constant 0 : i32
    %c0_i32_0 = arith.constant 0 : i32
    %c0_i32_1 = arith.constant 0 : i32
    return %c0_i32, %c0_i32_0 : i32, i32
  }
  func.func @transform_10(%arg0: i32) -> (i32, i32) {
    %c0_i32 = arith.constant 0 : i32
    %c0_i32_0 = arith.constant 0 : i32
    %c0_i32_1 = arith.constant 0 : i32
    return %c0_i32, %c0_i32_0 : i32, i32
  }
  func.func @transform_11(%arg0: i32) -> (i32, i32) {
    %c0_i32 = arith.constant 0 : i32
    %c0_i32_0 = arith.constant 0 : i32
    %c0_i32_1 = arith.constant 0 : i32
    return %c0_i32, %c0_i32_0 : i32, i32
  }
  func.func @transform_12(%arg0: i32) -> (i32, i32) {
    %c0_i32 = arith.constant 0 : i32
    %c0_i32_0 = arith.constant 0 : i32
    %c0_i32_1 = arith.constant 0 : i32
    return %c0_i32, %c0_i32_0 : i32, i32
  }
  func.func @transform_13(%arg0: i32) -> (i32, i32, i32) {
    %c0_i32 = arith.constant 0 : i32
    %c0_i32_0 = arith.constant 0 : i32
    %c0_i32_1 = arith.constant 0 : i32
    return %arg0, %c0_i32, %c0_i32_0 : i32, i32, i32
  }
}

module attributes {stable_mosaic.version = 11 : i64} {
  func.func @_encoder_layer_kernel(%arg0: i32, %arg1: memref<1x16x32xf32, #tpu.memory_space<vmem>>, %arg2: memref<32x96xbf16, #tpu.memory_space<vmem>>, %arg3: memref<1x96xf32, #tpu.memory_space<vmem>>, %arg4: memref<32x32xbf16, #tpu.memory_space<vmem>>, %arg5: memref<1x32xf32, #tpu.memory_space<vmem>>, %arg6: memref<1x32xf32, #tpu.memory_space<vmem>>, %arg7: memref<1x32xf32, #tpu.memory_space<vmem>>, %arg8: memref<32x64xbf16, #tpu.memory_space<vmem>>, %arg9: memref<1x64xf32, #tpu.memory_space<vmem>>, %arg10: memref<64x32xbf16, #tpu.memory_space<vmem>>, %arg11: memref<1x32xf32, #tpu.memory_space<vmem>>, %arg12: memref<1x32xf32, #tpu.memory_space<vmem>>, %arg13: memref<1x32xf32, #tpu.memory_space<vmem>>, %arg14: memref<1x16x32xf32, #tpu.memory_space<vmem>>) attributes {dimension_semantics = [#tpu.dimension_semantics<parallel>], iteration_bounds = array<i64: 2>, scalar_prefetch = 0 : i64, scratch_operands = 0 : i64, tpu.core_type = #tpu.core_type<tc>, window_params = [{transform_indices = @transform_0, window_bounds = array<i64: 1, 16, 32>}, {pipeline_mode = #tpu.pipeline_mode<synchronous>, transform_indices = @transform_1, window_bounds = array<i64: 32, 96>}, {pipeline_mode = #tpu.pipeline_mode<synchronous>, transform_indices = @transform_2, window_bounds = array<i64: 1, 96>}, {pipeline_mode = #tpu.pipeline_mode<synchronous>, transform_indices = @transform_3, window_bounds = array<i64: 32, 32>}, {pipeline_mode = #tpu.pipeline_mode<synchronous>, transform_indices = @transform_4, window_bounds = array<i64: 1, 32>}, {pipeline_mode = #tpu.pipeline_mode<synchronous>, transform_indices = @transform_5, window_bounds = array<i64: 1, 32>}, {pipeline_mode = #tpu.pipeline_mode<synchronous>, transform_indices = @transform_6, window_bounds = array<i64: 1, 32>}, {pipeline_mode = #tpu.pipeline_mode<synchronous>, transform_indices = @transform_7, window_bounds = array<i64: 32, 64>}, {pipeline_mode = #tpu.pipeline_mode<synchronous>, transform_indices = @transform_8, window_bounds = array<i64: 1, 64>}, {pipeline_mode = #tpu.pipeline_mode<synchronous>, transform_indices = @transform_9, window_bounds = array<i64: 64, 32>}, {pipeline_mode = #tpu.pipeline_mode<synchronous>, transform_indices = @transform_10, window_bounds = array<i64: 1, 32>}, {pipeline_mode = #tpu.pipeline_mode<synchronous>, transform_indices = @transform_11, window_bounds = array<i64: 1, 32>}, {pipeline_mode = #tpu.pipeline_mode<synchronous>, transform_indices = @transform_12, window_bounds = array<i64: 1, 32>}, {transform_indices = @transform_13, window_bounds = array<i64: 1, 16, 32>}]} {
    %c0 = arith.constant 0 : index
    %c0_0 = arith.constant 0 : index
    %c0_1 = arith.constant 0 : index
    %0 = vector.load %arg1[%c0, %c0_0, %c0_1] : memref<1x16x32xf32, #tpu.memory_space<vmem>>, vector<1x16x32xf32>
    %1 = vector.shape_cast %0 : vector<1x16x32xf32> to vector<16x32xf32>
    %c0_2 = arith.constant 0 : index
    %c0_3 = arith.constant 0 : index
    %2 = vector.load %arg2[%c0_2, %c0_3] : memref<32x96xbf16, #tpu.memory_space<vmem>>, vector<32x96xbf16>
    %3 = arith.truncf %1 : vector<16x32xf32> to vector<16x32xbf16>
    %cst = arith.constant dense<0.000000e+00> : vector<16x96xf32>
    %4 = tpu.matmul %3, %2, %cst {dimension_numbers = #tpu.dot_dimension_numbers<[1], [0], [0], [1], [0, 0, 1, 1], [], []>} : vector<16x32xbf16>, vector<32x96xbf16>, vector<16x96xf32> -> vector<16x96xf32>
    %c0_4 = arith.constant 0 : index
    %c0_5 = arith.constant 0 : index
    %5 = vector.load %arg3[%c0_4, %c0_5] : memref<1x96xf32, #tpu.memory_space<vmem>>, vector<1x96xf32>
    %6 = vector.broadcast %5 : vector<1x96xf32> to vector<16x96xf32>
    %7 = arith.addf %4, %6 : vector<16x96xf32>
    %8 = vector.extract_strided_slice %7 {offsets = [0, 0], sizes = [16, 32], strides = [1, 1]} : vector<16x96xf32> to vector<16x32xf32>
    %9 = vector.extract_strided_slice %7 {offsets = [0, 32], sizes = [16, 32], strides = [1, 1]} : vector<16x96xf32> to vector<16x32xf32>
    %10 = vector.extract_strided_slice %7 {offsets = [0, 64], sizes = [16, 32], strides = [1, 1]} : vector<16x96xf32> to vector<16x32xf32>
    %11 = vector.extract_strided_slice %8 {offsets = [0, 0], sizes = [16, 8], strides = [1, 1]} : vector<16x32xf32> to vector<16x8xf32>
    %12 = arith.truncf %11 : vector<16x8xf32> to vector<16x8xbf16>
    %13 = vector.extract_strided_slice %9 {offsets = [0, 0], sizes = [16, 8], strides = [1, 1]} : vector<16x32xf32> to vector<16x8xf32>
    %14 = arith.truncf %13 : vector<16x8xf32> to vector<16x8xbf16>
    %15 = vector.extract_strided_slice %10 {offsets = [0, 0], sizes = [16, 8], strides = [1, 1]} : vector<16x32xf32> to vector<16x8xf32>
    %16 = arith.truncf %15 : vector<16x8xf32> to vector<16x8xbf16>
    %cst_6 = arith.constant dense<0.000000e+00> : vector<16x16xf32>
    %17 = tpu.matmul %12, %14, %cst_6 {dimension_numbers = #tpu.dot_dimension_numbers<[1], [1], [0], [0], [0, 0, 1, 0], [], []>} : vector<16x8xbf16>, vector<16x8xbf16>, vector<16x16xf32> -> vector<16x16xf32>
    %cst_7 = arith.constant 0.353553385 : f32
    %18 = vector.broadcast %cst_7 : f32 to vector<16x16xf32>
    %19 = arith.mulf %17, %18 : vector<16x16xf32>
    %cst_8 = arith.constant dense<0xFF800000> : vector<16xf32>
    %20 = vector.multi_reduction <maximumf>, %19, %cst_8 [1] : vector<16x16xf32> to vector<16xf32>
    %21 = vector.shape_cast %20 : vector<16xf32> to vector<16x1xf32>
    %22 = vector.broadcast %21 : vector<16x1xf32> to vector<16x16xf32>
    %23 = arith.subf %19, %22 : vector<16x16xf32>
    %24 = math.exp %23 : vector<16x16xf32>
    %cst_9 = arith.constant dense<0.000000e+00> : vector<16xf32>
    %25 = vector.multi_reduction <add>, %24, %cst_9 [1] : vector<16x16xf32> to vector<16xf32>
    %26 = vector.shape_cast %25 : vector<16xf32> to vector<16x1xf32>
    %27 = tpu.reciprocal %26 {approx = true} : vector<16x1xf32> -> vector<16x1xf32>
    %28 = vector.broadcast %27 : vector<16x1xf32> to vector<16x16xf32>
    %29 = arith.mulf %24, %28 : vector<16x16xf32>
    %30 = arith.truncf %29 : vector<16x16xf32> to vector<16x16xbf16>
    %cst_10 = arith.constant dense<0.000000e+00> : vector<16x8xf32>
    %31 = tpu.matmul %30, %16, %cst_10 {dimension_numbers = #tpu.dot_dimension_numbers<[1], [0], [0], [1], [0, 0, 1, 1], [], []>} : vector<16x16xbf16>, vector<16x8xbf16>, vector<16x8xf32> -> vector<16x8xf32>
    %32 = vector.extract_strided_slice %8 {offsets = [0, 8], sizes = [16, 8], strides = [1, 1]} : vector<16x32xf32> to vector<16x8xf32>
    %33 = arith.truncf %32 : vector<16x8xf32> to vector<16x8xbf16>
    %34 = vector.extract_strided_slice %9 {offsets = [0, 8], sizes = [16, 8], strides = [1, 1]} : vector<16x32xf32> to vector<16x8xf32>
    %35 = arith.truncf %34 : vector<16x8xf32> to vector<16x8xbf16>
    %36 = vector.extract_strided_slice %10 {offsets = [0, 8], sizes = [16, 8], strides = [1, 1]} : vector<16x32xf32> to vector<16x8xf32>
    %37 = arith.truncf %36 : vector<16x8xf32> to vector<16x8xbf16>
    %cst_11 = arith.constant dense<0.000000e+00> : vector<16x16xf32>
    %38 = tpu.matmul %33, %35, %cst_11 {dimension_numbers = #tpu.dot_dimension_numbers<[1], [1], [0], [0], [0, 0, 1, 0], [], []>} : vector<16x8xbf16>, vector<16x8xbf16>, vector<16x16xf32> -> vector<16x16xf32>
    %cst_12 = arith.constant 0.353553385 : f32
    %39 = vector.broadcast %cst_12 : f32 to vector<16x16xf32>
    %40 = arith.mulf %38, %39 : vector<16x16xf32>
    %cst_13 = arith.constant dense<0xFF800000> : vector<16xf32>
    %41 = vector.multi_reduction <maximumf>, %40, %cst_13 [1] : vector<16x16xf32> to vector<16xf32>
    %42 = vector.shape_cast %41 : vector<16xf32> to vector<16x1xf32>
    %43 = vector.broadcast %42 : vector<16x1xf32> to vector<16x16xf32>
    %44 = arith.subf %40, %43 : vector<16x16xf32>
    %45 = math.exp %44 : vector<16x16xf32>
    %cst_14 = arith.constant dense<0.000000e+00> : vector<16xf32>
    %46 = vector.multi_reduction <add>, %45, %cst_14 [1] : vector<16x16xf32> to vector<16xf32>
    %47 = vector.shape_cast %46 : vector<16xf32> to vector<16x1xf32>
    %48 = tpu.reciprocal %47 {approx = true} : vector<16x1xf32> -> vector<16x1xf32>
    %49 = vector.broadcast %48 : vector<16x1xf32> to vector<16x16xf32>
    %50 = arith.mulf %45, %49 : vector<16x16xf32>
    %51 = arith.truncf %50 : vector<16x16xf32> to vector<16x16xbf16>
    %cst_15 = arith.constant dense<0.000000e+00> : vector<16x8xf32>
    %52 = tpu.matmul %51, %37, %cst_15 {dimension_numbers = #tpu.dot_dimension_numbers<[1], [0], [0], [1], [0, 0, 1, 1], [], []>} : vector<16x16xbf16>, vector<16x8xbf16>, vector<16x8xf32> -> vector<16x8xf32>
    %53 = vector.extract_strided_slice %8 {offsets = [0, 16], sizes = [16, 8], strides = [1, 1]} : vector<16x32xf32> to vector<16x8xf32>
    %54 = arith.truncf %53 : vector<16x8xf32> to vector<16x8xbf16>
    %55 = vector.extract_strided_slice %9 {offsets = [0, 16], sizes = [16, 8], strides = [1, 1]} : vector<16x32xf32> to vector<16x8xf32>
    %56 = arith.truncf %55 : vector<16x8xf32> to vector<16x8xbf16>
    %57 = vector.extract_strided_slice %10 {offsets = [0, 16], sizes = [16, 8], strides = [1, 1]} : vector<16x32xf32> to vector<16x8xf32>
    %58 = arith.truncf %57 : vector<16x8xf32> to vector<16x8xbf16>
    %cst_16 = arith.constant dense<0.000000e+00> : vector<16x16xf32>
    %59 = tpu.matmul %54, %56, %cst_16 {dimension_numbers = #tpu.dot_dimension_numbers<[1], [1], [0], [0], [0, 0, 1, 0], [], []>} : vector<16x8xbf16>, vector<16x8xbf16>, vector<16x16xf32> -> vector<16x16xf32>
    %cst_17 = arith.constant 0.353553385 : f32
    %60 = vector.broadcast %cst_17 : f32 to vector<16x16xf32>
    %61 = arith.mulf %59, %60 : vector<16x16xf32>
    %cst_18 = arith.constant dense<0xFF800000> : vector<16xf32>
    %62 = vector.multi_reduction <maximumf>, %61, %cst_18 [1] : vector<16x16xf32> to vector<16xf32>
    %63 = vector.shape_cast %62 : vector<16xf32> to vector<16x1xf32>
    %64 = vector.broadcast %63 : vector<16x1xf32> to vector<16x16xf32>
    %65 = arith.subf %61, %64 : vector<16x16xf32>
    %66 = math.exp %65 : vector<16x16xf32>
    %cst_19 = arith.constant dense<0.000000e+00> : vector<16xf32>
    %67 = vector.multi_reduction <add>, %66, %cst_19 [1] : vector<16x16xf32> to vector<16xf32>
    %68 = vector.shape_cast %67 : vector<16xf32> to vector<16x1xf32>
    %69 = tpu.reciprocal %68 {approx = true} : vector<16x1xf32> -> vector<16x1xf32>
    %70 = vector.broadcast %69 : vector<16x1xf32> to vector<16x16xf32>
    %71 = arith.mulf %66, %70 : vector<16x16xf32>
    %72 = arith.truncf %71 : vector<16x16xf32> to vector<16x16xbf16>
    %cst_20 = arith.constant dense<0.000000e+00> : vector<16x8xf32>
    %73 = tpu.matmul %72, %58, %cst_20 {dimension_numbers = #tpu.dot_dimension_numbers<[1], [0], [0], [1], [0, 0, 1, 1], [], []>} : vector<16x16xbf16>, vector<16x8xbf16>, vector<16x8xf32> -> vector<16x8xf32>
    %74 = vector.extract_strided_slice %8 {offsets = [0, 24], sizes = [16, 8], strides = [1, 1]} : vector<16x32xf32> to vector<16x8xf32>
    %75 = arith.truncf %74 : vector<16x8xf32> to vector<16x8xbf16>
    %76 = vector.extract_strided_slice %9 {offsets = [0, 24], sizes = [16, 8], strides = [1, 1]} : vector<16x32xf32> to vector<16x8xf32>
    %77 = arith.truncf %76 : vector<16x8xf32> to vector<16x8xbf16>
    %78 = vector.extract_strided_slice %10 {offsets = [0, 24], sizes = [16, 8], strides = [1, 1]} : vector<16x32xf32> to vector<16x8xf32>
    %79 = arith.truncf %78 : vector<16x8xf32> to vector<16x8xbf16>
    %cst_21 = arith.constant dense<0.000000e+00> : vector<16x16xf32>
    %80 = tpu.matmul %75, %77, %cst_21 {dimension_numbers = #tpu.dot_dimension_numbers<[1], [1], [0], [0], [0, 0, 1, 0], [], []>} : vector<16x8xbf16>, vector<16x8xbf16>, vector<16x16xf32> -> vector<16x16xf32>
    %cst_22 = arith.constant 0.353553385 : f32
    %81 = vector.broadcast %cst_22 : f32 to vector<16x16xf32>
    %82 = arith.mulf %80, %81 : vector<16x16xf32>
    %cst_23 = arith.constant dense<0xFF800000> : vector<16xf32>
    %83 = vector.multi_reduction <maximumf>, %82, %cst_23 [1] : vector<16x16xf32> to vector<16xf32>
    %84 = vector.shape_cast %83 : vector<16xf32> to vector<16x1xf32>
    %85 = vector.broadcast %84 : vector<16x1xf32> to vector<16x16xf32>
    %86 = arith.subf %82, %85 : vector<16x16xf32>
    %87 = math.exp %86 : vector<16x16xf32>
    %cst_24 = arith.constant dense<0.000000e+00> : vector<16xf32>
    %88 = vector.multi_reduction <add>, %87, %cst_24 [1] : vector<16x16xf32> to vector<16xf32>
    %89 = vector.shape_cast %88 : vector<16xf32> to vector<16x1xf32>
    %90 = tpu.reciprocal %89 {approx = true} : vector<16x1xf32> -> vector<16x1xf32>
    %91 = vector.broadcast %90 : vector<16x1xf32> to vector<16x16xf32>
    %92 = arith.mulf %87, %91 : vector<16x16xf32>
    %93 = arith.truncf %92 : vector<16x16xf32> to vector<16x16xbf16>
    %cst_25 = arith.constant dense<0.000000e+00> : vector<16x8xf32>
    %94 = tpu.matmul %93, %79, %cst_25 {dimension_numbers = #tpu.dot_dimension_numbers<[1], [0], [0], [1], [0, 0, 1, 1], [], []>} : vector<16x16xbf16>, vector<16x8xbf16>, vector<16x8xf32> -> vector<16x8xf32>
    %95 = tpu.concatenate %31, %52, %73, %94 in 1 : vector<16x8xf32>, vector<16x8xf32>, vector<16x8xf32>, vector<16x8xf32> -> vector<16x32xf32>
    %c0_26 = arith.constant 0 : index
    %c0_27 = arith.constant 0 : index
    %96 = vector.load %arg4[%c0_26, %c0_27] : memref<32x32xbf16, #tpu.memory_space<vmem>>, vector<32x32xbf16>
    %97 = arith.truncf %95 : vector<16x32xf32> to vector<16x32xbf16>
    %cst_28 = arith.constant dense<0.000000e+00> : vector<16x32xf32>
    %98 = tpu.matmul %97, %96, %cst_28 {dimension_numbers = #tpu.dot_dimension_numbers<[1], [0], [0], [1], [0, 0, 1, 1], [], []>} : vector<16x32xbf16>, vector<32x32xbf16>, vector<16x32xf32> -> vector<16x32xf32>
    %c0_29 = arith.constant 0 : index
    %c0_30 = arith.constant 0 : index
    %99 = vector.load %arg5[%c0_29, %c0_30] : memref<1x32xf32, #tpu.memory_space<vmem>>, vector<1x32xf32>
    %100 = vector.broadcast %99 : vector<1x32xf32> to vector<16x32xf32>
    %101 = arith.addf %98, %100 : vector<16x32xf32>
    %102 = arith.addf %101, %1 : vector<16x32xf32>
    %c0_31 = arith.constant 0 : index
    %c0_32 = arith.constant 0 : index
    %103 = vector.load %arg6[%c0_31, %c0_32] : memref<1x32xf32, #tpu.memory_space<vmem>>, vector<1x32xf32>
    %c0_33 = arith.constant 0 : index
    %c0_34 = arith.constant 0 : index
    %104 = vector.load %arg7[%c0_33, %c0_34] : memref<1x32xf32, #tpu.memory_space<vmem>>, vector<1x32xf32>
    %cst_35 = arith.constant dense<0.000000e+00> : vector<16xf32>
    %105 = vector.multi_reduction <add>, %102, %cst_35 [1] : vector<16x32xf32> to vector<16xf32>
    %106 = vector.shape_cast %105 : vector<16xf32> to vector<16x1xf32>
    %cst_36 = arith.constant 3.200000e+01 : f32
    %107 = vector.broadcast %cst_36 : f32 to vector<16x1xf32>
    %108 = arith.divf %106, %107 : vector<16x1xf32>
    %109 = vector.broadcast %108 : vector<16x1xf32> to vector<16x32xf32>
    %110 = arith.subf %102, %109 : vector<16x32xf32>
    %111 = arith.mulf %110, %110 : vector<16x32xf32>
    %cst_37 = arith.constant dense<0.000000e+00> : vector<16xf32>
    %112 = vector.multi_reduction <add>, %111, %cst_37 [1] : vector<16x32xf32> to vector<16xf32>
    %113 = vector.shape_cast %112 : vector<16xf32> to vector<16x1xf32>
    %cst_38 = arith.constant 3.200000e+01 : f32
    %114 = vector.broadcast %cst_38 : f32 to vector<16x1xf32>
    %115 = arith.divf %113, %114 : vector<16x1xf32>
    %116 = vector.broadcast %108 : vector<16x1xf32> to vector<16x32xf32>
    %117 = arith.subf %102, %116 : vector<16x32xf32>
    %cst_39 = arith.constant 9.99999974E-6 : f32
    %118 = vector.broadcast %cst_39 : f32 to vector<16x1xf32>
    %119 = arith.addf %115, %118 : vector<16x1xf32>
    %120 = math.rsqrt %119 : vector<16x1xf32>
    %121 = vector.broadcast %120 : vector<16x1xf32> to vector<16x32xf32>
    %122 = arith.mulf %117, %121 : vector<16x32xf32>
    %123 = vector.broadcast %103 : vector<1x32xf32> to vector<16x32xf32>
    %124 = arith.mulf %122, %123 : vector<16x32xf32>
    %125 = vector.broadcast %104 : vector<1x32xf32> to vector<16x32xf32>
    %126 = arith.addf %124, %125 : vector<16x32xf32>
    %c0_40 = arith.constant 0 : index
    %c0_41 = arith.constant 0 : index
    %127 = vector.load %arg8[%c0_40, %c0_41] : memref<32x64xbf16, #tpu.memory_space<vmem>>, vector<32x64xbf16>
    %128 = arith.truncf %126 : vector<16x32xf32> to vector<16x32xbf16>
    %cst_42 = arith.constant dense<0.000000e+00> : vector<16x64xf32>
    %129 = tpu.matmul %128, %127, %cst_42 {dimension_numbers = #tpu.dot_dimension_numbers<[1], [0], [0], [1], [0, 0, 1, 1], [], []>} : vector<16x32xbf16>, vector<32x64xbf16>, vector<16x64xf32> -> vector<16x64xf32>
    %c0_43 = arith.constant 0 : index
    %c0_44 = arith.constant 0 : index
    %130 = vector.load %arg9[%c0_43, %c0_44] : memref<1x64xf32, #tpu.memory_space<vmem>>, vector<1x64xf32>
    %131 = vector.broadcast %130 : vector<1x64xf32> to vector<16x64xf32>
    %132 = arith.addf %129, %131 : vector<16x64xf32>
    %cst_45 = arith.constant 0.000000e+00 : f32
    %133 = vector.broadcast %cst_45 : f32 to vector<16x64xf32>
    %134 = arith.maximumf %132, %133 : vector<16x64xf32>
    %c0_46 = arith.constant 0 : index
    %c0_47 = arith.constant 0 : index
    %135 = vector.load %arg10[%c0_46, %c0_47] : memref<64x32xbf16, #tpu.memory_space<vmem>>, vector<64x32xbf16>
    %136 = arith.truncf %134 : vector<16x64xf32> to vector<16x64xbf16>
    %cst_48 = arith.constant dense<0.000000e+00> : vector<16x32xf32>
    %137 = tpu.matmul %136, %135, %cst_48 {dimension_numbers = #tpu.dot_dimension_numbers<[1], [0], [0], [1], [0, 0, 1, 1], [], []>} : vector<16x64xbf16>, vector<64x32xbf16>, vector<16x32xf32> -> vector<16x32xf32>
    %c0_49 = arith.constant 0 : index
    %c0_50 = arith.constant 0 : index
    %138 = vector.load %arg11[%c0_49, %c0_50] : memref<1x32xf32, #tpu.memory_space<vmem>>, vector<1x32xf32>
    %139 = vector.broadcast %138 : vector<1x32xf32> to vector<16x32xf32>
    %140 = arith.addf %137, %139 : vector<16x32xf32>
    %141 = arith.addf %140, %126 : vector<16x32xf32>
    %c0_51 = arith.constant 0 : index
    %c0_52 = arith.constant 0 : index
    %142 = vector.load %arg12[%c0_51, %c0_52] : memref<1x32xf32, #tpu.memory_space<vmem>>, vector<1x32xf32>
    %c0_53 = arith.constant 0 : index
    %c0_54 = arith.constant 0 : index
    %143 = vector.load %arg13[%c0_53, %c0_54] : memref<1x32xf32, #tpu.memory_space<vmem>>, vector<1x32xf32>
    %cst_55 = arith.constant dense<0.000000e+00> : vector<16xf32>
    %144 = vector.multi_reduction <add>, %141, %cst_55 [1] : vector<16x32xf32> to vector<16xf32>
    %145 = vector.shape_cast %144 : vector<16xf32> to vector<16x1xf32>
    %cst_56 = arith.constant 3.200000e+01 : f32
    %146 = vector.broadcast %cst_56 : f32 to vector<16x1xf32>
    %147 = arith.divf %145, %146 : vector<16x1xf32>
    %148 = vector.broadcast %147 : vector<16x1xf32> to vector<16x32xf32>
    %149 = arith.subf %141, %148 : vector<16x32xf32>
    %150 = arith.mulf %149, %149 : vector<16x32xf32>
    %cst_57 = arith.constant dense<0.000000e+00> : vector<16xf32>
    %151 = vector.multi_reduction <add>, %150, %cst_57 [1] : vector<16x32xf32> to vector<16xf32>
    %152 = vector.shape_cast %151 : vector<16xf32> to vector<16x1xf32>
    %cst_58 = arith.constant 3.200000e+01 : f32
    %153 = vector.broadcast %cst_58 : f32 to vector<16x1xf32>
    %154 = arith.divf %152, %153 : vector<16x1xf32>
    %155 = vector.broadcast %147 : vector<16x1xf32> to vector<16x32xf32>
    %156 = arith.subf %141, %155 : vector<16x32xf32>
    %cst_59 = arith.constant 9.99999974E-6 : f32
    %157 = vector.broadcast %cst_59 : f32 to vector<16x1xf32>
    %158 = arith.addf %154, %157 : vector<16x1xf32>
    %159 = math.rsqrt %158 : vector<16x1xf32>
    %160 = vector.broadcast %159 : vector<16x1xf32> to vector<16x32xf32>
    %161 = arith.mulf %156, %160 : vector<16x32xf32>
    %162 = vector.broadcast %142 : vector<1x32xf32> to vector<16x32xf32>
    %163 = arith.mulf %161, %162 : vector<16x32xf32>
    %164 = vector.broadcast %143 : vector<1x32xf32> to vector<16x32xf32>
    %165 = arith.addf %163, %164 : vector<16x32xf32>
    %c0_60 = arith.constant 0 : index
    %c0_61 = arith.constant 0 : index
    %c0_62 = arith.constant 0 : index
    %166 = vector.load %arg14[%c0_60, %c0_61, %c0_62] : memref<1x16x32xf32, #tpu.memory_space<vmem>>, vector<1x16x32xf32>
    %167 = vector.shape_cast %166 : vector<1x16x32xf32> to vector<16x32xf32>
    %168 = vector.shape_cast %165 : vector<16x32xf32> to vector<1x16x32xf32>
    tpu.vector_store %arg14[%c0_60, %c0_61, %c0_62], %168 {strides = array<i32>} : memref<1x16x32xf32, #tpu.memory_space<vmem>>, vector<1x16x32xf32>,
    return
  }
  func.func @transform_0(%arg0: i32) -> (i32, i32, i32) {
    %c0_i32 = arith.constant 0 : i32
    %c0_i32_0 = arith.constant 0 : i32
    %c0_i32_1 = arith.constant 0 : i32
    return %arg0, %c0_i32, %c0_i32_0 : i32, i32, i32
  }
  func.func @transform_1(%arg0: i32) -> (i32, i32) {
    %c0_i32 = arith.constant 0 : i32
    %c0_i32_0 = arith.constant 0 : i32
    %c0_i32_1 = arith.constant 0 : i32
    return %c0_i32, %c0_i32_0 : i32, i32
  }
  func.func @transform_2(%arg0: i32) -> (i32, i32) {
    %c0_i32 = arith.constant 0 : i32
    %c0_i32_0 = arith.constant 0 : i32
    %c0_i32_1 = arith.constant 0 : i32
    return %c0_i32, %c0_i32_0 : i32, i32
  }
  func.func @transform_3(%arg0: i32) -> (i32, i32) {
    %c0_i32 = arith.constant 0 : i32
    %c0_i32_0 = arith.constant 0 : i32
    %c0_i32_1 = arith.constant 0 : i32
    return %c0_i32, %c0_i32_0 : i32, i32
  }
  func.func @transform_4(%arg0: i32) -> (i32, i32) {
    %c0_i32 = arith.constant 0 : i32
    %c0_i32_0 = arith.constant 0 : i32
    %c0_i32_1 = arith.constant 0 : i32
    return %c0_i32, %c0_i32_0 : i32, i32
  }
  func.func @transform_5(%arg0: i32) -> (i32, i32) {
    %c0_i32 = arith.constant 0 : i32
    %c0_i32_0 = arith.constant 0 : i32
    %c0_i32_1 = arith.constant 0 : i32
    return %c0_i32, %c0_i32_0 : i32, i32
  }
  func.func @transform_6(%arg0: i32) -> (i32, i32) {
    %c0_i32 = arith.constant 0 : i32
    %c0_i32_0 = arith.constant 0 : i32
    %c0_i32_1 = arith.constant 0 : i32
    return %c0_i32, %c0_i32_0 : i32, i32
  }
  func.func @transform_7(%arg0: i32) -> (i32, i32) {
    %c0_i32 = arith.constant 0 : i32
    %c0_i32_0 = arith.constant 0 : i32
    %c0_i32_1 = arith.constant 0 : i32
    return %c0_i32, %c0_i32_0 : i32, i32
  }
  func.func @transform_8(%arg0: i32) -> (i32, i32) {
    %c0_i32 = arith.constant 0 : i32
    %c0_i32_0 = arith.constant 0 : i32
    %c0_i32_1 = arith.constant 0 : i32
    return %c0_i32, %c0_i32_0 : i32, i32
  }
  func.func @transform_9(%arg0: i32) -> (i32, i32) {
    %c0_i32 = arith.constant 0 : i32
    %c0_i32_0 = arith.constant 0 : i32
    %c0_i32_1 = arith.constant 0 : i32
    return %c0_i32, %c0_i32_0 : i32, i32
  }
  func.func @transform_10(%arg0: i32) -> (i32, i32) {
    %c0_i32 = arith.constant 0 : i32
    %c0_i32_0 = arith.constant 0 : i32
    %c0_i32_1 = arith.constant 0 : i32
    return %c0_i32, %c0_i32_0 : i32, i32
  }
  func.func @transform_11(%arg0: i32) -> (i32, i32) {
    %c0_i32 = arith.constant 0 : i32
    %c0_i32_0 = arith.constant 0 : i32
    %c0_i32_1 = arith.constant 0 : i32
    return %c0_i32, %c0_i32_0 : i32, i32
  }
  func.func @transform_12(%arg0: i32) -> (i32, i32) {
    %c0_i32 = arith.constant 0 : i32
    %c0_i32_0 = arith.constant 0 : i32
    %c0_i32_1 = arith.constant 0 : i32
    return %c0_i32, %c0_i32_0 : i32, i32
  }
  func.func @transform_13(%arg0: i32) -> (i32, i32, i32) {
    %c0_i32 = arith.constant 0 : i32
    %c0_i32_0 = arith.constant 0 : i32
    %c0_i32_1 = arith.constant 0 : i32
    return %arg0, %c0_i32, %c0_i32_0 : i32, i32, i32
  }
}

module attributes {stable_mosaic.version = 11 : i64} {
  func.func @_decoder_layer_kernel(%arg0: i32, %arg1: memref<1x8x32xf32, #tpu.memory_space<vmem>>, %arg2: memref<1x16x32xf32, #tpu.memory_space<vmem>>, %arg3: memref<1x1x8xf32, #tpu.memory_space<vmem>>, %arg4: memref<32x96xbf16, #tpu.memory_space<vmem>>, %arg5: memref<1x96xf32, #tpu.memory_space<vmem>>, %arg6: memref<32x32xbf16, #tpu.memory_space<vmem>>, %arg7: memref<1x32xf32, #tpu.memory_space<vmem>>, %arg8: memref<1x32xf32, #tpu.memory_space<vmem>>, %arg9: memref<1x32xf32, #tpu.memory_space<vmem>>, %arg10: memref<32x32xbf16, #tpu.memory_space<vmem>>, %arg11: memref<1x32xf32, #tpu.memory_space<vmem>>, %arg12: memref<32x64xbf16, #tpu.memory_space<vmem>>, %arg13: memref<1x64xf32, #tpu.memory_space<vmem>>, %arg14: memref<32x32xbf16, #tpu.memory_space<vmem>>, %arg15: memref<1x32xf32, #tpu.memory_space<vmem>>, %arg16: memref<1x32xf32, #tpu.memory_space<vmem>>, %arg17: memref<1x32xf32, #tpu.memory_space<vmem>>, %arg18: memref<32x64xbf16, #tpu.memory_space<vmem>>, %arg19: memref<1x64xf32, #tpu.memory_space<vmem>>, %arg20: memref<64x32xbf16, #tpu.memory_space<vmem>>, %arg21: memref<1x32xf32, #tpu.memory_space<vmem>>, %arg22: memref<1x32xf32, #tpu.memory_space<vmem>>, %arg23: memref<1x32xf32, #tpu.memory_space<vmem>>, %arg24: memref<1x8x32xf32, #tpu.memory_space<vmem>>, %arg25: memref<1x8x16xf32, #tpu.memory_space<vmem>>) attributes {dimension_semantics = [#tpu.dimension_semantics<parallel>], iteration_bounds = array<i64: 2>, scalar_prefetch = 0 : i64, scratch_operands = 0 : i64, tpu.core_type = #tpu.core_type<tc>, window_params = [{transform_indices = @transform_0, window_bounds = array<i64: 1, 8, 32>}, {transform_indices = @transform_1, window_bounds = array<i64: 1, 16, 32>}, {transform_indices = @transform_2, window_bounds = array<i64: 1, 1, 8>}, {pipeline_mode = #tpu.pipeline_mode<synchronous>, transform_indices = @transform_3, window_bounds = array<i64: 32, 96>}, {pipeline_mode = #tpu.pipeline_mode<synchronous>, transform_indices = @transform_4, window_bounds = array<i64: 1, 96>}, {pipeline_mode = #tpu.pipeline_mode<synchronous>, transform_indices = @transform_5, window_bounds = array<i64: 32, 32>}, {pipeline_mode = #tpu.pipeline_mode<synchronous>, transform_indices = @transform_6, window_bounds = array<i64: 1, 32>}, {pipeline_mode = #tpu.pipeline_mode<synchronous>, transform_indices = @transform_7, window_bounds = array<i64: 1, 32>}, {pipeline_mode = #tpu.pipeline_mode<synchronous>, transform_indices = @transform_8, window_bounds = array<i64: 1, 32>}, {pipeline_mode = #tpu.pipeline_mode<synchronous>, transform_indices = @transform_9, window_bounds = array<i64: 32, 32>}, {pipeline_mode = #tpu.pipeline_mode<synchronous>, transform_indices = @transform_10, window_bounds = array<i64: 1, 32>}, {pipeline_mode = #tpu.pipeline_mode<synchronous>, transform_indices = @transform_11, window_bounds = array<i64: 32, 64>}, {pipeline_mode = #tpu.pipeline_mode<synchronous>, transform_indices = @transform_12, window_bounds = array<i64: 1, 64>}, {pipeline_mode = #tpu.pipeline_mode<synchronous>, transform_indices = @transform_13, window_bounds = array<i64: 32, 32>}, {pipeline_mode = #tpu.pipeline_mode<synchronous>, transform_indices = @transform_14, window_bounds = array<i64: 1, 32>}, {pipeline_mode = #tpu.pipeline_mode<synchronous>, transform_indices = @transform_15, window_bounds = array<i64: 1, 32>}, {pipeline_mode = #tpu.pipeline_mode<synchronous>, transform_indices = @transform_16, window_bounds = array<i64: 1, 32>}, {pipeline_mode = #tpu.pipeline_mode<synchronous>, transform_indices = @transform_17, window_bounds = array<i64: 32, 64>}, {pipeline_mode = #tpu.pipeline_mode<synchronous>, transform_indices = @transform_18, window_bounds = array<i64: 1, 64>}, {pipeline_mode = #tpu.pipeline_mode<synchronous>, transform_indices = @transform_19, window_bounds = array<i64: 64, 32>}, {pipeline_mode = #tpu.pipeline_mode<synchronous>, transform_indices = @transform_20, window_bounds = array<i64: 1, 32>}, {pipeline_mode = #tpu.pipeline_mode<synchronous>, transform_indices = @transform_21, window_bounds = array<i64: 1, 32>}, {pipeline_mode = #tpu.pipeline_mode<synchronous>, transform_indices = @transform_22, window_bounds = array<i64: 1, 32>}, {transform_indices = @transform_23, window_bounds = array<i64: 1, 8, 32>}, {transform_indices = @transform_24, window_bounds = array<i64: 1, 8, 16>}]} {
    %c0 = arith.constant 0 : index
    %c0_0 = arith.constant 0 : index
    %c0_1 = arith.constant 0 : index
    %0 = vector.load %arg1[%c0, %c0_0, %c0_1] : memref<1x8x32xf32, #tpu.memory_space<vmem>>, vector<1x8x32xf32>
    %1 = vector.shape_cast %0 : vector<1x8x32xf32> to vector<8x32xf32>
    %c0_2 = arith.constant 0 : index
    %c0_3 = arith.constant 0 : index
    %c0_4 = arith.constant 0 : index
    %2 = vector.load %arg2[%c0_2, %c0_3, %c0_4] : memref<1x16x32xf32, #tpu.memory_space<vmem>>, vector<1x16x32xf32>
    %3 = vector.shape_cast %2 : vector<1x16x32xf32> to vector<16x32xf32>
    %c0_5 = arith.constant 0 : index
    %c0_6 = arith.constant 0 : index
    %4 = vector.load %arg4[%c0_5, %c0_6] : memref<32x96xbf16, #tpu.memory_space<vmem>>, vector<32x96xbf16>
    %5 = arith.truncf %1 : vector<8x32xf32> to vector<8x32xbf16>
    %cst = arith.constant dense<0.000000e+00> : vector<8x96xf32>
    %6 = tpu.matmul %5, %4, %cst {dimension_numbers = #tpu.dot_dimension_numbers<[1], [0], [0], [1], [0, 0, 1, 1], [], []>} : vector<8x32xbf16>, vector<32x96xbf16>, vector<8x96xf32> -> vector<8x96xf32>
    %c0_7 = arith.constant 0 : index
    %c0_8 = arith.constant 0 : index
    %7 = vector.load %arg5[%c0_7, %c0_8] : memref<1x96xf32, #tpu.memory_space<vmem>>, vector<1x96xf32>
    %8 = vector.broadcast %7 : vector<1x96xf32> to vector<8x96xf32>
    %9 = arith.addf %6, %8 : vector<8x96xf32>
    %10 = vector.extract_strided_slice %9 {offsets = [0, 0], sizes = [8, 32], strides = [1, 1]} : vector<8x96xf32> to vector<8x32xf32>
    %11 = vector.extract_strided_slice %9 {offsets = [0, 32], sizes = [8, 32], strides = [1, 1]} : vector<8x96xf32> to vector<8x32xf32>
    %12 = vector.extract_strided_slice %9 {offsets = [0, 64], sizes = [8, 32], strides = [1, 1]} : vector<8x96xf32> to vector<8x32xf32>
    %13 = tpu.iota {dimensions = array<i32: 0>} : vector<8x8xi32>
    %14 = tpu.iota {dimensions = array<i32: 1>} : vector<8x8xi32>
    %15 = arith.cmpi sgt, %14, %13 : vector<8x8xi32>
    %cst_9 = arith.constant -1.000000e+30 : f32
    %cst_10 = arith.constant 0.000000e+00 : f32
    %16 = vector.broadcast %cst_9 : f32 to vector<8x8xf32>
    %17 = vector.broadcast %cst_10 : f32 to vector<8x8xf32>
    %18 = arith.select %15, %16, %17 : vector<8x8xi1>, vector<8x8xf32>
    %c0_11 = arith.constant 0 : index
    %c0_12 = arith.constant 0 : index
    %c0_13 = arith.constant 0 : index
    %19 = vector.load %arg3[%c0_11, %c0_12, %c0_13] : memref<1x1x8xf32, #tpu.memory_space<vmem>>, vector<1x1x8xf32>
    %20 = vector.shape_cast %19 : vector<1x1x8xf32> to vector<1x8xf32>
    %21 = vector.broadcast %20 : vector<1x8xf32> to vector<8x8xf32>
    %22 = arith.addf %18, %21 : vector<8x8xf32>
    %23 = vector.extract_strided_slice %10 {offsets = [0, 0], sizes = [8, 8], strides = [1, 1]} : vector<8x32xf32> to vector<8x8xf32>
    %24 = arith.truncf %23 : vector<8x8xf32> to vector<8x8xbf16>
    %25 = vector.extract_strided_slice %11 {offsets = [0, 0], sizes = [8, 8], strides = [1, 1]} : vector<8x32xf32> to vector<8x8xf32>
    %26 = arith.truncf %25 : vector<8x8xf32> to vector<8x8xbf16>
    %27 = vector.extract_strided_slice %12 {offsets = [0, 0], sizes = [8, 8], strides = [1, 1]} : vector<8x32xf32> to vector<8x8xf32>
    %28 = arith.truncf %27 : vector<8x8xf32> to vector<8x8xbf16>
    %cst_14 = arith.constant dense<0.000000e+00> : vector<8x8xf32>
    %29 = tpu.matmul %24, %26, %cst_14 {dimension_numbers = #tpu.dot_dimension_numbers<[1], [1], [0], [0], [0, 0, 1, 0], [], []>} : vector<8x8xbf16>, vector<8x8xbf16>, vector<8x8xf32> -> vector<8x8xf32>
    %cst_15 = arith.constant 0.353553385 : f32
    %30 = vector.broadcast %cst_15 : f32 to vector<8x8xf32>
    %31 = arith.mulf %29, %30 : vector<8x8xf32>
    %32 = arith.addf %31, %22 : vector<8x8xf32>
    %cst_16 = arith.constant dense<0xFF800000> : vector<8xf32>
    %33 = vector.multi_reduction <maximumf>, %32, %cst_16 [1] : vector<8x8xf32> to vector<8xf32>
    %34 = vector.shape_cast %33 : vector<8xf32> to vector<8x1xf32>
    %35 = vector.broadcast %34 : vector<8x1xf32> to vector<8x8xf32>
    %36 = arith.subf %32, %35 : vector<8x8xf32>
    %37 = math.exp %36 : vector<8x8xf32>
    %cst_17 = arith.constant dense<0.000000e+00> : vector<8xf32>
    %38 = vector.multi_reduction <add>, %37, %cst_17 [1] : vector<8x8xf32> to vector<8xf32>
    %39 = vector.shape_cast %38 : vector<8xf32> to vector<8x1xf32>
    %40 = tpu.reciprocal %39 {approx = true} : vector<8x1xf32> -> vector<8x1xf32>
    %41 = vector.broadcast %40 : vector<8x1xf32> to vector<8x8xf32>
    %42 = arith.mulf %37, %41 : vector<8x8xf32>
    %43 = arith.truncf %42 : vector<8x8xf32> to vector<8x8xbf16>
    %cst_18 = arith.constant dense<0.000000e+00> : vector<8x8xf32>
    %44 = tpu.matmul %43, %28, %cst_18 {dimension_numbers = #tpu.dot_dimension_numbers<[1], [0], [0], [1], [0, 0, 1, 1], [], []>} : vector<8x8xbf16>, vector<8x8xbf16>, vector<8x8xf32> -> vector<8x8xf32>
    %45 = vector.extract_strided_slice %10 {offsets = [0, 8], sizes = [8, 8], strides = [1, 1]} : vector<8x32xf32> to vector<8x8xf32>
    %46 = arith.truncf %45 : vector<8x8xf32> to vector<8x8xbf16>
    %47 = vector.extract_strided_slice %11 {offsets = [0, 8], sizes = [8, 8], strides = [1, 1]} : vector<8x32xf32> to vector<8x8xf32>
    %48 = arith.truncf %47 : vector<8x8xf32> to vector<8x8xbf16>
    %49 = vector.extract_strided_slice %12 {offsets = [0, 8], sizes = [8, 8], strides = [1, 1]} : vector<8x32xf32> to vector<8x8xf32>
    %50 = arith.truncf %49 : vector<8x8xf32> to vector<8x8xbf16>
    %cst_19 = arith.constant dense<0.000000e+00> : vector<8x8xf32>
    %51 = tpu.matmul %46, %48, %cst_19 {dimension_numbers = #tpu.dot_dimension_numbers<[1], [1], [0], [0], [0, 0, 1, 0], [], []>} : vector<8x8xbf16>, vector<8x8xbf16>, vector<8x8xf32> -> vector<8x8xf32>
    %cst_20 = arith.constant 0.353553385 : f32
    %52 = vector.broadcast %cst_20 : f32 to vector<8x8xf32>
    %53 = arith.mulf %51, %52 : vector<8x8xf32>
    %54 = arith.addf %53, %22 : vector<8x8xf32>
    %cst_21 = arith.constant dense<0xFF800000> : vector<8xf32>
    %55 = vector.multi_reduction <maximumf>, %54, %cst_21 [1] : vector<8x8xf32> to vector<8xf32>
    %56 = vector.shape_cast %55 : vector<8xf32> to vector<8x1xf32>
    %57 = vector.broadcast %56 : vector<8x1xf32> to vector<8x8xf32>
    %58 = arith.subf %54, %57 : vector<8x8xf32>
    %59 = math.exp %58 : vector<8x8xf32>
    %cst_22 = arith.constant dense<0.000000e+00> : vector<8xf32>
    %60 = vector.multi_reduction <add>, %59, %cst_22 [1] : vector<8x8xf32> to vector<8xf32>
    %61 = vector.shape_cast %60 : vector<8xf32> to vector<8x1xf32>
    %62 = tpu.reciprocal %61 {approx = true} : vector<8x1xf32> -> vector<8x1xf32>
    %63 = vector.broadcast %62 : vector<8x1xf32> to vector<8x8xf32>
    %64 = arith.mulf %59, %63 : vector<8x8xf32>
    %65 = arith.truncf %64 : vector<8x8xf32> to vector<8x8xbf16>
    %cst_23 = arith.constant dense<0.000000e+00> : vector<8x8xf32>
    %66 = tpu.matmul %65, %50, %cst_23 {dimension_numbers = #tpu.dot_dimension_numbers<[1], [0], [0], [1], [0, 0, 1, 1], [], []>} : vector<8x8xbf16>, vector<8x8xbf16>, vector<8x8xf32> -> vector<8x8xf32>
    %67 = vector.extract_strided_slice %10 {offsets = [0, 16], sizes = [8, 8], strides = [1, 1]} : vector<8x32xf32> to vector<8x8xf32>
    %68 = arith.truncf %67 : vector<8x8xf32> to vector<8x8xbf16>
    %69 = vector.extract_strided_slice %11 {offsets = [0, 16], sizes = [8, 8], strides = [1, 1]} : vector<8x32xf32> to vector<8x8xf32>
    %70 = arith.truncf %69 : vector<8x8xf32> to vector<8x8xbf16>
    %71 = vector.extract_strided_slice %12 {offsets = [0, 16], sizes = [8, 8], strides = [1, 1]} : vector<8x32xf32> to vector<8x8xf32>
    %72 = arith.truncf %71 : vector<8x8xf32> to vector<8x8xbf16>
    %cst_24 = arith.constant dense<0.000000e+00> : vector<8x8xf32>
    %73 = tpu.matmul %68, %70, %cst_24 {dimension_numbers = #tpu.dot_dimension_numbers<[1], [1], [0], [0], [0, 0, 1, 0], [], []>} : vector<8x8xbf16>, vector<8x8xbf16>, vector<8x8xf32> -> vector<8x8xf32>
    %cst_25 = arith.constant 0.353553385 : f32
    %74 = vector.broadcast %cst_25 : f32 to vector<8x8xf32>
    %75 = arith.mulf %73, %74 : vector<8x8xf32>
    %76 = arith.addf %75, %22 : vector<8x8xf32>
    %cst_26 = arith.constant dense<0xFF800000> : vector<8xf32>
    %77 = vector.multi_reduction <maximumf>, %76, %cst_26 [1] : vector<8x8xf32> to vector<8xf32>
    %78 = vector.shape_cast %77 : vector<8xf32> to vector<8x1xf32>
    %79 = vector.broadcast %78 : vector<8x1xf32> to vector<8x8xf32>
    %80 = arith.subf %76, %79 : vector<8x8xf32>
    %81 = math.exp %80 : vector<8x8xf32>
    %cst_27 = arith.constant dense<0.000000e+00> : vector<8xf32>
    %82 = vector.multi_reduction <add>, %81, %cst_27 [1] : vector<8x8xf32> to vector<8xf32>
    %83 = vector.shape_cast %82 : vector<8xf32> to vector<8x1xf32>
    %84 = tpu.reciprocal %83 {approx = true} : vector<8x1xf32> -> vector<8x1xf32>
    %85 = vector.broadcast %84 : vector<8x1xf32> to vector<8x8xf32>
    %86 = arith.mulf %81, %85 : vector<8x8xf32>
    %87 = arith.truncf %86 : vector<8x8xf32> to vector<8x8xbf16>
    %cst_28 = arith.constant dense<0.000000e+00> : vector<8x8xf32>
    %88 = tpu.matmul %87, %72, %cst_28 {dimension_numbers = #tpu.dot_dimension_numbers<[1], [0], [0], [1], [0, 0, 1, 1], [], []>} : vector<8x8xbf16>, vector<8x8xbf16>, vector<8x8xf32> -> vector<8x8xf32>
    %89 = vector.extract_strided_slice %10 {offsets = [0, 24], sizes = [8, 8], strides = [1, 1]} : vector<8x32xf32> to vector<8x8xf32>
    %90 = arith.truncf %89 : vector<8x8xf32> to vector<8x8xbf16>
    %91 = vector.extract_strided_slice %11 {offsets = [0, 24], sizes = [8, 8], strides = [1, 1]} : vector<8x32xf32> to vector<8x8xf32>
    %92 = arith.truncf %91 : vector<8x8xf32> to vector<8x8xbf16>
    %93 = vector.extract_strided_slice %12 {offsets = [0, 24], sizes = [8, 8], strides = [1, 1]} : vector<8x32xf32> to vector<8x8xf32>
    %94 = arith.truncf %93 : vector<8x8xf32> to vector<8x8xbf16>
    %cst_29 = arith.constant dense<0.000000e+00> : vector<8x8xf32>
    %95 = tpu.matmul %90, %92, %cst_29 {dimension_numbers = #tpu.dot_dimension_numbers<[1], [1], [0], [0], [0, 0, 1, 0], [], []>} : vector<8x8xbf16>, vector<8x8xbf16>, vector<8x8xf32> -> vector<8x8xf32>
    %cst_30 = arith.constant 0.353553385 : f32
    %96 = vector.broadcast %cst_30 : f32 to vector<8x8xf32>
    %97 = arith.mulf %95, %96 : vector<8x8xf32>
    %98 = arith.addf %97, %22 : vector<8x8xf32>
    %cst_31 = arith.constant dense<0xFF800000> : vector<8xf32>
    %99 = vector.multi_reduction <maximumf>, %98, %cst_31 [1] : vector<8x8xf32> to vector<8xf32>
    %100 = vector.shape_cast %99 : vector<8xf32> to vector<8x1xf32>
    %101 = vector.broadcast %100 : vector<8x1xf32> to vector<8x8xf32>
    %102 = arith.subf %98, %101 : vector<8x8xf32>
    %103 = math.exp %102 : vector<8x8xf32>
    %cst_32 = arith.constant dense<0.000000e+00> : vector<8xf32>
    %104 = vector.multi_reduction <add>, %103, %cst_32 [1] : vector<8x8xf32> to vector<8xf32>
    %105 = vector.shape_cast %104 : vector<8xf32> to vector<8x1xf32>
    %106 = tpu.reciprocal %105 {approx = true} : vector<8x1xf32> -> vector<8x1xf32>
    %107 = vector.broadcast %106 : vector<8x1xf32> to vector<8x8xf32>
    %108 = arith.mulf %103, %107 : vector<8x8xf32>
    %109 = arith.truncf %108 : vector<8x8xf32> to vector<8x8xbf16>
    %cst_33 = arith.constant dense<0.000000e+00> : vector<8x8xf32>
    %110 = tpu.matmul %109, %94, %cst_33 {dimension_numbers = #tpu.dot_dimension_numbers<[1], [0], [0], [1], [0, 0, 1, 1], [], []>} : vector<8x8xbf16>, vector<8x8xbf16>, vector<8x8xf32> -> vector<8x8xf32>
    %111 = tpu.concatenate %44, %66, %88, %110 in 1 : vector<8x8xf32>, vector<8x8xf32>, vector<8x8xf32>, vector<8x8xf32> -> vector<8x32xf32>
    %c0_34 = arith.constant 0 : index
    %c0_35 = arith.constant 0 : index
    %112 = vector.load %arg6[%c0_34, %c0_35] : memref<32x32xbf16, #tpu.memory_space<vmem>>, vector<32x32xbf16>
    %113 = arith.truncf %111 : vector<8x32xf32> to vector<8x32xbf16>
    %cst_36 = arith.constant dense<0.000000e+00> : vector<8x32xf32>
    %114 = tpu.matmul %113, %112, %cst_36 {dimension_numbers = #tpu.dot_dimension_numbers<[1], [0], [0], [1], [0, 0, 1, 1], [], []>} : vector<8x32xbf16>, vector<32x32xbf16>, vector<8x32xf32> -> vector<8x32xf32>
    %c0_37 = arith.constant 0 : index
    %c0_38 = arith.constant 0 : index
    %115 = vector.load %arg7[%c0_37, %c0_38] : memref<1x32xf32, #tpu.memory_space<vmem>>, vector<1x32xf32>
    %116 = vector.broadcast %115 : vector<1x32xf32> to vector<8x32xf32>
    %117 = arith.addf %114, %116 : vector<8x32xf32>
    %118 = arith.addf %117, %1 : vector<8x32xf32>
    %c0_39 = arith.constant 0 : index
    %c0_40 = arith.constant 0 : index
    %119 = vector.load %arg8[%c0_39, %c0_40] : memref<1x32xf32, #tpu.memory_space<vmem>>, vector<1x32xf32>
    %c0_41 = arith.constant 0 : index
    %c0_42 = arith.constant 0 : index
    %120 = vector.load %arg9[%c0_41, %c0_42] : memref<1x32xf32, #tpu.memory_space<vmem>>, vector<1x32xf32>
    %cst_43 = arith.constant dense<0.000000e+00> : vector<8xf32>
    %121 = vector.multi_reduction <add>, %118, %cst_43 [1] : vector<8x32xf32> to vector<8xf32>
    %122 = vector.shape_cast %121 : vector<8xf32> to vector<8x1xf32>
    %cst_44 = arith.constant 3.200000e+01 : f32
    %123 = vector.broadcast %cst_44 : f32 to vector<8x1xf32>
    %124 = arith.divf %122, %123 : vector<8x1xf32>
    %125 = vector.broadcast %124 : vector<8x1xf32> to vector<8x32xf32>
    %126 = arith.subf %118, %125 : vector<8x32xf32>
    %127 = arith.mulf %126, %126 : vector<8x32xf32>
    %cst_45 = arith.constant dense<0.000000e+00> : vector<8xf32>
    %128 = vector.multi_reduction <add>, %127, %cst_45 [1] : vector<8x32xf32> to vector<8xf32>
    %129 = vector.shape_cast %128 : vector<8xf32> to vector<8x1xf32>
    %cst_46 = arith.constant 3.200000e+01 : f32
    %130 = vector.broadcast %cst_46 : f32 to vector<8x1xf32>
    %131 = arith.divf %129, %130 : vector<8x1xf32>
    %132 = vector.broadcast %124 : vector<8x1xf32> to vector<8x32xf32>
    %133 = arith.subf %118, %132 : vector<8x32xf32>
    %cst_47 = arith.constant 9.99999974E-6 : f32
    %134 = vector.broadcast %cst_47 : f32 to vector<8x1xf32>
    %135 = arith.addf %131, %134 : vector<8x1xf32>
    %136 = math.rsqrt %135 : vector<8x1xf32>
    %137 = vector.broadcast %136 : vector<8x1xf32> to vector<8x32xf32>
    %138 = arith.mulf %133, %137 : vector<8x32xf32>
    %139 = vector.broadcast %119 : vector<1x32xf32> to vector<8x32xf32>
    %140 = arith.mulf %138, %139 : vector<8x32xf32>
    %141 = vector.broadcast %120 : vector<1x32xf32> to vector<8x32xf32>
    %142 = arith.addf %140, %141 : vector<8x32xf32>
    %c0_48 = arith.constant 0 : index
    %c0_49 = arith.constant 0 : index
    %143 = vector.load %arg10[%c0_48, %c0_49] : memref<32x32xbf16, #tpu.memory_space<vmem>>, vector<32x32xbf16>
    %144 = arith.truncf %142 : vector<8x32xf32> to vector<8x32xbf16>
    %cst_50 = arith.constant dense<0.000000e+00> : vector<8x32xf32>
    %145 = tpu.matmul %144, %143, %cst_50 {dimension_numbers = #tpu.dot_dimension_numbers<[1], [0], [0], [1], [0, 0, 1, 1], [], []>} : vector<8x32xbf16>, vector<32x32xbf16>, vector<8x32xf32> -> vector<8x32xf32>
    %c0_51 = arith.constant 0 : index
    %c0_52 = arith.constant 0 : index
    %146 = vector.load %arg11[%c0_51, %c0_52] : memref<1x32xf32, #tpu.memory_space<vmem>>, vector<1x32xf32>
    %147 = vector.broadcast %146 : vector<1x32xf32> to vector<8x32xf32>
    %148 = arith.addf %145, %147 : vector<8x32xf32>
    %c0_53 = arith.constant 0 : index
    %c0_54 = arith.constant 0 : index
    %149 = vector.load %arg12[%c0_53, %c0_54] : memref<32x64xbf16, #tpu.memory_space<vmem>>, vector<32x64xbf16>
    %150 = arith.truncf %3 : vector<16x32xf32> to vector<16x32xbf16>
    %cst_55 = arith.constant dense<0.000000e+00> : vector<16x64xf32>
    %151 = tpu.matmul %150, %149, %cst_55 {dimension_numbers = #tpu.dot_dimension_numbers<[1], [0], [0], [1], [0, 0, 1, 1], [], []>} : vector<16x32xbf16>, vector<32x64xbf16>, vector<16x64xf32> -> vector<16x64xf32>
    %c0_56 = arith.constant 0 : index
    %c0_57 = arith.constant 0 : index
    %152 = vector.load %arg13[%c0_56, %c0_57] : memref<1x64xf32, #tpu.memory_space<vmem>>, vector<1x64xf32>
    %153 = vector.broadcast %152 : vector<1x64xf32> to vector<16x64xf32>
    %154 = arith.addf %151, %153 : vector<16x64xf32>
    %155 = vector.extract_strided_slice %154 {offsets = [0, 0], sizes = [16, 32], strides = [1, 1]} : vector<16x64xf32> to vector<16x32xf32>
    %156 = vector.extract_strided_slice %154 {offsets = [0, 32], sizes = [16, 32], strides = [1, 1]} : vector<16x64xf32> to vector<16x32xf32>
    %157 = vector.extract_strided_slice %148 {offsets = [0, 0], sizes = [8, 8], strides = [1, 1]} : vector<8x32xf32> to vector<8x8xf32>
    %158 = arith.truncf %157 : vector<8x8xf32> to vector<8x8xbf16>
    %159 = vector.extract_strided_slice %155 {offsets = [0, 0], sizes = [16, 8], strides = [1, 1]} : vector<16x32xf32> to vector<16x8xf32>
    %160 = arith.truncf %159 : vector<16x8xf32> to vector<16x8xbf16>
    %161 = vector.extract_strided_slice %156 {offsets = [0, 0], sizes = [16, 8], strides = [1, 1]} : vector<16x32xf32> to vector<16x8xf32>
    %162 = arith.truncf %161 : vector<16x8xf32> to vector<16x8xbf16>
    %cst_58 = arith.constant dense<0.000000e+00> : vector<8x16xf32>
    %163 = tpu.matmul %158, %160, %cst_58 {dimension_numbers = #tpu.dot_dimension_numbers<[1], [1], [0], [0], [0, 0, 1, 0], [], []>} : vector<8x8xbf16>, vector<16x8xbf16>, vector<8x16xf32> -> vector<8x16xf32>
    %cst_59 = arith.constant 0.353553385 : f32
    %164 = vector.broadcast %cst_59 : f32 to vector<8x16xf32>
    %165 = arith.mulf %163, %164 : vector<8x16xf32>
    %cst_60 = arith.constant dense<0xFF800000> : vector<8xf32>
    %166 = vector.multi_reduction <maximumf>, %165, %cst_60 [1] : vector<8x16xf32> to vector<8xf32>
    %167 = vector.shape_cast %166 : vector<8xf32> to vector<8x1xf32>
    %168 = vector.broadcast %167 : vector<8x1xf32> to vector<8x16xf32>
    %169 = arith.subf %165, %168 : vector<8x16xf32>
    %170 = math.exp %169 : vector<8x16xf32>
    %cst_61 = arith.constant dense<0.000000e+00> : vector<8xf32>
    %171 = vector.multi_reduction <add>, %170, %cst_61 [1] : vector<8x16xf32> to vector<8xf32>
    %172 = vector.shape_cast %171 : vector<8xf32> to vector<8x1xf32>
    %173 = tpu.reciprocal %172 {approx = true} : vector<8x1xf32> -> vector<8x1xf32>
    %174 = vector.broadcast %173 : vector<8x1xf32> to vector<8x16xf32>
    %175 = arith.mulf %170, %174 : vector<8x16xf32>
    %176 = arith.truncf %175 : vector<8x16xf32> to vector<8x16xbf16>
    %cst_62 = arith.constant dense<0.000000e+00> : vector<8x8xf32>
    %177 = tpu.matmul %176, %162, %cst_62 {dimension_numbers = #tpu.dot_dimension_numbers<[1], [0], [0], [1], [0, 0, 1, 1], [], []>} : vector<8x16xbf16>, vector<16x8xbf16>, vector<8x8xf32> -> vector<8x8xf32>
    %178 = vector.extract_strided_slice %148 {offsets = [0, 8], sizes = [8, 8], strides = [1, 1]} : vector<8x32xf32> to vector<8x8xf32>
    %179 = arith.truncf %178 : vector<8x8xf32> to vector<8x8xbf16>
    %180 = vector.extract_strided_slice %155 {offsets = [0, 8], sizes = [16, 8], strides = [1, 1]} : vector<16x32xf32> to vector<16x8xf32>
    %181 = arith.truncf %180 : vector<16x8xf32> to vector<16x8xbf16>
    %182 = vector.extract_strided_slice %156 {offsets = [0, 8], sizes = [16, 8], strides = [1, 1]} : vector<16x32xf32> to vector<16x8xf32>
    %183 = arith.truncf %182 : vector<16x8xf32> to vector<16x8xbf16>
    %cst_63 = arith.constant dense<0.000000e+00> : vector<8x16xf32>
    %184 = tpu.matmul %179, %181, %cst_63 {dimension_numbers = #tpu.dot_dimension_numbers<[1], [1], [0], [0], [0, 0, 1, 0], [], []>} : vector<8x8xbf16>, vector<16x8xbf16>, vector<8x16xf32> -> vector<8x16xf32>
    %cst_64 = arith.constant 0.353553385 : f32
    %185 = vector.broadcast %cst_64 : f32 to vector<8x16xf32>
    %186 = arith.mulf %184, %185 : vector<8x16xf32>
    %cst_65 = arith.constant dense<0xFF800000> : vector<8xf32>
    %187 = vector.multi_reduction <maximumf>, %186, %cst_65 [1] : vector<8x16xf32> to vector<8xf32>
    %188 = vector.shape_cast %187 : vector<8xf32> to vector<8x1xf32>
    %189 = vector.broadcast %188 : vector<8x1xf32> to vector<8x16xf32>
    %190 = arith.subf %186, %189 : vector<8x16xf32>
    %191 = math.exp %190 : vector<8x16xf32>
    %cst_66 = arith.constant dense<0.000000e+00> : vector<8xf32>
    %192 = vector.multi_reduction <add>, %191, %cst_66 [1] : vector<8x16xf32> to vector<8xf32>
    %193 = vector.shape_cast %192 : vector<8xf32> to vector<8x1xf32>
    %194 = tpu.reciprocal %193 {approx = true} : vector<8x1xf32> -> vector<8x1xf32>
    %195 = vector.broadcast %194 : vector<8x1xf32> to vector<8x16xf32>
    %196 = arith.mulf %191, %195 : vector<8x16xf32>
    %197 = arith.truncf %196 : vector<8x16xf32> to vector<8x16xbf16>
    %cst_67 = arith.constant dense<0.000000e+00> : vector<8x8xf32>
    %198 = tpu.matmul %197, %183, %cst_67 {dimension_numbers = #tpu.dot_dimension_numbers<[1], [0], [0], [1], [0, 0, 1, 1], [], []>} : vector<8x16xbf16>, vector<16x8xbf16>, vector<8x8xf32> -> vector<8x8xf32>
    %199 = arith.addf %175, %196 : vector<8x16xf32>
    %200 = vector.extract_strided_slice %148 {offsets = [0, 16], sizes = [8, 8], strides = [1, 1]} : vector<8x32xf32> to vector<8x8xf32>
    %201 = arith.truncf %200 : vector<8x8xf32> to vector<8x8xbf16>
    %202 = vector.extract_strided_slice %155 {offsets = [0, 16], sizes = [16, 8], strides = [1, 1]} : vector<16x32xf32> to vector<16x8xf32>
    %203 = arith.truncf %202 : vector<16x8xf32> to vector<16x8xbf16>
    %204 = vector.extract_strided_slice %156 {offsets = [0, 16], sizes = [16, 8], strides = [1, 1]} : vector<16x32xf32> to vector<16x8xf32>
    %205 = arith.truncf %204 : vector<16x8xf32> to vector<16x8xbf16>
    %cst_68 = arith.constant dense<0.000000e+00> : vector<8x16xf32>
    %206 = tpu.matmul %201, %203, %cst_68 {dimension_numbers = #tpu.dot_dimension_numbers<[1], [1], [0], [0], [0, 0, 1, 0], [], []>} : vector<8x8xbf16>, vector<16x8xbf16>, vector<8x16xf32> -> vector<8x16xf32>
    %cst_69 = arith.constant 0.353553385 : f32
    %207 = vector.broadcast %cst_69 : f32 to vector<8x16xf32>
    %208 = arith.mulf %206, %207 : vector<8x16xf32>
    %cst_70 = arith.constant dense<0xFF800000> : vector<8xf32>
    %209 = vector.multi_reduction <maximumf>, %208, %cst_70 [1] : vector<8x16xf32> to vector<8xf32>
    %210 = vector.shape_cast %209 : vector<8xf32> to vector<8x1xf32>
    %211 = vector.broadcast %210 : vector<8x1xf32> to vector<8x16xf32>
    %212 = arith.subf %208, %211 : vector<8x16xf32>
    %213 = math.exp %212 : vector<8x16xf32>
    %cst_71 = arith.constant dense<0.000000e+00> : vector<8xf32>
    %214 = vector.multi_reduction <add>, %213, %cst_71 [1] : vector<8x16xf32> to vector<8xf32>
    %215 = vector.shape_cast %214 : vector<8xf32> to vector<8x1xf32>
    %216 = tpu.reciprocal %215 {approx = true} : vector<8x1xf32> -> vector<8x1xf32>
    %217 = vector.broadcast %216 : vector<8x1xf32> to vector<8x16xf32>
    %218 = arith.mulf %213, %217 : vector<8x16xf32>
    %219 = arith.truncf %218 : vector<8x16xf32> to vector<8x16xbf16>
    %cst_72 = arith.constant dense<0.000000e+00> : vector<8x8xf32>
    %220 = tpu.matmul %219, %205, %cst_72 {dimension_numbers = #tpu.dot_dimension_numbers<[1], [0], [0], [1], [0, 0, 1, 1], [], []>} : vector<8x16xbf16>, vector<16x8xbf16>, vector<8x8xf32> -> vector<8x8xf32>
    %221 = arith.addf %199, %218 : vector<8x16xf32>
    %222 = vector.extract_strided_slice %148 {offsets = [0, 24], sizes = [8, 8], strides = [1, 1]} : vector<8x32xf32> to vector<8x8xf32>
    %223 = arith.truncf %222 : vector<8x8xf32> to vector<8x8xbf16>
    %224 = vector.extract_strided_slice %155 {offsets = [0, 24], sizes = [16, 8], strides = [1, 1]} : vector<16x32xf32> to vector<16x8xf32>
    %225 = arith.truncf %224 : vector<16x8xf32> to vector<16x8xbf16>
    %226 = vector.extract_strided_slice %156 {offsets = [0, 24], sizes = [16, 8], strides = [1, 1]} : vector<16x32xf32> to vector<16x8xf32>
    %227 = arith.truncf %226 : vector<16x8xf32> to vector<16x8xbf16>
    %cst_73 = arith.constant dense<0.000000e+00> : vector<8x16xf32>
    %228 = tpu.matmul %223, %225, %cst_73 {dimension_numbers = #tpu.dot_dimension_numbers<[1], [1], [0], [0], [0, 0, 1, 0], [], []>} : vector<8x8xbf16>, vector<16x8xbf16>, vector<8x16xf32> -> vector<8x16xf32>
    %cst_74 = arith.constant 0.353553385 : f32
    %229 = vector.broadcast %cst_74 : f32 to vector<8x16xf32>
    %230 = arith.mulf %228, %229 : vector<8x16xf32>
    %cst_75 = arith.constant dense<0xFF800000> : vector<8xf32>
    %231 = vector.multi_reduction <maximumf>, %230, %cst_75 [1] : vector<8x16xf32> to vector<8xf32>
    %232 = vector.shape_cast %231 : vector<8xf32> to vector<8x1xf32>
    %233 = vector.broadcast %232 : vector<8x1xf32> to vector<8x16xf32>
    %234 = arith.subf %230, %233 : vector<8x16xf32>
    %235 = math.exp %234 : vector<8x16xf32>
    %cst_76 = arith.constant dense<0.000000e+00> : vector<8xf32>
    %236 = vector.multi_reduction <add>, %235, %cst_76 [1] : vector<8x16xf32> to vector<8xf32>
    %237 = vector.shape_cast %236 : vector<8xf32> to vector<8x1xf32>
    %238 = tpu.reciprocal %237 {approx = true} : vector<8x1xf32> -> vector<8x1xf32>
    %239 = vector.broadcast %238 : vector<8x1xf32> to vector<8x16xf32>
    %240 = arith.mulf %235, %239 : vector<8x16xf32>
    %241 = arith.truncf %240 : vector<8x16xf32> to vector<8x16xbf16>
    %cst_77 = arith.constant dense<0.000000e+00> : vector<8x8xf32>
    %242 = tpu.matmul %241, %227, %cst_77 {dimension_numbers = #tpu.dot_dimension_numbers<[1], [0], [0], [1], [0, 0, 1, 1], [], []>} : vector<8x16xbf16>, vector<16x8xbf16>, vector<8x8xf32> -> vector<8x8xf32>
    %243 = arith.addf %221, %240 : vector<8x16xf32>
    %244 = tpu.concatenate %177, %198, %220, %242 in 1 : vector<8x8xf32>, vector<8x8xf32>, vector<8x8xf32>, vector<8x8xf32> -> vector<8x32xf32>
    %cst_78 = arith.constant 2.500000e-01 : f32
    %245 = vector.broadcast %cst_78 : f32 to vector<8x16xf32>
    %246 = arith.mulf %243, %245 : vector<8x16xf32>
    %c0_79 = arith.constant 0 : index
    %c0_80 = arith.constant 0 : index
    %247 = vector.load %arg14[%c0_79, %c0_80] : memref<32x32xbf16, #tpu.memory_space<vmem>>, vector<32x32xbf16>
    %248 = arith.truncf %244 : vector<8x32xf32> to vector<8x32xbf16>
    %cst_81 = arith.constant dense<0.000000e+00> : vector<8x32xf32>
    %249 = tpu.matmul %248, %247, %cst_81 {dimension_numbers = #tpu.dot_dimension_numbers<[1], [0], [0], [1], [0, 0, 1, 1], [], []>} : vector<8x32xbf16>, vector<32x32xbf16>, vector<8x32xf32> -> vector<8x32xf32>
    %c0_82 = arith.constant 0 : index
    %c0_83 = arith.constant 0 : index
    %250 = vector.load %arg15[%c0_82, %c0_83] : memref<1x32xf32, #tpu.memory_space<vmem>>, vector<1x32xf32>
    %251 = vector.broadcast %250 : vector<1x32xf32> to vector<8x32xf32>
    %252 = arith.addf %249, %251 : vector<8x32xf32>
    %253 = arith.addf %252, %142 : vector<8x32xf32>
    %c0_84 = arith.constant 0 : index
    %c0_85 = arith.constant 0 : index
    %254 = vector.load %arg16[%c0_84, %c0_85] : memref<1x32xf32, #tpu.memory_space<vmem>>, vector<1x32xf32>
    %c0_86 = arith.constant 0 : index
    %c0_87 = arith.constant 0 : index
    %255 = vector.load %arg17[%c0_86, %c0_87] : memref<1x32xf32, #tpu.memory_space<vmem>>, vector<1x32xf32>
    %cst_88 = arith.constant dense<0.000000e+00> : vector<8xf32>
    %256 = vector.multi_reduction <add>, %253, %cst_88 [1] : vector<8x32xf32> to vector<8xf32>
    %257 = vector.shape_cast %256 : vector<8xf32> to vector<8x1xf32>
    %cst_89 = arith.constant 3.200000e+01 : f32
    %258 = vector.broadcast %cst_89 : f32 to vector<8x1xf32>
    %259 = arith.divf %257, %258 : vector<8x1xf32>
    %260 = vector.broadcast %259 : vector<8x1xf32> to vector<8x32xf32>
    %261 = arith.subf %253, %260 : vector<8x32xf32>
    %262 = arith.mulf %261, %261 : vector<8x32xf32>
    %cst_90 = arith.constant dense<0.000000e+00> : vector<8xf32>
    %263 = vector.multi_reduction <add>, %262, %cst_90 [1] : vector<8x32xf32> to vector<8xf32>
    %264 = vector.shape_cast %263 : vector<8xf32> to vector<8x1xf32>
    %cst_91 = arith.constant 3.200000e+01 : f32
    %265 = vector.broadcast %cst_91 : f32 to vector<8x1xf32>
    %266 = arith.divf %264, %265 : vector<8x1xf32>
    %267 = vector.broadcast %259 : vector<8x1xf32> to vector<8x32xf32>
    %268 = arith.subf %253, %267 : vector<8x32xf32>
    %cst_92 = arith.constant 9.99999974E-6 : f32
    %269 = vector.broadcast %cst_92 : f32 to vector<8x1xf32>
    %270 = arith.addf %266, %269 : vector<8x1xf32>
    %271 = math.rsqrt %270 : vector<8x1xf32>
    %272 = vector.broadcast %271 : vector<8x1xf32> to vector<8x32xf32>
    %273 = arith.mulf %268, %272 : vector<8x32xf32>
    %274 = vector.broadcast %254 : vector<1x32xf32> to vector<8x32xf32>
    %275 = arith.mulf %273, %274 : vector<8x32xf32>
    %276 = vector.broadcast %255 : vector<1x32xf32> to vector<8x32xf32>
    %277 = arith.addf %275, %276 : vector<8x32xf32>
    %c0_93 = arith.constant 0 : index
    %c0_94 = arith.constant 0 : index
    %278 = vector.load %arg18[%c0_93, %c0_94] : memref<32x64xbf16, #tpu.memory_space<vmem>>, vector<32x64xbf16>
    %279 = arith.truncf %277 : vector<8x32xf32> to vector<8x32xbf16>
    %cst_95 = arith.constant dense<0.000000e+00> : vector<8x64xf32>
    %280 = tpu.matmul %279, %278, %cst_95 {dimension_numbers = #tpu.dot_dimension_numbers<[1], [0], [0], [1], [0, 0, 1, 1], [], []>} : vector<8x32xbf16>, vector<32x64xbf16>, vector<8x64xf32> -> vector<8x64xf32>
    %c0_96 = arith.constant 0 : index
    %c0_97 = arith.constant 0 : index
    %281 = vector.load %arg19[%c0_96, %c0_97] : memref<1x64xf32, #tpu.memory_space<vmem>>, vector<1x64xf32>
    %282 = vector.broadcast %281 : vector<1x64xf32> to vector<8x64xf32>
    %283 = arith.addf %280, %282 : vector<8x64xf32>
    %cst_98 = arith.constant 0.000000e+00 : f32
    %284 = vector.broadcast %cst_98 : f32 to vector<8x64xf32>
    %285 = arith.maximumf %283, %284 : vector<8x64xf32>
    %c0_99 = arith.constant 0 : index
    %c0_100 = arith.constant 0 : index
    %286 = vector.load %arg20[%c0_99, %c0_100] : memref<64x32xbf16, #tpu.memory_space<vmem>>, vector<64x32xbf16>
    %287 = arith.truncf %285 : vector<8x64xf32> to vector<8x64xbf16>
    %cst_101 = arith.constant dense<0.000000e+00> : vector<8x32xf32>
    %288 = tpu.matmul %287, %286, %cst_101 {dimension_numbers = #tpu.dot_dimension_numbers<[1], [0], [0], [1], [0, 0, 1, 1], [], []>} : vector<8x64xbf16>, vector<64x32xbf16>, vector<8x32xf32> -> vector<8x32xf32>
    %c0_102 = arith.constant 0 : index
    %c0_103 = arith.constant 0 : index
    %289 = vector.load %arg21[%c0_102, %c0_103] : memref<1x32xf32, #tpu.memory_space<vmem>>, vector<1x32xf32>
    %290 = vector.broadcast %289 : vector<1x32xf32> to vector<8x32xf32>
    %291 = arith.addf %288, %290 : vector<8x32xf32>
    %292 = arith.addf %291, %277 : vector<8x32xf32>
    %c0_104 = arith.constant 0 : index
    %c0_105 = arith.constant 0 : index
    %293 = vector.load %arg22[%c0_104, %c0_105] : memref<1x32xf32, #tpu.memory_space<vmem>>, vector<1x32xf32>
    %c0_106 = arith.constant 0 : index
    %c0_107 = arith.constant 0 : index
    %294 = vector.load %arg23[%c0_106, %c0_107] : memref<1x32xf32, #tpu.memory_space<vmem>>, vector<1x32xf32>
    %cst_108 = arith.constant dense<0.000000e+00> : vector<8xf32>
    %295 = vector.multi_reduction <add>, %292, %cst_108 [1] : vector<8x32xf32> to vector<8xf32>
    %296 = vector.shape_cast %295 : vector<8xf32> to vector<8x1xf32>
    %cst_109 = arith.constant 3.200000e+01 : f32
    %297 = vector.broadcast %cst_109 : f32 to vector<8x1xf32>
    %298 = arith.divf %296, %297 : vector<8x1xf32>
    %299 = vector.broadcast %298 : vector<8x1xf32> to vector<8x32xf32>
    %300 = arith.subf %292, %299 : vector<8x32xf32>
    %301 = arith.mulf %300, %300 : vector<8x32xf32>
    %cst_110 = arith.constant dense<0.000000e+00> : vector<8xf32>
    %302 = vector.multi_reduction <add>, %301, %cst_110 [1] : vector<8x32xf32> to vector<8xf32>
    %303 = vector.shape_cast %302 : vector<8xf32> to vector<8x1xf32>
    %cst_111 = arith.constant 3.200000e+01 : f32
    %304 = vector.broadcast %cst_111 : f32 to vector<8x1xf32>
    %305 = arith.divf %303, %304 : vector<8x1xf32>
    %306 = vector.broadcast %298 : vector<8x1xf32> to vector<8x32xf32>
    %307 = arith.subf %292, %306 : vector<8x32xf32>
    %cst_112 = arith.constant 9.99999974E-6 : f32
    %308 = vector.broadcast %cst_112 : f32 to vector<8x1xf32>
    %309 = arith.addf %305, %308 : vector<8x1xf32>
    %310 = math.rsqrt %309 : vector<8x1xf32>
    %311 = vector.broadcast %310 : vector<8x1xf32> to vector<8x32xf32>
    %312 = arith.mulf %307, %311 : vector<8x32xf32>
    %313 = vector.broadcast %293 : vector<1x32xf32> to vector<8x32xf32>
    %314 = arith.mulf %312, %313 : vector<8x32xf32>
    %315 = vector.broadcast %294 : vector<1x32xf32> to vector<8x32xf32>
    %316 = arith.addf %314, %315 : vector<8x32xf32>
    %c0_113 = arith.constant 0 : index
    %c0_114 = arith.constant 0 : index
    %c0_115 = arith.constant 0 : index
    %317 = vector.load %arg24[%c0_113, %c0_114, %c0_115] : memref<1x8x32xf32, #tpu.memory_space<vmem>>, vector<1x8x32xf32>
    %318 = vector.shape_cast %317 : vector<1x8x32xf32> to vector<8x32xf32>
    %319 = vector.shape_cast %316 : vector<8x32xf32> to vector<1x8x32xf32>
    tpu.vector_store %arg24[%c0_113, %c0_114, %c0_115], %319 {strides = array<i32>} : memref<1x8x32xf32, #tpu.memory_space<vmem>>, vector<1x8x32xf32>,
    %c0_116 = arith.constant 0 : index
    %c0_117 = arith.constant 0 : index
    %c0_118 = arith.constant 0 : index
    %320 = vector.load %arg25[%c0_116, %c0_117, %c0_118] : memref<1x8x16xf32, #tpu.memory_space<vmem>>, vector<1x8x16xf32>
    %321 = vector.shape_cast %320 : vector<1x8x16xf32> to vector<8x16xf32>
    %322 = vector.shape_cast %246 : vector<8x16xf32> to vector<1x8x16xf32>
    tpu.vector_store %arg25[%c0_116, %c0_117, %c0_118], %322 {strides = array<i32>} : memref<1x8x16xf32, #tpu.memory_space<vmem>>, vector<1x8x16xf32>,
    return
  }
  func.func @transform_0(%arg0: i32) -> (i32, i32, i32) {
    %c0_i32 = arith.constant 0 : i32
    %c0_i32_0 = arith.constant 0 : i32
    %c0_i32_1 = arith.constant 0 : i32
    return %arg0, %c0_i32, %c0_i32_0 : i32, i32, i32
  }
  func.func @transform_1(%arg0: i32) -> (i32, i32, i32) {
    %c0_i32 = arith.constant 0 : i32
    %c0_i32_0 = arith.constant 0 : i32
    %c0_i32_1 = arith.constant 0 : i32
    return %arg0, %c0_i32, %c0_i32_0 : i32, i32, i32
  }
  func.func @transform_2(%arg0: i32) -> (i32, i32, i32) {
    %c0_i32 = arith.constant 0 : i32
    %c0_i32_0 = arith.constant 0 : i32
    %c0_i32_1 = arith.constant 0 : i32
    return %arg0, %c0_i32, %c0_i32_0 : i32, i32, i32
  }
  func.func @transform_3(%arg0: i32) -> (i32, i32) {
    %c0_i32 = arith.constant 0 : i32
    %c0_i32_0 = arith.constant 0 : i32
    %c0_i32_1 = arith.constant 0 : i32
    return %c0_i32, %c0_i32_0 : i32, i32
  }
  func.func @transform_4(%arg0: i32) -> (i32, i32) {
    %c0_i32 = arith.constant 0 : i32
    %c0_i32_0 = arith.constant 0 : i32
    %c0_i32_1 = arith.constant 0 : i32
    return %c0_i32, %c0_i32_0 : i32, i32
  }
  func.func @transform_5(%arg0: i32) -> (i32, i32) {
    %c0_i32 = arith.constant 0 : i32
    %c0_i32_0 = arith.constant 0 : i32
    %c0_i32_1 = arith.constant 0 : i32
    return %c0_i32, %c0_i32_0 : i32, i32
  }
  func.func @transform_6(%arg0: i32) -> (i32, i32) {
    %c0_i32 = arith.constant 0 : i32
    %c0_i32_0 = arith.constant 0 : i32
    %c0_i32_1 = arith.constant 0 : i32
    return %c0_i32, %c0_i32_0 : i32, i32
  }
  func.func @transform_7(%arg0: i32) -> (i32, i32) {
    %c0_i32 = arith.constant 0 : i32
    %c0_i32_0 = arith.constant 0 : i32
    %c0_i32_1 = arith.constant 0 : i32
    return %c0_i32, %c0_i32_0 : i32, i32
  }
  func.func @transform_8(%arg0: i32) -> (i32, i32) {
    %c0_i32 = arith.constant 0 : i32
    %c0_i32_0 = arith.constant 0 : i32
    %c0_i32_1 = arith.constant 0 : i32
    return %c0_i32, %c0_i32_0 : i32, i32
  }
  func.func @transform_9(%arg0: i32) -> (i32, i32) {
    %c0_i32 = arith.constant 0 : i32
    %c0_i32_0 = arith.constant 0 : i32
    %c0_i32_1 = arith.constant 0 : i32
    return %c0_i32, %c0_i32_0 : i32, i32
  }
  func.func @transform_10(%arg0: i32) -> (i32, i32) {
    %c0_i32 = arith.constant 0 : i32
    %c0_i32_0 = arith.constant 0 : i32
    %c0_i32_1 = arith.constant 0 : i32
    return %c0_i32, %c0_i32_0 : i32, i32
  }
  func.func @transform_11(%arg0: i32) -> (i32, i32) {
    %c0_i32 = arith.constant 0 : i32
    %c0_i32_0 = arith.constant 0 : i32
    %c0_i32_1 = arith.constant 0 : i32
    return %c0_i32, %c0_i32_0 : i32, i32
  }
  func.func @transform_12(%arg0: i32) -> (i32, i32) {
    %c0_i32 = arith.constant 0 : i32
    %c0_i32_0 = arith.constant 0 : i32
    %c0_i32_1 = arith.constant 0 : i32
    return %c0_i32, %c0_i32_0 : i32, i32
  }
  func.func @transform_13(%arg0: i32) -> (i32, i32) {
    %c0_i32 = arith.constant 0 : i32
    %c0_i32_0 = arith.constant 0 : i32
    %c0_i32_1 = arith.constant 0 : i32
    return %c0_i32, %c0_i32_0 : i32, i32
  }
  func.func @transform_14(%arg0: i32) -> (i32, i32) {
    %c0_i32 = arith.constant 0 : i32
    %c0_i32_0 = arith.constant 0 : i32
    %c0_i32_1 = arith.constant 0 : i32
    return %c0_i32, %c0_i32_0 : i32, i32
  }
  func.func @transform_15(%arg0: i32) -> (i32, i32) {
    %c0_i32 = arith.constant 0 : i32
    %c0_i32_0 = arith.constant 0 : i32
    %c0_i32_1 = arith.constant 0 : i32
    return %c0_i32, %c0_i32_0 : i32, i32
  }
  func.func @transform_16(%arg0: i32) -> (i32, i32) {
    %c0_i32 = arith.constant 0 : i32
    %c0_i32_0 = arith.constant 0 : i32
    %c0_i32_1 = arith.constant 0 : i32
    return %c0_i32, %c0_i32_0 : i32, i32
  }
  func.func @transform_17(%arg0: i32) -> (i32, i32) {
    %c0_i32 = arith.constant 0 : i32
    %c0_i32_0 = arith.constant 0 : i32
    %c0_i32_1 = arith.constant 0 : i32
    return %c0_i32, %c0_i32_0 : i32, i32
  }
  func.func @transform_18(%arg0: i32) -> (i32, i32) {
    %c0_i32 = arith.constant 0 : i32
    %c0_i32_0 = arith.constant 0 : i32
    %c0_i32_1 = arith.constant 0 : i32
    return %c0_i32, %c0_i32_0 : i32, i32
  }
  func.func @transform_19(%arg0: i32) -> (i32, i32) {
    %c0_i32 = arith.constant 0 : i32
    %c0_i32_0 = arith.constant 0 : i32
    %c0_i32_1 = arith.constant 0 : i32
    return %c0_i32, %c0_i32_0 : i32, i32
  }
  func.func @transform_20(%arg0: i32) -> (i32, i32) {
    %c0_i32 = arith.constant 0 : i32
    %c0_i32_0 = arith.constant 0 : i32
    %c0_i32_1 = arith.constant 0 : i32
    return %c0_i32, %c0_i32_0 : i32, i32
  }
  func.func @transform_21(%arg0: i32) -> (i32, i32) {
    %c0_i32 = arith.constant 0 : i32
    %c0_i32_0 = arith.constant 0 : i32
    %c0_i32_1 = arith.constant 0 : i32
    return %c0_i32, %c0_i32_0 : i32, i32
  }
  func.func @transform_22(%arg0: i32) -> (i32, i32) {
    %c0_i32 = arith.constant 0 : i32
    %c0_i32_0 = arith.constant 0 : i32
    %c0_i32_1 = arith.constant 0 : i32
    return %c0_i32, %c0_i32_0 : i32, i32
  }
  func.func @transform_23(%arg0: i32) -> (i32, i32, i32) {
    %c0_i32 = arith.constant 0 : i32
    %c0_i32_0 = arith.constant 0 : i32
    %c0_i32_1 = arith.constant 0 : i32
    return %arg0, %c0_i32, %c0_i32_0 : i32, i32, i32
  }
  func.func @transform_24(%arg0: i32) -> (i32, i32, i32) {
    %c0_i32 = arith.constant 0 : i32
    %c0_i32_0 = arith.constant 0 : i32
    %c0_i32_1 = arith.constant 0 : i32
    return %arg0, %c0_i32, %c0_i32_0 : i32, i32, i32
  }
}

module attributes {stable_mosaic.version = 11 : i64} {
  func.func @_decoder_layer_kernel(%arg0: i32, %arg1: memref<1x8x32xf32, #tpu.memory_space<vmem>>, %arg2: memref<1x16x32xf32, #tpu.memory_space<vmem>>, %arg3: memref<1x1x8xf32, #tpu.memory_space<vmem>>, %arg4: memref<32x96xbf16, #tpu.memory_space<vmem>>, %arg5: memref<1x96xf32, #tpu.memory_space<vmem>>, %arg6: memref<32x32xbf16, #tpu.memory_space<vmem>>, %arg7: memref<1x32xf32, #tpu.memory_space<vmem>>, %arg8: memref<1x32xf32, #tpu.memory_space<vmem>>, %arg9: memref<1x32xf32, #tpu.memory_space<vmem>>, %arg10: memref<32x32xbf16, #tpu.memory_space<vmem>>, %arg11: memref<1x32xf32, #tpu.memory_space<vmem>>, %arg12: memref<32x64xbf16, #tpu.memory_space<vmem>>, %arg13: memref<1x64xf32, #tpu.memory_space<vmem>>, %arg14: memref<32x32xbf16, #tpu.memory_space<vmem>>, %arg15: memref<1x32xf32, #tpu.memory_space<vmem>>, %arg16: memref<1x32xf32, #tpu.memory_space<vmem>>, %arg17: memref<1x32xf32, #tpu.memory_space<vmem>>, %arg18: memref<32x64xbf16, #tpu.memory_space<vmem>>, %arg19: memref<1x64xf32, #tpu.memory_space<vmem>>, %arg20: memref<64x32xbf16, #tpu.memory_space<vmem>>, %arg21: memref<1x32xf32, #tpu.memory_space<vmem>>, %arg22: memref<1x32xf32, #tpu.memory_space<vmem>>, %arg23: memref<1x32xf32, #tpu.memory_space<vmem>>, %arg24: memref<1x8x32xf32, #tpu.memory_space<vmem>>, %arg25: memref<1x8x16xf32, #tpu.memory_space<vmem>>) attributes {dimension_semantics = [#tpu.dimension_semantics<parallel>], iteration_bounds = array<i64: 2>, scalar_prefetch = 0 : i64, scratch_operands = 0 : i64, tpu.core_type = #tpu.core_type<tc>, window_params = [{transform_indices = @transform_0, window_bounds = array<i64: 1, 8, 32>}, {transform_indices = @transform_1, window_bounds = array<i64: 1, 16, 32>}, {transform_indices = @transform_2, window_bounds = array<i64: 1, 1, 8>}, {pipeline_mode = #tpu.pipeline_mode<synchronous>, transform_indices = @transform_3, window_bounds = array<i64: 32, 96>}, {pipeline_mode = #tpu.pipeline_mode<synchronous>, transform_indices = @transform_4, window_bounds = array<i64: 1, 96>}, {pipeline_mode = #tpu.pipeline_mode<synchronous>, transform_indices = @transform_5, window_bounds = array<i64: 32, 32>}, {pipeline_mode = #tpu.pipeline_mode<synchronous>, transform_indices = @transform_6, window_bounds = array<i64: 1, 32>}, {pipeline_mode = #tpu.pipeline_mode<synchronous>, transform_indices = @transform_7, window_bounds = array<i64: 1, 32>}, {pipeline_mode = #tpu.pipeline_mode<synchronous>, transform_indices = @transform_8, window_bounds = array<i64: 1, 32>}, {pipeline_mode = #tpu.pipeline_mode<synchronous>, transform_indices = @transform_9, window_bounds = array<i64: 32, 32>}, {pipeline_mode = #tpu.pipeline_mode<synchronous>, transform_indices = @transform_10, window_bounds = array<i64: 1, 32>}, {pipeline_mode = #tpu.pipeline_mode<synchronous>, transform_indices = @transform_11, window_bounds = array<i64: 32, 64>}, {pipeline_mode = #tpu.pipeline_mode<synchronous>, transform_indices = @transform_12, window_bounds = array<i64: 1, 64>}, {pipeline_mode = #tpu.pipeline_mode<synchronous>, transform_indices = @transform_13, window_bounds = array<i64: 32, 32>}, {pipeline_mode = #tpu.pipeline_mode<synchronous>, transform_indices = @transform_14, window_bounds = array<i64: 1, 32>}, {pipeline_mode = #tpu.pipeline_mode<synchronous>, transform_indices = @transform_15, window_bounds = array<i64: 1, 32>}, {pipeline_mode = #tpu.pipeline_mode<synchronous>, transform_indices = @transform_16, window_bounds = array<i64: 1, 32>}, {pipeline_mode = #tpu.pipeline_mode<synchronous>, transform_indices = @transform_17, window_bounds = array<i64: 32, 64>}, {pipeline_mode = #tpu.pipeline_mode<synchronous>, transform_indices = @transform_18, window_bounds = array<i64: 1, 64>}, {pipeline_mode = #tpu.pipeline_mode<synchronous>, transform_indices = @transform_19, window_bounds = array<i64: 64, 32>}, {pipeline_mode = #tpu.pipeline_mode<synchronous>, transform_indices = @transform_20, window_bounds = array<i64: 1, 32>}, {pipeline_mode = #tpu.pipeline_mode<synchronous>, transform_indices = @transform_21, window_bounds = array<i64: 1, 32>}, {pipeline_mode = #tpu.pipeline_mode<synchronous>, transform_indices = @transform_22, window_bounds = array<i64: 1, 32>}, {transform_indices = @transform_23, window_bounds = array<i64: 1, 8, 32>}, {transform_indices = @transform_24, window_bounds = array<i64: 1, 8, 16>}]} {
    %c0 = arith.constant 0 : index
    %c0_0 = arith.constant 0 : index
    %c0_1 = arith.constant 0 : index
    %0 = vector.load %arg1[%c0, %c0_0, %c0_1] : memref<1x8x32xf32, #tpu.memory_space<vmem>>, vector<1x8x32xf32>
    %1 = vector.shape_cast %0 : vector<1x8x32xf32> to vector<8x32xf32>
    %c0_2 = arith.constant 0 : index
    %c0_3 = arith.constant 0 : index
    %c0_4 = arith.constant 0 : index
    %2 = vector.load %arg2[%c0_2, %c0_3, %c0_4] : memref<1x16x32xf32, #tpu.memory_space<vmem>>, vector<1x16x32xf32>
    %3 = vector.shape_cast %2 : vector<1x16x32xf32> to vector<16x32xf32>
    %c0_5 = arith.constant 0 : index
    %c0_6 = arith.constant 0 : index
    %4 = vector.load %arg4[%c0_5, %c0_6] : memref<32x96xbf16, #tpu.memory_space<vmem>>, vector<32x96xbf16>
    %5 = arith.truncf %1 : vector<8x32xf32> to vector<8x32xbf16>
    %cst = arith.constant dense<0.000000e+00> : vector<8x96xf32>
    %6 = tpu.matmul %5, %4, %cst {dimension_numbers = #tpu.dot_dimension_numbers<[1], [0], [0], [1], [0, 0, 1, 1], [], []>} : vector<8x32xbf16>, vector<32x96xbf16>, vector<8x96xf32> -> vector<8x96xf32>
    %c0_7 = arith.constant 0 : index
    %c0_8 = arith.constant 0 : index
    %7 = vector.load %arg5[%c0_7, %c0_8] : memref<1x96xf32, #tpu.memory_space<vmem>>, vector<1x96xf32>
    %8 = vector.broadcast %7 : vector<1x96xf32> to vector<8x96xf32>
    %9 = arith.addf %6, %8 : vector<8x96xf32>
    %10 = vector.extract_strided_slice %9 {offsets = [0, 0], sizes = [8, 32], strides = [1, 1]} : vector<8x96xf32> to vector<8x32xf32>
    %11 = vector.extract_strided_slice %9 {offsets = [0, 32], sizes = [8, 32], strides = [1, 1]} : vector<8x96xf32> to vector<8x32xf32>
    %12 = vector.extract_strided_slice %9 {offsets = [0, 64], sizes = [8, 32], strides = [1, 1]} : vector<8x96xf32> to vector<8x32xf32>
    %13 = tpu.iota {dimensions = array<i32: 0>} : vector<8x8xi32>
    %14 = tpu.iota {dimensions = array<i32: 1>} : vector<8x8xi32>
    %15 = arith.cmpi sgt, %14, %13 : vector<8x8xi32>
    %cst_9 = arith.constant -1.000000e+30 : f32
    %cst_10 = arith.constant 0.000000e+00 : f32
    %16 = vector.broadcast %cst_9 : f32 to vector<8x8xf32>
    %17 = vector.broadcast %cst_10 : f32 to vector<8x8xf32>
    %18 = arith.select %15, %16, %17 : vector<8x8xi1>, vector<8x8xf32>
    %c0_11 = arith.constant 0 : index
    %c0_12 = arith.constant 0 : index
    %c0_13 = arith.constant 0 : index
    %19 = vector.load %arg3[%c0_11, %c0_12, %c0_13] : memref<1x1x8xf32, #tpu.memory_space<vmem>>, vector<1x1x8xf32>
    %20 = vector.shape_cast %19 : vector<1x1x8xf32> to vector<1x8xf32>
    %21 = vector.broadcast %20 : vector<1x8xf32> to vector<8x8xf32>
    %22 = arith.addf %18, %21 : vector<8x8xf32>
    %23 = vector.extract_strided_slice %10 {offsets = [0, 0], sizes = [8, 8], strides = [1, 1]} : vector<8x32xf32> to vector<8x8xf32>
    %24 = arith.truncf %23 : vector<8x8xf32> to vector<8x8xbf16>
    %25 = vector.extract_strided_slice %11 {offsets = [0, 0], sizes = [8, 8], strides = [1, 1]} : vector<8x32xf32> to vector<8x8xf32>
    %26 = arith.truncf %25 : vector<8x8xf32> to vector<8x8xbf16>
    %27 = vector.extract_strided_slice %12 {offsets = [0, 0], sizes = [8, 8], strides = [1, 1]} : vector<8x32xf32> to vector<8x8xf32>
    %28 = arith.truncf %27 : vector<8x8xf32> to vector<8x8xbf16>
    %cst_14 = arith.constant dense<0.000000e+00> : vector<8x8xf32>
    %29 = tpu.matmul %24, %26, %cst_14 {dimension_numbers = #tpu.dot_dimension_numbers<[1], [1], [0], [0], [0, 0, 1, 0], [], []>} : vector<8x8xbf16>, vector<8x8xbf16>, vector<8x8xf32> -> vector<8x8xf32>
    %cst_15 = arith.constant 0.353553385 : f32
    %30 = vector.broadcast %cst_15 : f32 to vector<8x8xf32>
    %31 = arith.mulf %29, %30 : vector<8x8xf32>
    %32 = arith.addf %31, %22 : vector<8x8xf32>
    %cst_16 = arith.constant dense<0xFF800000> : vector<8xf32>
    %33 = vector.multi_reduction <maximumf>, %32, %cst_16 [1] : vector<8x8xf32> to vector<8xf32>
    %34 = vector.shape_cast %33 : vector<8xf32> to vector<8x1xf32>
    %35 = vector.broadcast %34 : vector<8x1xf32> to vector<8x8xf32>
    %36 = arith.subf %32, %35 : vector<8x8xf32>
    %37 = math.exp %36 : vector<8x8xf32>
    %cst_17 = arith.constant dense<0.000000e+00> : vector<8xf32>
    %38 = vector.multi_reduction <add>, %37, %cst_17 [1] : vector<8x8xf32> to vector<8xf32>
    %39 = vector.shape_cast %38 : vector<8xf32> to vector<8x1xf32>
    %40 = tpu.reciprocal %39 {approx = true} : vector<8x1xf32> -> vector<8x1xf32>
    %41 = vector.broadcast %40 : vector<8x1xf32> to vector<8x8xf32>
    %42 = arith.mulf %37, %41 : vector<8x8xf32>
    %43 = arith.truncf %42 : vector<8x8xf32> to vector<8x8xbf16>
    %cst_18 = arith.constant dense<0.000000e+00> : vector<8x8xf32>
    %44 = tpu.matmul %43, %28, %cst_18 {dimension_numbers = #tpu.dot_dimension_numbers<[1], [0], [0], [1], [0, 0, 1, 1], [], []>} : vector<8x8xbf16>, vector<8x8xbf16>, vector<8x8xf32> -> vector<8x8xf32>
    %45 = vector.extract_strided_slice %10 {offsets = [0, 8], sizes = [8, 8], strides = [1, 1]} : vector<8x32xf32> to vector<8x8xf32>
    %46 = arith.truncf %45 : vector<8x8xf32> to vector<8x8xbf16>
    %47 = vector.extract_strided_slice %11 {offsets = [0, 8], sizes = [8, 8], strides = [1, 1]} : vector<8x32xf32> to vector<8x8xf32>
    %48 = arith.truncf %47 : vector<8x8xf32> to vector<8x8xbf16>
    %49 = vector.extract_strided_slice %12 {offsets = [0, 8], sizes = [8, 8], strides = [1, 1]} : vector<8x32xf32> to vector<8x8xf32>
    %50 = arith.truncf %49 : vector<8x8xf32> to vector<8x8xbf16>
    %cst_19 = arith.constant dense<0.000000e+00> : vector<8x8xf32>
    %51 = tpu.matmul %46, %48, %cst_19 {dimension_numbers = #tpu.dot_dimension_numbers<[1], [1], [0], [0], [0, 0, 1, 0], [], []>} : vector<8x8xbf16>, vector<8x8xbf16>, vector<8x8xf32> -> vector<8x8xf32>
    %cst_20 = arith.constant 0.353553385 : f32
    %52 = vector.broadcast %cst_20 : f32 to vector<8x8xf32>
    %53 = arith.mulf %51, %52 : vector<8x8xf32>
    %54 = arith.addf %53, %22 : vector<8x8xf32>
    %cst_21 = arith.constant dense<0xFF800000> : vector<8xf32>
    %55 = vector.multi_reduction <maximumf>, %54, %cst_21 [1] : vector<8x8xf32> to vector<8xf32>
    %56 = vector.shape_cast %55 : vector<8xf32> to vector<8x1xf32>
    %57 = vector.broadcast %56 : vector<8x1xf32> to vector<8x8xf32>
    %58 = arith.subf %54, %57 : vector<8x8xf32>
    %59 = math.exp %58 : vector<8x8xf32>
    %cst_22 = arith.constant dense<0.000000e+00> : vector<8xf32>
    %60 = vector.multi_reduction <add>, %59, %cst_22 [1] : vector<8x8xf32> to vector<8xf32>
    %61 = vector.shape_cast %60 : vector<8xf32> to vector<8x1xf32>
    %62 = tpu.reciprocal %61 {approx = true} : vector<8x1xf32> -> vector<8x1xf32>
    %63 = vector.broadcast %62 : vector<8x1xf32> to vector<8x8xf32>
    %64 = arith.mulf %59, %63 : vector<8x8xf32>
    %65 = arith.truncf %64 : vector<8x8xf32> to vector<8x8xbf16>
    %cst_23 = arith.constant dense<0.000000e+00> : vector<8x8xf32>
    %66 = tpu.matmul %65, %50, %cst_23 {dimension_numbers = #tpu.dot_dimension_numbers<[1], [0], [0], [1], [0, 0, 1, 1], [], []>} : vector<8x8xbf16>, vector<8x8xbf16>, vector<8x8xf32> -> vector<8x8xf32>
    %67 = vector.extract_strided_slice %10 {offsets = [0, 16], sizes = [8, 8], strides = [1, 1]} : vector<8x32xf32> to vector<8x8xf32>
    %68 = arith.truncf %67 : vector<8x8xf32> to vector<8x8xbf16>
    %69 = vector.extract_strided_slice %11 {offsets = [0, 16], sizes = [8, 8], strides = [1, 1]} : vector<8x32xf32> to vector<8x8xf32>
    %70 = arith.truncf %69 : vector<8x8xf32> to vector<8x8xbf16>
    %71 = vector.extract_strided_slice %12 {offsets = [0, 16], sizes = [8, 8], strides = [1, 1]} : vector<8x32xf32> to vector<8x8xf32>
    %72 = arith.truncf %71 : vector<8x8xf32> to vector<8x8xbf16>
    %cst_24 = arith.constant dense<0.000000e+00> : vector<8x8xf32>
    %73 = tpu.matmul %68, %70, %cst_24 {dimension_numbers = #tpu.dot_dimension_numbers<[1], [1], [0], [0], [0, 0, 1, 0], [], []>} : vector<8x8xbf16>, vector<8x8xbf16>, vector<8x8xf32> -> vector<8x8xf32>
    %cst_25 = arith.constant 0.353553385 : f32
    %74 = vector.broadcast %cst_25 : f32 to vector<8x8xf32>
    %75 = arith.mulf %73, %74 : vector<8x8xf32>
    %76 = arith.addf %75, %22 : vector<8x8xf32>
    %cst_26 = arith.constant dense<0xFF800000> : vector<8xf32>
    %77 = vector.multi_reduction <maximumf>, %76, %cst_26 [1] : vector<8x8xf32> to vector<8xf32>
    %78 = vector.shape_cast %77 : vector<8xf32> to vector<8x1xf32>
    %79 = vector.broadcast %78 : vector<8x1xf32> to vector<8x8xf32>
    %80 = arith.subf %76, %79 : vector<8x8xf32>
    %81 = math.exp %80 : vector<8x8xf32>
    %cst_27 = arith.constant dense<0.000000e+00> : vector<8xf32>
    %82 = vector.multi_reduction <add>, %81, %cst_27 [1] : vector<8x8xf32> to vector<8xf32>
    %83 = vector.shape_cast %82 : vector<8xf32> to vector<8x1xf32>
    %84 = tpu.reciprocal %83 {approx = true} : vector<8x1xf32> -> vector<8x1xf32>
    %85 = vector.broadcast %84 : vector<8x1xf32> to vector<8x8xf32>
    %86 = arith.mulf %81, %85 : vector<8x8xf32>
    %87 = arith.truncf %86 : vector<8x8xf32> to vector<8x8xbf16>
    %cst_28 = arith.constant dense<0.000000e+00> : vector<8x8xf32>
    %88 = tpu.matmul %87, %72, %cst_28 {dimension_numbers = #tpu.dot_dimension_numbers<[1], [0], [0], [1], [0, 0, 1, 1], [], []>} : vector<8x8xbf16>, vector<8x8xbf16>, vector<8x8xf32> -> vector<8x8xf32>
    %89 = vector.extract_strided_slice %10 {offsets = [0, 24], sizes = [8, 8], strides = [1, 1]} : vector<8x32xf32> to vector<8x8xf32>
    %90 = arith.truncf %89 : vector<8x8xf32> to vector<8x8xbf16>
    %91 = vector.extract_strided_slice %11 {offsets = [0, 24], sizes = [8, 8], strides = [1, 1]} : vector<8x32xf32> to vector<8x8xf32>
    %92 = arith.truncf %91 : vector<8x8xf32> to vector<8x8xbf16>
    %93 = vector.extract_strided_slice %12 {offsets = [0, 24], sizes = [8, 8], strides = [1, 1]} : vector<8x32xf32> to vector<8x8xf32>
    %94 = arith.truncf %93 : vector<8x8xf32> to vector<8x8xbf16>
    %cst_29 = arith.constant dense<0.000000e+00> : vector<8x8xf32>
    %95 = tpu.matmul %90, %92, %cst_29 {dimension_numbers = #tpu.dot_dimension_numbers<[1], [1], [0], [0], [0, 0, 1, 0], [], []>} : vector<8x8xbf16>, vector<8x8xbf16>, vector<8x8xf32> -> vector<8x8xf32>
    %cst_30 = arith.constant 0.353553385 : f32
    %96 = vector.broadcast %cst_30 : f32 to vector<8x8xf32>
    %97 = arith.mulf %95, %96 : vector<8x8xf32>
    %98 = arith.addf %97, %22 : vector<8x8xf32>
    %cst_31 = arith.constant dense<0xFF800000> : vector<8xf32>
    %99 = vector.multi_reduction <maximumf>, %98, %cst_31 [1] : vector<8x8xf32> to vector<8xf32>
    %100 = vector.shape_cast %99 : vector<8xf32> to vector<8x1xf32>
    %101 = vector.broadcast %100 : vector<8x1xf32> to vector<8x8xf32>
    %102 = arith.subf %98, %101 : vector<8x8xf32>
    %103 = math.exp %102 : vector<8x8xf32>
    %cst_32 = arith.constant dense<0.000000e+00> : vector<8xf32>
    %104 = vector.multi_reduction <add>, %103, %cst_32 [1] : vector<8x8xf32> to vector<8xf32>
    %105 = vector.shape_cast %104 : vector<8xf32> to vector<8x1xf32>
    %106 = tpu.reciprocal %105 {approx = true} : vector<8x1xf32> -> vector<8x1xf32>
    %107 = vector.broadcast %106 : vector<8x1xf32> to vector<8x8xf32>
    %108 = arith.mulf %103, %107 : vector<8x8xf32>
    %109 = arith.truncf %108 : vector<8x8xf32> to vector<8x8xbf16>
    %cst_33 = arith.constant dense<0.000000e+00> : vector<8x8xf32>
    %110 = tpu.matmul %109, %94, %cst_33 {dimension_numbers = #tpu.dot_dimension_numbers<[1], [0], [0], [1], [0, 0, 1, 1], [], []>} : vector<8x8xbf16>, vector<8x8xbf16>, vector<8x8xf32> -> vector<8x8xf32>
    %111 = tpu.concatenate %44, %66, %88, %110 in 1 : vector<8x8xf32>, vector<8x8xf32>, vector<8x8xf32>, vector<8x8xf32> -> vector<8x32xf32>
    %c0_34 = arith.constant 0 : index
    %c0_35 = arith.constant 0 : index
    %112 = vector.load %arg6[%c0_34, %c0_35] : memref<32x32xbf16, #tpu.memory_space<vmem>>, vector<32x32xbf16>
    %113 = arith.truncf %111 : vector<8x32xf32> to vector<8x32xbf16>
    %cst_36 = arith.constant dense<0.000000e+00> : vector<8x32xf32>
    %114 = tpu.matmul %113, %112, %cst_36 {dimension_numbers = #tpu.dot_dimension_numbers<[1], [0], [0], [1], [0, 0, 1, 1], [], []>} : vector<8x32xbf16>, vector<32x32xbf16>, vector<8x32xf32> -> vector<8x32xf32>
    %c0_37 = arith.constant 0 : index
    %c0_38 = arith.constant 0 : index
    %115 = vector.load %arg7[%c0_37, %c0_38] : memref<1x32xf32, #tpu.memory_space<vmem>>, vector<1x32xf32>
    %116 = vector.broadcast %115 : vector<1x32xf32> to vector<8x32xf32>
    %117 = arith.addf %114, %116 : vector<8x32xf32>
    %118 = arith.addf %117, %1 : vector<8x32xf32>
    %c0_39 = arith.constant 0 : index
    %c0_40 = arith.constant 0 : index
    %119 = vector.load %arg8[%c0_39, %c0_40] : memref<1x32xf32, #tpu.memory_space<vmem>>, vector<1x32xf32>
    %c0_41 = arith.constant 0 : index
    %c0_42 = arith.constant 0 : index
    %120 = vector.load %arg9[%c0_41, %c0_42] : memref<1x32xf32, #tpu.memory_space<vmem>>, vector<1x32xf32>
    %cst_43 = arith.constant dense<0.000000e+00> : vector<8xf32>
    %121 = vector.multi_reduction <add>, %118, %cst_43 [1] : vector<8x32xf32> to vector<8xf32>
    %122 = vector.shape_cast %121 : vector<8xf32> to vector<8x1xf32>
    %cst_44 = arith.constant 3.200000e+01 : f32
    %123 = vector.broadcast %cst_44 : f32 to vector<8x1xf32>
    %124 = arith.divf %122, %123 : vector<8x1xf32>
    %125 = vector.broadcast %124 : vector<8x1xf32> to vector<8x32xf32>
    %126 = arith.subf %118, %125 : vector<8x32xf32>
    %127 = arith.mulf %126, %126 : vector<8x32xf32>
    %cst_45 = arith.constant dense<0.000000e+00> : vector<8xf32>
    %128 = vector.multi_reduction <add>, %127, %cst_45 [1] : vector<8x32xf32> to vector<8xf32>
    %129 = vector.shape_cast %128 : vector<8xf32> to vector<8x1xf32>
    %cst_46 = arith.constant 3.200000e+01 : f32
    %130 = vector.broadcast %cst_46 : f32 to vector<8x1xf32>
    %131 = arith.divf %129, %130 : vector<8x1xf32>
    %132 = vector.broadcast %124 : vector<8x1xf32> to vector<8x32xf32>
    %133 = arith.subf %118, %132 : vector<8x32xf32>
    %cst_47 = arith.constant 9.99999974E-6 : f32
    %134 = vector.broadcast %cst_47 : f32 to vector<8x1xf32>
    %135 = arith.addf %131, %134 : vector<8x1xf32>
    %136 = math.rsqrt %135 : vector<8x1xf32>
    %137 = vector.broadcast %136 : vector<8x1xf32> to vector<8x32xf32>
    %138 = arith.mulf %133, %137 : vector<8x32xf32>
    %139 = vector.broadcast %119 : vector<1x32xf32> to vector<8x32xf32>
    %140 = arith.mulf %138, %139 : vector<8x32xf32>
    %141 = vector.broadcast %120 : vector<1x32xf32> to vector<8x32xf32>
    %142 = arith.addf %140, %141 : vector<8x32xf32>
    %c0_48 = arith.constant 0 : index
    %c0_49 = arith.constant 0 : index
    %143 = vector.load %arg10[%c0_48, %c0_49] : memref<32x32xbf16, #tpu.memory_space<vmem>>, vector<32x32xbf16>
    %144 = arith.truncf %142 : vector<8x32xf32> to vector<8x32xbf16>
    %cst_50 = arith.constant dense<0.000000e+00> : vector<8x32xf32>
    %145 = tpu.matmul %144, %143, %cst_50 {dimension_numbers = #tpu.dot_dimension_numbers<[1], [0], [0], [1], [0, 0, 1, 1], [], []>} : vector<8x32xbf16>, vector<32x32xbf16>, vector<8x32xf32> -> vector<8x32xf32>
    %c0_51 = arith.constant 0 : index
    %c0_52 = arith.constant 0 : index
    %146 = vector.load %arg11[%c0_51, %c0_52] : memref<1x32xf32, #tpu.memory_space<vmem>>, vector<1x32xf32>
    %147 = vector.broadcast %146 : vector<1x32xf32> to vector<8x32xf32>
    %148 = arith.addf %145, %147 : vector<8x32xf32>
    %c0_53 = arith.constant 0 : index
    %c0_54 = arith.constant 0 : index
    %149 = vector.load %arg12[%c0_53, %c0_54] : memref<32x64xbf16, #tpu.memory_space<vmem>>, vector<32x64xbf16>
    %150 = arith.truncf %3 : vector<16x32xf32> to vector<16x32xbf16>
    %cst_55 = arith.constant dense<0.000000e+00> : vector<16x64xf32>
    %151 = tpu.matmul %150, %149, %cst_55 {dimension_numbers = #tpu.dot_dimension_numbers<[1], [0], [0], [1], [0, 0, 1, 1], [], []>} : vector<16x32xbf16>, vector<32x64xbf16>, vector<16x64xf32> -> vector<16x64xf32>
    %c0_56 = arith.constant 0 : index
    %c0_57 = arith.constant 0 : index
    %152 = vector.load %arg13[%c0_56, %c0_57] : memref<1x64xf32, #tpu.memory_space<vmem>>, vector<1x64xf32>
    %153 = vector.broadcast %152 : vector<1x64xf32> to vector<16x64xf32>
    %154 = arith.addf %151, %153 : vector<16x64xf32>
    %155 = vector.extract_strided_slice %154 {offsets = [0, 0], sizes = [16, 32], strides = [1, 1]} : vector<16x64xf32> to vector<16x32xf32>
    %156 = vector.extract_strided_slice %154 {offsets = [0, 32], sizes = [16, 32], strides = [1, 1]} : vector<16x64xf32> to vector<16x32xf32>
    %157 = vector.extract_strided_slice %148 {offsets = [0, 0], sizes = [8, 8], strides = [1, 1]} : vector<8x32xf32> to vector<8x8xf32>
    %158 = arith.truncf %157 : vector<8x8xf32> to vector<8x8xbf16>
    %159 = vector.extract_strided_slice %155 {offsets = [0, 0], sizes = [16, 8], strides = [1, 1]} : vector<16x32xf32> to vector<16x8xf32>
    %160 = arith.truncf %159 : vector<16x8xf32> to vector<16x8xbf16>
    %161 = vector.extract_strided_slice %156 {offsets = [0, 0], sizes = [16, 8], strides = [1, 1]} : vector<16x32xf32> to vector<16x8xf32>
    %162 = arith.truncf %161 : vector<16x8xf32> to vector<16x8xbf16>
    %cst_58 = arith.constant dense<0.000000e+00> : vector<8x16xf32>
    %163 = tpu.matmul %158, %160, %cst_58 {dimension_numbers = #tpu.dot_dimension_numbers<[1], [1], [0], [0], [0, 0, 1, 0], [], []>} : vector<8x8xbf16>, vector<16x8xbf16>, vector<8x16xf32> -> vector<8x16xf32>
    %cst_59 = arith.constant 0.353553385 : f32
    %164 = vector.broadcast %cst_59 : f32 to vector<8x16xf32>
    %165 = arith.mulf %163, %164 : vector<8x16xf32>
    %cst_60 = arith.constant dense<0xFF800000> : vector<8xf32>
    %166 = vector.multi_reduction <maximumf>, %165, %cst_60 [1] : vector<8x16xf32> to vector<8xf32>
    %167 = vector.shape_cast %166 : vector<8xf32> to vector<8x1xf32>
    %168 = vector.broadcast %167 : vector<8x1xf32> to vector<8x16xf32>
    %169 = arith.subf %165, %168 : vector<8x16xf32>
    %170 = math.exp %169 : vector<8x16xf32>
    %cst_61 = arith.constant dense<0.000000e+00> : vector<8xf32>
    %171 = vector.multi_reduction <add>, %170, %cst_61 [1] : vector<8x16xf32> to vector<8xf32>
    %172 = vector.shape_cast %171 : vector<8xf32> to vector<8x1xf32>
    %173 = tpu.reciprocal %172 {approx = true} : vector<8x1xf32> -> vector<8x1xf32>
    %174 = vector.broadcast %173 : vector<8x1xf32> to vector<8x16xf32>
    %175 = arith.mulf %170, %174 : vector<8x16xf32>
    %176 = arith.truncf %175 : vector<8x16xf32> to vector<8x16xbf16>
    %cst_62 = arith.constant dense<0.000000e+00> : vector<8x8xf32>
    %177 = tpu.matmul %176, %162, %cst_62 {dimension_numbers = #tpu.dot_dimension_numbers<[1], [0], [0], [1], [0, 0, 1, 1], [], []>} : vector<8x16xbf16>, vector<16x8xbf16>, vector<8x8xf32> -> vector<8x8xf32>
    %178 = vector.extract_strided_slice %148 {offsets = [0, 8], sizes = [8, 8], strides = [1, 1]} : vector<8x32xf32> to vector<8x8xf32>
    %179 = arith.truncf %178 : vector<8x8xf32> to vector<8x8xbf16>
    %180 = vector.extract_strided_slice %155 {offsets = [0, 8], sizes = [16, 8], strides = [1, 1]} : vector<16x32xf32> to vector<16x8xf32>
    %181 = arith.truncf %180 : vector<16x8xf32> to vector<16x8xbf16>
    %182 = vector.extract_strided_slice %156 {offsets = [0, 8], sizes = [16, 8], strides = [1, 1]} : vector<16x32xf32> to vector<16x8xf32>
    %183 = arith.truncf %182 : vector<16x8xf32> to vector<16x8xbf16>
    %cst_63 = arith.constant dense<0.000000e+00> : vector<8x16xf32>
    %184 = tpu.matmul %179, %181, %cst_63 {dimension_numbers = #tpu.dot_dimension_numbers<[1], [1], [0], [0], [0, 0, 1, 0], [], []>} : vector<8x8xbf16>, vector<16x8xbf16>, vector<8x16xf32> -> vector<8x16xf32>
    %cst_64 = arith.constant 0.353553385 : f32
    %185 = vector.broadcast %cst_64 : f32 to vector<8x16xf32>
    %186 = arith.mulf %184, %185 : vector<8x16xf32>
    %cst_65 = arith.constant dense<0xFF800000> : vector<8xf32>
    %187 = vector.multi_reduction <maximumf>, %186, %cst_65 [1] : vector<8x16xf32> to vector<8xf32>
    %188 = vector.shape_cast %187 : vector<8xf32> to vector<8x1xf32>
    %189 = vector.broadcast %188 : vector<8x1xf32> to vector<8x16xf32>
    %190 = arith.subf %186, %189 : vector<8x16xf32>
    %191 = math.exp %190 : vector<8x16xf32>
    %cst_66 = arith.constant dense<0.000000e+00> : vector<8xf32>
    %192 = vector.multi_reduction <add>, %191, %cst_66 [1] : vector<8x16xf32> to vector<8xf32>
    %193 = vector.shape_cast %192 : vector<8xf32> to vector<8x1xf32>
    %194 = tpu.reciprocal %193 {approx = true} : vector<8x1xf32> -> vector<8x1xf32>
    %195 = vector.broadcast %194 : vector<8x1xf32> to vector<8x16xf32>
    %196 = arith.mulf %191, %195 : vector<8x16xf32>
    %197 = arith.truncf %196 : vector<8x16xf32> to vector<8x16xbf16>
    %cst_67 = arith.constant dense<0.000000e+00> : vector<8x8xf32>
    %198 = tpu.matmul %197, %183, %cst_67 {dimension_numbers = #tpu.dot_dimension_numbers<[1], [0], [0], [1], [0, 0, 1, 1], [], []>} : vector<8x16xbf16>, vector<16x8xbf16>, vector<8x8xf32> -> vector<8x8xf32>
    %199 = arith.addf %175, %196 : vector<8x16xf32>
    %200 = vector.extract_strided_slice %148 {offsets = [0, 16], sizes = [8, 8], strides = [1, 1]} : vector<8x32xf32> to vector<8x8xf32>
    %201 = arith.truncf %200 : vector<8x8xf32> to vector<8x8xbf16>
    %202 = vector.extract_strided_slice %155 {offsets = [0, 16], sizes = [16, 8], strides = [1, 1]} : vector<16x32xf32> to vector<16x8xf32>
    %203 = arith.truncf %202 : vector<16x8xf32> to vector<16x8xbf16>
    %204 = vector.extract_strided_slice %156 {offsets = [0, 16], sizes = [16, 8], strides = [1, 1]} : vector<16x32xf32> to vector<16x8xf32>
    %205 = arith.truncf %204 : vector<16x8xf32> to vector<16x8xbf16>
    %cst_68 = arith.constant dense<0.000000e+00> : vector<8x16xf32>
    %206 = tpu.matmul %201, %203, %cst_68 {dimension_numbers = #tpu.dot_dimension_numbers<[1], [1], [0], [0], [0, 0, 1, 0], [], []>} : vector<8x8xbf16>, vector<16x8xbf16>, vector<8x16xf32> -> vector<8x16xf32>
    %cst_69 = arith.constant 0.353553385 : f32
    %207 = vector.broadcast %cst_69 : f32 to vector<8x16xf32>
    %208 = arith.mulf %206, %207 : vector<8x16xf32>
    %cst_70 = arith.constant dense<0xFF800000> : vector<8xf32>
    %209 = vector.multi_reduction <maximumf>, %208, %cst_70 [1] : vector<8x16xf32> to vector<8xf32>
    %210 = vector.shape_cast %209 : vector<8xf32> to vector<8x1xf32>
    %211 = vector.broadcast %210 : vector<8x1xf32> to vector<8x16xf32>
    %212 = arith.subf %208, %211 : vector<8x16xf32>
    %213 = math.exp %212 : vector<8x16xf32>
    %cst_71 = arith.constant dense<0.000000e+00> : vector<8xf32>
    %214 = vector.multi_reduction <add>, %213, %cst_71 [1] : vector<8x16xf32> to vector<8xf32>
    %215 = vector.shape_cast %214 : vector<8xf32> to vector<8x1xf32>
    %216 = tpu.reciprocal %215 {approx = true} : vector<8x1xf32> -> vector<8x1xf32>
    %217 = vector.broadcast %216 : vector<8x1xf32> to vector<8x16xf32>
    %218 = arith.mulf %213, %217 : vector<8x16xf32>
    %219 = arith.truncf %218 : vector<8x16xf32> to vector<8x16xbf16>
    %cst_72 = arith.constant dense<0.000000e+00> : vector<8x8xf32>
    %220 = tpu.matmul %219, %205, %cst_72 {dimension_numbers = #tpu.dot_dimension_numbers<[1], [0], [0], [1], [0, 0, 1, 1], [], []>} : vector<8x16xbf16>, vector<16x8xbf16>, vector<8x8xf32> -> vector<8x8xf32>
    %221 = arith.addf %199, %218 : vector<8x16xf32>
    %222 = vector.extract_strided_slice %148 {offsets = [0, 24], sizes = [8, 8], strides = [1, 1]} : vector<8x32xf32> to vector<8x8xf32>
    %223 = arith.truncf %222 : vector<8x8xf32> to vector<8x8xbf16>
    %224 = vector.extract_strided_slice %155 {offsets = [0, 24], sizes = [16, 8], strides = [1, 1]} : vector<16x32xf32> to vector<16x8xf32>
    %225 = arith.truncf %224 : vector<16x8xf32> to vector<16x8xbf16>
    %226 = vector.extract_strided_slice %156 {offsets = [0, 24], sizes = [16, 8], strides = [1, 1]} : vector<16x32xf32> to vector<16x8xf32>
    %227 = arith.truncf %226 : vector<16x8xf32> to vector<16x8xbf16>
    %cst_73 = arith.constant dense<0.000000e+00> : vector<8x16xf32>
    %228 = tpu.matmul %223, %225, %cst_73 {dimension_numbers = #tpu.dot_dimension_numbers<[1], [1], [0], [0], [0, 0, 1, 0], [], []>} : vector<8x8xbf16>, vector<16x8xbf16>, vector<8x16xf32> -> vector<8x16xf32>
    %cst_74 = arith.constant 0.353553385 : f32
    %229 = vector.broadcast %cst_74 : f32 to vector<8x16xf32>
    %230 = arith.mulf %228, %229 : vector<8x16xf32>
    %cst_75 = arith.constant dense<0xFF800000> : vector<8xf32>
    %231 = vector.multi_reduction <maximumf>, %230, %cst_75 [1] : vector<8x16xf32> to vector<8xf32>
    %232 = vector.shape_cast %231 : vector<8xf32> to vector<8x1xf32>
    %233 = vector.broadcast %232 : vector<8x1xf32> to vector<8x16xf32>
    %234 = arith.subf %230, %233 : vector<8x16xf32>
    %235 = math.exp %234 : vector<8x16xf32>
    %cst_76 = arith.constant dense<0.000000e+00> : vector<8xf32>
    %236 = vector.multi_reduction <add>, %235, %cst_76 [1] : vector<8x16xf32> to vector<8xf32>
    %237 = vector.shape_cast %236 : vector<8xf32> to vector<8x1xf32>
    %238 = tpu.reciprocal %237 {approx = true} : vector<8x1xf32> -> vector<8x1xf32>
    %239 = vector.broadcast %238 : vector<8x1xf32> to vector<8x16xf32>
    %240 = arith.mulf %235, %239 : vector<8x16xf32>
    %241 = arith.truncf %240 : vector<8x16xf32> to vector<8x16xbf16>
    %cst_77 = arith.constant dense<0.000000e+00> : vector<8x8xf32>
    %242 = tpu.matmul %241, %227, %cst_77 {dimension_numbers = #tpu.dot_dimension_numbers<[1], [0], [0], [1], [0, 0, 1, 1], [], []>} : vector<8x16xbf16>, vector<16x8xbf16>, vector<8x8xf32> -> vector<8x8xf32>
    %243 = arith.addf %221, %240 : vector<8x16xf32>
    %244 = tpu.concatenate %177, %198, %220, %242 in 1 : vector<8x8xf32>, vector<8x8xf32>, vector<8x8xf32>, vector<8x8xf32> -> vector<8x32xf32>
    %cst_78 = arith.constant 2.500000e-01 : f32
    %245 = vector.broadcast %cst_78 : f32 to vector<8x16xf32>
    %246 = arith.mulf %243, %245 : vector<8x16xf32>
    %c0_79 = arith.constant 0 : index
    %c0_80 = arith.constant 0 : index
    %247 = vector.load %arg14[%c0_79, %c0_80] : memref<32x32xbf16, #tpu.memory_space<vmem>>, vector<32x32xbf16>
    %248 = arith.truncf %244 : vector<8x32xf32> to vector<8x32xbf16>
    %cst_81 = arith.constant dense<0.000000e+00> : vector<8x32xf32>
    %249 = tpu.matmul %248, %247, %cst_81 {dimension_numbers = #tpu.dot_dimension_numbers<[1], [0], [0], [1], [0, 0, 1, 1], [], []>} : vector<8x32xbf16>, vector<32x32xbf16>, vector<8x32xf32> -> vector<8x32xf32>
    %c0_82 = arith.constant 0 : index
    %c0_83 = arith.constant 0 : index
    %250 = vector.load %arg15[%c0_82, %c0_83] : memref<1x32xf32, #tpu.memory_space<vmem>>, vector<1x32xf32>
    %251 = vector.broadcast %250 : vector<1x32xf32> to vector<8x32xf32>
    %252 = arith.addf %249, %251 : vector<8x32xf32>
    %253 = arith.addf %252, %142 : vector<8x32xf32>
    %c0_84 = arith.constant 0 : index
    %c0_85 = arith.constant 0 : index
    %254 = vector.load %arg16[%c0_84, %c0_85] : memref<1x32xf32, #tpu.memory_space<vmem>>, vector<1x32xf32>
    %c0_86 = arith.constant 0 : index
    %c0_87 = arith.constant 0 : index
    %255 = vector.load %arg17[%c0_86, %c0_87] : memref<1x32xf32, #tpu.memory_space<vmem>>, vector<1x32xf32>
    %cst_88 = arith.constant dense<0.000000e+00> : vector<8xf32>
    %256 = vector.multi_reduction <add>, %253, %cst_88 [1] : vector<8x32xf32> to vector<8xf32>
    %257 = vector.shape_cast %256 : vector<8xf32> to vector<8x1xf32>
    %cst_89 = arith.constant 3.200000e+01 : f32
    %258 = vector.broadcast %cst_89 : f32 to vector<8x1xf32>
    %259 = arith.divf %257, %258 : vector<8x1xf32>
    %260 = vector.broadcast %259 : vector<8x1xf32> to vector<8x32xf32>
    %261 = arith.subf %253, %260 : vector<8x32xf32>
    %262 = arith.mulf %261, %261 : vector<8x32xf32>
    %cst_90 = arith.constant dense<0.000000e+00> : vector<8xf32>
    %263 = vector.multi_reduction <add>, %262, %cst_90 [1] : vector<8x32xf32> to vector<8xf32>
    %264 = vector.shape_cast %263 : vector<8xf32> to vector<8x1xf32>
    %cst_91 = arith.constant 3.200000e+01 : f32
    %265 = vector.broadcast %cst_91 : f32 to vector<8x1xf32>
    %266 = arith.divf %264, %265 : vector<8x1xf32>
    %267 = vector.broadcast %259 : vector<8x1xf32> to vector<8x32xf32>
    %268 = arith.subf %253, %267 : vector<8x32xf32>
    %cst_92 = arith.constant 9.99999974E-6 : f32
    %269 = vector.broadcast %cst_92 : f32 to vector<8x1xf32>
    %270 = arith.addf %266, %269 : vector<8x1xf32>
    %271 = math.rsqrt %270 : vector<8x1xf32>
    %272 = vector.broadcast %271 : vector<8x1xf32> to vector<8x32xf32>
    %273 = arith.mulf %268, %272 : vector<8x32xf32>
    %274 = vector.broadcast %254 : vector<1x32xf32> to vector<8x32xf32>
    %275 = arith.mulf %273, %274 : vector<8x32xf32>
    %276 = vector.broadcast %255 : vector<1x32xf32> to vector<8x32xf32>
    %277 = arith.addf %275, %276 : vector<8x32xf32>
    %c0_93 = arith.constant 0 : index
    %c0_94 = arith.constant 0 : index
    %278 = vector.load %arg18[%c0_93, %c0_94] : memref<32x64xbf16, #tpu.memory_space<vmem>>, vector<32x64xbf16>
    %279 = arith.truncf %277 : vector<8x32xf32> to vector<8x32xbf16>
    %cst_95 = arith.constant dense<0.000000e+00> : vector<8x64xf32>
    %280 = tpu.matmul %279, %278, %cst_95 {dimension_numbers = #tpu.dot_dimension_numbers<[1], [0], [0], [1], [0, 0, 1, 1], [], []>} : vector<8x32xbf16>, vector<32x64xbf16>, vector<8x64xf32> -> vector<8x64xf32>
    %c0_96 = arith.constant 0 : index
    %c0_97 = arith.constant 0 : index
    %281 = vector.load %arg19[%c0_96, %c0_97] : memref<1x64xf32, #tpu.memory_space<vmem>>, vector<1x64xf32>
    %282 = vector.broadcast %281 : vector<1x64xf32> to vector<8x64xf32>
    %283 = arith.addf %280, %282 : vector<8x64xf32>
    %cst_98 = arith.constant 0.000000e+00 : f32
    %284 = vector.broadcast %cst_98 : f32 to vector<8x64xf32>
    %285 = arith.maximumf %283, %284 : vector<8x64xf32>
    %c0_99 = arith.constant 0 : index
    %c0_100 = arith.constant 0 : index
    %286 = vector.load %arg20[%c0_99, %c0_100] : memref<64x32xbf16, #tpu.memory_space<vmem>>, vector<64x32xbf16>
    %287 = arith.truncf %285 : vector<8x64xf32> to vector<8x64xbf16>
    %cst_101 = arith.constant dense<0.000000e+00> : vector<8x32xf32>
    %288 = tpu.matmul %287, %286, %cst_101 {dimension_numbers = #tpu.dot_dimension_numbers<[1], [0], [0], [1], [0, 0, 1, 1], [], []>} : vector<8x64xbf16>, vector<64x32xbf16>, vector<8x32xf32> -> vector<8x32xf32>
    %c0_102 = arith.constant 0 : index
    %c0_103 = arith.constant 0 : index
    %289 = vector.load %arg21[%c0_102, %c0_103] : memref<1x32xf32, #tpu.memory_space<vmem>>, vector<1x32xf32>
    %290 = vector.broadcast %289 : vector<1x32xf32> to vector<8x32xf32>
    %291 = arith.addf %288, %290 : vector<8x32xf32>
    %292 = arith.addf %291, %277 : vector<8x32xf32>
    %c0_104 = arith.constant 0 : index
    %c0_105 = arith.constant 0 : index
    %293 = vector.load %arg22[%c0_104, %c0_105] : memref<1x32xf32, #tpu.memory_space<vmem>>, vector<1x32xf32>
    %c0_106 = arith.constant 0 : index
    %c0_107 = arith.constant 0 : index
    %294 = vector.load %arg23[%c0_106, %c0_107] : memref<1x32xf32, #tpu.memory_space<vmem>>, vector<1x32xf32>
    %cst_108 = arith.constant dense<0.000000e+00> : vector<8xf32>
    %295 = vector.multi_reduction <add>, %292, %cst_108 [1] : vector<8x32xf32> to vector<8xf32>
    %296 = vector.shape_cast %295 : vector<8xf32> to vector<8x1xf32>
    %cst_109 = arith.constant 3.200000e+01 : f32
    %297 = vector.broadcast %cst_109 : f32 to vector<8x1xf32>
    %298 = arith.divf %296, %297 : vector<8x1xf32>
    %299 = vector.broadcast %298 : vector<8x1xf32> to vector<8x32xf32>
    %300 = arith.subf %292, %299 : vector<8x32xf32>
    %301 = arith.mulf %300, %300 : vector<8x32xf32>
    %cst_110 = arith.constant dense<0.000000e+00> : vector<8xf32>
    %302 = vector.multi_reduction <add>, %301, %cst_110 [1] : vector<8x32xf32> to vector<8xf32>
    %303 = vector.shape_cast %302 : vector<8xf32> to vector<8x1xf32>
    %cst_111 = arith.constant 3.200000e+01 : f32
    %304 = vector.broadcast %cst_111 : f32 to vector<8x1xf32>
    %305 = arith.divf %303, %304 : vector<8x1xf32>
    %306 = vector.broadcast %298 : vector<8x1xf32> to vector<8x32xf32>
    %307 = arith.subf %292, %306 : vector<8x32xf32>
    %cst_112 = arith.constant 9.99999974E-6 : f32
    %308 = vector.broadcast %cst_112 : f32 to vector<8x1xf32>
    %309 = arith.addf %305, %308 : vector<8x1xf32>
    %310 = math.rsqrt %309 : vector<8x1xf32>
    %311 = vector.broadcast %310 : vector<8x1xf32> to vector<8x32xf32>
    %312 = arith.mulf %307, %311 : vector<8x32xf32>
    %313 = vector.broadcast %293 : vector<1x32xf32> to vector<8x32xf32>
    %314 = arith.mulf %312, %313 : vector<8x32xf32>
    %315 = vector.broadcast %294 : vector<1x32xf32> to vector<8x32xf32>
    %316 = arith.addf %314, %315 : vector<8x32xf32>
    %c0_113 = arith.constant 0 : index
    %c0_114 = arith.constant 0 : index
    %c0_115 = arith.constant 0 : index
    %317 = vector.load %arg24[%c0_113, %c0_114, %c0_115] : memref<1x8x32xf32, #tpu.memory_space<vmem>>, vector<1x8x32xf32>
    %318 = vector.shape_cast %317 : vector<1x8x32xf32> to vector<8x32xf32>
    %319 = vector.shape_cast %316 : vector<8x32xf32> to vector<1x8x32xf32>
    tpu.vector_store %arg24[%c0_113, %c0_114, %c0_115], %319 {strides = array<i32>} : memref<1x8x32xf32, #tpu.memory_space<vmem>>, vector<1x8x32xf32>,
    %c0_116 = arith.constant 0 : index
    %c0_117 = arith.constant 0 : index
    %c0_118 = arith.constant 0 : index
    %320 = vector.load %arg25[%c0_116, %c0_117, %c0_118] : memref<1x8x16xf32, #tpu.memory_space<vmem>>, vector<1x8x16xf32>
    %321 = vector.shape_cast %320 : vector<1x8x16xf32> to vector<8x16xf32>
    %322 = vector.shape_cast %246 : vector<8x16xf32> to vector<1x8x16xf32>
    tpu.vector_store %arg25[%c0_116, %c0_117, %c0_118], %322 {strides = array<i32>} : memref<1x8x16xf32, #tpu.memory_space<vmem>>, vector<1x8x16xf32>,
    return
  }
  func.func @transform_0(%arg0: i32) -> (i32, i32, i32) {
    %c0_i32 = arith.constant 0 : i32
    %c0_i32_0 = arith.constant 0 : i32
    %c0_i32_1 = arith.constant 0 : i32
    return %arg0, %c0_i32, %c0_i32_0 : i32, i32, i32
  }
  func.func @transform_1(%arg0: i32) -> (i32, i32, i32) {
    %c0_i32 = arith.constant 0 : i32
    %c0_i32_0 = arith.constant 0 : i32
    %c0_i32_1 = arith.constant 0 : i32
    return %arg0, %c0_i32, %c0_i32_0 : i32, i32, i32
  }
  func.func @transform_2(%arg0: i32) -> (i32, i32, i32) {
    %c0_i32 = arith.constant 0 : i32
    %c0_i32_0 = arith.constant 0 : i32
    %c0_i32_1 = arith.constant 0 : i32
    return %arg0, %c0_i32, %c0_i32_0 : i32, i32, i32
  }
  func.func @transform_3(%arg0: i32) -> (i32, i32) {
    %c0_i32 = arith.constant 0 : i32
    %c0_i32_0 = arith.constant 0 : i32
    %c0_i32_1 = arith.constant 0 : i32
    return %c0_i32, %c0_i32_0 : i32, i32
  }
  func.func @transform_4(%arg0: i32) -> (i32, i32) {
    %c0_i32 = arith.constant 0 : i32
    %c0_i32_0 = arith.constant 0 : i32
    %c0_i32_1 = arith.constant 0 : i32
    return %c0_i32, %c0_i32_0 : i32, i32
  }
  func.func @transform_5(%arg0: i32) -> (i32, i32) {
    %c0_i32 = arith.constant 0 : i32
    %c0_i32_0 = arith.constant 0 : i32
    %c0_i32_1 = arith.constant 0 : i32
    return %c0_i32, %c0_i32_0 : i32, i32
  }
  func.func @transform_6(%arg0: i32) -> (i32, i32) {
    %c0_i32 = arith.constant 0 : i32
    %c0_i32_0 = arith.constant 0 : i32
    %c0_i32_1 = arith.constant 0 : i32
    return %c0_i32, %c0_i32_0 : i32, i32
  }
  func.func @transform_7(%arg0: i32) -> (i32, i32) {
    %c0_i32 = arith.constant 0 : i32
    %c0_i32_0 = arith.constant 0 : i32
    %c0_i32_1 = arith.constant 0 : i32
    return %c0_i32, %c0_i32_0 : i32, i32
  }
  func.func @transform_8(%arg0: i32) -> (i32, i32) {
    %c0_i32 = arith.constant 0 : i32
    %c0_i32_0 = arith.constant 0 : i32
    %c0_i32_1 = arith.constant 0 : i32
    return %c0_i32, %c0_i32_0 : i32, i32
  }
  func.func @transform_9(%arg0: i32) -> (i32, i32) {
    %c0_i32 = arith.constant 0 : i32
    %c0_i32_0 = arith.constant 0 : i32
    %c0_i32_1 = arith.constant 0 : i32
    return %c0_i32, %c0_i32_0 : i32, i32
  }
  func.func @transform_10(%arg0: i32) -> (i32, i32) {
    %c0_i32 = arith.constant 0 : i32
    %c0_i32_0 = arith.constant 0 : i32
    %c0_i32_1 = arith.constant 0 : i32
    return %c0_i32, %c0_i32_0 : i32, i32
  }
  func.func @transform_11(%arg0: i32) -> (i32, i32) {
    %c0_i32 = arith.constant 0 : i32
    %c0_i32_0 = arith.constant 0 : i32
    %c0_i32_1 = arith.constant 0 : i32
    return %c0_i32, %c0_i32_0 : i32, i32
  }
  func.func @transform_12(%arg0: i32) -> (i32, i32) {
    %c0_i32 = arith.constant 0 : i32
    %c0_i32_0 = arith.constant 0 : i32
    %c0_i32_1 = arith.constant 0 : i32
    return %c0_i32, %c0_i32_0 : i32, i32
  }
  func.func @transform_13(%arg0: i32) -> (i32, i32) {
    %c0_i32 = arith.constant 0 : i32
    %c0_i32_0 = arith.constant 0 : i32
    %c0_i32_1 = arith.constant 0 : i32
    return %c0_i32, %c0_i32_0 : i32, i32
  }
  func.func @transform_14(%arg0: i32) -> (i32, i32) {
    %c0_i32 = arith.constant 0 : i32
    %c0_i32_0 = arith.constant 0 : i32
    %c0_i32_1 = arith.constant 0 : i32
    return %c0_i32, %c0_i32_0 : i32, i32
  }
  func.func @transform_15(%arg0: i32) -> (i32, i32) {
    %c0_i32 = arith.constant 0 : i32
    %c0_i32_0 = arith.constant 0 : i32
    %c0_i32_1 = arith.constant 0 : i32
    return %c0_i32, %c0_i32_0 : i32, i32
  }
  func.func @transform_16(%arg0: i32) -> (i32, i32) {
    %c0_i32 = arith.constant 0 : i32
    %c0_i32_0 = arith.constant 0 : i32
    %c0_i32_1 = arith.constant 0 : i32
    return %c0_i32, %c0_i32_0 : i32, i32
  }
  func.func @transform_17(%arg0: i32) -> (i32, i32) {
    %c0_i32 = arith.constant 0 : i32
    %c0_i32_0 = arith.constant 0 : i32
    %c0_i32_1 = arith.constant 0 : i32
    return %c0_i32, %c0_i32_0 : i32, i32
  }
  func.func @transform_18(%arg0: i32) -> (i32, i32) {
    %c0_i32 = arith.constant 0 : i32
    %c0_i32_0 = arith.constant 0 : i32
    %c0_i32_1 = arith.constant 0 : i32
    return %c0_i32, %c0_i32_0 : i32, i32
  }
  func.func @transform_19(%arg0: i32) -> (i32, i32) {
    %c0_i32 = arith.constant 0 : i32
    %c0_i32_0 = arith.constant 0 : i32
    %c0_i32_1 = arith.constant 0 : i32
    return %c0_i32, %c0_i32_0 : i32, i32
  }
  func.func @transform_20(%arg0: i32) -> (i32, i32) {
    %c0_i32 = arith.constant 0 : i32
    %c0_i32_0 = arith.constant 0 : i32
    %c0_i32_1 = arith.constant 0 : i32
    return %c0_i32, %c0_i32_0 : i32, i32
  }
  func.func @transform_21(%arg0: i32) -> (i32, i32) {
    %c0_i32 = arith.constant 0 : i32
    %c0_i32_0 = arith.constant 0 : i32
    %c0_i32_1 = arith.constant 0 : i32
    return %c0_i32, %c0_i32_0 : i32, i32
  }
  func.func @transform_22(%arg0: i32) -> (i32, i32) {
    %c0_i32 = arith.constant 0 : i32
    %c0_i32_0 = arith.constant 0 : i32
    %c0_i32_1 = arith.constant 0 : i32
    return %c0_i32, %c0_i32_0 : i32, i32
  }
  func.func @transform_23(%arg0: i32) -> (i32, i32, i32) {
    %c0_i32 = arith.constant 0 : i32
    %c0_i32_0 = arith.constant 0 : i32
    %c0_i32_1 = arith.constant 0 : i32
    return %arg0, %c0_i32, %c0_i32_0 : i32, i32, i32
  }
  func.func @transform_24(%arg0: i32) -> (i32, i32, i32) {
    %c0_i32 = arith.constant 0 : i32
    %c0_i32_0 = arith.constant 0 : i32
    %c0_i32_1 = arith.constant 0 : i32
    return %arg0, %c0_i32, %c0_i32_0 : i32, i32, i32
  }
}

module attributes {stable_mosaic.version = 11 : i64} {
  func.func @_predictor_kernel(%arg0: i32, %arg1: memref<8x32xf32, #tpu.memory_space<vmem>>, %arg2: memref<32x64xbf16, #tpu.memory_space<vmem>>, %arg3: memref<8x64xf32, #tpu.memory_space<vmem>>) attributes {dimension_semantics = [#tpu.dimension_semantics<parallel>], iteration_bounds = array<i64: 2>, scalar_prefetch = 0 : i64, scratch_operands = 0 : i64, tpu.core_type = #tpu.core_type<tc>, window_params = [{transform_indices = @transform_0, window_bounds = array<i64: 8, 32>}, {pipeline_mode = #tpu.pipeline_mode<synchronous>, transform_indices = @transform_1, window_bounds = array<i64: 32, 64>}, {transform_indices = @transform_2, window_bounds = array<i64: 8, 64>}]} {
    %c0 = arith.constant 0 : index
    %c0_0 = arith.constant 0 : index
    %0 = vector.load %arg1[%c0, %c0_0] : memref<8x32xf32, #tpu.memory_space<vmem>>, vector<8x32xf32>
    %1 = arith.truncf %0 : vector<8x32xf32> to vector<8x32xbf16>
    %c0_1 = arith.constant 0 : index
    %c0_2 = arith.constant 0 : index
    %2 = vector.load %arg2[%c0_1, %c0_2] : memref<32x64xbf16, #tpu.memory_space<vmem>>, vector<32x64xbf16>
    %cst = arith.constant dense<0.000000e+00> : vector<8x64xf32>
    %3 = tpu.matmul %1, %2, %cst {dimension_numbers = #tpu.dot_dimension_numbers<[1], [0], [0], [1], [0, 0, 1, 1], [], []>} : vector<8x32xbf16>, vector<32x64xbf16>, vector<8x64xf32> -> vector<8x64xf32>
    %c0_3 = arith.constant 0 : index
    %c0_4 = arith.constant 0 : index
    %4 = vector.load %arg3[%c0_3, %c0_4] : memref<8x64xf32, #tpu.memory_space<vmem>>, vector<8x64xf32>
    tpu.vector_store %arg3[%c0_3, %c0_4], %3 {strides = array<i32>} : memref<8x64xf32, #tpu.memory_space<vmem>>, vector<8x64xf32>,
    return
  }
  func.func @transform_0(%arg0: i32) -> (i32, i32) {
    %c0_i32 = arith.constant 0 : i32
    %c0_i32_0 = arith.constant 0 : i32
    return %arg0, %c0_i32 : i32, i32
  }
  func.func @transform_1(%arg0: i32) -> (i32, i32) {
    %c0_i32 = arith.constant 0 : i32
    %c0_i32_0 = arith.constant 0 : i32
    %c0_i32_1 = arith.constant 0 : i32
    return %c0_i32, %c0_i32_0 : i32, i32
  }
  func.func @transform_2(%arg0: i32) -> (i32, i32) {
    %c0_i32 = arith.constant 0 : i32
    %c0_i32_0 = arith.constant 0 : i32
    return %arg0, %c0_i32 : i32, i32
  }
}

</mosaic_0001>

<llo_original>
// kernel: transformer_forward.6
$region0: #{transformer_forward.6}
  #allocation0 [shape = 'u32[]', space=smem, size = 0x4, offset = 0x4, fixed_abs, tag = 'smem constant byte address 0x4 - core index']
  #allocation1 [shape = 'u32[72,128]{1,0:T(1,128)}', space=vmem, size = 0x9000, scoped, tag = 'internal scratch']
  %s0 = inlined_call_operand.vmem [shape: f32[2,16,32], index: 0, kind: input, shape index: {}]
  %s1 = inlined_call_operand.hbm [shape: bf16[32,96], index: 1, kind: input, shape index: {}]
  %s2 = inlined_call_operand.vmem [shape: f32[1,96], index: 2, kind: input, shape index: {}]
  %s3 = inlined_call_operand.hbm [shape: bf16[32,32], index: 3, kind: input, shape index: {}]
  %s4 = inlined_call_operand.vmem [shape: f32[1,32], index: 4, kind: input, shape index: {}]
  %s5 = inlined_call_operand.vmem [shape: f32[1,32], index: 5, kind: input, shape index: {}]
  %s6 = inlined_call_operand.vmem [shape: f32[1,32], index: 6, kind: input, shape index: {}]
  %s7 = inlined_call_operand.hbm [shape: bf16[32,64], index: 7, kind: input, shape index: {}]
  %s8 = inlined_call_operand.vmem [shape: f32[1,64], index: 8, kind: input, shape index: {}]
  %s9 = inlined_call_operand.vmem [shape: bf16[64,32], index: 9, kind: input, shape index: {}]
  %s10 = inlined_call_operand.vmem [shape: f32[1,32], index: 10, kind: input, shape index: {}]
  %s11 = inlined_call_operand.vmem [shape: f32[1,32], index: 11, kind: input, shape index: {}]
  %s12 = inlined_call_operand.vmem [shape: f32[1,32], index: 12, kind: input, shape index: {}]
  %s13 = inlined_call_operand.vmem [shape: f32[2,16,32], index: 13, kind: output, shape index: {}]
  %s14 = sld [smem:[#allocation0]]
  $region97: #{transformer_forward.6} parent=0
    _
  %s16 = ssub.s32 1, %s14
  %s17 = scalar_select 0, %s16, %s14
  $region1: #{transformer_forward.6} parent=0
    #allocation2 [shape = 'u8[8192]{0}', space=vmem, size = 0x2000, scoped, tag = 'input window, operand 1, single buffered']
    #allocation3 [shape = 's32[2]{0}', space=sflag, size = 0x8, scoped, tag = 'scoped memory for transformer_forward.6']
    #allocation4 [shape = 'u8[8192]{0}', space=vmem, size = 0x2000, scoped, tag = 'input window, operand 3, single buffered']
    #allocation5 [shape = 's32[1]{0}', space=sflag, size = 0x4, scoped, tag = 'scoped memory for transformer_forward.6']
    #allocation6 [shape = 'u8[8192]{0}', space=vmem, size = 0x2000, scoped, tag = 'input window, operand 7, single buffered']
    %18 = vsyncpa [#allocation3], 0
    %19 = vsyncpa [#allocation5], 0
    loop: start=0, step=1, limit=4
    $region2: #{transformer_forward.6} parent=1 // loop_pre_header
      _
    $region3: #{transformer_forward.6} parent=1 // loop_header
      %s21 = sphi 0, %s25
      %p22 = scmp.ge.s32.totalorder %s21, 4
      %s31 = sphi 0, %s33
      %s34 = sphi 0, %s31
      %s35 = sphi 0, %s34
      %s51 = sphi 0, %s35
      %s55 = sphi 0, %s55
      %s57 = sphi 0, %s55
      %s58 = sphi 0, %s57
      %s72 = sphi 0, %s58
      %s76 = sphi 0, %s76
      %s78 = sphi 0, %s76
      %s79 = sphi 0, %s78
      %s93 = sphi 0, %s79
      %s97 = sphi 0, %s97
      %s99 = sphi 0, %s97
      %s100 = sphi 0, %s99
      %s114 = sphi 0, %s100
      %s118 = sphi 0, %s118
      %s120 = sphi 0, %s118
      %s121 = sphi 0, %s120
      %s135 = sphi 0, %s121
      %s139 = sphi 0, %s139
      %s141 = sphi 0, %s139
      %s142 = sphi 0, %s141
      %s156 = sphi 0, %s142
      %s160 = sphi 0, %s160
      %s162 = sphi 0, %s160
      %s163 = sphi 0, %s162
      %s177 = sphi 0, %s163
      %s181 = sphi 0, %s181
      %s183 = sphi 0, %s181
      %s184 = sphi 0, %s183
      %s198 = sphi 0, %s184
      %s202 = sphi 0, %s202
      %s204 = sphi 0, %s202
      %s205 = sphi 0, %s204
      %s219 = sphi 0, %s205
      %s223 = sphi 0, %s223
      %s225 = sphi 0, %s223
      %s226 = sphi 0, %s225
      %s240 = sphi 0, %s226
      %s244 = sphi 0, %s244
      %s246 = sphi 0, %s244
      %s247 = sphi 0, %s246
      %s261 = sphi 0, %s247
      %s265 = sphi 0, %s265
      %s267 = sphi 0, %s265
      %s268 = sphi 0, %s267
      %s282 = sphi 0, %s268
      %s286 = sphi 0, %s286
      %s288 = sphi 0, %s286
      %s289 = sphi 0, %s288
      %s303 = sphi 0, %s289
      %s309 = sphi 0, %s311
      %s312 = sphi 0, %s309
      %s313 = sphi 0, %s312
      %s329 = sphi 0, %s313
    $region4: #{transformer_forward.6} parent=1 // loop_header_branch
      %24 = sbr.rel (%p22) target = $region8
    $region5: #{transformer_forward.6} parent=1 // loop_body
      %s26 = ssub.s32 %s21, 1
      %s27 = ssub.s32 %s21, 2
      %s28 = sadd.s32 %s21, 1
      %s29 = ssub.s32 %s21, %s28
      %p30 = scmp.eq.s32.totalorder %s29, 0
      %s32 = sadd.s32 %s31, 1
      %s33 = scalar_select %p30, %s31, %s32
      %p36 = pneg %p30
      %p37 = scmp.eq.s32.totalorder %s21, 1
      %p38 = por %p36, %p37
      %p39 = scmp.ne.s32.totalorder %s31, %s34
      %p40 = scmp.eq.s32.totalorder %s21, 0
      %p41 = por %p39, %p40
      %p42 = scmp.ne.s32.totalorder %s31, %s34
      %p43 = scmp.eq.s32.totalorder %s26, 1
      %p44 = por %p42, %p43
      %p45 = scmp.ne.s32.totalorder %s34, %s35
      %p46 = scmp.eq.s32.totalorder %s26, 0
      %p47 = por %p45, %p46
      %p48 = scmp.ne.s32.totalorder %s34, %s35
      %p49 = scmp.eq.s32.totalorder %s27, 1
      %p50 = por %p48, %p49
      %p52 = scmp.ne.s32.totalorder %s35, %s51
      %p53 = scmp.eq.s32.totalorder %s27, 0
      %p54 = por %p52, %p53
      %s56 = sadd.s32 %s55, 1
      %p59 = scmp.eq.s32.totalorder %s21, 1
      %p60 = scmp.ne.s32.totalorder %s55, %s57
      %p61 = scmp.eq.s32.totalorder %s21, 0
      %p62 = por %p60, %p61
      %p63 = scmp.ne.s32.totalorder %s55, %s57
      %p64 = scmp.eq.s32.totalorder %s26, 1
      %p65 = por %p63, %p64
      %p66 = scmp.ne.s32.totalorder %s57, %s58
      %p67 = scmp.eq.s32.totalorder %s26, 0
      %p68 = por %p66, %p67
      %p69 = scmp.ne.s32.totalorder %s57, %s58
      %p70 = scmp.eq.s32.totalorder %s27, 1
      %p71 = por %p69, %p70
      %p73 = scmp.ne.s32.totalorder %s58, %s72
      %p74 = scmp.eq.s32.totalorder %s27, 0
      %p75 = por %p73, %p74
      %s77 = sadd.s32 %s76, 1
      %p80 = scmp.eq.s32.totalorder %s21, 1
      %p81 = scmp.ne.s32.totalorder %s76, %s78
      %p82 = scmp.eq.s32.totalorder %s21, 0
      %p83 = por %p81, %p82
      %p84 = scmp.ne.s32.totalorder %s76, %s78
      %p85 = scmp.eq.s32.totalorder %s26, 1
      %p86 = por %p84, %p85
      %p87 = scmp.ne.s32.totalorder %s78, %s79
      %p88 = scmp.eq.s32.totalorder %s26, 0
      %p89 = por %p87, %p88
      %p90 = scmp.ne.s32.totalorder %s78, %s79
      %p91 = scmp.eq.s32.totalorder %s27, 1
      %p92 = por %p90, %p91
      %p94 = scmp.ne.s32.totalorder %s79, %s93
      %p95 = scmp.eq.s32.totalorder %s27, 0
      %p96 = por %p94, %p95
      %s98 = sadd.s32 %s97, 1
      %p101 = scmp.eq.s32.totalorder %s21, 1
      %p102 = scmp.ne.s32.totalorder %s97, %s99
      %p103 = scmp.eq.s32.totalorder %s21, 0
      %p104 = por %p102, %p103
      %p105 = scmp.ne.s32.totalorder %s97, %s99
      %p106 = scmp.eq.s32.totalorder %s26, 1
      %p107 = por %p105, %p106
      %p108 = scmp.ne.s32.totalorder %s99, %s100
      %p109 = scmp.eq.s32.totalorder %s26, 0
      %p110 = por %p108, %p109
      %p111 = scmp.ne.s32.totalorder %s99, %s100
      %p112 = scmp.eq.s32.totalorder %s27, 1
      %p113 = por %p111, %p112
      %p115 = scmp.ne.s32.totalorder %s100, %s114
      %p116 = scmp.eq.s32.totalorder %s27, 0
      %p117 = por %p115, %p116
      %s119 = sadd.s32 %s118, 1
      %p122 = scmp.eq.s32.totalorder %s21, 1
      %p123 = scmp.ne.s32.totalorder %s118, %s120
      %p124 = scmp.eq.s32.totalorder %s21, 0
      %p125 = por %p123, %p124
      %p126 = scmp.ne.s32.totalorder %s118, %s120
      %p127 = scmp.eq.s32.totalorder %s26, 1
      %p128 = por %p126, %p127
      %p129 = scmp.ne.s32.totalorder %s120, %s121
      %p130 = scmp.eq.s32.totalorder %s26, 0
      %p131 = por %p129, %p130
      %p132 = scmp.ne.s32.totalorder %s120, %s121
      %p133 = scmp.eq.s32.totalorder %s27, 1
      %p134 = por %p132, %p133
      %p136 = scmp.ne.s32.totalorder %s121, %s135
      %p137 = scmp.eq.s32.totalorder %s27, 0
      %p138 = por %p136, %p137
      %s140 = sadd.s32 %s139, 1
      %p143 = scmp.eq.s32.totalorder %s21, 1
      %p144 = scmp.ne.s32.totalorder %s139, %s141
      %p145 = scmp.eq.s32.totalorder %s21, 0
      %p146 = por %p144, %p145
      %p147 = scmp.ne.s32.totalorder %s139, %s141
      %p148 = scmp.eq.s32.totalorder %s26, 1
      %p149 = por %p147, %p148
      %p150 = scmp.ne.s32.totalorder %s141, %s142
      %p151 = scmp.eq.s32.totalorder %s26, 0
      %p152 = por %p150, %p151
      %p153 = scmp.ne.s32.totalorder %s141, %s142
      %p154 = scmp.eq.s32.totalorder %s27, 1
      %p155 = por %p153, %p154
      %p157 = scmp.ne.s32.totalorder %s142, %s156
      %p158 = scmp.eq.s32.totalorder %s27, 0
      %p159 = por %p157, %p158
      %s161 = sadd.s32 %s160, 1
      %p164 = scmp.eq.s32.totalorder %s21, 1
      %p165 = scmp.ne.s32.totalorder %s160, %s162
      %p166 = scmp.eq.s32.totalorder %s21, 0
      %p167 = por %p165, %p166
      %p168 = scmp.ne.s32.totalorder %s160, %s162
      %p169 = scmp.eq.s32.totalorder %s26, 1
      %p170 = por %p168, %p169
      %p171 = scmp.ne.s32.totalorder %s162, %s163
      %p172 = scmp.eq.s32.totalorder %s26, 0
      %p173 = por %p171, %p172
      %p174 = scmp.ne.s32.totalorder %s162, %s163
      %p175 = scmp.eq.s32.totalorder %s27, 1
      %p176 = por %p174, %p175
      %p178 = scmp.ne.s32.totalorder %s163, %s177
      %p179 = scmp.eq.s32.totalorder %s27, 0
      %p180 = por %p178, %p179
      %s182 = sadd.s32 %s181, 1
      %p185 = scmp.eq.s32.totalorder %s21, 1
      %p186 = scmp.ne.s32.totalorder %s181, %s183
      %p187 = scmp.eq.s32.totalorder %s21, 0
      %p188 = por %p186, %p187
      %p189 = scmp.ne.s32.totalorder %s181, %s183
      %p190 = scmp.eq.s32.totalorder %s26, 1
      %p191 = por %p189, %p190
      %p192 = scmp.ne.s32.totalorder %s183, %s184
      %p193 = scmp.eq.s32.totalorder %s26, 0
      %p194 = por %p192, %p193
      %p195 = scmp.ne.s32.totalorder %s183, %s184
      %p196 = scmp.eq.s32.totalorder %s27, 1
      %p197 = por %p195, %p196
      %p199 = scmp.ne.s32.totalorder %s184, %s198
      %p200 = scmp.eq.s32.totalorder %s27, 0
      %p201 = por %p199, %p200
      %s203 = sadd.s32 %s202, 1
      %p206 = scmp.eq.s32.totalorder %s21, 1
      %p207 = scmp.ne.s32.totalorder %s202, %s204
      %p208 = scmp.eq.s32.totalorder %s21, 0
      %p209 = por %p207, %p208
      %p210 = scmp.ne.s32.totalorder %s202, %s204
      %p211 = scmp.eq.s32.totalorder %s26, 1
      %p212 = por %p210, %p211
      %p213 = scmp.ne.s32.totalorder %s204, %s205
      %p214 = scmp.eq.s32.totalorder %s26, 0
      %p215 = por %p213, %p214
      %p216 = scmp.ne.s32.totalorder %s204, %s205
      %p217 = scmp.eq.s32.totalorder %s27, 1
      %p218 = por %p216, %p217
      %p220 = scmp.ne.s32.totalorder %s205, %s219
      %p221 = scmp.eq.s32.totalorder %s27, 0
      %p222 = por %p220, %p221
      %s224 = sadd.s32 %s223, 1
      %p227 = scmp.eq.s32.totalorder %s21, 1
      %p228 = scmp.ne.s32.totalorder %s223, %s225
      %p229 = scmp.eq.s32.totalorder %s21, 0
      %p230 = por %p228, %p229
      %p231 = scmp.ne.s32.totalorder %s223, %s225
      %p232 = scmp.eq.s32.totalorder %s26, 1
      %p233 = por %p231, %p232
      %p234 = scmp.ne.s32.totalorder %s225, %s226
      %p235 = scmp.eq.s32.totalorder %s26, 0
      %p236 = por %p234, %p235
      %p237 = scmp.ne.s32.totalorder %s225, %s226
      %p238 = scmp.eq.s32.totalorder %s27, 1
      %p239 = por %p237, %p238
      %p241 = scmp.ne.s32.totalorder %s226, %s240
      %p242 = scmp.eq.s32.totalorder %s27, 0
      %p243 = por %p241, %p242
      %s245 = sadd.s32 %s244, 1
      %p248 = scmp.eq.s32.totalorder %s21, 1
      %p249 = scmp.ne.s32.totalorder %s244, %s246
      %p250 = scmp.eq.s32.totalorder %s21, 0
      %p251 = por %p249, %p250
      %p252 = scmp.ne.s32.totalorder %s244, %s246
      %p253 = scmp.eq.s32.totalorder %s26, 1
      %p254 = por %p252, %p253
      %p255 = scmp.ne.s32.totalorder %s246, %s247
      %p256 = scmp.eq.s32.totalorder %s26, 0
      %p257 = por %p255, %p256
      %p258 = scmp.ne.s32.totalorder %s246, %s247
      %p259 = scmp.eq.s32.totalorder %s27, 1
      %p260 = por %p258, %p259
      %p262 = scmp.ne.s32.totalorder %s247, %s261
      %p263 = scmp.eq.s32.totalorder %s27, 0
      %p264 = por %p262, %p263
      %s266 = sadd.s32 %s265, 1
      %p269 = scmp.eq.s32.totalorder %s21, 1
      %p270 = scmp.ne.s32.totalorder %s265, %s267
      %p271 = scmp.eq.s32.totalorder %s21, 0
      %p272 = por %p270, %p271
      %p273 = scmp.ne.s32.totalorder %s265, %s267
      %p274 = scmp.eq.s32.totalorder %s26, 1
      %p275 = por %p273, %p274
      %p276 = scmp.ne.s32.totalorder %s267, %s268
      %p277 = scmp.eq.s32.totalorder %s26, 0
      %p278 = por %p276, %p277
      %p279 = scmp.ne.s32.totalorder %s267, %s268
      %p280 = scmp.eq.s32.totalorder %s27, 1
      %p281 = por %p279, %p280
      %p283 = scmp.ne.s32.totalorder %s268, %s282
      %p284 = scmp.eq.s32.totalorder %s27, 0
      %p285 = por %p283, %p284
      %s287 = sadd.s32 %s286, 1
      %p290 = scmp.eq.s32.totalorder %s21, 1
      %p291 = scmp.ne.s32.totalorder %s286, %s288
      %p292 = scmp.eq.s32.totalorder %s21, 0
      %p293 = por %p291, %p292
      %p294 = scmp.ne.s32.totalorder %s286, %s288
      %p295 = scmp.eq.s32.totalorder %s26, 1
      %p296 = por %p294, %p295
      %p297 = scmp.ne.s32.totalorder %s288, %s289
      %p298 = scmp.eq.s32.totalorder %s26, 0
      %p299 = por %p297, %p298
      %p300 = scmp.ne.s32.totalorder %s288, %s289
      %p301 = scmp.eq.s32.totalorder %s27, 1
      %p302 = por %p300, %p301
      %p304 = scmp.ne.s32.totalorder %s289, %s303
      %p305 = scmp.eq.s32.totalorder %s27, 0
      %p306 = por %p304, %p305
      %s307 = ssub.s32 %s21, %s28
      %p308 = scmp.eq.s32.totalorder %s307, 0
      %s310 = sadd.s32 %s309, 1
      %s311 = scalar_select %p308, %s309, %s310
      %p314 = pneg %p308
      %p315 = scmp.eq.s32.totalorder %s21, 1
      %p316 = por %p314, %p315
      %p317 = scmp.ne.s32.totalorder %s309, %s312
      %p318 = scmp.eq.s32.totalorder %s21, 0
      %p319 = por %p317, %p318
      %p320 = scmp.ne.s32.totalorder %s309, %s312
      %p321 = scmp.eq.s32.totalorder %s26, 1
      %p322 = por %p320, %p321
      %p323 = scmp.ne.s32.totalorder %s312, %s313
      %p324 = scmp.eq.s32.totalorder %s26, 0
      %p325 = por %p323, %p324
      %p326 = scmp.ne.s32.totalorder %s312, %s313
      %p327 = scmp.eq.s32.totalorder %s27, 1
      %p328 = por %p326, %p327
      %p330 = scmp.ne.s32.totalorder %s313, %s329
      %p331 = scmp.eq.s32.totalorder %s27, 0
      %p332 = por %p330, %p331
      %p333 = scmp.le.s32.totalorder 1, %s21
      %p334 = scmp.lt.s32.totalorder %s21, 3
      %p335 = pnand %p333, %p334
      %p336 = pneg %p335
      // Predicated region
      $region9: #{transformer_forward.6} parent=5 // pred_check
        _
      $region10: #{transformer_forward.6} parent=5 // pred_check_branch
        %338 = sbr.rel (%p335) target = $region12
      $region11: #{transformer_forward.6} parent=5 // pred_region
        %s339 = ssub.s32 %s21, 1
        // Predicated region
        $region13: #{transformer_forward.6} parent=11 // pred_check
          %p340 = pneg %p68
        $region14: #{transformer_forward.6} parent=11 // pred_check_branch
          %342 = sbr.rel (%p340) target = $region16
        $region15: #{transformer_forward.6} parent=11 // pred_region
          %344 = vsyncadd [#allocation3], 0
          %s345 = sshll.u32 %s1, 4
          %s346 = int_to_ptr.hbm [resolvable:$true] %s345
          %s347 = sshll.u32 [#allocation2], 4
          %s348 = int_to_ptr.vmem [resolvable:$true] %s347
          %353 = dma.hbm_to_vmem [thread:$0]  %s346, 256, %s348, [#allocation3], 64, 64, 4
        $region16: #{transformer_forward.6} parent=11 // pred_fallthru
          _
        // Predicated region
        $region17: #{transformer_forward.6} parent=11 // pred_check
          %p354 = pneg %p89
        $region18: #{transformer_forward.6} parent=11 // pred_check_branch
          %356 = sbr.rel (%p354) target = $region20
        $region19: #{transformer_forward.6} parent=11 // pred_region
          _
        $region20: #{transformer_forward.6} parent=11 // pred_fallthru
          _
        // Predicated region
        $region21: #{transformer_forward.6} parent=11 // pred_check
          %p357 = pneg %p110
        $region22: #{transformer_forward.6} parent=11 // pred_check_branch
          %359 = sbr.rel (%p357) target = $region24
        $region23: #{transformer_forward.6} parent=11 // pred_region
          %361 = vsyncadd [#allocation5], 0
          %s362 = sshll.u32 %s3, 4
          %s363 = int_to_ptr.hbm [resolvable:$true] %s362
          %s364 = sshll.u32 [#allocation4], 4
          %s365 = int_to_ptr.vmem [resolvable:$true] %s364
          %370 = dma.hbm_to_vmem [thread:$0]  %s363, 256, %s365, [#allocation5], 64, 64, 4
        $region24: #{transformer_forward.6} parent=11 // pred_fallthru
          _
        // Predicated region
        $region25: #{transformer_forward.6} parent=11 // pred_check
          %p371 = pneg %p131
        $region26: #{transformer_forward.6} parent=11 // pred_check_branch
          %373 = sbr.rel (%p371) target = $region28
        $region27: #{transformer_forward.6} parent=11 // pred_region
          _
        $region28: #{transformer_forward.6} parent=11 // pred_fallthru
          _
        // Predicated region
        $region29: #{transformer_forward.6} parent=11 // pred_check
          %p374 = pneg %p152
        $region30: #{transformer_forward.6} parent=11 // pred_check_branch
          %376 = sbr.rel (%p374) target = $region32
        $region31: #{transformer_forward.6} parent=11 // pred_region
          _
        $region32: #{transformer_forward.6} parent=11 // pred_fallthru
          _
        // Predicated region
        $region33: #{transformer_forward.6} parent=11 // pred_check
          %p377 = pneg %p173
        $region34: #{transformer_forward.6} parent=11 // pred_check_branch
          %379 = sbr.rel (%p377) target = $region36
        $region35: #{transformer_forward.6} parent=11 // pred_region
          _
        $region36: #{transformer_forward.6} parent=11 // pred_fallthru
          _
        // Predicated region
        $region37: #{transformer_forward.6} parent=11 // pred_check
          %p380 = pneg %p194
        $region38: #{transformer_forward.6} parent=11 // pred_check_branch
          %382 = sbr.rel (%p380) target = $region40
        $region39: #{transformer_forward.6} parent=11 // pred_region
          %384 = vsyncadd [#allocation5], 0
          %s385 = sshll.u32 %s7, 4
          %s386 = int_to_ptr.hbm [resolvable:$true] %s385
          %s387 = sshll.u32 [#allocation6], 4
          %s388 = int_to_ptr.vmem [resolvable:$true] %s387
          %393 = dma.hbm_to_vmem [thread:$0]  %s386, 256, %s388, [#allocation5], 64, 64, 4
        $region40: #{transformer_forward.6} parent=11 // pred_fallthru
          _
        // Predicated region
        $region41: #{transformer_forward.6} parent=11 // pred_check
          %p394 = pneg %p215
        $region42: #{transformer_forward.6} parent=11 // pred_check_branch
          %396 = sbr.rel (%p394) target = $region44
        $region43: #{transformer_forward.6} parent=11 // pred_region
          _
        $region44: #{transformer_forward.6} parent=11 // pred_fallthru
          _
        // Predicated region
        $region45: #{transformer_forward.6} parent=11 // pred_check
          %p397 = pneg %p236
        $region46: #{transformer_forward.6} parent=11 // pred_check_branch
          %399 = sbr.rel (%p397) target = $region48
        $region47: #{transformer_forward.6} parent=11 // pred_region
          _
        $region48: #{transformer_forward.6} parent=11 // pred_fallthru
          _
        // Predicated region
        $region49: #{transformer_forward.6} parent=11 // pred_check
          %p400 = pneg %p257
        $region50: #{transformer_forward.6} parent=11 // pred_check_branch
          %402 = sbr.rel (%p400) target = $region52
        $region51: #{transformer_forward.6} parent=11 // pred_region
          _
        $region52: #{transformer_forward.6} parent=11 // pred_fallthru
          _
        // Predicated region
        $region53: #{transformer_forward.6} parent=11 // pred_check
          %p403 = pneg %p278
        $region54: #{transformer_forward.6} parent=11 // pred_check_branch
          %405 = sbr.rel (%p403) target = $region56
        $region55: #{transformer_forward.6} parent=11 // pred_region
          _
        $region56: #{transformer_forward.6} parent=11 // pred_fallthru
          _
        // Predicated region
        $region57: #{transformer_forward.6} parent=11 // pred_check
          %p406 = pneg %p299
        $region58: #{transformer_forward.6} parent=11 // pred_check_branch
          %408 = sbr.rel (%p406) target = $region60
        $region59: #{transformer_forward.6} parent=11 // pred_region
          _
        $region60: #{transformer_forward.6} parent=11 // pred_fallthru
          _
      $region12: #{transformer_forward.6} parent=5 // pred_fallthru
        _
      %p409 = scmp.lt.s32.totalorder %s21, 2
      // Predicated region
      $region61: #{transformer_forward.6} parent=5 // pred_check
        %p410 = pneg %p409
      $region62: #{transformer_forward.6} parent=5 // pred_check_branch
        %412 = sbr.rel (%p410) target = $region64
      $region63: #{transformer_forward.6} parent=5 // pred_region
        // Predicated region
        $region65: #{transformer_forward.6} parent=63 // pred_check
          %p413 = pneg %p41
        $region66: #{transformer_forward.6} parent=63 // pred_check_branch
          %415 = sbr.rel (%p413) target = $region68
        $region67: #{transformer_forward.6} parent=63 // pred_region
          %p416 = scmp.lt.s32.totalorder %s21, 1
          %s417 = scalar_select %p416, %s21, 1
          %s418 = smul.addr %s417, 2
          %s419 = smul.addr %s418, 8
          %s420 = scalar_lea.vmem %s0, %s419
        $region68: #{transformer_forward.6} parent=63 // pred_fallthru
          _
      $region64: #{transformer_forward.6} parent=5 // pred_fallthru
        _
      %p421 = scmp.le.s32.totalorder 1, %s21
      %p422 = scmp.lt.s32.totalorder %s21, 3
      %p423 = pnand %p421, %p422
      %p424 = pneg %p423
      // Predicated region
      $region69: #{transformer_forward.6} parent=5 // pred_check
        _
      $region70: #{transformer_forward.6} parent=5 // pred_check_branch
        %426 = sbr.rel (%p423) target = $region72
      $region71: #{transformer_forward.6} parent=5 // pred_region
        %s427 = ssub.s32 %s21, 1
        // Predicated region
        $region73: #{transformer_forward.6} parent=71 // pred_check
          %p428 = pneg %p68
        $region74: #{transformer_forward.6} parent=71 // pred_check_branch
          %430 = sbr.rel (%p428) target = $region76
        $region75: #{transformer_forward.6} parent=71 // pred_region
          %432 = dma.done [#allocation3], 256
        $region76: #{transformer_forward.6} parent=71 // pred_fallthru
          _
        // Predicated region
        $region77: #{transformer_forward.6} parent=71 // pred_check
          %p433 = pneg %p110
        $region78: #{transformer_forward.6} parent=71 // pred_check_branch
          %435 = sbr.rel (%p433) target = $region80
        $region79: #{transformer_forward.6} parent=71 // pred_region
          %437 = dma.done [#allocation5], 256
        $region80: #{transformer_forward.6} parent=71 // pred_fallthru
          _
        // Predicated region
        $region81: #{transformer_forward.6} parent=71 // pred_check
          %p438 = pneg %p194
        $region82: #{transformer_forward.6} parent=71 // pred_check_branch
          %440 = sbr.rel (%p438) target = $region84
        $region83: #{transformer_forward.6} parent=71 // pred_region
          %442 = dma.done [#allocation5], 256
        $region84: #{transformer_forward.6} parent=71 // pred_fallthru
          _
        %p443 = scmp.lt.s32.totalorder %s26, 1
        %s444 = scalar_select %p443, %s26, 1
        %s445 = smul.addr %s444, 2
        %s446 = smul.addr %s445, 8
        %s447 = scalar_lea.vmem %s0, %s446
        %p448 = pneg %p47
        %p449 = pneg %p44
        %p450 = pneg %p68
        %p451 = pneg %p65
        %p452 = pneg %p89
        %p453 = pneg %p86
        %p454 = pneg %p110
        %p455 = pneg %p107
        %p456 = pneg %p131
        %p457 = pneg %p128
        %p458 = pneg %p152
        %p459 = pneg %p149
        %p460 = pneg %p173
        %p461 = pneg %p170
        %p462 = pneg %p194
        %p463 = pneg %p191
        %p464 = pneg %p215
        %p465 = pneg %p212
        %p466 = pneg %p236
        %p467 = pneg %p233
        %p468 = pneg %p257
        %p469 = pneg %p254
        %p470 = pneg %p278
        %p471 = pneg %p275
        %p472 = pneg %p299
        %p473 = pneg %p296
        %p474 = pneg %p325
        %p475 = pneg %p322
        %p476 = scmp.lt.s32.totalorder %s26, 1
        %s477 = scalar_select %p476, %s26, 1
        %s478 = smul.addr %s477, 2
        %s479 = smul.addr %s478, 8
        %s480 = scalar_lea.vmem %s13, %s479
        %p481 = scmp.lt.s32.totalorder %s26, 1
        %s482 = scalar_select %p481, %s26, 1
        %s483 = smul.addr %s482, 2
        %s484 = smul.addr %s483, 8
        %s485 = scalar_lea.vmem %s0, %s484
        %p486 = scmp.lt.s32.totalorder %s26, 1
        %s487 = scalar_select %p486, %s26, 1
        %s488 = smul.addr %s487, 2
        %s489 = smul.addr %s488, 8
        %s490 = scalar_lea.vmem %s13, %s489
        %v492 = vld [vmem:[%s485] sm:$0xff]
        %v493 = vld [vmem:[%s485 + $0x8] sm:$0xff]
        %v494 = vld [vmem:[#allocation2] sm:$0xf]
        %v495 = vld [vmem:[#allocation2 + $0x4] sm:$0xf]
        %v496 = vld [vmem:[#allocation2 + $0x8] sm:$0xf]
        %v497 = vld [vmem:[#allocation2 + $0xc] sm:$0xf]
        %v498 = vpack.c.bf16 %v493, %v492
        %v499 = vld [vmem:[%s2] sm:$0x1]
        %v501 = vperm.slane %v499, 0
        %v507 = vunpack.c.l.b16 %v494
        %v508 = vunpack.c.l.b16 %v495
        %v509 = vunpack.c.l.b16 %v496
        %v510 = vunpack.c.l.b16 %v497
        %v511 = vpack.c.b16 %v508, %v507
        %v512 = vpack.c.b16 %v510, %v509
        %vm515 = vcmask 261120
        %v517 = vsel %vm515, %v498, 0
        %519 = vmatpush.bf16.msra.mxu0 0
        %520 = vmatpush.bf16.msra.mxu0 0
        %521 = vmatpush.bf16.msra.mxu0 0
        %522 = vmatpush.bf16.msra.mxu0 0
        %523 = vmatpush.bf16.msra.mxu0 0
        %524 = vmatpush.bf16.msra.mxu0 0
        %525 = vmatpush.bf16.msra.mxu0 %v512
        %526 = vmatpush.bf16.msra.mxu0 %v511
        %527 = vmatmul.bf16.gmra.mxu0 %v517
        %v528 = vpop.f32.mrf.mxu0
        %v529 = vadd.f32 %v501, %v528
        %v530 = vpop.f32.mrf.mxu0
        %v531 = vadd.f32 %v501, %v530
        %532 = vdwg.mxu0
        %v533 = vpack.c.bf16 %v531, %v529
        %535 = vrot.lane.b32.xlu0 %v533, 96
        %v536 = vpop.permute.xlu0 %535
        %vm537 = vcmask 64512
        %v539 = vsel %vm537, %v533, 0
        %v542 = vsel %vm537, %v536, 0
        %544 = vmatpush.bf16.xpose.msra.mxu0 0
        %545 = vmatpush.bf16.xpose.msra.mxu0 0
        %546 = vmatpush.bf16.xpose.msra.mxu0 0
        %547 = vmatpush.bf16.xpose.msra.mxu0 0
        %548 = vmatpush.bf16.xpose.msra.mxu0 0
        %549 = vmatpush.bf16.xpose.msra.mxu0 0
        %550 = vmatpush.bf16.xpose.msra.mxu0 0
        %551 = vmatpush.bf16.xpose.msra.mxu0 %v542
        %552 = vmatmul.bf16.gmra.mxu0 %v539
        %v553 = vpop.f32.mrf.mxu0
        %v554 = vadd.f32 0.0, %v553
        %v555 = vpop.f32.mrf.mxu0
        %v556 = vadd.f32 0.0, %v555
        %557 = vdwg.mxu0
        %v558 = vmul.f32 %v554, 0.35355338
        %v559 = vmul.f32 %v556, 0.35355338
        %vm560 = vcmask 130048
        %v561 = vsel %vm560, %v558, -inf
        %562 = vmax.xlane.f32.xlu0 %v561
        %v563 = vpop.xlane.xlu0 %562
        %v564 = vsel %vm560, %v559, -inf
        %565 = vmax.xlane.f32.xlu0 %v564
        %v566 = vpop.xlane.xlu0 %565
        %v567 = vsub.f32 %v558, %v563
        %v568 = vsub.f32 %v559, %v566
        %v569 = vmul.f32 %v567, 1.442695
        %v570 = vpow.pop %v569
        %v571 = vmul.f32 %v568, 1.442695
        %v572 = vpow.pop %v571
        %v573 = vsel %vm560, %v570, 0.0
        %574 = vadd.xlane.f32.xlu0 %v573
        %v575 = vpop.xlane.xlu0 %574
        %v576 = vsel %vm560, %v572, 0.0
        %577 = vadd.xlane.f32.xlu0 %v576
        %v578 = vpop.xlane.xlu0 %577
        %v579 = vrcp.pop %v575
        %v580 = vrcp.pop %v578
        %v581 = vmul.f32 %v570, %v579
        %v582 = vmul.f32 %v572, %v580
        %v583 = vpack.c.bf16 %v582, %v581
        %584 = vrot.lane.b32.xlu0 %v533, 64
        %v585 = vpop.permute.xlu0 %584
        %v588 = vsel %vm560, %v583, 0
        %590 = vmatpush.bf16.msra.mxu0 0
        %591 = vmatpush.bf16.msra.mxu0 0
        %592 = vmatpush.bf16.msra.mxu0 0
        %593 = vmatpush.bf16.msra.mxu0 0
        %594 = vmatpush.bf16.msra.mxu0 0
        %595 = vmatpush.bf16.msra.mxu0 0
        %596 = vmatpush.bf16.msra.mxu0 0
        %597 = vmatpush.bf16.msra.mxu0 %v585
        %598 = vmatmul.bf16.gmra.mxu0 %v588
        %v599 = vpop.f32.mrf.mxu0
        %v600 = vadd.f32 0.0, %v599
        %v601 = vpop.f32.mrf.mxu0
        %v602 = vadd.f32 0.0, %v601
        %603 = vdwg.mxu0
        %604 = vrot.lane.b32.xlu0 %v533, 120
        %v605 = vpop.permute.xlu0 %604
        %606 = vrot.lane.b32.xlu0 %v533, 88
        %v607 = vpop.permute.xlu0 %606
        %v609 = vsel %vm537, %v605, 0
        %v612 = vsel %vm537, %v607, 0
        %614 = vmatpush.bf16.xpose.msra.mxu0 0
        %615 = vmatpush.bf16.xpose.msra.mxu0 0
        %616 = vmatpush.bf16.xpose.msra.mxu0 0
        %617 = vmatpush.bf16.xpose.msra.mxu0 0
        %618 = vmatpush.bf16.xpose.msra.mxu0 0
        %619 = vmatpush.bf16.xpose.msra.mxu0 0
        %620 = vmatpush.bf16.xpose.msra.mxu0 0
        %621 = vmatpush.bf16.xpose.msra.mxu0 %v612
        %622 = vmatmul.bf16.gmra.mxu0 %v609
        %v623 = vpop.f32.mrf.mxu0
        %v624 = vadd.f32 0.0, %v623
        %v625 = vpop.f32.mrf.mxu0
        %v626 = vadd.f32 0.0, %v625
        %627 = vdwg.mxu0
        %v628 = vmul.f32 %v624, 0.35355338
        %v629 = vmul.f32 %v626, 0.35355338
        %v630 = vsel %vm560, %v628, -inf
        %631 = vmax.xlane.f32.xlu0 %v630
        %v632 = vpop.xlane.xlu0 %631
        %v633 = vsel %vm560, %v629, -inf
        %634 = vmax.xlane.f32.xlu0 %v633
        %v635 = vpop.xlane.xlu0 %634
        %v636 = vsub.f32 %v628, %v632
        %v637 = vsub.f32 %v629, %v635
        %v638 = vmul.f32 %v636, 1.442695
        %v639 = vpow.pop %v638
        %v640 = vmul.f32 %v637, 1.442695
        %v641 = vpow.pop %v640
        %v642 = vsel %vm560, %v639, 0.0
        %643 = vadd.xlane.f32.xlu0 %v642
        %v644 = vpop.xlane.xlu0 %643
        %v645 = vsel %vm560, %v641, 0.0
        %646 = vadd.xlane.f32.xlu0 %v645
        %v647 = vpop.xlane.xlu0 %646
        %v648 = vrcp.pop %v644
        %v649 = vrcp.pop %v647
        %v650 = vmul.f32 %v639, %v648
        %v651 = vmul.f32 %v641, %v649
        %v652 = vpack.c.bf16 %v651, %v650
        %653 = vrot.lane.b32.xlu0 %v533, 56
        %v654 = vpop.permute.xlu0 %653
        %v657 = vsel %vm560, %v652, 0
        %659 = vmatpush.bf16.msra.mxu0 0
        %660 = vmatpush.bf16.msra.mxu0 0
        %661 = vmatpush.bf16.msra.mxu0 0
        %662 = vmatpush.bf16.msra.mxu0 0
        %663 = vmatpush.bf16.msra.mxu0 0
        %664 = vmatpush.bf16.msra.mxu0 0
        %665 = vmatpush.bf16.msra.mxu0 0
        %666 = vmatpush.bf16.msra.mxu0 %v654
        %667 = vmatmul.bf16.gmra.mxu0 %v657
        %v668 = vpop.f32.mrf.mxu0
        %v669 = vadd.f32 0.0, %v668
        %v670 = vpop.f32.mrf.mxu0
        %v671 = vadd.f32 0.0, %v670
        %672 = vdwg.mxu0
        %673 = vrot.lane.b32.xlu0 %v533, 112
        %v674 = vpop.permute.xlu0 %673
        %675 = vrot.lane.b32.xlu0 %v533, 80
        %v676 = vpop.permute.xlu0 %675
        %v678 = vsel %vm537, %v674, 0
        %v681 = vsel %vm537, %v676, 0
        %683 = vmatpush.bf16.xpose.msra.mxu0 0
        %684 = vmatpush.bf16.xpose.msra.mxu0 0
        %685 = vmatpush.bf16.xpose.msra.mxu0 0
        %686 = vmatpush.bf16.xpose.msra.mxu0 0
        %687 = vmatpush.bf16.xpose.msra.mxu0 0
        %688 = vmatpush.bf16.xpose.msra.mxu0 0
        %689 = vmatpush.bf16.xpose.msra.mxu0 0
        %690 = vmatpush.bf16.xpose.msra.mxu0 %v681
        %691 = vmatmul.bf16.gmra.mxu0 %v678
        %v692 = vpop.f32.mrf.mxu0
        %v693 = vadd.f32 0.0, %v692
        %v694 = vpop.f32.mrf.mxu0
        %v695 = vadd.f32 0.0, %v694
        %696 = vdwg.mxu0
        %v697 = vmul.f32 %v693, 0.35355338
        %v698 = vmul.f32 %v695, 0.35355338
        %v699 = vsel %vm560, %v697, -inf
        %700 = vmax.xlane.f32.xlu0 %v699
        %v701 = vpop.xlane.xlu0 %700
        %v702 = vsel %vm560, %v698, -inf
        %703 = vmax.xlane.f32.xlu0 %v702
        %v704 = vpop.xlane.xlu0 %703
        %v705 = vsub.f32 %v697, %v701
        %v706 = vsub.f32 %v698, %v704
        %v707 = vmul.f32 %v705, 1.442695
        %v708 = vpow.pop %v707
        %v709 = vmul.f32 %v706, 1.442695
        %v710 = vpow.pop %v709
        %v711 = vsel %vm560, %v708, 0.0
        %712 = vadd.xlane.f32.xlu0 %v711
        %v713 = vpop.xlane.xlu0 %712
        %v714 = vsel %vm560, %v710, 0.0
        %715 = vadd.xlane.f32.xlu0 %v714
        %v716 = vpop.xlane.xlu0 %715
        %v717 = vrcp.pop %v713
        %v718 = vrcp.pop %v716
        %v719 = vmul.f32 %v708, %v717
        %v720 = vmul.f32 %v710, %v718
        %v721 = vpack.c.bf16 %v720, %v719
        %722 = vrot.lane.b32.xlu0 %v533, 48
        %v723 = vpop.permute.xlu0 %722
        %v726 = vsel %vm560, %v721, 0
        %728 = vmatpush.bf16.msra.mxu0 0
        %729 = vmatpush.bf16.msra.mxu0 0
        %730 = vmatpush.bf16.msra.mxu0 0
        %731 = vmatpush.bf16.msra.mxu0 0
        %732 = vmatpush.bf16.msra.mxu0 0
        %733 = vmatpush.bf16.msra.mxu0 0
        %734 = vmatpush.bf16.msra.mxu0 0
        %735 = vmatpush.bf16.msra.mxu0 %v723
        %736 = vmatmul.bf16.gmra.mxu0 %v726
        %v737 = vpop.f32.mrf.mxu0
        %v738 = vadd.f32 0.0, %v737
        %v739 = vpop.f32.mrf.mxu0
        %v740 = vadd.f32 0.0, %v739
        %741 = vdwg.mxu0
        %742 = vrot.lane.b32.xlu0 %v533, 104
        %v743 = vpop.permute.xlu0 %742
        %744 = vrot.lane.b32.xlu0 %v533, 72
        %v745 = vpop.permute.xlu0 %744
        %v747 = vsel %vm537, %v743, 0
        %v750 = vsel %vm537, %v745, 0
        %752 = vmatpush.bf16.xpose.msra.mxu0 0
        %753 = vmatpush.bf16.xpose.msra.mxu0 0
        %754 = vmatpush.bf16.xpose.msra.mxu0 0
        %755 = vmatpush.bf16.xpose.msra.mxu0 0
        %756 = vmatpush.bf16.xpose.msra.mxu0 0
        %757 = vmatpush.bf16.xpose.msra.mxu0 0
        %758 = vmatpush.bf16.xpose.msra.mxu0 0
        %759 = vmatpush.bf16.xpose.msra.mxu0 %v750
        %760 = vmatmul.bf16.gmra.mxu0 %v747
        %v761 = vpop.f32.mrf.mxu0
        %v762 = vadd.f32 0.0, %v761
        %v763 = vpop.f32.mrf.mxu0
        %v764 = vadd.f32 0.0, %v763
        %765 = vdwg.mxu0
        %v766 = vmul.f32 %v762, 0.35355338
        %v767 = vmul.f32 %v764, 0.35355338
        %v768 = vsel %vm560, %v766, -inf
        %769 = vmax.xlane.f32.xlu0 %v768
        %v770 = vpop.xlane.xlu0 %769
        %v771 = vsel %vm560, %v767, -inf
        %772 = vmax.xlane.f32.xlu0 %v771
        %v773 = vpop.xlane.xlu0 %772
        %v774 = vsub.f32 %v766, %v770
        %v775 = vsub.f32 %v767, %v773
        %v776 = vmul.f32 %v774, 1.442695
        %v777 = vpow.pop %v776
        %v778 = vmul.f32 %v775, 1.442695
        %v779 = vpow.pop %v778
        %v780 = vsel %vm560, %v777, 0.0
        %781 = vadd.xlane.f32.xlu0 %v780
        %v782 = vpop.xlane.xlu0 %781
        %v783 = vsel %vm560, %v779, 0.0
        %784 = vadd.xlane.f32.xlu0 %v783
        %v785 = vpop.xlane.xlu0 %784
        %v786 = vrcp.pop %v782
        %v787 = vrcp.pop %v785
        %v788 = vmul.f32 %v777, %v786
        %v789 = vmul.f32 %v779, %v787
        %v790 = vpack.c.bf16 %v789, %v788
        %791 = vrot.lane.b32.xlu0 %v533, 40
        %v792 = vpop.permute.xlu0 %791
        %v795 = vsel %vm560, %v790, 0
        %797 = vmatpush.bf16.msra.mxu0 0
        %798 = vmatpush.bf16.msra.mxu0 0
        %799 = vmatpush.bf16.msra.mxu0 0
        %800 = vmatpush.bf16.msra.mxu0 0
        %801 = vmatpush.bf16.msra.mxu0 0
        %802 = vmatpush.bf16.msra.mxu0 0
        %803 = vmatpush.bf16.msra.mxu0 0
        %804 = vmatpush.bf16.msra.mxu0 %v792
        %805 = vmatmul.bf16.gmra.mxu0 %v795
        %v806 = vpop.f32.mrf.mxu0
        %v807 = vadd.f32 0.0, %v806
        %v808 = vpop.f32.mrf.mxu0
        %v809 = vadd.f32 0.0, %v808
        %810 = vdwg.mxu0
        %813 = vrot.lane.b32.xlu0 %v669, 8
        %v814 = vpop.permute.xlu0 %813
        %815 = vrot.lane.b32.xlu0 %v671, 8
        %v816 = vpop.permute.xlu0 %815
        %821 = vrot.lane.b32.xlu0 %v738, 16
        %v822 = vpop.permute.xlu0 %821
        %823 = vrot.lane.b32.xlu0 %v740, 16
        %v824 = vpop.permute.xlu0 %823
        %829 = vrot.lane.b32.xlu0 %v807, 24
        %v830 = vpop.permute.xlu0 %829
        %831 = vrot.lane.b32.xlu0 %v809, 24
        %v832 = vpop.permute.xlu0 %831
        %v835 = vsel %vm537, %v600, %v814
        %v836 = vsel %vm537, %v602, %v816
        %v837 = vsel %vm560, %v835, %v822
        %v838 = vsel %vm560, %v836, %v824
        %vm839 = vcmask 195584
        %v840 = vsel %vm839, %v837, %v830
        %v841 = vsel %vm839, %v838, %v832
        %v842 = vld [vmem:[#allocation4] sm:$0xf]
        %v843 = vld [vmem:[#allocation4 + $0x4] sm:$0xf]
        %v844 = vld [vmem:[#allocation4 + $0x8] sm:$0xf]
        %v845 = vld [vmem:[#allocation4 + $0xc] sm:$0xf]
        %v846 = vpack.c.bf16 %v841, %v840
        %v847 = vld [vmem:[%s4] sm:$0x1]
        %v849 = vperm.slane %v847, 0
        %v855 = vunpack.c.l.b16 %v842
        %v856 = vunpack.c.l.b16 %v843
        %v857 = vunpack.c.l.b16 %v844
        %v858 = vunpack.c.l.b16 %v845
        %v859 = vpack.c.b16 %v856, %v855
        %v860 = vpack.c.b16 %v858, %v857
        %v864 = vsel %vm515, %v846, 0
        %866 = vmatpush.bf16.msra.mxu0 0
        %867 = vmatpush.bf16.msra.mxu0 0
        %868 = vmatpush.bf16.msra.mxu0 0
        %869 = vmatpush.bf16.msra.mxu0 0
        %870 = vmatpush.bf16.msra.mxu0 0
        %871 = vmatpush.bf16.msra.mxu0 0
        %872 = vmatpush.bf16.msra.mxu0 %v860
        %873 = vmatpush.bf16.msra.mxu0 %v859
        %874 = vmatmul.bf16.gmra.mxu0 %v864
        %v875 = vpop.f32.mrf.mxu0
        %v876 = vadd.f32 %v849, %v875
        %v877 = vpop.f32.mrf.mxu0
        %v878 = vadd.f32 %v849, %v877
        %879 = vdwg.mxu0
        %v880 = vadd.f32 %v876, %v492
        %v881 = vadd.f32 %v878, %v493
        %v882 = vld [vmem:[%s5] sm:$0x1]
        %v883 = vld [vmem:[%s6] sm:$0x1]
        %v884 = vsel %vm515, %v880, 0.0
        %885 = vadd.xlane.f32.xlu0 %v884
        %v886 = vpop.xlane.xlu0 %885
        %v887 = vsel %vm515, %v881, 0.0
        %888 = vadd.xlane.f32.xlu0 %v887
        %v889 = vpop.xlane.xlu0 %888
        %v890 = vrcp.pop 32.0
        %v891 = vmul.f32 32.0, %v890
        %v892 = vsub.f32 1.0, %v891
        %v893 = vmul.f32 %v890, %v892
        %v894 = vadd.f32 %v890, %v893
        %vm895 = vweird.f32 %v890
        %v896 = vsel %vm895, %v890, %v894
        %v897 = vmul.f32 %v886, %v896
        %v898 = vmul.f32 %v889, %v896
        %v899 = vsub.f32 %v880, %v897
        %v900 = vsub.f32 %v881, %v898
        %v901 = vmul.f32 %v899, %v899
        %v902 = vmul.f32 %v900, %v900
        %v903 = vsel %vm515, %v901, 0.0
        %904 = vadd.xlane.f32.xlu0 %v903
        %v905 = vpop.xlane.xlu0 %904
        %v906 = vsel %vm515, %v902, 0.0
        %907 = vadd.xlane.f32.xlu0 %v906
        %v908 = vpop.xlane.xlu0 %907
        %v909 = vmul.f32 %v905, %v896
        %v910 = vmul.f32 %v908, %v896
        %v911 = vadd.f32 %v909, 1e-05
        %v912 = vadd.f32 %v910, 1e-05
        %v913 = vrsqrt.pop %v911
        %v914 = vmul.f32 %v913, %v911
        %v915 = vmul.f32 %v914, %v913
        %v916 = vmul.f32 0.5, %v915
        %v917 = vsub.f32 1.5, %v916
        %v918 = vmul.f32 %v913, %v917
        %vm919 = vweird.f32 %v911
        %vm920 = vweird.f32 %v913
        %vm921 = vmor %vm919, %vm920
        %v922 = vsel %vm921, %v913, %v918
        %v923 = vrsqrt.pop %v912
        %v924 = vmul.f32 %v923, %v912
        %v925 = vmul.f32 %v924, %v923
        %v926 = vmul.f32 0.5, %v925
        %v927 = vsub.f32 1.5, %v926
        %v928 = vmul.f32 %v923, %v927
        %vm929 = vweird.f32 %v912
        %vm930 = vweird.f32 %v923
        %vm931 = vmor %vm929, %vm930
        %v932 = vsel %vm931, %v923, %v928
        %v933 = vmul.f32 %v899, %v922
        %v934 = vmul.f32 %v900, %v932
        %v936 = vperm.slane %v882, 0
        %v938 = vmul.f32 %v933, %v936
        %v939 = vmul.f32 %v934, %v936
        %v941 = vperm.slane %v883, 0
        %v943 = vadd.f32 %v938, %v941
        %v944 = vadd.f32 %v939, %v941
        %v945 = vld [vmem:[#allocation6] sm:$0xf]
        %v946 = vld [vmem:[#allocation6 + $0x4] sm:$0xf]
        %v947 = vld [vmem:[#allocation6 + $0x8] sm:$0xf]
        %v948 = vld [vmem:[#allocation6 + $0xc] sm:$0xf]
        %v949 = vpack.c.bf16 %v944, %v943
        %v950 = vld [vmem:[%s8] sm:$0x1]
        %v952 = vperm.slane %v950, 0
        %v958 = vunpack.c.l.b16 %v945
        %v959 = vunpack.c.l.b16 %v946
        %v960 = vunpack.c.l.b16 %v947
        %v961 = vunpack.c.l.b16 %v948
        %v962 = vpack.c.b16 %v959, %v958
        %v963 = vpack.c.b16 %v961, %v960
        %v967 = vsel %vm515, %v949, 0
        %969 = vmatpush.bf16.msra.mxu0 0
        %970 = vmatpush.bf16.msra.mxu0 0
        %971 = vmatpush.bf16.msra.mxu0 0
        %972 = vmatpush.bf16.msra.mxu0 0
        %973 = vmatpush.bf16.msra.mxu0 0
        %974 = vmatpush.bf16.msra.mxu0 0
        %975 = vmatpush.bf16.msra.mxu0 %v963
        %976 = vmatpush.bf16.msra.mxu0 %v962
        %977 = vmatmul.bf16.gmra.mxu0 %v967
        %v978 = vpop.f32.mrf.mxu0
        %v979 = vadd.f32 %v952, %v978
        %v980 = vpop.f32.mrf.mxu0
        %v981 = vadd.f32 %v952, %v980
        %982 = vdwg.mxu0
        %v983 = vmax.f32 %v979, 0.0
        %v984 = vmax.f32 %v981, 0.0
        %v985 = vld [vmem:[%s9] sm:$0xf]
        %v986 = vld [vmem:[%s9 + $0x4] sm:$0xf]
        %v987 = vld [vmem:[%s9 + $0x8] sm:$0xf]
        %v988 = vld [vmem:[%s9 + $0xc] sm:$0xf]
        %v989 = vld [vmem:[%s9 + $0x10] sm:$0xf]
        %v990 = vld [vmem:[%s9 + $0x14] sm:$0xf]
        %v991 = vld [vmem:[%s9 + $0x18] sm:$0xf]
        %v992 = vld [vmem:[%s9 + $0x1c] sm:$0xf]
        %v993 = vpack.c.bf16 %v984, %v983
        %v994 = vld [vmem:[%s10] sm:$0x1]
        %v996 = vperm.slane %v994, 0
        %v1006 = vunpack.c.l.b16 %v985
        %v1007 = vunpack.c.l.b16 %v986
        %v1008 = vunpack.c.l.b16 %v987
        %v1009 = vunpack.c.l.b16 %v988
        %v1010 = vunpack.c.l.b16 %v989
        %v1011 = vunpack.c.l.b16 %v990
        %v1012 = vunpack.c.l.b16 %v991
        %v1013 = vunpack.c.l.b16 %v992
        %v1014 = vpack.c.b16 %v1007, %v1006
        %v1015 = vpack.c.b16 %v1009, %v1008
        %v1016 = vpack.c.b16 %v1011, %v1010
        %v1017 = vpack.c.b16 %v1013, %v1012
        %vm1022 = vcmask 523264
        %v1024 = vsel %vm1022, %v993, 0
        %1026 = vmatpush.bf16.msra.mxu0 0
        %1027 = vmatpush.bf16.msra.mxu0 0
        %1028 = vmatpush.bf16.msra.mxu0 0
        %1029 = vmatpush.bf16.msra.mxu0 0
        %1030 = vmatpush.bf16.msra.mxu0 %v1017
        %1031 = vmatpush.bf16.msra.mxu0 %v1016
        %1032 = vmatpush.bf16.msra.mxu0 %v1015
        %1033 = vmatpush.bf16.msra.mxu0 %v1014
        %1034 = vmatmul.bf16.gmra.mxu0 %v1024
        %v1035 = vpop.f32.mrf.mxu0
        %v1036 = vadd.f32 %v996, %v1035
        %v1037 = vpop.f32.mrf.mxu0
        %v1038 = vadd.f32 %v996, %v1037
        %1039 = vdwg.mxu0
        %v1040 = vadd.f32 %v1036, %v943
        %v1041 = vadd.f32 %v1038, %v944
        %v1042 = vld [vmem:[%s11] sm:$0x1]
        %v1043 = vld [vmem:[%s12] sm:$0x1]
        %v1044 = vsel %vm515, %v1040, 0.0
        %1045 = vadd.xlane.f32.xlu0 %v1044
        %v1046 = vpop.xlane.xlu0 %1045
        %v1047 = vsel %vm515, %v1041, 0.0
        %1048 = vadd.xlane.f32.xlu0 %v1047
        %v1049 = vpop.xlane.xlu0 %1048
        %v1050 = vmul.f32 %v1046, %v896
        %v1051 = vmul.f32 %v1049, %v896
        %v1052 = vsub.f32 %v1040, %v1050
        %v1053 = vsub.f32 %v1041, %v1051
        %v1054 = vmul.f32 %v1052, %v1052
        %v1055 = vmul.f32 %v1053, %v1053
        %v1056 = vsel %vm515, %v1054, 0.0
        %1057 = vadd.xlane.f32.xlu0 %v1056
        %v1058 = vpop.xlane.xlu0 %1057
        %v1059 = vsel %vm515, %v1055, 0.0
        %1060 = vadd.xlane.f32.xlu0 %v1059
        %v1061 = vpop.xlane.xlu0 %1060
        %v1062 = vmul.f32 %v1058, %v896
        %v1063 = vmul.f32 %v1061, %v896
        %v1064 = vadd.f32 %v1062, 1e-05
        %v1065 = vadd.f32 %v1063, 1e-05
        %v1066 = vrsqrt.pop %v1064
        %v1067 = vmul.f32 %v1066, %v1064
        %v1068 = vmul.f32 %v1067, %v1066
        %v1069 = vmul.f32 0.5, %v1068
        %v1070 = vsub.f32 1.5, %v1069
        %v1071 = vmul.f32 %v1066, %v1070
        %vm1072 = vweird.f32 %v1064
        %vm1073 = vweird.f32 %v1066
        %vm1074 = vmor %vm1072, %vm1073
        %v1075 = vsel %vm1074, %v1066, %v1071
        %v1076 = vrsqrt.pop %v1065
        %v1077 = vmul.f32 %v1076, %v1065
        %v1078 = vmul.f32 %v1077, %v1076
        %v1079 = vmul.f32 0.5, %v1078
        %v1080 = vsub.f32 1.5, %v1079
        %v1081 = vmul.f32 %v1076, %v1080
        %vm1082 = vweird.f32 %v1065
        %vm1083 = vweird.f32 %v1076
        %vm1084 = vmor %vm1082, %vm1083
        %v1085 = vsel %vm1084, %v1076, %v1081
        %v1086 = vmul.f32 %v1052, %v1075
        %v1087 = vmul.f32 %v1053, %v1085
        %v1089 = vperm.slane %v1042, 0
        %v1091 = vmul.f32 %v1086, %v1089
        %v1092 = vmul.f32 %v1087, %v1089
        %v1094 = vperm.slane %v1043, 0
        %v1096 = vadd.f32 %v1091, %v1094
        %v1097 = vadd.f32 %v1092, %v1094
        %1098 = vst.msk [vmem:[%s490] sm:$0xff] %vm515, %v1096
        %1099 = vst.msk [vmem:[%s490 + $0x8] sm:$0xff] %vm515, %v1097
        %p1100 = scmp.lt.s32.totalorder %s26, 1
        %s1101 = scalar_select %p1100, %s26, 1
        %s1102 = smul.addr %s1101, 2
        %s1103 = smul.addr %s1102, 8
        %s1104 = scalar_lea.vmem %s13, %s1103
        // Predicated region
        $region85: #{transformer_forward.6} parent=71 // pred_check
          %p1105 = pneg %p322
        $region86: #{transformer_forward.6} parent=71 // pred_check_branch
          %1107 = sbr.rel (%p1105) target = $region88
        $region87: #{transformer_forward.6} parent=71 // pred_region
          _
        $region88: #{transformer_forward.6} parent=71 // pred_fallthru
          _
      $region72: #{transformer_forward.6} parent=5 // pred_fallthru
        _
      %p1108 = scmp.le.s32.totalorder 2, %s21
      // Predicated region
      $region89: #{transformer_forward.6} parent=5 // pred_check
        %p1109 = pneg %p1108
      $region90: #{transformer_forward.6} parent=5 // pred_check_branch
        %1111 = sbr.rel (%p1109) target = $region92
      $region91: #{transformer_forward.6} parent=5 // pred_region
        %s1112 = ssub.s32 %s21, 2
        // Predicated region
        $region93: #{transformer_forward.6} parent=91 // pred_check
          %p1113 = pneg %p328
        $region94: #{transformer_forward.6} parent=91 // pred_check_branch
          %1115 = sbr.rel (%p1113) target = $region96
        $region95: #{transformer_forward.6} parent=91 // pred_region
          %p1116 = scmp.lt.s32.totalorder %s27, 1
          %s1117 = scalar_select %p1116, %s27, 1
          %s1118 = smul.addr %s1117, 2
          %s1119 = smul.addr %s1118, 8
          %s1120 = scalar_lea.vmem %s13, %s1119
        $region96: #{transformer_forward.6} parent=91 // pred_fallthru
          _
      $region92: #{transformer_forward.6} parent=5 // pred_fallthru
        _
    $region6: #{transformer_forward.6} parent=1 // loop_footer
      %s25 = sadd.s32 1, %s21
    $region7: #{transformer_forward.6} parent=1 // loop_footer_branch
      %20 = sbr.rel target = $region3
    $region8: #{transformer_forward.6} parent=1 // loop_exit
      _
    %1121 = vsyncpa [#allocation3], 1
    %s1122 = scalar_lea.sflag [#allocation3], 1
    %1123 = vsyncpa %s1122, 1
    %1124 = vsyncpa [#allocation5], 1

// kernel: transformer_forward.5
$region0: #{transformer_forward.5}
  #allocation0 [shape = 'u32[]', space=smem, size = 0x4, offset = 0x4, fixed_abs, tag = 'smem constant byte address 0x4 - core index']
  #allocation1 [shape = 'u32[72,128]{1,0:T(1,128)}', space=vmem, size = 0x9000, scoped, tag = 'internal scratch']
  %s0 = inlined_call_operand.vmem [shape: f32[2,16,32], index: 0, kind: input, shape index: {}]
  %s1 = inlined_call_operand.vmem [shape: bf16[32,96], index: 1, kind: input, shape index: {}]
  %s2 = inlined_call_operand.vmem [shape: f32[1,96], index: 2, kind: input, shape index: {}]
  %s3 = inlined_call_operand.vmem [shape: bf16[32,32], index: 3, kind: input, shape index: {}]
  %s4 = inlined_call_operand.vmem [shape: f32[1,32], index: 4, kind: input, shape index: {}]
  %s5 = inlined_call_operand.vmem [shape: f32[1,32], index: 5, kind: input, shape index: {}]
  %s6 = inlined_call_operand.vmem [shape: f32[1,32], index: 6, kind: input, shape index: {}]
  %s7 = inlined_call_operand.hbm [shape: bf16[32,64], index: 7, kind: input, shape index: {}]
  %s8 = inlined_call_operand.vmem [shape: f32[1,64], index: 8, kind: input, shape index: {}]
  %s9 = inlined_call_operand.vmem [shape: bf16[64,32], index: 9, kind: input, shape index: {}]
  %s10 = inlined_call_operand.vmem [shape: f32[1,32], index: 10, kind: input, shape index: {}]
  %s11 = inlined_call_operand.vmem [shape: f32[1,32], index: 11, kind: input, shape index: {}]
  %s12 = inlined_call_operand.vmem [shape: f32[1,32], index: 12, kind: input, shape index: {}]
  %s13 = inlined_call_operand.vmem [shape: f32[2,16,32], index: 13, kind: output, shape index: {}]
  %s14 = sld [smem:[#allocation0]]
  $region89: #{transformer_forward.5} parent=0
    _
  %s16 = ssub.s32 1, %s14
  %s17 = scalar_select 0, %s16, %s14
  $region1: #{transformer_forward.5} parent=0
    #allocation2 [shape = 'u8[8192]{0}', space=vmem, size = 0x2000, scoped, tag = 'input window, operand 7, single buffered']
    #allocation3 [shape = 's32[2]{0}', space=sflag, size = 0x8, scoped, tag = 'scoped memory for transformer_forward.5']
    %18 = vsyncpa [#allocation3], 0
    loop: start=0, step=1, limit=4
    $region2: #{transformer_forward.5} parent=1 // loop_pre_header
      _
    $region3: #{transformer_forward.5} parent=1 // loop_header
      %s20 = sphi 0, %s24
      %p21 = scmp.ge.s32.totalorder %s20, 4
      %s30 = sphi 0, %s32
      %s33 = sphi 0, %s30
      %s34 = sphi 0, %s33
      %s50 = sphi 0, %s34
      %s54 = sphi 0, %s54
      %s56 = sphi 0, %s54
      %s57 = sphi 0, %s56
      %s71 = sphi 0, %s57
      %s75 = sphi 0, %s75
      %s77 = sphi 0, %s75
      %s78 = sphi 0, %s77
      %s92 = sphi 0, %s78
      %s96 = sphi 0, %s96
      %s98 = sphi 0, %s96
      %s99 = sphi 0, %s98
      %s113 = sphi 0, %s99
      %s117 = sphi 0, %s117
      %s119 = sphi 0, %s117
      %s120 = sphi 0, %s119
      %s134 = sphi 0, %s120
      %s138 = sphi 0, %s138
      %s140 = sphi 0, %s138
      %s141 = sphi 0, %s140
      %s155 = sphi 0, %s141
      %s159 = sphi 0, %s159
      %s161 = sphi 0, %s159
      %s162 = sphi 0, %s161
      %s176 = sphi 0, %s162
      %s180 = sphi 0, %s180
      %s182 = sphi 0, %s180
      %s183 = sphi 0, %s182
      %s197 = sphi 0, %s183
      %s201 = sphi 0, %s201
      %s203 = sphi 0, %s201
      %s204 = sphi 0, %s203
      %s218 = sphi 0, %s204
      %s222 = sphi 0, %s222
      %s224 = sphi 0, %s222
      %s225 = sphi 0, %s224
      %s239 = sphi 0, %s225
      %s243 = sphi 0, %s243
      %s245 = sphi 0, %s243
      %s246 = sphi 0, %s245
      %s260 = sphi 0, %s246
      %s264 = sphi 0, %s264
      %s266 = sphi 0, %s264
      %s267 = sphi 0, %s266
      %s281 = sphi 0, %s267
      %s285 = sphi 0, %s285
      %s287 = sphi 0, %s285
      %s288 = sphi 0, %s287
      %s302 = sphi 0, %s288
      %s308 = sphi 0, %s310
      %s311 = sphi 0, %s308
      %s312 = sphi 0, %s311
      %s328 = sphi 0, %s312
    $region4: #{transformer_forward.5} parent=1 // loop_header_branch
      %23 = sbr.rel (%p21) target = $region8
    $region5: #{transformer_forward.5} parent=1 // loop_body
      %s25 = ssub.s32 %s20, 1
      %s26 = ssub.s32 %s20, 2
      %s27 = sadd.s32 %s20, 1
      %s28 = ssub.s32 %s20, %s27
      %p29 = scmp.eq.s32.totalorder %s28, 0
      %s31 = sadd.s32 %s30, 1
      %s32 = scalar_select %p29, %s30, %s31
      %p35 = pneg %p29
      %p36 = scmp.eq.s32.totalorder %s20, 1
      %p37 = por %p35, %p36
      %p38 = scmp.ne.s32.totalorder %s30, %s33
      %p39 = scmp.eq.s32.totalorder %s20, 0
      %p40 = por %p38, %p39
      %p41 = scmp.ne.s32.totalorder %s30, %s33
      %p42 = scmp.eq.s32.totalorder %s25, 1
      %p43 = por %p41, %p42
      %p44 = scmp.ne.s32.totalorder %s33, %s34
      %p45 = scmp.eq.s32.totalorder %s25, 0
      %p46 = por %p44, %p45
      %p47 = scmp.ne.s32.totalorder %s33, %s34
      %p48 = scmp.eq.s32.totalorder %s26, 1
      %p49 = por %p47, %p48
      %p51 = scmp.ne.s32.totalorder %s34, %s50
      %p52 = scmp.eq.s32.totalorder %s26, 0
      %p53 = por %p51, %p52
      %s55 = sadd.s32 %s54, 1
      %p58 = scmp.eq.s32.totalorder %s20, 1
      %p59 = scmp.ne.s32.totalorder %s54, %s56
      %p60 = scmp.eq.s32.totalorder %s20, 0
      %p61 = por %p59, %p60
      %p62 = scmp.ne.s32.totalorder %s54, %s56
      %p63 = scmp.eq.s32.totalorder %s25, 1
      %p64 = por %p62, %p63
      %p65 = scmp.ne.s32.totalorder %s56, %s57
      %p66 = scmp.eq.s32.totalorder %s25, 0
      %p67 = por %p65, %p66
      %p68 = scmp.ne.s32.totalorder %s56, %s57
      %p69 = scmp.eq.s32.totalorder %s26, 1
      %p70 = por %p68, %p69
      %p72 = scmp.ne.s32.totalorder %s57, %s71
      %p73 = scmp.eq.s32.totalorder %s26, 0
      %p74 = por %p72, %p73
      %s76 = sadd.s32 %s75, 1
      %p79 = scmp.eq.s32.totalorder %s20, 1
      %p80 = scmp.ne.s32.totalorder %s75, %s77
      %p81 = scmp.eq.s32.totalorder %s20, 0
      %p82 = por %p80, %p81
      %p83 = scmp.ne.s32.totalorder %s75, %s77
      %p84 = scmp.eq.s32.totalorder %s25, 1
      %p85 = por %p83, %p84
      %p86 = scmp.ne.s32.totalorder %s77, %s78
      %p87 = scmp.eq.s32.totalorder %s25, 0
      %p88 = por %p86, %p87
      %p89 = scmp.ne.s32.totalorder %s77, %s78
      %p90 = scmp.eq.s32.totalorder %s26, 1
      %p91 = por %p89, %p90
      %p93 = scmp.ne.s32.totalorder %s78, %s92
      %p94 = scmp.eq.s32.totalorder %s26, 0
      %p95 = por %p93, %p94
      %s97 = sadd.s32 %s96, 1
      %p100 = scmp.eq.s32.totalorder %s20, 1
      %p101 = scmp.ne.s32.totalorder %s96, %s98
      %p102 = scmp.eq.s32.totalorder %s20, 0
      %p103 = por %p101, %p102
      %p104 = scmp.ne.s32.totalorder %s96, %s98
      %p105 = scmp.eq.s32.totalorder %s25, 1
      %p106 = por %p104, %p105
      %p107 = scmp.ne.s32.totalorder %s98, %s99
      %p108 = scmp.eq.s32.totalorder %s25, 0
      %p109 = por %p107, %p108
      %p110 = scmp.ne.s32.totalorder %s98, %s99
      %p111 = scmp.eq.s32.totalorder %s26, 1
      %p112 = por %p110, %p111
      %p114 = scmp.ne.s32.totalorder %s99, %s113
      %p115 = scmp.eq.s32.totalorder %s26, 0
      %p116 = por %p114, %p115
      %s118 = sadd.s32 %s117, 1
      %p121 = scmp.eq.s32.totalorder %s20, 1
      %p122 = scmp.ne.s32.totalorder %s117, %s119
      %p123 = scmp.eq.s32.totalorder %s20, 0
      %p124 = por %p122, %p123
      %p125 = scmp.ne.s32.totalorder %s117, %s119
      %p126 = scmp.eq.s32.totalorder %s25, 1
      %p127 = por %p125, %p126
      %p128 = scmp.ne.s32.totalorder %s119, %s120
      %p129 = scmp.eq.s32.totalorder %s25, 0
      %p130 = por %p128, %p129
      %p131 = scmp.ne.s32.totalorder %s119, %s120
      %p132 = scmp.eq.s32.totalorder %s26, 1
      %p133 = por %p131, %p132
      %p135 = scmp.ne.s32.totalorder %s120, %s134
      %p136 = scmp.eq.s32.totalorder %s26, 0
      %p137 = por %p135, %p136
      %s139 = sadd.s32 %s138, 1
      %p142 = scmp.eq.s32.totalorder %s20, 1
      %p143 = scmp.ne.s32.totalorder %s138, %s140
      %p144 = scmp.eq.s32.totalorder %s20, 0
      %p145 = por %p143, %p144
      %p146 = scmp.ne.s32.totalorder %s138, %s140
      %p147 = scmp.eq.s32.totalorder %s25, 1
      %p148 = por %p146, %p147
      %p149 = scmp.ne.s32.totalorder %s140, %s141
      %p150 = scmp.eq.s32.totalorder %s25, 0
      %p151 = por %p149, %p150
      %p152 = scmp.ne.s32.totalorder %s140, %s141
      %p153 = scmp.eq.s32.totalorder %s26, 1
      %p154 = por %p152, %p153
      %p156 = scmp.ne.s32.totalorder %s141, %s155
      %p157 = scmp.eq.s32.totalorder %s26, 0
      %p158 = por %p156, %p157
      %s160 = sadd.s32 %s159, 1
      %p163 = scmp.eq.s32.totalorder %s20, 1
      %p164 = scmp.ne.s32.totalorder %s159, %s161
      %p165 = scmp.eq.s32.totalorder %s20, 0
      %p166 = por %p164, %p165
      %p167 = scmp.ne.s32.totalorder %s159, %s161
      %p168 = scmp.eq.s32.totalorder %s25, 1
      %p169 = por %p167, %p168
      %p170 = scmp.ne.s32.totalorder %s161, %s162
      %p171 = scmp.eq.s32.totalorder %s25, 0
      %p172 = por %p170, %p171
      %p173 = scmp.ne.s32.totalorder %s161, %s162
      %p174 = scmp.eq.s32.totalorder %s26, 1
      %p175 = por %p173, %p174
      %p177 = scmp.ne.s32.totalorder %s162, %s176
      %p178 = scmp.eq.s32.totalorder %s26, 0
      %p179 = por %p177, %p178
      %s181 = sadd.s32 %s180, 1
      %p184 = scmp.eq.s32.totalorder %s20, 1
      %p185 = scmp.ne.s32.totalorder %s180, %s182
      %p186 = scmp.eq.s32.totalorder %s20, 0
      %p187 = por %p185, %p186
      %p188 = scmp.ne.s32.totalorder %s180, %s182
      %p189 = scmp.eq.s32.totalorder %s25, 1
      %p190 = por %p188, %p189
      %p191 = scmp.ne.s32.totalorder %s182, %s183
      %p192 = scmp.eq.s32.totalorder %s25, 0
      %p193 = por %p191, %p192
      %p194 = scmp.ne.s32.totalorder %s182, %s183
      %p195 = scmp.eq.s32.totalorder %s26, 1
      %p196 = por %p194, %p195
      %p198 = scmp.ne.s32.totalorder %s183, %s197
      %p199 = scmp.eq.s32.totalorder %s26, 0
      %p200 = por %p198, %p199
      %s202 = sadd.s32 %s201, 1
      %p205 = scmp.eq.s32.totalorder %s20, 1
      %p206 = scmp.ne.s32.totalorder %s201, %s203
      %p207 = scmp.eq.s32.totalorder %s20, 0
      %p208 = por %p206, %p207
      %p209 = scmp.ne.s32.totalorder %s201, %s203
      %p210 = scmp.eq.s32.totalorder %s25, 1
      %p211 = por %p209, %p210
      %p212 = scmp.ne.s32.totalorder %s203, %s204
      %p213 = scmp.eq.s32.totalorder %s25, 0
      %p214 = por %p212, %p213
      %p215 = scmp.ne.s32.totalorder %s203, %s204
      %p216 = scmp.eq.s32.totalorder %s26, 1
      %p217 = por %p215, %p216
      %p219 = scmp.ne.s32.totalorder %s204, %s218
      %p220 = scmp.eq.s32.totalorder %s26, 0
      %p221 = por %p219, %p220
      %s223 = sadd.s32 %s222, 1
      %p226 = scmp.eq.s32.totalorder %s20, 1
      %p227 = scmp.ne.s32.totalorder %s222, %s224
      %p228 = scmp.eq.s32.totalorder %s20, 0
      %p229 = por %p227, %p228
      %p230 = scmp.ne.s32.totalorder %s222, %s224
      %p231 = scmp.eq.s32.totalorder %s25, 1
      %p232 = por %p230, %p231
      %p233 = scmp.ne.s32.totalorder %s224, %s225
      %p234 = scmp.eq.s32.totalorder %s25, 0
      %p235 = por %p233, %p234
      %p236 = scmp.ne.s32.totalorder %s224, %s225
      %p237 = scmp.eq.s32.totalorder %s26, 1
      %p238 = por %p236, %p237
      %p240 = scmp.ne.s32.totalorder %s225, %s239
      %p241 = scmp.eq.s32.totalorder %s26, 0
      %p242 = por %p240, %p241
      %s244 = sadd.s32 %s243, 1
      %p247 = scmp.eq.s32.totalorder %s20, 1
      %p248 = scmp.ne.s32.totalorder %s243, %s245
      %p249 = scmp.eq.s32.totalorder %s20, 0
      %p250 = por %p248, %p249
      %p251 = scmp.ne.s32.totalorder %s243, %s245
      %p252 = scmp.eq.s32.totalorder %s25, 1
      %p253 = por %p251, %p252
      %p254 = scmp.ne.s32.totalorder %s245, %s246
      %p255 = scmp.eq.s32.totalorder %s25, 0
      %p256 = por %p254, %p255
      %p257 = scmp.ne.s32.totalorder %s245, %s246
      %p258 = scmp.eq.s32.totalorder %s26, 1
      %p259 = por %p257, %p258
      %p261 = scmp.ne.s32.totalorder %s246, %s260
      %p262 = scmp.eq.s32.totalorder %s26, 0
      %p263 = por %p261, %p262
      %s265 = sadd.s32 %s264, 1
      %p268 = scmp.eq.s32.totalorder %s20, 1
      %p269 = scmp.ne.s32.totalorder %s264, %s266
      %p270 = scmp.eq.s32.totalorder %s20, 0
      %p271 = por %p269, %p270
      %p272 = scmp.ne.s32.totalorder %s264, %s266
      %p273 = scmp.eq.s32.totalorder %s25, 1
      %p274 = por %p272, %p273
      %p275 = scmp.ne.s32.totalorder %s266, %s267
      %p276 = scmp.eq.s32.totalorder %s25, 0
      %p277 = por %p275, %p276
      %p278 = scmp.ne.s32.totalorder %s266, %s267
      %p279 = scmp.eq.s32.totalorder %s26, 1
      %p280 = por %p278, %p279
      %p282 = scmp.ne.s32.totalorder %s267, %s281
      %p283 = scmp.eq.s32.totalorder %s26, 0
      %p284 = por %p282, %p283
      %s286 = sadd.s32 %s285, 1
      %p289 = scmp.eq.s32.totalorder %s20, 1
      %p290 = scmp.ne.s32.totalorder %s285, %s287
      %p291 = scmp.eq.s32.totalorder %s20, 0
      %p292 = por %p290, %p291
      %p293 = scmp.ne.s32.totalorder %s285, %s287
      %p294 = scmp.eq.s32.totalorder %s25, 1
      %p295 = por %p293, %p294
      %p296 = scmp.ne.s32.totalorder %s287, %s288
      %p297 = scmp.eq.s32.totalorder %s25, 0
      %p298 = por %p296, %p297
      %p299 = scmp.ne.s32.totalorder %s287, %s288
      %p300 = scmp.eq.s32.totalorder %s26, 1
      %p301 = por %p299, %p300
      %p303 = scmp.ne.s32.totalorder %s288, %s302
      %p304 = scmp.eq.s32.totalorder %s26, 0
      %p305 = por %p303, %p304
      %s306 = ssub.s32 %s20, %s27
      %p307 = scmp.eq.s32.totalorder %s306, 0
      %s309 = sadd.s32 %s308, 1
      %s310 = scalar_select %p307, %s308, %s309
      %p313 = pneg %p307
      %p314 = scmp.eq.s32.totalorder %s20, 1
      %p315 = por %p313, %p314
      %p316 = scmp.ne.s32.totalorder %s308, %s311
      %p317 = scmp.eq.s32.totalorder %s20, 0
      %p318 = por %p316, %p317
      %p319 = scmp.ne.s32.totalorder %s308, %s311
      %p320 = scmp.eq.s32.totalorder %s25, 1
      %p321 = por %p319, %p320
      %p322 = scmp.ne.s32.totalorder %s311, %s312
      %p323 = scmp.eq.s32.totalorder %s25, 0
      %p324 = por %p322, %p323
      %p325 = scmp.ne.s32.totalorder %s311, %s312
      %p326 = scmp.eq.s32.totalorder %s26, 1
      %p327 = por %p325, %p326
      %p329 = scmp.ne.s32.totalorder %s312, %s328
      %p330 = scmp.eq.s32.totalorder %s26, 0
      %p331 = por %p329, %p330
      %p332 = scmp.le.s32.totalorder 1, %s20
      %p333 = scmp.lt.s32.totalorder %s20, 3
      %p334 = pnand %p332, %p333
      %p335 = pneg %p334
      // Predicated region
      $region9: #{transformer_forward.5} parent=5 // pred_check
        _
      $region10: #{transformer_forward.5} parent=5 // pred_check_branch
        %337 = sbr.rel (%p334) target = $region12
      $region11: #{transformer_forward.5} parent=5 // pred_region
        %s338 = ssub.s32 %s20, 1
        // Predicated region
        $region13: #{transformer_forward.5} parent=11 // pred_check
          %p339 = pneg %p67
        $region14: #{transformer_forward.5} parent=11 // pred_check_branch
          %341 = sbr.rel (%p339) target = $region16
        $region15: #{transformer_forward.5} parent=11 // pred_region
          _
        $region16: #{transformer_forward.5} parent=11 // pred_fallthru
          _
        // Predicated region
        $region17: #{transformer_forward.5} parent=11 // pred_check
          %p342 = pneg %p88
        $region18: #{transformer_forward.5} parent=11 // pred_check_branch
          %344 = sbr.rel (%p342) target = $region20
        $region19: #{transformer_forward.5} parent=11 // pred_region
          _
        $region20: #{transformer_forward.5} parent=11 // pred_fallthru
          _
        // Predicated region
        $region21: #{transformer_forward.5} parent=11 // pred_check
          %p345 = pneg %p109
        $region22: #{transformer_forward.5} parent=11 // pred_check_branch
          %347 = sbr.rel (%p345) target = $region24
        $region23: #{transformer_forward.5} parent=11 // pred_region
          _
        $region24: #{transformer_forward.5} parent=11 // pred_fallthru
          _
        // Predicated region
        $region25: #{transformer_forward.5} parent=11 // pred_check
          %p348 = pneg %p130
        $region26: #{transformer_forward.5} parent=11 // pred_check_branch
          %350 = sbr.rel (%p348) target = $region28
        $region27: #{transformer_forward.5} parent=11 // pred_region
          _
        $region28: #{transformer_forward.5} parent=11 // pred_fallthru
          _
        // Predicated region
        $region29: #{transformer_forward.5} parent=11 // pred_check
          %p351 = pneg %p151
        $region30: #{transformer_forward.5} parent=11 // pred_check_branch
          %353 = sbr.rel (%p351) target = $region32
        $region31: #{transformer_forward.5} parent=11 // pred_region
          _
        $region32: #{transformer_forward.5} parent=11 // pred_fallthru
          _
        // Predicated region
        $region33: #{transformer_forward.5} parent=11 // pred_check
          %p354 = pneg %p172
        $region34: #{transformer_forward.5} parent=11 // pred_check_branch
          %356 = sbr.rel (%p354) target = $region36
        $region35: #{transformer_forward.5} parent=11 // pred_region
          _
        $region36: #{transformer_forward.5} parent=11 // pred_fallthru
          _
        // Predicated region
        $region37: #{transformer_forward.5} parent=11 // pred_check
          %p357 = pneg %p193
        $region38: #{transformer_forward.5} parent=11 // pred_check_branch
          %359 = sbr.rel (%p357) target = $region40
        $region39: #{transformer_forward.5} parent=11 // pred_region
          %361 = vsyncadd [#allocation3], 0
          %s362 = sshll.u32 %s7, 4
          %s363 = int_to_ptr.hbm [resolvable:$true] %s362
          %s364 = sshll.u32 [#allocation2], 4
          %s365 = int_to_ptr.vmem [resolvable:$true] %s364
          %370 = dma.hbm_to_vmem [thread:$0]  %s363, 256, %s365, [#allocation3], 64, 64, 4
        $region40: #{transformer_forward.5} parent=11 // pred_fallthru
          _
        // Predicated region
        $region41: #{transformer_forward.5} parent=11 // pred_check
          %p371 = pneg %p214
        $region42: #{transformer_forward.5} parent=11 // pred_check_branch
          %373 = sbr.rel (%p371) target = $region44
        $region43: #{transformer_forward.5} parent=11 // pred_region
          _
        $region44: #{transformer_forward.5} parent=11 // pred_fallthru
          _
        // Predicated region
        $region45: #{transformer_forward.5} parent=11 // pred_check
          %p374 = pneg %p235
        $region46: #{transformer_forward.5} parent=11 // pred_check_branch
          %376 = sbr.rel (%p374) target = $region48
        $region47: #{transformer_forward.5} parent=11 // pred_region
          _
        $region48: #{transformer_forward.5} parent=11 // pred_fallthru
          _
        // Predicated region
        $region49: #{transformer_forward.5} parent=11 // pred_check
          %p377 = pneg %p256
        $region50: #{transformer_forward.5} parent=11 // pred_check_branch
          %379 = sbr.rel (%p377) target = $region52
        $region51: #{transformer_forward.5} parent=11 // pred_region
          _
        $region52: #{transformer_forward.5} parent=11 // pred_fallthru
          _
        // Predicated region
        $region53: #{transformer_forward.5} parent=11 // pred_check
          %p380 = pneg %p277
        $region54: #{transformer_forward.5} parent=11 // pred_check_branch
          %382 = sbr.rel (%p380) target = $region56
        $region55: #{transformer_forward.5} parent=11 // pred_region
          _
        $region56: #{transformer_forward.5} parent=11 // pred_fallthru
          _
        // Predicated region
        $region57: #{transformer_forward.5} parent=11 // pred_check
          %p383 = pneg %p298
        $region58: #{transformer_forward.5} parent=11 // pred_check_branch
          %385 = sbr.rel (%p383) target = $region60
        $region59: #{transformer_forward.5} parent=11 // pred_region
          _
        $region60: #{transformer_forward.5} parent=11 // pred_fallthru
          _
      $region12: #{transformer_forward.5} parent=5 // pred_fallthru
        _
      %p386 = scmp.lt.s32.totalorder %s20, 2
      // Predicated region
      $region61: #{transformer_forward.5} parent=5 // pred_check
        %p387 = pneg %p386
      $region62: #{transformer_forward.5} parent=5 // pred_check_branch
        %389 = sbr.rel (%p387) target = $region64
      $region63: #{transformer_forward.5} parent=5 // pred_region
        // Predicated region
        $region65: #{transformer_forward.5} parent=63 // pred_check
          %p390 = pneg %p40
        $region66: #{transformer_forward.5} parent=63 // pred_check_branch
          %392 = sbr.rel (%p390) target = $region68
        $region67: #{transformer_forward.5} parent=63 // pred_region
          %p393 = scmp.lt.s32.totalorder %s20, 1
          %s394 = scalar_select %p393, %s20, 1
          %s395 = smul.addr %s394, 2
          %s396 = smul.addr %s395, 8
          %s397 = scalar_lea.vmem %s0, %s396
        $region68: #{transformer_forward.5} parent=63 // pred_fallthru
          _
      $region64: #{transformer_forward.5} parent=5 // pred_fallthru
        _
      %p398 = scmp.le.s32.totalorder 1, %s20
      %p399 = scmp.lt.s32.totalorder %s20, 3
      %p400 = pnand %p398, %p399
      %p401 = pneg %p400
      // Predicated region
      $region69: #{transformer_forward.5} parent=5 // pred_check
        _
      $region70: #{transformer_forward.5} parent=5 // pred_check_branch
        %403 = sbr.rel (%p400) target = $region72
      $region71: #{transformer_forward.5} parent=5 // pred_region
        %s404 = ssub.s32 %s20, 1
        // Predicated region
        $region73: #{transformer_forward.5} parent=71 // pred_check
          %p405 = pneg %p193
        $region74: #{transformer_forward.5} parent=71 // pred_check_branch
          %407 = sbr.rel (%p405) target = $region76
        $region75: #{transformer_forward.5} parent=71 // pred_region
          %409 = dma.done [#allocation3], 256
        $region76: #{transformer_forward.5} parent=71 // pred_fallthru
          _
        %p410 = scmp.lt.s32.totalorder %s25, 1
        %s411 = scalar_select %p410, %s25, 1
        %s412 = smul.addr %s411, 2
        %s413 = smul.addr %s412, 8
        %s414 = scalar_lea.vmem %s0, %s413
        %p415 = pneg %p46
        %p416 = pneg %p43
        %p417 = pneg %p67
        %p418 = pneg %p64
        %p419 = pneg %p88
        %p420 = pneg %p85
        %p421 = pneg %p109
        %p422 = pneg %p106
        %p423 = pneg %p130
        %p424 = pneg %p127
        %p425 = pneg %p151
        %p426 = pneg %p148
        %p427 = pneg %p172
        %p428 = pneg %p169
        %p429 = pneg %p193
        %p430 = pneg %p190
        %p431 = pneg %p214
        %p432 = pneg %p211
        %p433 = pneg %p235
        %p434 = pneg %p232
        %p435 = pneg %p256
        %p436 = pneg %p253
        %p437 = pneg %p277
        %p438 = pneg %p274
        %p439 = pneg %p298
        %p440 = pneg %p295
        %p441 = pneg %p324
        %p442 = pneg %p321
        %p443 = scmp.lt.s32.totalorder %s25, 1
        %s444 = scalar_select %p443, %s25, 1
        %s445 = smul.addr %s444, 2
        %s446 = smul.addr %s445, 8
        %s447 = scalar_lea.vmem %s13, %s446
        %p448 = scmp.lt.s32.totalorder %s25, 1
        %s449 = scalar_select %p448, %s25, 1
        %s450 = smul.addr %s449, 2
        %s451 = smul.addr %s450, 8
        %s452 = scalar_lea.vmem %s0, %s451
        %p453 = scmp.lt.s32.totalorder %s25, 1
        %s454 = scalar_select %p453, %s25, 1
        %s455 = smul.addr %s454, 2
        %s456 = smul.addr %s455, 8
        %s457 = scalar_lea.vmem %s13, %s456
        %v459 = vld [vmem:[%s452] sm:$0xff]
        %v460 = vld [vmem:[%s452 + $0x8] sm:$0xff]
        %v461 = vld [vmem:[%s1] sm:$0xf]
        %v462 = vld [vmem:[%s1 + $0x4] sm:$0xf]
        %v463 = vld [vmem:[%s1 + $0x8] sm:$0xf]
        %v464 = vld [vmem:[%s1 + $0xc] sm:$0xf]
        %v465 = vpack.c.bf16 %v460, %v459
        %v466 = vld [vmem:[%s2] sm:$0x1]
        %v468 = vperm.slane %v466, 0
        %v474 = vunpack.c.l.b16 %v461
        %v475 = vunpack.c.l.b16 %v462
        %v476 = vunpack.c.l.b16 %v463
        %v477 = vunpack.c.l.b16 %v464
        %v478 = vpack.c.b16 %v475, %v474
        %v479 = vpack.c.b16 %v477, %v476
        %vm482 = vcmask 261120
        %v484 = vsel %vm482, %v465, 0
        %486 = vmatpush.bf16.msra.mxu0 0
        %487 = vmatpush.bf16.msra.mxu0 0
        %488 = vmatpush.bf16.msra.mxu0 0
        %489 = vmatpush.bf16.msra.mxu0 0
        %490 = vmatpush.bf16.msra.mxu0 0
        %491 = vmatpush.bf16.msra.mxu0 0
        %492 = vmatpush.bf16.msra.mxu0 %v479
        %493 = vmatpush.bf16.msra.mxu0 %v478
        %494 = vmatmul.bf16.gmra.mxu0 %v484
        %v495 = vpop.f32.mrf.mxu0
        %v496 = vadd.f32 %v468, %v495
        %v497 = vpop.f32.mrf.mxu0
        %v498 = vadd.f32 %v468, %v497
        %499 = vdwg.mxu0
        %v500 = vpack.c.bf16 %v498, %v496
        %502 = vrot.lane.b32.xlu0 %v500, 96
        %v503 = vpop.permute.xlu0 %502
        %vm504 = vcmask 64512
        %v506 = vsel %vm504, %v500, 0
        %v509 = vsel %vm504, %v503, 0
        %511 = vmatpush.bf16.xpose.msra.mxu0 0
        %512 = vmatpush.bf16.xpose.msra.mxu0 0
        %513 = vmatpush.bf16.xpose.msra.mxu0 0
        %514 = vmatpush.bf16.xpose.msra.mxu0 0
        %515 = vmatpush.bf16.xpose.msra.mxu0 0
        %516 = vmatpush.bf16.xpose.msra.mxu0 0
        %517 = vmatpush.bf16.xpose.msra.mxu0 0
        %518 = vmatpush.bf16.xpose.msra.mxu0 %v509
        %519 = vmatmul.bf16.gmra.mxu0 %v506
        %v520 = vpop.f32.mrf.mxu0
        %v521 = vadd.f32 0.0, %v520
        %v522 = vpop.f32.mrf.mxu0
        %v523 = vadd.f32 0.0, %v522
        %524 = vdwg.mxu0
        %v525 = vmul.f32 %v521, 0.35355338
        %v526 = vmul.f32 %v523, 0.35355338
        %vm527 = vcmask 130048
        %v528 = vsel %vm527, %v525, -inf
        %529 = vmax.xlane.f32.xlu0 %v528
        %v530 = vpop.xlane.xlu0 %529
        %v531 = vsel %vm527, %v526, -inf
        %532 = vmax.xlane.f32.xlu0 %v531
        %v533 = vpop.xlane.xlu0 %532
        %v534 = vsub.f32 %v525, %v530
        %v535 = vsub.f32 %v526, %v533
        %v536 = vmul.f32 %v534, 1.442695
        %v537 = vpow.pop %v536
        %v538 = vmul.f32 %v535, 1.442695
        %v539 = vpow.pop %v538
        %v540 = vsel %vm527, %v537, 0.0
        %541 = vadd.xlane.f32.xlu0 %v540
        %v542 = vpop.xlane.xlu0 %541
        %v543 = vsel %vm527, %v539, 0.0
        %544 = vadd.xlane.f32.xlu0 %v543
        %v545 = vpop.xlane.xlu0 %544
        %v546 = vrcp.pop %v542
        %v547 = vrcp.pop %v545
        %v548 = vmul.f32 %v537, %v546
        %v549 = vmul.f32 %v539, %v547
        %v550 = vpack.c.bf16 %v549, %v548
        %551 = vrot.lane.b32.xlu0 %v500, 64
        %v552 = vpop.permute.xlu0 %551
        %v555 = vsel %vm527, %v550, 0
        %557 = vmatpush.bf16.msra.mxu0 0
        %558 = vmatpush.bf16.msra.mxu0 0
        %559 = vmatpush.bf16.msra.mxu0 0
        %560 = vmatpush.bf16.msra.mxu0 0
        %561 = vmatpush.bf16.msra.mxu0 0
        %562 = vmatpush.bf16.msra.mxu0 0
        %563 = vmatpush.bf16.msra.mxu0 0
        %564 = vmatpush.bf16.msra.mxu0 %v552
        %565 = vmatmul.bf16.gmra.mxu0 %v555
        %v566 = vpop.f32.mrf.mxu0
        %v567 = vadd.f32 0.0, %v566
        %v568 = vpop.f32.mrf.mxu0
        %v569 = vadd.f32 0.0, %v568
        %570 = vdwg.mxu0
        %571 = vrot.lane.b32.xlu0 %v500, 120
        %v572 = vpop.permute.xlu0 %571
        %573 = vrot.lane.b32.xlu0 %v500, 88
        %v574 = vpop.permute.xlu0 %573
        %v576 = vsel %vm504, %v572, 0
        %v579 = vsel %vm504, %v574, 0
        %581 = vmatpush.bf16.xpose.msra.mxu0 0
        %582 = vmatpush.bf16.xpose.msra.mxu0 0
        %583 = vmatpush.bf16.xpose.msra.mxu0 0
        %584 = vmatpush.bf16.xpose.msra.mxu0 0
        %585 = vmatpush.bf16.xpose.msra.mxu0 0
        %586 = vmatpush.bf16.xpose.msra.mxu0 0
        %587 = vmatpush.bf16.xpose.msra.mxu0 0
        %588 = vmatpush.bf16.xpose.msra.mxu0 %v579
        %589 = vmatmul.bf16.gmra.mxu0 %v576
        %v590 = vpop.f32.mrf.mxu0
        %v591 = vadd.f32 0.0, %v590
        %v592 = vpop.f32.mrf.mxu0
        %v593 = vadd.f32 0.0, %v592
        %594 = vdwg.mxu0
        %v595 = vmul.f32 %v591, 0.35355338
        %v596 = vmul.f32 %v593, 0.35355338
        %v597 = vsel %vm527, %v595, -inf
        %598 = vmax.xlane.f32.xlu0 %v597
        %v599 = vpop.xlane.xlu0 %598
        %v600 = vsel %vm527, %v596, -inf
        %601 = vmax.xlane.f32.xlu0 %v600
        %v602 = vpop.xlane.xlu0 %601
        %v603 = vsub.f32 %v595, %v599
        %v604 = vsub.f32 %v596, %v602
        %v605 = vmul.f32 %v603, 1.442695
        %v606 = vpow.pop %v605
        %v607 = vmul.f32 %v604, 1.442695
        %v608 = vpow.pop %v607
        %v609 = vsel %vm527, %v606, 0.0
        %610 = vadd.xlane.f32.xlu0 %v609
        %v611 = vpop.xlane.xlu0 %610
        %v612 = vsel %vm527, %v608, 0.0
        %613 = vadd.xlane.f32.xlu0 %v612
        %v614 = vpop.xlane.xlu0 %613
        %v615 = vrcp.pop %v611
        %v616 = vrcp.pop %v614
        %v617 = vmul.f32 %v606, %v615
        %v618 = vmul.f32 %v608, %v616
        %v619 = vpack.c.bf16 %v618, %v617
        %620 = vrot.lane.b32.xlu0 %v500, 56
        %v621 = vpop.permute.xlu0 %620
        %v624 = vsel %vm527, %v619, 0
        %626 = vmatpush.bf16.msra.mxu0 0
        %627 = vmatpush.bf16.msra.mxu0 0
        %628 = vmatpush.bf16.msra.mxu0 0
        %629 = vmatpush.bf16.msra.mxu0 0
        %630 = vmatpush.bf16.msra.mxu0 0
        %631 = vmatpush.bf16.msra.mxu0 0
        %632 = vmatpush.bf16.msra.mxu0 0
        %633 = vmatpush.bf16.msra.mxu0 %v621
        %634 = vmatmul.bf16.gmra.mxu0 %v624
        %v635 = vpop.f32.mrf.mxu0
        %v636 = vadd.f32 0.0, %v635
        %v637 = vpop.f32.mrf.mxu0
        %v638 = vadd.f32 0.0, %v637
        %639 = vdwg.mxu0
        %640 = vrot.lane.b32.xlu0 %v500, 112
        %v641 = vpop.permute.xlu0 %640
        %642 = vrot.lane.b32.xlu0 %v500, 80
        %v643 = vpop.permute.xlu0 %642
        %v645 = vsel %vm504, %v641, 0
        %v648 = vsel %vm504, %v643, 0
        %650 = vmatpush.bf16.xpose.msra.mxu0 0
        %651 = vmatpush.bf16.xpose.msra.mxu0 0
        %652 = vmatpush.bf16.xpose.msra.mxu0 0
        %653 = vmatpush.bf16.xpose.msra.mxu0 0
        %654 = vmatpush.bf16.xpose.msra.mxu0 0
        %655 = vmatpush.bf16.xpose.msra.mxu0 0
        %656 = vmatpush.bf16.xpose.msra.mxu0 0
        %657 = vmatpush.bf16.xpose.msra.mxu0 %v648
        %658 = vmatmul.bf16.gmra.mxu0 %v645
        %v659 = vpop.f32.mrf.mxu0
        %v660 = vadd.f32 0.0, %v659
        %v661 = vpop.f32.mrf.mxu0
        %v662 = vadd.f32 0.0, %v661
        %663 = vdwg.mxu0
        %v664 = vmul.f32 %v660, 0.35355338
        %v665 = vmul.f32 %v662, 0.35355338
        %v666 = vsel %vm527, %v664, -inf
        %667 = vmax.xlane.f32.xlu0 %v666
        %v668 = vpop.xlane.xlu0 %667
        %v669 = vsel %vm527, %v665, -inf
        %670 = vmax.xlane.f32.xlu0 %v669
        %v671 = vpop.xlane.xlu0 %670
        %v672 = vsub.f32 %v664, %v668
        %v673 = vsub.f32 %v665, %v671
        %v674 = vmul.f32 %v672, 1.442695
        %v675 = vpow.pop %v674
        %v676 = vmul.f32 %v673, 1.442695
        %v677 = vpow.pop %v676
        %v678 = vsel %vm527, %v675, 0.0
        %679 = vadd.xlane.f32.xlu0 %v678
        %v680 = vpop.xlane.xlu0 %679
        %v681 = vsel %vm527, %v677, 0.0
        %682 = vadd.xlane.f32.xlu0 %v681
        %v683 = vpop.xlane.xlu0 %682
        %v684 = vrcp.pop %v680
        %v685 = vrcp.pop %v683
        %v686 = vmul.f32 %v675, %v684
        %v687 = vmul.f32 %v677, %v685
        %v688 = vpack.c.bf16 %v687, %v686
        %689 = vrot.lane.b32.xlu0 %v500, 48
        %v690 = vpop.permute.xlu0 %689
        %v693 = vsel %vm527, %v688, 0
        %695 = vmatpush.bf16.msra.mxu0 0
        %696 = vmatpush.bf16.msra.mxu0 0
        %697 = vmatpush.bf16.msra.mxu0 0
        %698 = vmatpush.bf16.msra.mxu0 0
        %699 = vmatpush.bf16.msra.mxu0 0
        %700 = vmatpush.bf16.msra.mxu0 0
        %701 = vmatpush.bf16.msra.mxu0 0
        %702 = vmatpush.bf16.msra.mxu0 %v690
        %703 = vmatmul.bf16.gmra.mxu0 %v693
        %v704 = vpop.f32.mrf.mxu0
        %v705 = vadd.f32 0.0, %v704
        %v706 = vpop.f32.mrf.mxu0
        %v707 = vadd.f32 0.0, %v706
        %708 = vdwg.mxu0
        %709 = vrot.lane.b32.xlu0 %v500, 104
        %v710 = vpop.permute.xlu0 %709
        %711 = vrot.lane.b32.xlu0 %v500, 72
        %v712 = vpop.permute.xlu0 %711
        %v714 = vsel %vm504, %v710, 0
        %v717 = vsel %vm504, %v712, 0
        %719 = vmatpush.bf16.xpose.msra.mxu0 0
        %720 = vmatpush.bf16.xpose.msra.mxu0 0
        %721 = vmatpush.bf16.xpose.msra.mxu0 0
        %722 = vmatpush.bf16.xpose.msra.mxu0 0
        %723 = vmatpush.bf16.xpose.msra.mxu0 0
        %724 = vmatpush.bf16.xpose.msra.mxu0 0
        %725 = vmatpush.bf16.xpose.msra.mxu0 0
        %726 = vmatpush.bf16.xpose.msra.mxu0 %v717
        %727 = vmatmul.bf16.gmra.mxu0 %v714
        %v728 = vpop.f32.mrf.mxu0
        %v729 = vadd.f32 0.0, %v728
        %v730 = vpop.f32.mrf.mxu0
        %v731 = vadd.f32 0.0, %v730
        %732 = vdwg.mxu0
        %v733 = vmul.f32 %v729, 0.35355338
        %v734 = vmul.f32 %v731, 0.35355338
        %v735 = vsel %vm527, %v733, -inf
        %736 = vmax.xlane.f32.xlu0 %v735
        %v737 = vpop.xlane.xlu0 %736
        %v738 = vsel %vm527, %v734, -inf
        %739 = vmax.xlane.f32.xlu0 %v738
        %v740 = vpop.xlane.xlu0 %739
        %v741 = vsub.f32 %v733, %v737
        %v742 = vsub.f32 %v734, %v740
        %v743 = vmul.f32 %v741, 1.442695
        %v744 = vpow.pop %v743
        %v745 = vmul.f32 %v742, 1.442695
        %v746 = vpow.pop %v745
        %v747 = vsel %vm527, %v744, 0.0
        %748 = vadd.xlane.f32.xlu0 %v747
        %v749 = vpop.xlane.xlu0 %748
        %v750 = vsel %vm527, %v746, 0.0
        %751 = vadd.xlane.f32.xlu0 %v750
        %v752 = vpop.xlane.xlu0 %751
        %v753 = vrcp.pop %v749
        %v754 = vrcp.pop %v752
        %v755 = vmul.f32 %v744, %v753
        %v756 = vmul.f32 %v746, %v754
        %v757 = vpack.c.bf16 %v756, %v755
        %758 = vrot.lane.b32.xlu0 %v500, 40
        %v759 = vpop.permute.xlu0 %758
        %v762 = vsel %vm527, %v757, 0
        %764 = vmatpush.bf16.msra.mxu0 0
        %765 = vmatpush.bf16.msra.mxu0 0
        %766 = vmatpush.bf16.msra.mxu0 0
        %767 = vmatpush.bf16.msra.mxu0 0
        %768 = vmatpush.bf16.msra.mxu0 0
        %769 = vmatpush.bf16.msra.mxu0 0
        %770 = vmatpush.bf16.msra.mxu0 0
        %771 = vmatpush.bf16.msra.mxu0 %v759
        %772 = vmatmul.bf16.gmra.mxu0 %v762
        %v773 = vpop.f32.mrf.mxu0
        %v774 = vadd.f32 0.0, %v773
        %v775 = vpop.f32.mrf.mxu0
        %v776 = vadd.f32 0.0, %v775
        %777 = vdwg.mxu0
        %780 = vrot.lane.b32.xlu0 %v636, 8
        %v781 = vpop.permute.xlu0 %780
        %782 = vrot.lane.b32.xlu0 %v638, 8
        %v783 = vpop.permute.xlu0 %782
        %788 = vrot.lane.b32.xlu0 %v705, 16
        %v789 = vpop.permute.xlu0 %788
        %790 = vrot.lane.b32.xlu0 %v707, 16
        %v791 = vpop.permute.xlu0 %790
        %796 = vrot.lane.b32.xlu0 %v774, 24
        %v797 = vpop.permute.xlu0 %796
        %798 = vrot.lane.b32.xlu0 %v776, 24
        %v799 = vpop.permute.xlu0 %798
        %v802 = vsel %vm504, %v567, %v781
        %v803 = vsel %vm504, %v569, %v783
        %v804 = vsel %vm527, %v802, %v789
        %v805 = vsel %vm527, %v803, %v791
        %vm806 = vcmask 195584
        %v807 = vsel %vm806, %v804, %v797
        %v808 = vsel %vm806, %v805, %v799
        %v809 = vld [vmem:[%s3] sm:$0xf]
        %v810 = vld [vmem:[%s3 + $0x4] sm:$0xf]
        %v811 = vld [vmem:[%s3 + $0x8] sm:$0xf]
        %v812 = vld [vmem:[%s3 + $0xc] sm:$0xf]
        %v813 = vpack.c.bf16 %v808, %v807
        %v814 = vld [vmem:[%s4] sm:$0x1]
        %v816 = vperm.slane %v814, 0
        %v822 = vunpack.c.l.b16 %v809
        %v823 = vunpack.c.l.b16 %v810
        %v824 = vunpack.c.l.b16 %v811
        %v825 = vunpack.c.l.b16 %v812
        %v826 = vpack.c.b16 %v823, %v822
        %v827 = vpack.c.b16 %v825, %v824
        %v831 = vsel %vm482, %v813, 0
        %833 = vmatpush.bf16.msra.mxu0 0
        %834 = vmatpush.bf16.msra.mxu0 0
        %835 = vmatpush.bf16.msra.mxu0 0
        %836 = vmatpush.bf16.msra.mxu0 0
        %837 = vmatpush.bf16.msra.mxu0 0
        %838 = vmatpush.bf16.msra.mxu0 0
        %839 = vmatpush.bf16.msra.mxu0 %v827
        %840 = vmatpush.bf16.msra.mxu0 %v826
        %841 = vmatmul.bf16.gmra.mxu0 %v831
        %v842 = vpop.f32.mrf.mxu0
        %v843 = vadd.f32 %v816, %v842
        %v844 = vpop.f32.mrf.mxu0
        %v845 = vadd.f32 %v816, %v844
        %846 = vdwg.mxu0
        %v847 = vadd.f32 %v843, %v459
        %v848 = vadd.f32 %v845, %v460
        %v849 = vld [vmem:[%s5] sm:$0x1]
        %v850 = vld [vmem:[%s6] sm:$0x1]
        %v851 = vsel %vm482, %v847, 0.0
        %852 = vadd.xlane.f32.xlu0 %v851
        %v853 = vpop.xlane.xlu0 %852
        %v854 = vsel %vm482, %v848, 0.0
        %855 = vadd.xlane.f32.xlu0 %v854
        %v856 = vpop.xlane.xlu0 %855
        %v857 = vrcp.pop 32.0
        %v858 = vmul.f32 32.0, %v857
        %v859 = vsub.f32 1.0, %v858
        %v860 = vmul.f32 %v857, %v859
        %v861 = vadd.f32 %v857, %v860
        %vm862 = vweird.f32 %v857
        %v863 = vsel %vm862, %v857, %v861
        %v864 = vmul.f32 %v853, %v863
        %v865 = vmul.f32 %v856, %v863
        %v866 = vsub.f32 %v847, %v864
        %v867 = vsub.f32 %v848, %v865
        %v868 = vmul.f32 %v866, %v866
        %v869 = vmul.f32 %v867, %v867
        %v870 = vsel %vm482, %v868, 0.0
        %871 = vadd.xlane.f32.xlu0 %v870
        %v872 = vpop.xlane.xlu0 %871
        %v873 = vsel %vm482, %v869, 0.0
        %874 = vadd.xlane.f32.xlu0 %v873
        %v875 = vpop.xlane.xlu0 %874
        %v876 = vmul.f32 %v872, %v863
        %v877 = vmul.f32 %v875, %v863
        %v878 = vadd.f32 %v876, 1e-05
        %v879 = vadd.f32 %v877, 1e-05
        %v880 = vrsqrt.pop %v878
        %v881 = vmul.f32 %v880, %v878
        %v882 = vmul.f32 %v881, %v880
        %v883 = vmul.f32 0.5, %v882
        %v884 = vsub.f32 1.5, %v883
        %v885 = vmul.f32 %v880, %v884
        %vm886 = vweird.f32 %v878
        %vm887 = vweird.f32 %v880
        %vm888 = vmor %vm886, %vm887
        %v889 = vsel %vm888, %v880, %v885
        %v890 = vrsqrt.pop %v879
        %v891 = vmul.f32 %v890, %v879
        %v892 = vmul.f32 %v891, %v890
        %v893 = vmul.f32 0.5, %v892
        %v894 = vsub.f32 1.5, %v893
        %v895 = vmul.f32 %v890, %v894
        %vm896 = vweird.f32 %v879
        %vm897 = vweird.f32 %v890
        %vm898 = vmor %vm896, %vm897
        %v899 = vsel %vm898, %v890, %v895
        %v900 = vmul.f32 %v866, %v889
        %v901 = vmul.f32 %v867, %v899
        %v903 = vperm.slane %v849, 0
        %v905 = vmul.f32 %v900, %v903
        %v906 = vmul.f32 %v901, %v903
        %v908 = vperm.slane %v850, 0
        %v910 = vadd.f32 %v905, %v908
        %v911 = vadd.f32 %v906, %v908
        %v912 = vld [vmem:[#allocation2] sm:$0xf]
        %v913 = vld [vmem:[#allocation2 + $0x4] sm:$0xf]
        %v914 = vld [vmem:[#allocation2 + $0x8] sm:$0xf]
        %v915 = vld [vmem:[#allocation2 + $0xc] sm:$0xf]
        %v916 = vpack.c.bf16 %v911, %v910
        %v917 = vld [vmem:[%s8] sm:$0x1]
        %v919 = vperm.slane %v917, 0
        %v925 = vunpack.c.l.b16 %v912
        %v926 = vunpack.c.l.b16 %v913
        %v927 = vunpack.c.l.b16 %v914
        %v928 = vunpack.c.l.b16 %v915
        %v929 = vpack.c.b16 %v926, %v925
        %v930 = vpack.c.b16 %v928, %v927
        %v934 = vsel %vm482, %v916, 0
        %936 = vmatpush.bf16.msra.mxu0 0
        %937 = vmatpush.bf16.msra.mxu0 0
        %938 = vmatpush.bf16.msra.mxu0 0
        %939 = vmatpush.bf16.msra.mxu0 0
        %940 = vmatpush.bf16.msra.mxu0 0
        %941 = vmatpush.bf16.msra.mxu0 0
        %942 = vmatpush.bf16.msra.mxu0 %v930
        %943 = vmatpush.bf16.msra.mxu0 %v929
        %944 = vmatmul.bf16.gmra.mxu0 %v934
        %v945 = vpop.f32.mrf.mxu0
        %v946 = vadd.f32 %v919, %v945
        %v947 = vpop.f32.mrf.mxu0
        %v948 = vadd.f32 %v919, %v947
        %949 = vdwg.mxu0
        %v950 = vmax.f32 %v946, 0.0
        %v951 = vmax.f32 %v948, 0.0
        %v952 = vld [vmem:[%s9] sm:$0xf]
        %v953 = vld [vmem:[%s9 + $0x4] sm:$0xf]
        %v954 = vld [vmem:[%s9 + $0x8] sm:$0xf]
        %v955 = vld [vmem:[%s9 + $0xc] sm:$0xf]
        %v956 = vld [vmem:[%s9 + $0x10] sm:$0xf]
        %v957 = vld [vmem:[%s9 + $0x14] sm:$0xf]
        %v958 = vld [vmem:[%s9 + $0x18] sm:$0xf]
        %v959 = vld [vmem:[%s9 + $0x1c] sm:$0xf]
        %v960 = vpack.c.bf16 %v951, %v950
        %v961 = vld [vmem:[%s10] sm:$0x1]
        %v963 = vperm.slane %v961, 0
        %v973 = vunpack.c.l.b16 %v952
        %v974 = vunpack.c.l.b16 %v953
        %v975 = vunpack.c.l.b16 %v954
        %v976 = vunpack.c.l.b16 %v955
        %v977 = vunpack.c.l.b16 %v956
        %v978 = vunpack.c.l.b16 %v957
        %v979 = vunpack.c.l.b16 %v958
        %v980 = vunpack.c.l.b16 %v959
        %v981 = vpack.c.b16 %v974, %v973
        %v982 = vpack.c.b16 %v976, %v975
        %v983 = vpack.c.b16 %v978, %v977
        %v984 = vpack.c.b16 %v980, %v979
        %vm989 = vcmask 523264
        %v991 = vsel %vm989, %v960, 0
        %993 = vmatpush.bf16.msra.mxu0 0
        %994 = vmatpush.bf16.msra.mxu0 0
        %995 = vmatpush.bf16.msra.mxu0 0
        %996 = vmatpush.bf16.msra.mxu0 0
        %997 = vmatpush.bf16.msra.mxu0 %v984
        %998 = vmatpush.bf16.msra.mxu0 %v983
        %999 = vmatpush.bf16.msra.mxu0 %v982
        %1000 = vmatpush.bf16.msra.mxu0 %v981
        %1001 = vmatmul.bf16.gmra.mxu0 %v991
        %v1002 = vpop.f32.mrf.mxu0
        %v1003 = vadd.f32 %v963, %v1002
        %v1004 = vpop.f32.mrf.mxu0
        %v1005 = vadd.f32 %v963, %v1004
        %1006 = vdwg.mxu0
        %v1007 = vadd.f32 %v1003, %v910
        %v1008 = vadd.f32 %v1005, %v911
        %v1009 = vld [vmem:[%s11] sm:$0x1]
        %v1010 = vld [vmem:[%s12] sm:$0x1]
        %v1011 = vsel %vm482, %v1007, 0.0
        %1012 = vadd.xlane.f32.xlu0 %v1011
        %v1013 = vpop.xlane.xlu0 %1012
        %v1014 = vsel %vm482, %v1008, 0.0
        %1015 = vadd.xlane.f32.xlu0 %v1014
        %v1016 = vpop.xlane.xlu0 %1015
        %v1017 = vmul.f32 %v1013, %v863
        %v1018 = vmul.f32 %v1016, %v863
        %v1019 = vsub.f32 %v1007, %v1017
        %v1020 = vsub.f32 %v1008, %v1018
        %v1021 = vmul.f32 %v1019, %v1019
        %v1022 = vmul.f32 %v1020, %v1020
        %v1023 = vsel %vm482, %v1021, 0.0
        %1024 = vadd.xlane.f32.xlu0 %v1023
        %v1025 = vpop.xlane.xlu0 %1024
        %v1026 = vsel %vm482, %v1022, 0.0
        %1027 = vadd.xlane.f32.xlu0 %v1026
        %v1028 = vpop.xlane.xlu0 %1027
        %v1029 = vmul.f32 %v1025, %v863
        %v1030 = vmul.f32 %v1028, %v863
        %v1031 = vadd.f32 %v1029, 1e-05
        %v1032 = vadd.f32 %v1030, 1e-05
        %v1033 = vrsqrt.pop %v1031
        %v1034 = vmul.f32 %v1033, %v1031
        %v1035 = vmul.f32 %v1034, %v1033
        %v1036 = vmul.f32 0.5, %v1035
        %v1037 = vsub.f32 1.5, %v1036
        %v1038 = vmul.f32 %v1033, %v1037
        %vm1039 = vweird.f32 %v1031
        %vm1040 = vweird.f32 %v1033
        %vm1041 = vmor %vm1039, %vm1040
        %v1042 = vsel %vm1041, %v1033, %v1038
        %v1043 = vrsqrt.pop %v1032
        %v1044 = vmul.f32 %v1043, %v1032
        %v1045 = vmul.f32 %v1044, %v1043
        %v1046 = vmul.f32 0.5, %v1045
        %v1047 = vsub.f32 1.5, %v1046
        %v1048 = vmul.f32 %v1043, %v1047
        %vm1049 = vweird.f32 %v1032
        %vm1050 = vweird.f32 %v1043
        %vm1051 = vmor %vm1049, %vm1050
        %v1052 = vsel %vm1051, %v1043, %v1048
        %v1053 = vmul.f32 %v1019, %v1042
        %v1054 = vmul.f32 %v1020, %v1052
        %v1056 = vperm.slane %v1009, 0
        %v1058 = vmul.f32 %v1053, %v1056
        %v1059 = vmul.f32 %v1054, %v1056
        %v1061 = vperm.slane %v1010, 0
        %v1063 = vadd.f32 %v1058, %v1061
        %v1064 = vadd.f32 %v1059, %v1061
        %1065 = vst.msk [vmem:[%s457] sm:$0xff] %vm482, %v1063
        %1066 = vst.msk [vmem:[%s457 + $0x8] sm:$0xff] %vm482, %v1064
        %p1067 = scmp.lt.s32.totalorder %s25, 1
        %s1068 = scalar_select %p1067, %s25, 1
        %s1069 = smul.addr %s1068, 2
        %s1070 = smul.addr %s1069, 8
        %s1071 = scalar_lea.vmem %s13, %s1070
        // Predicated region
        $region77: #{transformer_forward.5} parent=71 // pred_check
          %p1072 = pneg %p321
        $region78: #{transformer_forward.5} parent=71 // pred_check_branch
          %1074 = sbr.rel (%p1072) target = $region80
        $region79: #{transformer_forward.5} parent=71 // pred_region
          _
        $region80: #{transformer_forward.5} parent=71 // pred_fallthru
          _
      $region72: #{transformer_forward.5} parent=5 // pred_fallthru
        _
      %p1075 = scmp.le.s32.totalorder 2, %s20
      // Predicated region
      $region81: #{transformer_forward.5} parent=5 // pred_check
        %p1076 = pneg %p1075
      $region82: #{transformer_forward.5} parent=5 // pred_check_branch
        %1078 = sbr.rel (%p1076) target = $region84
      $region83: #{transformer_forward.5} parent=5 // pred_region
        %s1079 = ssub.s32 %s20, 2
        // Predicated region
        $region85: #{transformer_forward.5} parent=83 // pred_check
          %p1080 = pneg %p327
        $region86: #{transformer_forward.5} parent=83 // pred_check_branch
          %1082 = sbr.rel (%p1080) target = $region88
        $region87: #{transformer_forward.5} parent=83 // pred_region
          %p1083 = scmp.lt.s32.totalorder %s26, 1
          %s1084 = scalar_select %p1083, %s26, 1
          %s1085 = smul.addr %s1084, 2
          %s1086 = smul.addr %s1085, 8
          %s1087 = scalar_lea.vmem %s13, %s1086
        $region88: #{transformer_forward.5} parent=83 // pred_fallthru
          _
      $region84: #{transformer_forward.5} parent=5 // pred_fallthru
        _
    $region6: #{transformer_forward.5} parent=1 // loop_footer
      %s24 = sadd.s32 1, %s20
    $region7: #{transformer_forward.5} parent=1 // loop_footer_branch
      %19 = sbr.rel target = $region3
    $region8: #{transformer_forward.5} parent=1 // loop_exit
      _
    %1088 = vsyncpa [#allocation3], 1
    %s1089 = scalar_lea.sflag [#allocation3], 1
    %1090 = vsyncpa %s1089, 1

// kernel: transformer_forward.7
$region0: #{transformer_forward.7}
  #allocation0 [shape = 'u32[]', space=smem, size = 0x4, offset = 0x4, fixed_abs, tag = 'smem constant byte address 0x4 - core index']
  #allocation1 [shape = 'u32[72,128]{1,0:T(1,128)}', space=vmem, size = 0x9000, scoped, tag = 'internal scratch']
  %s0 = inlined_call_operand.vmem [shape: f32[2,8,32], index: 0, kind: input, shape index: {}]
  %s1 = inlined_call_operand.vmem [shape: f32[2,16,32], index: 1, kind: input, shape index: {}]
  %s2 = inlined_call_operand.vmem [shape: f32[2,1,8], index: 2, kind: input, shape index: {}]
  %s3 = inlined_call_operand.vmem [shape: bf16[32,96], index: 3, kind: input, shape index: {}]
  %s4 = inlined_call_operand.vmem [shape: f32[1,96], index: 4, kind: input, shape index: {}]
  %s5 = inlined_call_operand.vmem [shape: bf16[32,32], index: 5, kind: input, shape index: {}]
  %s6 = inlined_call_operand.vmem [shape: f32[1,32], index: 6, kind: input, shape index: {}]
  %s7 = inlined_call_operand.vmem [shape: f32[1,32], index: 7, kind: input, shape index: {}]
  %s8 = inlined_call_operand.vmem [shape: f32[1,32], index: 8, kind: input, shape index: {}]
  %s9 = inlined_call_operand.vmem [shape: bf16[32,32], index: 9, kind: input, shape index: {}]
  %s10 = inlined_call_operand.vmem [shape: f32[1,32], index: 10, kind: input, shape index: {}]
  %s11 = inlined_call_operand.vmem [shape: bf16[32,64], index: 11, kind: input, shape index: {}]
  %s12 = inlined_call_operand.vmem [shape: f32[1,64], index: 12, kind: input, shape index: {}]
  %s13 = inlined_call_operand.vmem [shape: bf16[32,32], index: 13, kind: input, shape index: {}]
  %s14 = inlined_call_operand.vmem [shape: f32[1,32], index: 14, kind: input, shape index: {}]
  %s15 = inlined_call_operand.vmem [shape: f32[1,32], index: 15, kind: input, shape index: {}]
  %s16 = inlined_call_operand.vmem [shape: f32[1,32], index: 16, kind: input, shape index: {}]
  %s17 = inlined_call_operand.vmem [shape: bf16[32,64], index: 17, kind: input, shape index: {}]
  %s18 = inlined_call_operand.vmem [shape: f32[1,64], index: 18, kind: input, shape index: {}]
  %s19 = inlined_call_operand.vmem [shape: bf16[64,32], index: 19, kind: input, shape index: {}]
  %s20 = inlined_call_operand.vmem [shape: f32[1,32], index: 20, kind: input, shape index: {}]
  %s21 = inlined_call_operand.vmem [shape: f32[1,32], index: 21, kind: input, shape index: {}]
  %s22 = inlined_call_operand.vmem [shape: f32[1,32], index: 22, kind: input, shape index: {}]
  %s23 = inlined_call_operand.vmem [shape: f32[2,8,32], index: 23, kind: output, shape index: {0}]
  %s24 = inlined_call_operand.vmem [shape: f32[2,8,16], index: 24, kind: output, shape index: {1}]
  %25 = xla_tuple %s23, %s24
  %s26 = sld [smem:[#allocation0]]
  $region133: #{transformer_forward.7} parent=0
    _
  %s28 = ssub.s32 1, %s26
  %s29 = scalar_select 0, %s28, %s26
  loop: start=0, step=1, limit=4
  $region2: #{transformer_forward.7} parent=0 // loop_pre_header
    _
  $region3: #{transformer_forward.7} parent=0 // loop_header
    %s31 = sphi 0, %s35
    %p32 = scmp.ge.s32.totalorder %s31, 4
    %s41 = sphi 0, %s43
    %s44 = sphi 0, %s41
    %s45 = sphi 0, %s44
    %s61 = sphi 0, %s45
    %s67 = sphi 0, %s69
    %s70 = sphi 0, %s67
    %s71 = sphi 0, %s70
    %s87 = sphi 0, %s71
    %s93 = sphi 0, %s95
    %s96 = sphi 0, %s93
    %s97 = sphi 0, %s96
    %s113 = sphi 0, %s97
    %s117 = sphi 0, %s117
    %s119 = sphi 0, %s117
    %s120 = sphi 0, %s119
    %s134 = sphi 0, %s120
    %s138 = sphi 0, %s138
    %s140 = sphi 0, %s138
    %s141 = sphi 0, %s140
    %s155 = sphi 0, %s141
    %s159 = sphi 0, %s159
    %s161 = sphi 0, %s159
    %s162 = sphi 0, %s161
    %s176 = sphi 0, %s162
    %s180 = sphi 0, %s180
    %s182 = sphi 0, %s180
    %s183 = sphi 0, %s182
    %s197 = sphi 0, %s183
    %s201 = sphi 0, %s201
    %s203 = sphi 0, %s201
    %s204 = sphi 0, %s203
    %s218 = sphi 0, %s204
    %s222 = sphi 0, %s222
    %s224 = sphi 0, %s222
    %s225 = sphi 0, %s224
    %s239 = sphi 0, %s225
    %s243 = sphi 0, %s243
    %s245 = sphi 0, %s243
    %s246 = sphi 0, %s245
    %s260 = sphi 0, %s246
    %s264 = sphi 0, %s264
    %s266 = sphi 0, %s264
    %s267 = sphi 0, %s266
    %s281 = sphi 0, %s267
    %s285 = sphi 0, %s285
    %s287 = sphi 0, %s285
    %s288 = sphi 0, %s287
    %s302 = sphi 0, %s288
    %s306 = sphi 0, %s306
    %s308 = sphi 0, %s306
    %s309 = sphi 0, %s308
    %s323 = sphi 0, %s309
    %s327 = sphi 0, %s327
    %s329 = sphi 0, %s327
    %s330 = sphi 0, %s329
    %s344 = sphi 0, %s330
    %s348 = sphi 0, %s348
    %s350 = sphi 0, %s348
    %s351 = sphi 0, %s350
    %s365 = sphi 0, %s351
    %s369 = sphi 0, %s369
    %s371 = sphi 0, %s369
    %s372 = sphi 0, %s371
    %s386 = sphi 0, %s372
    %s390 = sphi 0, %s390
    %s392 = sphi 0, %s390
    %s393 = sphi 0, %s392
    %s407 = sphi 0, %s393
    %s411 = sphi 0, %s411
    %s413 = sphi 0, %s411
    %s414 = sphi 0, %s413
    %s428 = sphi 0, %s414
    %s432 = sphi 0, %s432
    %s434 = sphi 0, %s432
    %s435 = sphi 0, %s434
    %s449 = sphi 0, %s435
    %s453 = sphi 0, %s453
    %s455 = sphi 0, %s453
    %s456 = sphi 0, %s455
    %s470 = sphi 0, %s456
    %s474 = sphi 0, %s474
    %s476 = sphi 0, %s474
    %s477 = sphi 0, %s476
    %s491 = sphi 0, %s477
    %s495 = sphi 0, %s495
    %s497 = sphi 0, %s495
    %s498 = sphi 0, %s497
    %s512 = sphi 0, %s498
    %s516 = sphi 0, %s516
    %s518 = sphi 0, %s516
    %s519 = sphi 0, %s518
    %s533 = sphi 0, %s519
    %s539 = sphi 0, %s541
    %s542 = sphi 0, %s539
    %s543 = sphi 0, %s542
    %s559 = sphi 0, %s543
    %s565 = sphi 0, %s567
    %s568 = sphi 0, %s565
    %s569 = sphi 0, %s568
    %s585 = sphi 0, %s569
  $region4: #{transformer_forward.7} parent=0 // loop_header_branch
    %34 = sbr.rel (%p32) target = $region8
  $region5: #{transformer_forward.7} parent=0 // loop_body
    %s36 = ssub.s32 %s31, 1
    %s37 = ssub.s32 %s31, 2
    %s38 = sadd.s32 %s31, 1
    %s39 = ssub.s32 %s31, %s38
    %p40 = scmp.eq.s32.totalorder %s39, 0
    %s42 = sadd.s32 %s41, 1
    %s43 = scalar_select %p40, %s41, %s42
    %p46 = pneg %p40
    %p47 = scmp.eq.s32.totalorder %s31, 1
    %p48 = por %p46, %p47
    %p49 = scmp.ne.s32.totalorder %s41, %s44
    %p50 = scmp.eq.s32.totalorder %s31, 0
    %p51 = por %p49, %p50
    %p52 = scmp.ne.s32.totalorder %s41, %s44
    %p53 = scmp.eq.s32.totalorder %s36, 1
    %p54 = por %p52, %p53
    %p55 = scmp.ne.s32.totalorder %s44, %s45
    %p56 = scmp.eq.s32.totalorder %s36, 0
    %p57 = por %p55, %p56
    %p58 = scmp.ne.s32.totalorder %s44, %s45
    %p59 = scmp.eq.s32.totalorder %s37, 1
    %p60 = por %p58, %p59
    %p62 = scmp.ne.s32.totalorder %s45, %s61
    %p63 = scmp.eq.s32.totalorder %s37, 0
    %p64 = por %p62, %p63
    %s65 = ssub.s32 %s31, %s38
    %p66 = scmp.eq.s32.totalorder %s65, 0
    %s68 = sadd.s32 %s67, 1
    %s69 = scalar_select %p66, %s67, %s68
    %p72 = pneg %p66
    %p73 = scmp.eq.s32.totalorder %s31, 1
    %p74 = por %p72, %p73
    %p75 = scmp.ne.s32.totalorder %s67, %s70
    %p76 = scmp.eq.s32.totalorder %s31, 0
    %p77 = por %p75, %p76
    %p78 = scmp.ne.s32.totalorder %s67, %s70
    %p79 = scmp.eq.s32.totalorder %s36, 1
    %p80 = por %p78, %p79
    %p81 = scmp.ne.s32.totalorder %s70, %s71
    %p82 = scmp.eq.s32.totalorder %s36, 0
    %p83 = por %p81, %p82
    %p84 = scmp.ne.s32.totalorder %s70, %s71
    %p85 = scmp.eq.s32.totalorder %s37, 1
    %p86 = por %p84, %p85
    %p88 = scmp.ne.s32.totalorder %s71, %s87
    %p89 = scmp.eq.s32.totalorder %s37, 0
    %p90 = por %p88, %p89
    %s91 = ssub.s32 %s31, %s38
    %p92 = scmp.eq.s32.totalorder %s91, 0
    %s94 = sadd.s32 %s93, 1
    %s95 = scalar_select %p92, %s93, %s94
    %p98 = pneg %p92
    %p99 = scmp.eq.s32.totalorder %s31, 1
    %p100 = por %p98, %p99
    %p101 = scmp.ne.s32.totalorder %s93, %s96
    %p102 = scmp.eq.s32.totalorder %s31, 0
    %p103 = por %p101, %p102
    %p104 = scmp.ne.s32.totalorder %s93, %s96
    %p105 = scmp.eq.s32.totalorder %s36, 1
    %p106 = por %p104, %p105
    %p107 = scmp.ne.s32.totalorder %s96, %s97
    %p108 = scmp.eq.s32.totalorder %s36, 0
    %p109 = por %p107, %p108
    %p110 = scmp.ne.s32.totalorder %s96, %s97
    %p111 = scmp.eq.s32.totalorder %s37, 1
    %p112 = por %p110, %p111
    %p114 = scmp.ne.s32.totalorder %s97, %s113
    %p115 = scmp.eq.s32.totalorder %s37, 0
    %p116 = por %p114, %p115
    %s118 = sadd.s32 %s117, 1
    %p121 = scmp.eq.s32.totalorder %s31, 1
    %p122 = scmp.ne.s32.totalorder %s117, %s119
    %p123 = scmp.eq.s32.totalorder %s31, 0
    %p124 = por %p122, %p123
    %p125 = scmp.ne.s32.totalorder %s117, %s119
    %p126 = scmp.eq.s32.totalorder %s36, 1
    %p127 = por %p125, %p126
    %p128 = scmp.ne.s32.totalorder %s119, %s120
    %p129 = scmp.eq.s32.totalorder %s36, 0
    %p130 = por %p128, %p129
    %p131 = scmp.ne.s32.totalorder %s119, %s120
    %p132 = scmp.eq.s32.totalorder %s37, 1
    %p133 = por %p131, %p132
    %p135 = scmp.ne.s32.totalorder %s120, %s134
    %p136 = scmp.eq.s32.totalorder %s37, 0
    %p137 = por %p135, %p136
    %s139 = sadd.s32 %s138, 1
    %p142 = scmp.eq.s32.totalorder %s31, 1
    %p143 = scmp.ne.s32.totalorder %s138, %s140
    %p144 = scmp.eq.s32.totalorder %s31, 0
    %p145 = por %p143, %p144
    %p146 = scmp.ne.s32.totalorder %s138, %s140
    %p147 = scmp.eq.s32.totalorder %s36, 1
    %p148 = por %p146, %p147
    %p149 = scmp.ne.s32.totalorder %s140, %s141
    %p150 = scmp.eq.s32.totalorder %s36, 0
    %p151 = por %p149, %p150
    %p152 = scmp.ne.s32.totalorder %s140, %s141
    %p153 = scmp.eq.s32.totalorder %s37, 1
    %p154 = por %p152, %p153
    %p156 = scmp.ne.s32.totalorder %s141, %s155
    %p157 = scmp.eq.s32.totalorder %s37, 0
    %p158 = por %p156, %p157
    %s160 = sadd.s32 %s159, 1
    %p163 = scmp.eq.s32.totalorder %s31, 1
    %p164 = scmp.ne.s32.totalorder %s159, %s161
    %p165 = scmp.eq.s32.totalorder %s31, 0
    %p166 = por %p164, %p165
    %p167 = scmp.ne.s32.totalorder %s159, %s161
    %p168 = scmp.eq.s32.totalorder %s36, 1
    %p169 = por %p167, %p168
    %p170 = scmp.ne.s32.totalorder %s161, %s162
    %p171 = scmp.eq.s32.totalorder %s36, 0
    %p172 = por %p170, %p171
    %p173 = scmp.ne.s32.totalorder %s161, %s162
    %p174 = scmp.eq.s32.totalorder %s37, 1
    %p175 = por %p173, %p174
    %p177 = scmp.ne.s32.totalorder %s162, %s176
    %p178 = scmp.eq.s32.totalorder %s37, 0
    %p179 = por %p177, %p178
    %s181 = sadd.s32 %s180, 1
    %p184 = scmp.eq.s32.totalorder %s31, 1
    %p185 = scmp.ne.s32.totalorder %s180, %s182
    %p186 = scmp.eq.s32.totalorder %s31, 0
    %p187 = por %p185, %p186
    %p188 = scmp.ne.s32.totalorder %s180, %s182
    %p189 = scmp.eq.s32.totalorder %s36, 1
    %p190 = por %p188, %p189
    %p191 = scmp.ne.s32.totalorder %s182, %s183
    %p192 = scmp.eq.s32.totalorder %s36, 0
    %p193 = por %p191, %p192
    %p194 = scmp.ne.s32.totalorder %s182, %s183
    %p195 = scmp.eq.s32.totalorder %s37, 1
    %p196 = por %p194, %p195
    %p198 = scmp.ne.s32.totalorder %s183, %s197
    %p199 = scmp.eq.s32.totalorder %s37, 0
    %p200 = por %p198, %p199
    %s202 = sadd.s32 %s201, 1
    %p205 = scmp.eq.s32.totalorder %s31, 1
    %p206 = scmp.ne.s32.totalorder %s201, %s203
    %p207 = scmp.eq.s32.totalorder %s31, 0
    %p208 = por %p206, %p207
    %p209 = scmp.ne.s32.totalorder %s201, %s203
    %p210 = scmp.eq.s32.totalorder %s36, 1
    %p211 = por %p209, %p210
    %p212 = scmp.ne.s32.totalorder %s203, %s204
    %p213 = scmp.eq.s32.totalorder %s36, 0
    %p214 = por %p212, %p213
    %p215 = scmp.ne.s32.totalorder %s203, %s204
    %p216 = scmp.eq.s32.totalorder %s37, 1
    %p217 = por %p215, %p216
    %p219 = scmp.ne.s32.totalorder %s204, %s218
    %p220 = scmp.eq.s32.totalorder %s37, 0
    %p221 = por %p219, %p220
    %s223 = sadd.s32 %s222, 1
    %p226 = scmp.eq.s32.totalorder %s31, 1
    %p227 = scmp.ne.s32.totalorder %s222, %s224
    %p228 = scmp.eq.s32.totalorder %s31, 0
    %p229 = por %p227, %p228
    %p230 = scmp.ne.s32.totalorder %s222, %s224
    %p231 = scmp.eq.s32.totalorder %s36, 1
    %p232 = por %p230, %p231
    %p233 = scmp.ne.s32.totalorder %s224, %s225
    %p234 = scmp.eq.s32.totalorder %s36, 0
    %p235 = por %p233, %p234
    %p236 = scmp.ne.s32.totalorder %s224, %s225
    %p237 = scmp.eq.s32.totalorder %s37, 1
    %p238 = por %p236, %p237
    %p240 = scmp.ne.s32.totalorder %s225, %s239
    %p241 = scmp.eq.s32.totalorder %s37, 0
    %p242 = por %p240, %p241
    %s244 = sadd.s32 %s243, 1
    %p247 = scmp.eq.s32.totalorder %s31, 1
    %p248 = scmp.ne.s32.totalorder %s243, %s245
    %p249 = scmp.eq.s32.totalorder %s31, 0
    %p250 = por %p248, %p249
    %p251 = scmp.ne.s32.totalorder %s243, %s245
    %p252 = scmp.eq.s32.totalorder %s36, 1
    %p253 = por %p251, %p252
    %p254 = scmp.ne.s32.totalorder %s245, %s246
    %p255 = scmp.eq.s32.totalorder %s36, 0
    %p256 = por %p254, %p255
    %p257 = scmp.ne.s32.totalorder %s245, %s246
    %p258 = scmp.eq.s32.totalorder %s37, 1
    %p259 = por %p257, %p258
    %p261 = scmp.ne.s32.totalorder %s246, %s260
    %p262 = scmp.eq.s32.totalorder %s37, 0
    %p263 = por %p261, %p262
    %s265 = sadd.s32 %s264, 1
    %p268 = scmp.eq.s32.totalorder %s31, 1
    %p269 = scmp.ne.s32.totalorder %s264, %s266
    %p270 = scmp.eq.s32.totalorder %s31, 0
    %p271 = por %p269, %p270
    %p272 = scmp.ne.s32.totalorder %s264, %s266
    %p273 = scmp.eq.s32.totalorder %s36, 1
    %p274 = por %p272, %p273
    %p275 = scmp.ne.s32.totalorder %s266, %s267
    %p276 = scmp.eq.s32.totalorder %s36, 0
    %p277 = por %p275, %p276
    %p278 = scmp.ne.s32.totalorder %s266, %s267
    %p279 = scmp.eq.s32.totalorder %s37, 1
    %p280 = por %p278, %p279
    %p282 = scmp.ne.s32.totalorder %s267, %s281
    %p283 = scmp.eq.s32.totalorder %s37, 0
    %p284 = por %p282, %p283
    %s286 = sadd.s32 %s285, 1
    %p289 = scmp.eq.s32.totalorder %s31, 1
    %p290 = scmp.ne.s32.totalorder %s285, %s287
    %p291 = scmp.eq.s32.totalorder %s31, 0
    %p292 = por %p290, %p291
    %p293 = scmp.ne.s32.totalorder %s285, %s287
    %p294 = scmp.eq.s32.totalorder %s36, 1
    %p295 = por %p293, %p294
    %p296 = scmp.ne.s32.totalorder %s287, %s288
    %p297 = scmp.eq.s32.totalorder %s36, 0
    %p298 = por %p296, %p297
    %p299 = scmp.ne.s32.totalorder %s287, %s288
    %p300 = scmp.eq.s32.totalorder %s37, 1
    %p301 = por %p299, %p300
    %p303 = scmp.ne.s32.totalorder %s288, %s302
    %p304 = scmp.eq.s32.totalorder %s37, 0
    %p305 = por %p303, %p304
    %s307 = sadd.s32 %s306, 1
    %p310 = scmp.eq.s32.totalorder %s31, 1
    %p311 = scmp.ne.s32.totalorder %s306, %s308
    %p312 = scmp.eq.s32.totalorder %s31, 0
    %p313 = por %p311, %p312
    %p314 = scmp.ne.s32.totalorder %s306, %s308
    %p315 = scmp.eq.s32.totalorder %s36, 1
    %p316 = por %p314, %p315
    %p317 = scmp.ne.s32.totalorder %s308, %s309
    %p318 = scmp.eq.s32.totalorder %s36, 0
    %p319 = por %p317, %p318
    %p320 = scmp.ne.s32.totalorder %s308, %s309
    %p321 = scmp.eq.s32.totalorder %s37, 1
    %p322 = por %p320, %p321
    %p324 = scmp.ne.s32.totalorder %s309, %s323
    %p325 = scmp.eq.s32.totalorder %s37, 0
    %p326 = por %p324, %p325
    %s328 = sadd.s32 %s327, 1
    %p331 = scmp.eq.s32.totalorder %s31, 1
    %p332 = scmp.ne.s32.totalorder %s327, %s329
    %p333 = scmp.eq.s32.totalorder %s31, 0
    %p334 = por %p332, %p333
    %p335 = scmp.ne.s32.totalorder %s327, %s329
    %p336 = scmp.eq.s32.totalorder %s36, 1
    %p337 = por %p335, %p336
    %p338 = scmp.ne.s32.totalorder %s329, %s330
    %p339 = scmp.eq.s32.totalorder %s36, 0
    %p340 = por %p338, %p339
    %p341 = scmp.ne.s32.totalorder %s329, %s330
    %p342 = scmp.eq.s32.totalorder %s37, 1
    %p343 = por %p341, %p342
    %p345 = scmp.ne.s32.totalorder %s330, %s344
    %p346 = scmp.eq.s32.totalorder %s37, 0
    %p347 = por %p345, %p346
    %s349 = sadd.s32 %s348, 1
    %p352 = scmp.eq.s32.totalorder %s31, 1
    %p353 = scmp.ne.s32.totalorder %s348, %s350
    %p354 = scmp.eq.s32.totalorder %s31, 0
    %p355 = por %p353, %p354
    %p356 = scmp.ne.s32.totalorder %s348, %s350
    %p357 = scmp.eq.s32.totalorder %s36, 1
    %p358 = por %p356, %p357
    %p359 = scmp.ne.s32.totalorder %s350, %s351
    %p360 = scmp.eq.s32.totalorder %s36, 0
    %p361 = por %p359, %p360
    %p362 = scmp.ne.s32.totalorder %s350, %s351
    %p363 = scmp.eq.s32.totalorder %s37, 1
    %p364 = por %p362, %p363
    %p366 = scmp.ne.s32.totalorder %s351, %s365
    %p367 = scmp.eq.s32.totalorder %s37, 0
    %p368 = por %p366, %p367
    %s370 = sadd.s32 %s369, 1
    %p373 = scmp.eq.s32.totalorder %s31, 1
    %p374 = scmp.ne.s32.totalorder %s369, %s371
    %p375 = scmp.eq.s32.totalorder %s31, 0
    %p376 = por %p374, %p375
    %p377 = scmp.ne.s32.totalorder %s369, %s371
    %p378 = scmp.eq.s32.totalorder %s36, 1
    %p379 = por %p377, %p378
    %p380 = scmp.ne.s32.totalorder %s371, %s372
    %p381 = scmp.eq.s32.totalorder %s36, 0
    %p382 = por %p380, %p381
    %p383 = scmp.ne.s32.totalorder %s371, %s372
    %p384 = scmp.eq.s32.totalorder %s37, 1
    %p385 = por %p383, %p384
    %p387 = scmp.ne.s32.totalorder %s372, %s386
    %p388 = scmp.eq.s32.totalorder %s37, 0
    %p389 = por %p387, %p388
    %s391 = sadd.s32 %s390, 1
    %p394 = scmp.eq.s32.totalorder %s31, 1
    %p395 = scmp.ne.s32.totalorder %s390, %s392
    %p396 = scmp.eq.s32.totalorder %s31, 0
    %p397 = por %p395, %p396
    %p398 = scmp.ne.s32.totalorder %s390, %s392
    %p399 = scmp.eq.s32.totalorder %s36, 1
    %p400 = por %p398, %p399
    %p401 = scmp.ne.s32.totalorder %s392, %s393
    %p402 = scmp.eq.s32.totalorder %s36, 0
    %p403 = por %p401, %p402
    %p404 = scmp.ne.s32.totalorder %s392, %s393
    %p405 = scmp.eq.s32.totalorder %s37, 1
    %p406 = por %p404, %p405
    %p408 = scmp.ne.s32.totalorder %s393, %s407
    %p409 = scmp.eq.s32.totalorder %s37, 0
    %p410 = por %p408, %p409
    %s412 = sadd.s32 %s411, 1
    %p415 = scmp.eq.s32.totalorder %s31, 1
    %p416 = scmp.ne.s32.totalorder %s411, %s413
    %p417 = scmp.eq.s32.totalorder %s31, 0
    %p418 = por %p416, %p417
    %p419 = scmp.ne.s32.totalorder %s411, %s413
    %p420 = scmp.eq.s32.totalorder %s36, 1
    %p421 = por %p419, %p420
    %p422 = scmp.ne.s32.totalorder %s413, %s414
    %p423 = scmp.eq.s32.totalorder %s36, 0
    %p424 = por %p422, %p423
    %p425 = scmp.ne.s32.totalorder %s413, %s414
    %p426 = scmp.eq.s32.totalorder %s37, 1
    %p427 = por %p425, %p426
    %p429 = scmp.ne.s32.totalorder %s414, %s428
    %p430 = scmp.eq.s32.totalorder %s37, 0
    %p431 = por %p429, %p430
    %s433 = sadd.s32 %s432, 1
    %p436 = scmp.eq.s32.totalorder %s31, 1
    %p437 = scmp.ne.s32.totalorder %s432, %s434
    %p438 = scmp.eq.s32.totalorder %s31, 0
    %p439 = por %p437, %p438
    %p440 = scmp.ne.s32.totalorder %s432, %s434
    %p441 = scmp.eq.s32.totalorder %s36, 1
    %p442 = por %p440, %p441
    %p443 = scmp.ne.s32.totalorder %s434, %s435
    %p444 = scmp.eq.s32.totalorder %s36, 0
    %p445 = por %p443, %p444
    %p446 = scmp.ne.s32.totalorder %s434, %s435
    %p447 = scmp.eq.s32.totalorder %s37, 1
    %p448 = por %p446, %p447
    %p450 = scmp.ne.s32.totalorder %s435, %s449
    %p451 = scmp.eq.s32.totalorder %s37, 0
    %p452 = por %p450, %p451
    %s454 = sadd.s32 %s453, 1
    %p457 = scmp.eq.s32.totalorder %s31, 1
    %p458 = scmp.ne.s32.totalorder %s453, %s455
    %p459 = scmp.eq.s32.totalorder %s31, 0
    %p460 = por %p458, %p459
    %p461 = scmp.ne.s32.totalorder %s453, %s455
    %p462 = scmp.eq.s32.totalorder %s36, 1
    %p463 = por %p461, %p462
    %p464 = scmp.ne.s32.totalorder %s455, %s456
    %p465 = scmp.eq.s32.totalorder %s36, 0
    %p466 = por %p464, %p465
    %p467 = scmp.ne.s32.totalorder %s455, %s456
    %p468 = scmp.eq.s32.totalorder %s37, 1
    %p469 = por %p467, %p468
    %p471 = scmp.ne.s32.totalorder %s456, %s470
    %p472 = scmp.eq.s32.totalorder %s37, 0
    %p473 = por %p471, %p472
    %s475 = sadd.s32 %s474, 1
    %p478 = scmp.eq.s32.totalorder %s31, 1
    %p479 = scmp.ne.s32.totalorder %s474, %s476
    %p480 = scmp.eq.s32.totalorder %s31, 0
    %p481 = por %p479, %p480
    %p482 = scmp.ne.s32.totalorder %s474, %s476
    %p483 = scmp.eq.s32.totalorder %s36, 1
    %p484 = por %p482, %p483
    %p485 = scmp.ne.s32.totalorder %s476, %s477
    %p486 = scmp.eq.s32.totalorder %s36, 0
    %p487 = por %p485, %p486
    %p488 = scmp.ne.s32.totalorder %s476, %s477
    %p489 = scmp.eq.s32.totalorder %s37, 1
    %p490 = por %p488, %p489
    %p492 = scmp.ne.s32.totalorder %s477, %s491
    %p493 = scmp.eq.s32.totalorder %s37, 0
    %p494 = por %p492, %p493
    %s496 = sadd.s32 %s495, 1
    %p499 = scmp.eq.s32.totalorder %s31, 1
    %p500 = scmp.ne.s32.totalorder %s495, %s497
    %p501 = scmp.eq.s32.totalorder %s31, 0
    %p502 = por %p500, %p501
    %p503 = scmp.ne.s32.totalorder %s495, %s497
    %p504 = scmp.eq.s32.totalorder %s36, 1
    %p505 = por %p503, %p504
    %p506 = scmp.ne.s32.totalorder %s497, %s498
    %p507 = scmp.eq.s32.totalorder %s36, 0
    %p508 = por %p506, %p507
    %p509 = scmp.ne.s32.totalorder %s497, %s498
    %p510 = scmp.eq.s32.totalorder %s37, 1
    %p511 = por %p509, %p510
    %p513 = scmp.ne.s32.totalorder %s498, %s512
    %p514 = scmp.eq.s32.totalorder %s37, 0
    %p515 = por %p513, %p514
    %s517 = sadd.s32 %s516, 1
    %p520 = scmp.eq.s32.totalorder %s31, 1
    %p521 = scmp.ne.s32.totalorder %s516, %s518
    %p522 = scmp.eq.s32.totalorder %s31, 0
    %p523 = por %p521, %p522
    %p524 = scmp.ne.s32.totalorder %s516, %s518
    %p525 = scmp.eq.s32.totalorder %s36, 1
    %p526 = por %p524, %p525
    %p527 = scmp.ne.s32.totalorder %s518, %s519
    %p528 = scmp.eq.s32.totalorder %s36, 0
    %p529 = por %p527, %p528
    %p530 = scmp.ne.s32.totalorder %s518, %s519
    %p531 = scmp.eq.s32.totalorder %s37, 1
    %p532 = por %p530, %p531
    %p534 = scmp.ne.s32.totalorder %s519, %s533
    %p535 = scmp.eq.s32.totalorder %s37, 0
    %p536 = por %p534, %p535
    %s537 = ssub.s32 %s31, %s38
    %p538 = scmp.eq.s32.totalorder %s537, 0
    %s540 = sadd.s32 %s539, 1
    %s541 = scalar_select %p538, %s539, %s540
    %p544 = pneg %p538
    %p545 = scmp.eq.s32.totalorder %s31, 1
    %p546 = por %p544, %p545
    %p547 = scmp.ne.s32.totalorder %s539, %s542
    %p548 = scmp.eq.s32.totalorder %s31, 0
    %p549 = por %p547, %p548
    %p550 = scmp.ne.s32.totalorder %s539, %s542
    %p551 = scmp.eq.s32.totalorder %s36, 1
    %p552 = por %p550, %p551
    %p553 = scmp.ne.s32.totalorder %s542, %s543
    %p554 = scmp.eq.s32.totalorder %s36, 0
    %p555 = por %p553, %p554
    %p556 = scmp.ne.s32.totalorder %s542, %s543
    %p557 = scmp.eq.s32.totalorder %s37, 1
    %p558 = por %p556, %p557
    %p560 = scmp.ne.s32.totalorder %s543, %s559
    %p561 = scmp.eq.s32.totalorder %s37, 0
    %p562 = por %p560, %p561
    %s563 = ssub.s32 %s31, %s38
    %p564 = scmp.eq.s32.totalorder %s563, 0
    %s566 = sadd.s32 %s565, 1
    %s567 = scalar_select %p564, %s565, %s566
    %p570 = pneg %p564
    %p571 = scmp.eq.s32.totalorder %s31, 1
    %p572 = por %p570, %p571
    %p573 = scmp.ne.s32.totalorder %s565, %s568
    %p574 = scmp.eq.s32.totalorder %s31, 0
    %p575 = por %p573, %p574
    %p576 = scmp.ne.s32.totalorder %s565, %s568
    %p577 = scmp.eq.s32.totalorder %s36, 1
    %p578 = por %p576, %p577
    %p579 = scmp.ne.s32.totalorder %s568, %s569
    %p580 = scmp.eq.s32.totalorder %s36, 0
    %p581 = por %p579, %p580
    %p582 = scmp.ne.s32.totalorder %s568, %s569
    %p583 = scmp.eq.s32.totalorder %s37, 1
    %p584 = por %p582, %p583
    %p586 = scmp.ne.s32.totalorder %s569, %s585
    %p587 = scmp.eq.s32.totalorder %s37, 0
    %p588 = por %p586, %p587
    %p589 = scmp.le.s32.totalorder 1, %s31
    %p590 = scmp.lt.s32.totalorder %s31, 3
    %p591 = pnand %p589, %p590
    %p592 = pneg %p591
    // Predicated region
    $region9: #{transformer_forward.7} parent=5 // pred_check
      _
    $region10: #{transformer_forward.7} parent=5 // pred_check_branch
      %594 = sbr.rel (%p591) target = $region12
    $region11: #{transformer_forward.7} parent=5 // pred_region
      %s595 = ssub.s32 %s31, 1
      // Predicated region
      $region13: #{transformer_forward.7} parent=11 // pred_check
        %p596 = pneg %p130
      $region14: #{transformer_forward.7} parent=11 // pred_check_branch
        %598 = sbr.rel (%p596) target = $region16
      $region15: #{transformer_forward.7} parent=11 // pred_region
        _
      $region16: #{transformer_forward.7} parent=11 // pred_fallthru
        _
      // Predicated region
      $region17: #{transformer_forward.7} parent=11 // pred_check
        %p599 = pneg %p151
      $region18: #{transformer_forward.7} parent=11 // pred_check_branch
        %601 = sbr.rel (%p599) target = $region20
      $region19: #{transformer_forward.7} parent=11 // pred_region
        _
      $region20: #{transformer_forward.7} parent=11 // pred_fallthru
        _
      // Predicated region
      $region21: #{transformer_forward.7} parent=11 // pred_check
        %p602 = pneg %p172
      $region22: #{transformer_forward.7} parent=11 // pred_check_branch
        %604 = sbr.rel (%p602) target = $region24
      $region23: #{transformer_forward.7} parent=11 // pred_region
        _
      $region24: #{transformer_forward.7} parent=11 // pred_fallthru
        _
      // Predicated region
      $region25: #{transformer_forward.7} parent=11 // pred_check
        %p605 = pneg %p193
      $region26: #{transformer_forward.7} parent=11 // pred_check_branch
        %607 = sbr.rel (%p605) target = $region28
      $region27: #{transformer_forward.7} parent=11 // pred_region
        _
      $region28: #{transformer_forward.7} parent=11 // pred_fallthru
        _
      // Predicated region
      $region29: #{transformer_forward.7} parent=11 // pred_check
        %p608 = pneg %p214
      $region30: #{transformer_forward.7} parent=11 // pred_check_branch
        %610 = sbr.rel (%p608) target = $region32
      $region31: #{transformer_forward.7} parent=11 // pred_region
        _
      $region32: #{transformer_forward.7} parent=11 // pred_fallthru
        _
      // Predicated region
      $region33: #{transformer_forward.7} parent=11 // pred_check
        %p611 = pneg %p235
      $region34: #{transformer_forward.7} parent=11 // pred_check_branch
        %613 = sbr.rel (%p611) target = $region36
      $region35: #{transformer_forward.7} parent=11 // pred_region
        _
      $region36: #{transformer_forward.7} parent=11 // pred_fallthru
        _
      // Predicated region
      $region37: #{transformer_forward.7} parent=11 // pred_check
        %p614 = pneg %p256
      $region38: #{transformer_forward.7} parent=11 // pred_check_branch
        %616 = sbr.rel (%p614) target = $region40
      $region39: #{transformer_forward.7} parent=11 // pred_region
        _
      $region40: #{transformer_forward.7} parent=11 // pred_fallthru
        _
      // Predicated region
      $region41: #{transformer_forward.7} parent=11 // pred_check
        %p617 = pneg %p277
      $region42: #{transformer_forward.7} parent=11 // pred_check_branch
        %619 = sbr.rel (%p617) target = $region44
      $region43: #{transformer_forward.7} parent=11 // pred_region
        _
      $region44: #{transformer_forward.7} parent=11 // pred_fallthru
        _
      // Predicated region
      $region45: #{transformer_forward.7} parent=11 // pred_check
        %p620 = pneg %p298
      $region46: #{transformer_forward.7} parent=11 // pred_check_branch
        %622 = sbr.rel (%p620) target = $region48
      $region47: #{transformer_forward.7} parent=11 // pred_region
        _
      $region48: #{transformer_forward.7} parent=11 // pred_fallthru
        _
      // Predicated region
      $region49: #{transformer_forward.7} parent=11 // pred_check
        %p623 = pneg %p319
      $region50: #{transformer_forward.7} parent=11 // pred_check_branch
        %625 = sbr.rel (%p623) target = $region52
      $region51: #{transformer_forward.7} parent=11 // pred_region
        _
      $region52: #{transformer_forward.7} parent=11 // pred_fallthru
        _
      // Predicated region
      $region53: #{transformer_forward.7} parent=11 // pred_check
        %p626 = pneg %p340
      $region54: #{transformer_forward.7} parent=11 // pred_check_branch
        %628 = sbr.rel (%p626) target = $region56
      $region55: #{transformer_forward.7} parent=11 // pred_region
        _
      $region56: #{transformer_forward.7} parent=11 // pred_fallthru
        _
      // Predicated region
      $region57: #{transformer_forward.7} parent=11 // pred_check
        %p629 = pneg %p361
      $region58: #{transformer_forward.7} parent=11 // pred_check_branch
        %631 = sbr.rel (%p629) target = $region60
      $region59: #{transformer_forward.7} parent=11 // pred_region
        _
      $region60: #{transformer_forward.7} parent=11 // pred_fallthru
        _
      // Predicated region
      $region61: #{transformer_forward.7} parent=11 // pred_check
        %p632 = pneg %p382
      $region62: #{transformer_forward.7} parent=11 // pred_check_branch
        %634 = sbr.rel (%p632) target = $region64
      $region63: #{transformer_forward.7} parent=11 // pred_region
        _
      $region64: #{transformer_forward.7} parent=11 // pred_fallthru
        _
      // Predicated region
      $region65: #{transformer_forward.7} parent=11 // pred_check
        %p635 = pneg %p403
      $region66: #{transformer_forward.7} parent=11 // pred_check_branch
        %637 = sbr.rel (%p635) target = $region68
      $region67: #{transformer_forward.7} parent=11 // pred_region
        _
      $region68: #{transformer_forward.7} parent=11 // pred_fallthru
        _
      // Predicated region
      $region69: #{transformer_forward.7} parent=11 // pred_check
        %p638 = pneg %p424
      $region70: #{transformer_forward.7} parent=11 // pred_check_branch
        %640 = sbr.rel (%p638) target = $region72
      $region71: #{transformer_forward.7} parent=11 // pred_region
        _
      $region72: #{transformer_forward.7} parent=11 // pred_fallthru
        _
      // Predicated region
      $region73: #{transformer_forward.7} parent=11 // pred_check
        %p641 = pneg %p445
      $region74: #{transformer_forward.7} parent=11 // pred_check_branch
        %643 = sbr.rel (%p641) target = $region76
      $region75: #{transformer_forward.7} parent=11 // pred_region
        _
      $region76: #{transformer_forward.7} parent=11 // pred_fallthru
        _
      // Predicated region
      $region77: #{transformer_forward.7} parent=11 // pred_check
        %p644 = pneg %p466
      $region78: #{transformer_forward.7} parent=11 // pred_check_branch
        %646 = sbr.rel (%p644) target = $region80
      $region79: #{transformer_forward.7} parent=11 // pred_region
        _
      $region80: #{transformer_forward.7} parent=11 // pred_fallthru
        _
      // Predicated region
      $region81: #{transformer_forward.7} parent=11 // pred_check
        %p647 = pneg %p487
      $region82: #{transformer_forward.7} parent=11 // pred_check_branch
        %649 = sbr.rel (%p647) target = $region84
      $region83: #{transformer_forward.7} parent=11 // pred_region
        _
      $region84: #{transformer_forward.7} parent=11 // pred_fallthru
        _
      // Predicated region
      $region85: #{transformer_forward.7} parent=11 // pred_check
        %p650 = pneg %p508
      $region86: #{transformer_forward.7} parent=11 // pred_check_branch
        %652 = sbr.rel (%p650) target = $region88
      $region87: #{transformer_forward.7} parent=11 // pred_region
        _
      $region88: #{transformer_forward.7} parent=11 // pred_fallthru
        _
      // Predicated region
      $region89: #{transformer_forward.7} parent=11 // pred_check
        %p653 = pneg %p529
      $region90: #{transformer_forward.7} parent=11 // pred_check_branch
        %655 = sbr.rel (%p653) target = $region92
      $region91: #{transformer_forward.7} parent=11 // pred_region
        _
      $region92: #{transformer_forward.7} parent=11 // pred_fallthru
        _
    $region12: #{transformer_forward.7} parent=5 // pred_fallthru
      _
    %p656 = scmp.lt.s32.totalorder %s31, 2
    // Predicated region
    $region93: #{transformer_forward.7} parent=5 // pred_check
      %p657 = pneg %p656
    $region94: #{transformer_forward.7} parent=5 // pred_check_branch
      %659 = sbr.rel (%p657) target = $region96
    $region95: #{transformer_forward.7} parent=5 // pred_region
      // Predicated region
      $region97: #{transformer_forward.7} parent=95 // pred_check
        %p660 = pneg %p51
      $region98: #{transformer_forward.7} parent=95 // pred_check_branch
        %662 = sbr.rel (%p660) target = $region100
      $region99: #{transformer_forward.7} parent=95 // pred_region
        %p663 = scmp.lt.s32.totalorder %s31, 1
        %s664 = scalar_select %p663, %s31, 1
        %s665 = smul.addr %s664, 8
        %s666 = scalar_lea.vmem %s0, %s665
      $region100: #{transformer_forward.7} parent=95 // pred_fallthru
        _
      // Predicated region
      $region101: #{transformer_forward.7} parent=95 // pred_check
        %p667 = pneg %p77
      $region102: #{transformer_forward.7} parent=95 // pred_check_branch
        %669 = sbr.rel (%p667) target = $region104
      $region103: #{transformer_forward.7} parent=95 // pred_region
        %p670 = scmp.lt.s32.totalorder %s31, 1
        %s671 = scalar_select %p670, %s31, 1
        %s672 = smul.addr %s671, 2
        %s673 = smul.addr %s672, 8
        %s674 = scalar_lea.vmem %s1, %s673
      $region104: #{transformer_forward.7} parent=95 // pred_fallthru
        _
      // Predicated region
      $region105: #{transformer_forward.7} parent=95 // pred_check
        %p675 = pneg %p103
      $region106: #{transformer_forward.7} parent=95 // pred_check_branch
        %677 = sbr.rel (%p675) target = $region108
      $region107: #{transformer_forward.7} parent=95 // pred_region
        %p678 = scmp.lt.s32.totalorder %s31, 1
        %s679 = scalar_select %p678, %s31, 1
        %s680 = scalar_lea.vmem %s2, %s679
      $region108: #{transformer_forward.7} parent=95 // pred_fallthru
        _
    $region96: #{transformer_forward.7} parent=5 // pred_fallthru
      _
    %p681 = scmp.le.s32.totalorder 1, %s31
    %p682 = scmp.lt.s32.totalorder %s31, 3
    %p683 = pnand %p681, %p682
    %p684 = pneg %p683
    // Predicated region
    $region109: #{transformer_forward.7} parent=5 // pred_check
      _
    $region110: #{transformer_forward.7} parent=5 // pred_check_branch
      %686 = sbr.rel (%p683) target = $region112
    $region111: #{transformer_forward.7} parent=5 // pred_region
      %s687 = ssub.s32 %s31, 1
      %p688 = scmp.lt.s32.totalorder %s36, 1
      %s689 = scalar_select %p688, %s36, 1
      %s690 = smul.addr %s689, 8
      %s691 = scalar_lea.vmem %s0, %s690
      %p692 = pneg %p57
      %p693 = pneg %p54
      %p694 = scmp.lt.s32.totalorder %s36, 1
      %s695 = scalar_select %p694, %s36, 1
      %s696 = smul.addr %s695, 2
      %s697 = smul.addr %s696, 8
      %s698 = scalar_lea.vmem %s1, %s697
      %p699 = pneg %p83
      %p700 = pneg %p80
      %p701 = scmp.lt.s32.totalorder %s36, 1
      %s702 = scalar_select %p701, %s36, 1
      %s703 = scalar_lea.vmem %s2, %s702
      %p704 = pneg %p109
      %p705 = pneg %p106
      %p706 = pneg %p130
      %p707 = pneg %p127
      %p708 = pneg %p151
      %p709 = pneg %p148
      %p710 = pneg %p172
      %p711 = pneg %p169
      %p712 = pneg %p193
      %p713 = pneg %p190
      %p714 = pneg %p214
      %p715 = pneg %p211
      %p716 = pneg %p235
      %p717 = pneg %p232
      %p718 = pneg %p256
      %p719 = pneg %p253
      %p720 = pneg %p277
      %p721 = pneg %p274
      %p722 = pneg %p298
      %p723 = pneg %p295
      %p724 = pneg %p319
      %p725 = pneg %p316
      %p726 = pneg %p340
      %p727 = pneg %p337
      %p728 = pneg %p361
      %p729 = pneg %p358
      %p730 = pneg %p382
      %p731 = pneg %p379
      %p732 = pneg %p403
      %p733 = pneg %p400
      %p734 = pneg %p424
      %p735 = pneg %p421
      %p736 = pneg %p445
      %p737 = pneg %p442
      %p738 = pneg %p466
      %p739 = pneg %p463
      %p740 = pneg %p487
      %p741 = pneg %p484
      %p742 = pneg %p508
      %p743 = pneg %p505
      %p744 = pneg %p529
      %p745 = pneg %p526
      %p746 = pneg %p555
      %p747 = pneg %p552
      %p748 = scmp.lt.s32.totalorder %s36, 1
      %s749 = scalar_select %p748, %s36, 1
      %s750 = smul.addr %s749, 8
      %s751 = scalar_lea.vmem %s23, %s750
      %p752 = pneg %p581
      %p753 = pneg %p578
      %p754 = scmp.lt.s32.totalorder %s36, 1
      %s755 = scalar_select %p754, %s36, 1
      %s756 = smul.addr %s755, 8
      %s757 = scalar_lea.vmem %s24, %s756
      %p758 = scmp.lt.s32.totalorder %s36, 1
      %s759 = scalar_select %p758, %s36, 1
      %s760 = smul.addr %s759, 8
      %s761 = scalar_lea.vmem %s0, %s760
      %p762 = scmp.lt.s32.totalorder %s36, 1
      %s763 = scalar_select %p762, %s36, 1
      %s764 = smul.addr %s763, 2
      %s765 = smul.addr %s764, 8
      %s766 = scalar_lea.vmem %s1, %s765
      %p767 = scmp.lt.s32.totalorder %s36, 1
      %s768 = scalar_select %p767, %s36, 1
      %s769 = scalar_lea.vmem %s2, %s768
      %p770 = scmp.lt.s32.totalorder %s36, 1
      %s771 = scalar_select %p770, %s36, 1
      %s772 = smul.addr %s771, 8
      %s773 = scalar_lea.vmem %s23, %s772
      %p774 = scmp.lt.s32.totalorder %s36, 1
      %s775 = scalar_select %p774, %s36, 1
      %s776 = smul.addr %s775, 8
      %s777 = scalar_lea.vmem %s24, %s776
      %v779 = vld [vmem:[%s761] sm:$0xff]
      %v780 = vld [vmem:[%s766] sm:$0xff]
      %v781 = vld [vmem:[%s766 + $0x8] sm:$0xff]
      %v782 = vld [vmem:[%s3] sm:$0xf]
      %v783 = vld [vmem:[%s3 + $0x4] sm:$0xf]
      %v784 = vld [vmem:[%s3 + $0x8] sm:$0xf]
      %v785 = vld [vmem:[%s3 + $0xc] sm:$0xf]
      %v786 = vpack.c.bf16 %v779, %v779
      %v787 = vld [vmem:[%s4] sm:$0x1]
      %v789 = vperm.slane %v787, 0
      %v795 = vunpack.c.l.b16 %v782
      %v796 = vunpack.c.l.b16 %v783
      %v797 = vunpack.c.l.b16 %v784
      %v798 = vunpack.c.l.b16 %v785
      %v799 = vpack.c.b16 %v796, %v795
      %v800 = vpack.c.b16 %v798, %v797
      %vm803 = vcmask 261120
      %v805 = vsel %vm803, %v786, 0
      %807 = vmatpush.bf16.msra.mxu0 0
      %808 = vmatpush.bf16.msra.mxu0 0
      %809 = vmatpush.bf16.msra.mxu0 0
      %810 = vmatpush.bf16.msra.mxu0 0
      %811 = vmatpush.bf16.msra.mxu0 0
      %812 = vmatpush.bf16.msra.mxu0 0
      %813 = vmatpush.bf16.msra.mxu0 %v800
      %814 = vmatpush.bf16.msra.mxu0 %v799
      %815 = vmatmul.bf16.gmra.mxu0 %v805
      %v816 = vpop.f32.mrf.mxu0
      %v817 = vadd.f32 %v789, %v816
      %v818 = vpop.f32.mrf.mxu0
      %819 = vdwg.mxu0
      %v820 = vlaneseq
      %v821 = vshrl.u32 %v820, 7
      %v822 = vlaneseq
      %v823 = vand.u32 %v822, 127
      %vm824 = vcmp.gt.s32.totalorder %v823, %v821
      %v825 = vsel %vm824, -1e+30, 0.0
      %v826 = vld [vmem:[%s769] sm:$0x1]
      %v828 = vperm.slane %v826, 0
      %v830 = vadd.f32 %v825, %v828
      %v831 = vpack.c.bf16 %v817, %v817
      %833 = vrot.lane.b32.xlu0 %v831, 96
      %v834 = vpop.permute.xlu0 %833
      %vm835 = vcmask 64512
      %v837 = vsel %vm835, %v831, 0
      %v840 = vsel %vm835, %v834, 0
      %842 = vmatpush.bf16.xpose.msra.mxu0 0
      %843 = vmatpush.bf16.xpose.msra.mxu0 0
      %844 = vmatpush.bf16.xpose.msra.mxu0 0
      %845 = vmatpush.bf16.xpose.msra.mxu0 0
      %846 = vmatpush.bf16.xpose.msra.mxu0 0
      %847 = vmatpush.bf16.xpose.msra.mxu0 0
      %848 = vmatpush.bf16.xpose.msra.mxu0 0
      %849 = vmatpush.bf16.xpose.msra.mxu0 %v840
      %850 = vmatmul.bf16.gmra.mxu0 %v837
      %v851 = vpop.f32.mrf.mxu0
      %v852 = vadd.f32 0.0, %v851
      %v853 = vpop.f32.mrf.mxu0
      %854 = vdwg.mxu0
      %v855 = vmul.f32 %v852, 0.35355338
      %v856 = vadd.f32 %v855, %v830
      %v857 = vsel %vm835, %v856, -inf
      %858 = vmax.xlane.f32.xlu0 %v857
      %v859 = vpop.xlane.xlu0 %858
      %v860 = vsub.f32 %v856, %v859
      %v861 = vmul.f32 %v860, 1.442695
      %v862 = vpow.pop %v861
      %v863 = vsel %vm835, %v862, 0.0
      %864 = vadd.xlane.f32.xlu0 %v863
      %v865 = vpop.xlane.xlu0 %864
      %v866 = vrcp.pop %v865
      %v867 = vmul.f32 %v862, %v866
      %v868 = vpack.c.bf16 %v867, %v867
      %869 = vrot.lane.b32.xlu0 %v831, 64
      %v870 = vpop.permute.xlu0 %869
      %v872 = vsel %vm835, %v868, 0
      %vm874 = vcmask 1043456
      %v876 = vsel %vm874, %v870, 0
      %878 = vmatpush.bf16.msra.mxu0 0
      %879 = vmatpush.bf16.msra.mxu0 0
      %880 = vmatpush.bf16.msra.mxu0 0
      %881 = vmatpush.bf16.msra.mxu0 0
      %882 = vmatpush.bf16.msra.mxu0 0
      %883 = vmatpush.bf16.msra.mxu0 0
      %884 = vmatpush.bf16.msra.mxu0 0
      %885 = vmatpush.bf16.msra.mxu0 %v876
      %886 = vmatmul.bf16.gmra.mxu0 %v872
      %v887 = vpop.f32.mrf.mxu0
      %v888 = vadd.f32 0.0, %v887
      %v889 = vpop.f32.mrf.mxu0
      %890 = vdwg.mxu0
      %891 = vrot.lane.b32.xlu0 %v831, 120
      %v892 = vpop.permute.xlu0 %891
      %893 = vrot.lane.b32.xlu0 %v831, 88
      %v894 = vpop.permute.xlu0 %893
      %v896 = vsel %vm835, %v892, 0
      %v899 = vsel %vm835, %v894, 0
      %901 = vmatpush.bf16.xpose.msra.mxu0 0
      %902 = vmatpush.bf16.xpose.msra.mxu0 0
      %903 = vmatpush.bf16.xpose.msra.mxu0 0
      %904 = vmatpush.bf16.xpose.msra.mxu0 0
      %905 = vmatpush.bf16.xpose.msra.mxu0 0
      %906 = vmatpush.bf16.xpose.msra.mxu0 0
      %907 = vmatpush.bf16.xpose.msra.mxu0 0
      %908 = vmatpush.bf16.xpose.msra.mxu0 %v899
      %909 = vmatmul.bf16.gmra.mxu0 %v896
      %v910 = vpop.f32.mrf.mxu0
      %v911 = vadd.f32 0.0, %v910
      %v912 = vpop.f32.mrf.mxu0
      %913 = vdwg.mxu0
      %v914 = vmul.f32 %v911, 0.35355338
      %v915 = vadd.f32 %v914, %v830
      %v916 = vsel %vm835, %v915, -inf
      %917 = vmax.xlane.f32.xlu0 %v916
      %v918 = vpop.xlane.xlu0 %917
      %v919 = vsub.f32 %v915, %v918
      %v920 = vmul.f32 %v919, 1.442695
      %v921 = vpow.pop %v920
      %v922 = vsel %vm835, %v921, 0.0
      %923 = vadd.xlane.f32.xlu0 %v922
      %v924 = vpop.xlane.xlu0 %923
      %v925 = vrcp.pop %v924
      %v926 = vmul.f32 %v921, %v925
      %v927 = vpack.c.bf16 %v926, %v926
      %928 = vrot.lane.b32.xlu0 %v831, 56
      %v929 = vpop.permute.xlu0 %928
      %v931 = vsel %vm835, %v927, 0
      %v934 = vsel %vm874, %v929, 0
      %936 = vmatpush.bf16.msra.mxu0 0
      %937 = vmatpush.bf16.msra.mxu0 0
      %938 = vmatpush.bf16.msra.mxu0 0
      %939 = vmatpush.bf16.msra.mxu0 0
      %940 = vmatpush.bf16.msra.mxu0 0
      %941 = vmatpush.bf16.msra.mxu0 0
      %942 = vmatpush.bf16.msra.mxu0 0
      %943 = vmatpush.bf16.msra.mxu0 %v934
      %944 = vmatmul.bf16.gmra.mxu0 %v931
      %v945 = vpop.f32.mrf.mxu0
      %v946 = vadd.f32 0.0, %v945
      %v947 = vpop.f32.mrf.mxu0
      %948 = vdwg.mxu0
      %949 = vrot.lane.b32.xlu0 %v831, 112
      %v950 = vpop.permute.xlu0 %949
      %951 = vrot.lane.b32.xlu0 %v831, 80
      %v952 = vpop.permute.xlu0 %951
      %v954 = vsel %vm835, %v950, 0
      %v957 = vsel %vm835, %v952, 0
      %959 = vmatpush.bf16.xpose.msra.mxu0 0
      %960 = vmatpush.bf16.xpose.msra.mxu0 0
      %961 = vmatpush.bf16.xpose.msra.mxu0 0
      %962 = vmatpush.bf16.xpose.msra.mxu0 0
      %963 = vmatpush.bf16.xpose.msra.mxu0 0
      %964 = vmatpush.bf16.xpose.msra.mxu0 0
      %965 = vmatpush.bf16.xpose.msra.mxu0 0
      %966 = vmatpush.bf16.xpose.msra.mxu0 %v957
      %967 = vmatmul.bf16.gmra.mxu0 %v954
      %v968 = vpop.f32.mrf.mxu0
      %v969 = vadd.f32 0.0, %v968
      %v970 = vpop.f32.mrf.mxu0
      %971 = vdwg.mxu0
      %v972 = vmul.f32 %v969, 0.35355338
      %v973 = vadd.f32 %v972, %v830
      %v974 = vsel %vm835, %v973, -inf
      %975 = vmax.xlane.f32.xlu0 %v974
      %v976 = vpop.xlane.xlu0 %975
      %v977 = vsub.f32 %v973, %v976
      %v978 = vmul.f32 %v977, 1.442695
      %v979 = vpow.pop %v978
      %v980 = vsel %vm835, %v979, 0.0
      %981 = vadd.xlane.f32.xlu0 %v980
      %v982 = vpop.xlane.xlu0 %981
      %v983 = vrcp.pop %v982
      %v984 = vmul.f32 %v979, %v983
      %v985 = vpack.c.bf16 %v984, %v984
      %986 = vrot.lane.b32.xlu0 %v831, 48
      %v987 = vpop.permute.xlu0 %986
      %v989 = vsel %vm835, %v985, 0
      %v992 = vsel %vm874, %v987, 0
      %994 = vmatpush.bf16.msra.mxu0 0
      %995 = vmatpush.bf16.msra.mxu0 0
      %996 = vmatpush.bf16.msra.mxu0 0
      %997 = vmatpush.bf16.msra.mxu0 0
      %998 = vmatpush.bf16.msra.mxu0 0
      %999 = vmatpush.bf16.msra.mxu0 0
      %1000 = vmatpush.bf16.msra.mxu0 0
      %1001 = vmatpush.bf16.msra.mxu0 %v992
      %1002 = vmatmul.bf16.gmra.mxu0 %v989
      %v1003 = vpop.f32.mrf.mxu0
      %v1004 = vadd.f32 0.0, %v1003
      %v1005 = vpop.f32.mrf.mxu0
      %1006 = vdwg.mxu0
      %1007 = vrot.lane.b32.xlu0 %v831, 104
      %v1008 = vpop.permute.xlu0 %1007
      %1009 = vrot.lane.b32.xlu0 %v831, 72
      %v1010 = vpop.permute.xlu0 %1009
      %v1012 = vsel %vm835, %v1008, 0
      %v1015 = vsel %vm835, %v1010, 0
      %1017 = vmatpush.bf16.xpose.msra.mxu0 0
      %1018 = vmatpush.bf16.xpose.msra.mxu0 0
      %1019 = vmatpush.bf16.xpose.msra.mxu0 0
      %1020 = vmatpush.bf16.xpose.msra.mxu0 0
      %1021 = vmatpush.bf16.xpose.msra.mxu0 0
      %1022 = vmatpush.bf16.xpose.msra.mxu0 0
      %1023 = vmatpush.bf16.xpose.msra.mxu0 0
      %1024 = vmatpush.bf16.xpose.msra.mxu0 %v1015
      %1025 = vmatmul.bf16.gmra.mxu0 %v1012
      %v1026 = vpop.f32.mrf.mxu0
      %v1027 = vadd.f32 0.0, %v1026
      %v1028 = vpop.f32.mrf.mxu0
      %1029 = vdwg.mxu0
      %v1030 = vmul.f32 %v1027, 0.35355338
      %v1031 = vadd.f32 %v1030, %v830
      %v1032 = vsel %vm835, %v1031, -inf
      %1033 = vmax.xlane.f32.xlu0 %v1032
      %v1034 = vpop.xlane.xlu0 %1033
      %v1035 = vsub.f32 %v1031, %v1034
      %v1036 = vmul.f32 %v1035, 1.442695
      %v1037 = vpow.pop %v1036
      %v1038 = vsel %vm835, %v1037, 0.0
      %1039 = vadd.xlane.f32.xlu0 %v1038
      %v1040 = vpop.xlane.xlu0 %1039
      %v1041 = vrcp.pop %v1040
      %v1042 = vmul.f32 %v1037, %v1041
      %v1043 = vpack.c.bf16 %v1042, %v1042
      %1044 = vrot.lane.b32.xlu0 %v831, 40
      %v1045 = vpop.permute.xlu0 %1044
      %v1047 = vsel %vm835, %v1043, 0
      %v1050 = vsel %vm874, %v1045, 0
      %1052 = vmatpush.bf16.msra.mxu0 0
      %1053 = vmatpush.bf16.msra.mxu0 0
      %1054 = vmatpush.bf16.msra.mxu0 0
      %1055 = vmatpush.bf16.msra.mxu0 0
      %1056 = vmatpush.bf16.msra.mxu0 0
      %1057 = vmatpush.bf16.msra.mxu0 0
      %1058 = vmatpush.bf16.msra.mxu0 0
      %1059 = vmatpush.bf16.msra.mxu0 %v1050
      %1060 = vmatmul.bf16.gmra.mxu0 %v1047
      %v1061 = vpop.f32.mrf.mxu0
      %v1062 = vadd.f32 0.0, %v1061
      %v1063 = vpop.f32.mrf.mxu0
      %1064 = vdwg.mxu0
      %1066 = vrot.lane.b32.xlu0 %v946, 8
      %v1067 = vpop.permute.xlu0 %1066
      %1070 = vrot.lane.b32.xlu0 %v1004, 16
      %v1071 = vpop.permute.xlu0 %1070
      %1074 = vrot.lane.b32.xlu0 %v1062, 24
      %v1075 = vpop.permute.xlu0 %1074
      %v1077 = vsel %vm835, %v888, %v1067
      %vm1078 = vcmask 130048
      %v1079 = vsel %vm1078, %v1077, %v1071
      %vm1080 = vcmask 195584
      %v1081 = vsel %vm1080, %v1079, %v1075
      %v1082 = vld [vmem:[%s5] sm:$0xf]
      %v1083 = vld [vmem:[%s5 + $0x4] sm:$0xf]
      %v1084 = vld [vmem:[%s5 + $0x8] sm:$0xf]
      %v1085 = vld [vmem:[%s5 + $0xc] sm:$0xf]
      %v1086 = vpack.c.bf16 %v1081, %v1081
      %v1087 = vld [vmem:[%s6] sm:$0x1]
      %v1089 = vperm.slane %v1087, 0
      %v1095 = vunpack.c.l.b16 %v1082
      %v1096 = vunpack.c.l.b16 %v1083
      %v1097 = vunpack.c.l.b16 %v1084
      %v1098 = vunpack.c.l.b16 %v1085
      %v1099 = vpack.c.b16 %v1096, %v1095
      %v1100 = vpack.c.b16 %v1098, %v1097
      %v1104 = vsel %vm803, %v1086, 0
      %1106 = vmatpush.bf16.msra.mxu0 0
      %1107 = vmatpush.bf16.msra.mxu0 0
      %1108 = vmatpush.bf16.msra.mxu0 0
      %1109 = vmatpush.bf16.msra.mxu0 0
      %1110 = vmatpush.bf16.msra.mxu0 0
      %1111 = vmatpush.bf16.msra.mxu0 0
      %1112 = vmatpush.bf16.msra.mxu0 %v1100
      %1113 = vmatpush.bf16.msra.mxu0 %v1099
      %1114 = vmatmul.bf16.gmra.mxu0 %v1104
      %v1115 = vpop.f32.mrf.mxu0
      %v1116 = vadd.f32 %v1089, %v1115
      %v1117 = vpop.f32.mrf.mxu0
      %1118 = vdwg.mxu0
      %v1119 = vadd.f32 %v1116, %v779
      %v1120 = vld [vmem:[%s7] sm:$0x1]
      %v1121 = vld [vmem:[%s8] sm:$0x1]
      %v1122 = vsel %vm803, %v1119, 0.0
      %1123 = vadd.xlane.f32.xlu0 %v1122
      %v1124 = vpop.xlane.xlu0 %1123
      %v1125 = vrcp.pop 32.0
      %v1126 = vmul.f32 32.0, %v1125
      %v1127 = vsub.f32 1.0, %v1126
      %v1128 = vmul.f32 %v1125, %v1127
      %v1129 = vadd.f32 %v1125, %v1128
      %vm1130 = vweird.f32 %v1125
      %v1131 = vsel %vm1130, %v1125, %v1129
      %v1132 = vmul.f32 %v1124, %v1131
      %v1133 = vsub.f32 %v1119, %v1132
      %v1134 = vmul.f32 %v1133, %v1133
      %v1135 = vsel %vm803, %v1134, 0.0
      %1136 = vadd.xlane.f32.xlu0 %v1135
      %v1137 = vpop.xlane.xlu0 %1136
      %v1138 = vmul.f32 %v1137, %v1131
      %v1139 = vadd.f32 %v1138, 1e-05
      %v1140 = vrsqrt.pop %v1139
      %v1141 = vmul.f32 %v1140, %v1139
      %v1142 = vmul.f32 %v1141, %v1140
      %v1143 = vmul.f32 0.5, %v1142
      %v1144 = vsub.f32 1.5, %v1143
      %v1145 = vmul.f32 %v1140, %v1144
      %vm1146 = vweird.f32 %v1139
      %vm1147 = vweird.f32 %v1140
      %vm1148 = vmor %vm1146, %vm1147
      %v1149 = vsel %vm1148, %v1140, %v1145
      %v1150 = vmul.f32 %v1133, %v1149
      %v1152 = vperm.slane %v1120, 0
      %v1154 = vmul.f32 %v1150, %v1152
      %v1156 = vperm.slane %v1121, 0
      %v1158 = vadd.f32 %v1154, %v1156
      %v1159 = vld [vmem:[%s9] sm:$0xf]
      %v1160 = vld [vmem:[%s9 + $0x4] sm:$0xf]
      %v1161 = vld [vmem:[%s9 + $0x8] sm:$0xf]
      %v1162 = vld [vmem:[%s9 + $0xc] sm:$0xf]
      %v1163 = vpack.c.bf16 %v1158, %v1158
      %v1164 = vld [vmem:[%s10] sm:$0x1]
      %v1166 = vperm.slane %v1164, 0
      %v1172 = vunpack.c.l.b16 %v1159
      %v1173 = vunpack.c.l.b16 %v1160
      %v1174 = vunpack.c.l.b16 %v1161
      %v1175 = vunpack.c.l.b16 %v1162
      %v1176 = vpack.c.b16 %v1173, %v1172
      %v1177 = vpack.c.b16 %v1175, %v1174
      %v1181 = vsel %vm803, %v1163, 0
      %1183 = vmatpush.bf16.msra.mxu0 0
      %1184 = vmatpush.bf16.msra.mxu0 0
      %1185 = vmatpush.bf16.msra.mxu0 0
      %1186 = vmatpush.bf16.msra.mxu0 0
      %1187 = vmatpush.bf16.msra.mxu0 0
      %1188 = vmatpush.bf16.msra.mxu0 0
      %1189 = vmatpush.bf16.msra.mxu0 %v1177
      %1190 = vmatpush.bf16.msra.mxu0 %v1176
      %1191 = vmatmul.bf16.gmra.mxu0 %v1181
      %v1192 = vpop.f32.mrf.mxu0
      %v1193 = vadd.f32 %v1166, %v1192
      %v1194 = vpop.f32.mrf.mxu0
      %1195 = vdwg.mxu0
      %v1196 = vld [vmem:[%s11] sm:$0xf]
      %v1197 = vld [vmem:[%s11 + $0x4] sm:$0xf]
      %v1198 = vld [vmem:[%s11 + $0x8] sm:$0xf]
      %v1199 = vld [vmem:[%s11 + $0xc] sm:$0xf]
      %v1200 = vpack.c.bf16 %v781, %v780
      %v1201 = vld [vmem:[%s12] sm:$0x1]
      %v1203 = vperm.slane %v1201, 0
      %v1209 = vunpack.c.l.b16 %v1196
      %v1210 = vunpack.c.l.b16 %v1197
      %v1211 = vunpack.c.l.b16 %v1198
      %v1212 = vunpack.c.l.b16 %v1199
      %v1213 = vpack.c.b16 %v1210, %v1209
      %v1214 = vpack.c.b16 %v1212, %v1211
      %v1218 = vsel %vm803, %v1200, 0
      %1220 = vmatpush.bf16.msra.mxu0 0
      %1221 = vmatpush.bf16.msra.mxu0 0
      %1222 = vmatpush.bf16.msra.mxu0 0
      %1223 = vmatpush.bf16.msra.mxu0 0
      %1224 = vmatpush.bf16.msra.mxu0 0
      %1225 = vmatpush.bf16.msra.mxu0 0
      %1226 = vmatpush.bf16.msra.mxu0 %v1214
      %1227 = vmatpush.bf16.msra.mxu0 %v1213
      %1228 = vmatmul.bf16.gmra.mxu0 %v1218
      %v1229 = vpop.f32.mrf.mxu0
      %v1230 = vadd.f32 %v1203, %v1229
      %v1231 = vpop.f32.mrf.mxu0
      %v1232 = vadd.f32 %v1203, %v1231
      %1233 = vdwg.mxu0
      %v1234 = vpack.c.bf16 %v1193, %v1193
      %v1235 = vpack.c.bf16 %v1232, %v1230
      %v1237 = vsel %vm835, %v1234, 0
      %v1240 = vsel %vm835, %v1235, 0
      %1242 = vmatpush.bf16.xpose.msra.mxu0 0
      %1243 = vmatpush.bf16.xpose.msra.mxu0 0
      %1244 = vmatpush.bf16.xpose.msra.mxu0 0
      %1245 = vmatpush.bf16.xpose.msra.mxu0 0
      %1246 = vmatpush.bf16.xpose.msra.mxu0 0
      %1247 = vmatpush.bf16.xpose.msra.mxu0 0
      %1248 = vmatpush.bf16.xpose.msra.mxu0 0
      %1249 = vmatpush.bf16.xpose.msra.mxu0 %v1240
      %1250 = vmatmul.bf16.gmra.mxu0 %v1237
      %v1251 = vpop.f32.mrf.mxu0
      %v1252 = vadd.f32 0.0, %v1251
      %v1253 = vpop.f32.mrf.mxu0
      %1254 = vdwg.mxu0
      %v1255 = vmul.f32 %v1252, 0.35355338
      %v1256 = vsel %vm1078, %v1255, -inf
      %1257 = vmax.xlane.f32.xlu0 %v1256
      %v1258 = vpop.xlane.xlu0 %1257
      %v1259 = vsub.f32 %v1255, %v1258
      %v1260 = vmul.f32 %v1259, 1.442695
      %v1261 = vpow.pop %v1260
      %v1262 = vsel %vm1078, %v1261, 0.0
      %1263 = vadd.xlane.f32.xlu0 %v1262
      %v1264 = vpop.xlane.xlu0 %1263
      %v1265 = vrcp.pop %v1264
      %v1266 = vmul.f32 %v1261, %v1265
      %v1267 = vpack.c.bf16 %v1266, %v1266
      %1269 = vrot.lane.b32.xlu0 %v1235, 96
      %v1270 = vpop.permute.xlu0 %1269
      %v1273 = vsel %vm1078, %v1267, 0
      %1275 = vmatpush.bf16.msra.mxu0 0
      %1276 = vmatpush.bf16.msra.mxu0 0
      %1277 = vmatpush.bf16.msra.mxu0 0
      %1278 = vmatpush.bf16.msra.mxu0 0
      %1279 = vmatpush.bf16.msra.mxu0 0
      %1280 = vmatpush.bf16.msra.mxu0 0
      %1281 = vmatpush.bf16.msra.mxu0 0
      %1282 = vmatpush.bf16.msra.mxu0 %v1270
      %1283 = vmatmul.bf16.gmra.mxu0 %v1273
      %v1284 = vpop.f32.mrf.mxu0
      %v1285 = vadd.f32 0.0, %v1284
      %v1286 = vpop.f32.mrf.mxu0
      %1287 = vdwg.mxu0
      %1289 = vrot.lane.b32.xlu0 %v1234, 120
      %v1290 = vpop.permute.xlu0 %1289
      %1291 = vrot.lane.b32.xlu0 %v1235, 120
      %v1292 = vpop.permute.xlu0 %1291
      %v1294 = vsel %vm835, %v1290, 0
      %v1297 = vsel %vm835, %v1292, 0
      %1299 = vmatpush.bf16.xpose.msra.mxu0 0
      %1300 = vmatpush.bf16.xpose.msra.mxu0 0
      %1301 = vmatpush.bf16.xpose.msra.mxu0 0
      %1302 = vmatpush.bf16.xpose.msra.mxu0 0
      %1303 = vmatpush.bf16.xpose.msra.mxu0 0
      %1304 = vmatpush.bf16.xpose.msra.mxu0 0
      %1305 = vmatpush.bf16.xpose.msra.mxu0 0
      %1306 = vmatpush.bf16.xpose.msra.mxu0 %v1297
      %1307 = vmatmul.bf16.gmra.mxu0 %v1294
      %v1308 = vpop.f32.mrf.mxu0
      %v1309 = vadd.f32 0.0, %v1308
      %v1310 = vpop.f32.mrf.mxu0
      %1311 = vdwg.mxu0
      %v1312 = vmul.f32 %v1309, 0.35355338
      %v1313 = vsel %vm1078, %v1312, -inf
      %1314 = vmax.xlane.f32.xlu0 %v1313
      %v1315 = vpop.xlane.xlu0 %1314
      %v1316 = vsub.f32 %v1312, %v1315
      %v1317 = vmul.f32 %v1316, 1.442695
      %v1318 = vpow.pop %v1317
      %v1319 = vsel %vm1078, %v1318, 0.0
      %1320 = vadd.xlane.f32.xlu0 %v1319
      %v1321 = vpop.xlane.xlu0 %1320
      %v1322 = vrcp.pop %v1321
      %v1323 = vmul.f32 %v1318, %v1322
      %v1324 = vpack.c.bf16 %v1323, %v1323
      %1325 = vrot.lane.b32.xlu0 %v1235, 88
      %v1326 = vpop.permute.xlu0 %1325
      %v1329 = vsel %vm1078, %v1324, 0
      %1331 = vmatpush.bf16.msra.mxu0 0
      %1332 = vmatpush.bf16.msra.mxu0 0
      %1333 = vmatpush.bf16.msra.mxu0 0
      %1334 = vmatpush.bf16.msra.mxu0 0
      %1335 = vmatpush.bf16.msra.mxu0 0
      %1336 = vmatpush.bf16.msra.mxu0 0
      %1337 = vmatpush.bf16.msra.mxu0 0
      %1338 = vmatpush.bf16.msra.mxu0 %v1326
      %1339 = vmatmul.bf16.gmra.mxu0 %v1329
      %v1340 = vpop.f32.mrf.mxu0
      %v1341 = vadd.f32 0.0, %v1340
      %v1342 = vpop.f32.mrf.mxu0
      %1343 = vdwg.mxu0
      %v1344 = vadd.f32 %v1266, %v1323
      %1345 = vrot.lane.b32.xlu0 %v1234, 112
      %v1346 = vpop.permute.xlu0 %1345
      %1347 = vrot.lane.b32.xlu0 %v1235, 112
      %v1348 = vpop.permute.xlu0 %1347
      %v1350 = vsel %vm835, %v1346, 0
      %v1353 = vsel %vm835, %v1348, 0
      %1355 = vmatpush.bf16.xpose.msra.mxu0 0
      %1356 = vmatpush.bf16.xpose.msra.mxu0 0
      %1357 = vmatpush.bf16.xpose.msra.mxu0 0
      %1358 = vmatpush.bf16.xpose.msra.mxu0 0
      %1359 = vmatpush.bf16.xpose.msra.mxu0 0
      %1360 = vmatpush.bf16.xpose.msra.mxu0 0
      %1361 = vmatpush.bf16.xpose.msra.mxu0 0
      %1362 = vmatpush.bf16.xpose.msra.mxu0 %v1353
      %1363 = vmatmul.bf16.gmra.mxu0 %v1350
      %v1364 = vpop.f32.mrf.mxu0
      %v1365 = vadd.f32 0.0, %v1364
      %v1366 = vpop.f32.mrf.mxu0
      %1367 = vdwg.mxu0
      %v1368 = vmul.f32 %v1365, 0.35355338
      %v1369 = vsel %vm1078, %v1368, -inf
      %1370 = vmax.xlane.f32.xlu0 %v1369
      %v1371 = vpop.xlane.xlu0 %1370
      %v1372 = vsub.f32 %v1368, %v1371
      %v1373 = vmul.f32 %v1372, 1.442695
      %v1374 = vpow.pop %v1373
      %v1375 = vsel %vm1078, %v1374, 0.0
      %1376 = vadd.xlane.f32.xlu0 %v1375
      %v1377 = vpop.xlane.xlu0 %1376
      %v1378 = vrcp.pop %v1377
      %v1379 = vmul.f32 %v1374, %v1378
      %v1380 = vpack.c.bf16 %v1379, %v1379
      %1381 = vrot.lane.b32.xlu0 %v1235, 80
      %v1382 = vpop.permute.xlu0 %1381
      %v1385 = vsel %vm1078, %v1380, 0
      %1387 = vmatpush.bf16.msra.mxu0 0
      %1388 = vmatpush.bf16.msra.mxu0 0
      %1389 = vmatpush.bf16.msra.mxu0 0
      %1390 = vmatpush.bf16.msra.mxu0 0
      %1391 = vmatpush.bf16.msra.mxu0 0
      %1392 = vmatpush.bf16.msra.mxu0 0
      %1393 = vmatpush.bf16.msra.mxu0 0
      %1394 = vmatpush.bf16.msra.mxu0 %v1382
      %1395 = vmatmul.bf16.gmra.mxu0 %v1385
      %v1396 = vpop.f32.mrf.mxu0
      %v1397 = vadd.f32 0.0, %v1396
      %v1398 = vpop.f32.mrf.mxu0
      %1399 = vdwg.mxu0
      %v1400 = vadd.f32 %v1344, %v1379
      %1401 = vrot.lane.b32.xlu0 %v1234, 104
      %v1402 = vpop.permute.xlu0 %1401
      %1403 = vrot.lane.b32.xlu0 %v1235, 104
      %v1404 = vpop.permute.xlu0 %1403
      %v1406 = vsel %vm835, %v1402, 0
      %v1409 = vsel %vm835, %v1404, 0
      %1411 = vmatpush.bf16.xpose.msra.mxu0 0
      %1412 = vmatpush.bf16.xpose.msra.mxu0 0
      %1413 = vmatpush.bf16.xpose.msra.mxu0 0
      %1414 = vmatpush.bf16.xpose.msra.mxu0 0
      %1415 = vmatpush.bf16.xpose.msra.mxu0 0
      %1416 = vmatpush.bf16.xpose.msra.mxu0 0
      %1417 = vmatpush.bf16.xpose.msra.mxu0 0
      %1418 = vmatpush.bf16.xpose.msra.mxu0 %v1409
      %1419 = vmatmul.bf16.gmra.mxu0 %v1406
      %v1420 = vpop.f32.mrf.mxu0
      %v1421 = vadd.f32 0.0, %v1420
      %v1422 = vpop.f32.mrf.mxu0
      %1423 = vdwg.mxu0
      %v1424 = vmul.f32 %v1421, 0.35355338
      %v1425 = vsel %vm1078, %v1424, -inf
      %1426 = vmax.xlane.f32.xlu0 %v1425
      %v1427 = vpop.xlane.xlu0 %1426
      %v1428 = vsub.f32 %v1424, %v1427
      %v1429 = vmul.f32 %v1428, 1.442695
      %v1430 = vpow.pop %v1429
      %v1431 = vsel %vm1078, %v1430, 0.0
      %1432 = vadd.xlane.f32.xlu0 %v1431
      %v1433 = vpop.xlane.xlu0 %1432
      %v1434 = vrcp.pop %v1433
      %v1435 = vmul.f32 %v1430, %v1434
      %v1436 = vpack.c.bf16 %v1435, %v1435
      %1437 = vrot.lane.b32.xlu0 %v1235, 72
      %v1438 = vpop.permute.xlu0 %1437
      %v1441 = vsel %vm1078, %v1436, 0
      %1443 = vmatpush.bf16.msra.mxu0 0
      %1444 = vmatpush.bf16.msra.mxu0 0
      %1445 = vmatpush.bf16.msra.mxu0 0
      %1446 = vmatpush.bf16.msra.mxu0 0
      %1447 = vmatpush.bf16.msra.mxu0 0
      %1448 = vmatpush.bf16.msra.mxu0 0
      %1449 = vmatpush.bf16.msra.mxu0 0
      %1450 = vmatpush.bf16.msra.mxu0 %v1438
      %1451 = vmatmul.bf16.gmra.mxu0 %v1441
      %v1452 = vpop.f32.mrf.mxu0
      %v1453 = vadd.f32 0.0, %v1452
      %v1454 = vpop.f32.mrf.mxu0
      %1455 = vdwg.mxu0
      %v1456 = vadd.f32 %v1400, %v1435
      %1458 = vrot.lane.b32.xlu0 %v1341, 8
      %v1459 = vpop.permute.xlu0 %1458
      %1462 = vrot.lane.b32.xlu0 %v1397, 16
      %v1463 = vpop.permute.xlu0 %1462
      %1466 = vrot.lane.b32.xlu0 %v1453, 24
      %v1467 = vpop.permute.xlu0 %1466
      %v1469 = vsel %vm835, %v1285, %v1459
      %v1470 = vsel %vm1078, %v1469, %v1463
      %v1471 = vsel %vm1080, %v1470, %v1467
      %v1472 = vmul.f32 %v1456, 0.25
      %v1473 = vld [vmem:[%s13] sm:$0xf]
      %v1474 = vld [vmem:[%s13 + $0x4] sm:$0xf]
      %v1475 = vld [vmem:[%s13 + $0x8] sm:$0xf]
      %v1476 = vld [vmem:[%s13 + $0xc] sm:$0xf]
      %v1477 = vpack.c.bf16 %v1471, %v1471
      %v1478 = vld [vmem:[%s14] sm:$0x1]
      %v1480 = vperm.slane %v1478, 0
      %v1486 = vunpack.c.l.b16 %v1473
      %v1487 = vunpack.c.l.b16 %v1474
      %v1488 = vunpack.c.l.b16 %v1475
      %v1489 = vunpack.c.l.b16 %v1476
      %v1490 = vpack.c.b16 %v1487, %v1486
      %v1491 = vpack.c.b16 %v1489, %v1488
      %v1495 = vsel %vm803, %v1477, 0
      %1497 = vmatpush.bf16.msra.mxu0 0
      %1498 = vmatpush.bf16.msra.mxu0 0
      %1499 = vmatpush.bf16.msra.mxu0 0
      %1500 = vmatpush.bf16.msra.mxu0 0
      %1501 = vmatpush.bf16.msra.mxu0 0
      %1502 = vmatpush.bf16.msra.mxu0 0
      %1503 = vmatpush.bf16.msra.mxu0 %v1491
      %1504 = vmatpush.bf16.msra.mxu0 %v1490
      %1505 = vmatmul.bf16.gmra.mxu0 %v1495
      %v1506 = vpop.f32.mrf.mxu0
      %v1507 = vadd.f32 %v1480, %v1506
      %v1508 = vpop.f32.mrf.mxu0
      %1509 = vdwg.mxu0
      %v1510 = vadd.f32 %v1507, %v1158
      %v1511 = vld [vmem:[%s15] sm:$0x1]
      %v1512 = vld [vmem:[%s16] sm:$0x1]
      %v1513 = vsel %vm803, %v1510, 0.0
      %1514 = vadd.xlane.f32.xlu0 %v1513
      %v1515 = vpop.xlane.xlu0 %1514
      %v1516 = vmul.f32 %v1515, %v1131
      %v1517 = vsub.f32 %v1510, %v1516
      %v1518 = vmul.f32 %v1517, %v1517
      %v1519 = vsel %vm803, %v1518, 0.0
      %1520 = vadd.xlane.f32.xlu0 %v1519
      %v1521 = vpop.xlane.xlu0 %1520
      %v1522 = vmul.f32 %v1521, %v1131
      %v1523 = vadd.f32 %v1522, 1e-05
      %v1524 = vrsqrt.pop %v1523
      %v1525 = vmul.f32 %v1524, %v1523
      %v1526 = vmul.f32 %v1525, %v1524
      %v1527 = vmul.f32 0.5, %v1526
      %v1528 = vsub.f32 1.5, %v1527
      %v1529 = vmul.f32 %v1524, %v1528
      %vm1530 = vweird.f32 %v1523
      %vm1531 = vweird.f32 %v1524
      %vm1532 = vmor %vm1530, %vm1531
      %v1533 = vsel %vm1532, %v1524, %v1529
      %v1534 = vmul.f32 %v1517, %v1533
      %v1536 = vperm.slane %v1511, 0
      %v1538 = vmul.f32 %v1534, %v1536
      %v1540 = vperm.slane %v1512, 0
      %v1542 = vadd.f32 %v1538, %v1540
      %v1543 = vld [vmem:[%s17] sm:$0xf]
      %v1544 = vld [vmem:[%s17 + $0x4] sm:$0xf]
      %v1545 = vld [vmem:[%s17 + $0x8] sm:$0xf]
      %v1546 = vld [vmem:[%s17 + $0xc] sm:$0xf]
      %v1547 = vpack.c.bf16 %v1542, %v1542
      %v1548 = vld [vmem:[%s18] sm:$0x1]
      %v1550 = vperm.slane %v1548, 0
      %v1556 = vunpack.c.l.b16 %v1543
      %v1557 = vunpack.c.l.b16 %v1544
      %v1558 = vunpack.c.l.b16 %v1545
      %v1559 = vunpack.c.l.b16 %v1546
      %v1560 = vpack.c.b16 %v1557, %v1556
      %v1561 = vpack.c.b16 %v1559, %v1558
      %v1565 = vsel %vm803, %v1547, 0
      %1567 = vmatpush.bf16.msra.mxu0 0
      %1568 = vmatpush.bf16.msra.mxu0 0
      %1569 = vmatpush.bf16.msra.mxu0 0
      %1570 = vmatpush.bf16.msra.mxu0 0
      %1571 = vmatpush.bf16.msra.mxu0 0
      %1572 = vmatpush.bf16.msra.mxu0 0
      %1573 = vmatpush.bf16.msra.mxu0 %v1561
      %1574 = vmatpush.bf16.msra.mxu0 %v1560
      %1575 = vmatmul.bf16.gmra.mxu0 %v1565
      %v1576 = vpop.f32.mrf.mxu0
      %v1577 = vadd.f32 %v1550, %v1576
      %v1578 = vpop.f32.mrf.mxu0
      %1579 = vdwg.mxu0
      %v1580 = vmax.f32 %v1577, 0.0
      %v1581 = vld [vmem:[%s19] sm:$0xf]
      %v1582 = vld [vmem:[%s19 + $0x4] sm:$0xf]
      %v1583 = vld [vmem:[%s19 + $0x8] sm:$0xf]
      %v1584 = vld [vmem:[%s19 + $0xc] sm:$0xf]
      %v1585 = vld [vmem:[%s19 + $0x10] sm:$0xf]
      %v1586 = vld [vmem:[%s19 + $0x14] sm:$0xf]
      %v1587 = vld [vmem:[%s19 + $0x18] sm:$0xf]
      %v1588 = vld [vmem:[%s19 + $0x1c] sm:$0xf]
      %v1589 = vpack.c.bf16 %v1580, %v1580
      %v1590 = vld [vmem:[%s20] sm:$0x1]
      %v1592 = vperm.slane %v1590, 0
      %v1602 = vunpack.c.l.b16 %v1581
      %v1603 = vunpack.c.l.b16 %v1582
      %v1604 = vunpack.c.l.b16 %v1583
      %v1605 = vunpack.c.l.b16 %v1584
      %v1606 = vunpack.c.l.b16 %v1585
      %v1607 = vunpack.c.l.b16 %v1586
      %v1608 = vunpack.c.l.b16 %v1587
      %v1609 = vunpack.c.l.b16 %v1588
      %v1610 = vpack.c.b16 %v1603, %v1602
      %v1611 = vpack.c.b16 %v1605, %v1604
      %v1612 = vpack.c.b16 %v1607, %v1606
      %v1613 = vpack.c.b16 %v1609, %v1608
      %vm1618 = vcmask 523264
      %v1620 = vsel %vm1618, %v1589, 0
      %1622 = vmatpush.bf16.msra.mxu0 0
      %1623 = vmatpush.bf16.msra.mxu0 0
      %1624 = vmatpush.bf16.msra.mxu0 0
      %1625 = vmatpush.bf16.msra.mxu0 0
      %1626 = vmatpush.bf16.msra.mxu0 %v1613
      %1627 = vmatpush.bf16.msra.mxu0 %v1612
      %1628 = vmatpush.bf16.msra.mxu0 %v1611
      %1629 = vmatpush.bf16.msra.mxu0 %v1610
      %1630 = vmatmul.bf16.gmra.mxu0 %v1620
      %v1631 = vpop.f32.mrf.mxu0
      %v1632 = vadd.f32 %v1592, %v1631
      %v1633 = vpop.f32.mrf.mxu0
      %1634 = vdwg.mxu0
      %v1635 = vadd.f32 %v1632, %v1542
      %v1636 = vld [vmem:[%s21] sm:$0x1]
      %v1637 = vld [vmem:[%s22] sm:$0x1]
      %v1638 = vsel %vm803, %v1635, 0.0
      %1639 = vadd.xlane.f32.xlu0 %v1638
      %v1640 = vpop.xlane.xlu0 %1639
      %v1641 = vmul.f32 %v1640, %v1131
      %v1642 = vsub.f32 %v1635, %v1641
      %v1643 = vmul.f32 %v1642, %v1642
      %v1644 = vsel %vm803, %v1643, 0.0
      %1645 = vadd.xlane.f32.xlu0 %v1644
      %v1646 = vpop.xlane.xlu0 %1645
      %v1647 = vmul.f32 %v1646, %v1131
      %v1648 = vadd.f32 %v1647, 1e-05
      %v1649 = vrsqrt.pop %v1648
      %v1650 = vmul.f32 %v1649, %v1648
      %v1651 = vmul.f32 %v1650, %v1649
      %v1652 = vmul.f32 0.5, %v1651
      %v1653 = vsub.f32 1.5, %v1652
      %v1654 = vmul.f32 %v1649, %v1653
      %vm1655 = vweird.f32 %v1648
      %vm1656 = vweird.f32 %v1649
      %vm1657 = vmor %vm1655, %vm1656
      %v1658 = vsel %vm1657, %v1649, %v1654
      %v1659 = vmul.f32 %v1642, %v1658
      %v1661 = vperm.slane %v1636, 0
      %v1663 = vmul.f32 %v1659, %v1661
      %v1665 = vperm.slane %v1637, 0
      %v1667 = vadd.f32 %v1663, %v1665
      %1668 = vst.msk [vmem:[%s773] sm:$0xff] %vm803, %v1667
      %1669 = vst.msk [vmem:[%s777] sm:$0xff] %vm1078, %v1472
      %p1670 = scmp.lt.s32.totalorder %s36, 1
      %s1671 = scalar_select %p1670, %s36, 1
      %s1672 = smul.addr %s1671, 8
      %s1673 = scalar_lea.vmem %s23, %s1672
      %p1674 = scmp.lt.s32.totalorder %s36, 1
      %s1675 = scalar_select %p1674, %s36, 1
      %s1676 = smul.addr %s1675, 8
      %s1677 = scalar_lea.vmem %s24, %s1676
      // Predicated region
      $region113: #{transformer_forward.7} parent=111 // pred_check
        %p1678 = pneg %p552
      $region114: #{transformer_forward.7} parent=111 // pred_check_branch
        %1680 = sbr.rel (%p1678) target = $region116
      $region115: #{transformer_forward.7} parent=111 // pred_region
        _
      $region116: #{transformer_forward.7} parent=111 // pred_fallthru
        _
      // Predicated region
      $region117: #{transformer_forward.7} parent=111 // pred_check
        %p1681 = pneg %p578
      $region118: #{transformer_forward.7} parent=111 // pred_check_branch
        %1683 = sbr.rel (%p1681) target = $region120
      $region119: #{transformer_forward.7} parent=111 // pred_region
        _
      $region120: #{transformer_forward.7} parent=111 // pred_fallthru
        _
    $region112: #{transformer_forward.7} parent=5 // pred_fallthru
      _
    %p1684 = scmp.le.s32.totalorder 2, %s31
    // Predicated region
    $region121: #{transformer_forward.7} parent=5 // pred_check
      %p1685 = pneg %p1684
    $region122: #{transformer_forward.7} parent=5 // pred_check_branch
      %1687 = sbr.rel (%p1685) target = $region124
    $region123: #{transformer_forward.7} parent=5 // pred_region
      %s1688 = ssub.s32 %s31, 2
      // Predicated region
      $region125: #{transformer_forward.7} parent=123 // pred_check
        %p1689 = pneg %p558
      $region126: #{transformer_forward.7} parent=123 // pred_check_branch
        %1691 = sbr.rel (%p1689) target = $region128
      $region127: #{transformer_forward.7} parent=123 // pred_region
        %p1692 = scmp.lt.s32.totalorder %s37, 1
        %s1693 = scalar_select %p1692, %s37, 1
        %s1694 = smul.addr %s1693, 8
        %s1695 = scalar_lea.vmem %s23, %s1694
      $region128: #{transformer_forward.7} parent=123 // pred_fallthru
        _
      // Predicated region
      $region129: #{transformer_forward.7} parent=123 // pred_check
        %p1696 = pneg %p584
      $region130: #{transformer_forward.7} parent=123 // pred_check_branch
        %1698 = sbr.rel (%p1696) target = $region132
      $region131: #{transformer_forward.7} parent=123 // pred_region
        %p1699 = scmp.lt.s32.totalorder %s37, 1
        %s1700 = scalar_select %p1699, %s37, 1
        %s1701 = smul.addr %s1700, 8
        %s1702 = scalar_lea.vmem %s24, %s1701
      $region132: #{transformer_forward.7} parent=123 // pred_fallthru
        _
    $region124: #{transformer_forward.7} parent=5 // pred_fallthru
      _
  $region6: #{transformer_forward.7} parent=0 // loop_footer
    %s35 = sadd.s32 1, %s31
  $region7: #{transformer_forward.7} parent=0 // loop_footer_branch
    %30 = sbr.rel target = $region3
  $region8: #{transformer_forward.7} parent=0 // loop_exit
    _

// kernel: transformer_forward.8
$region0: #{transformer_forward.8}
  #allocation0 [shape = 'u32[]', space=smem, size = 0x4, offset = 0x4, fixed_abs, tag = 'smem constant byte address 0x4 - core index']
  #allocation1 [shape = 'u32[72,128]{1,0:T(1,128)}', space=vmem, size = 0x9000, scoped, tag = 'internal scratch']
  %s0 = inlined_call_operand.vmem [shape: f32[2,8,32], index: 0, kind: input, shape index: {}]
  %s1 = inlined_call_operand.vmem [shape: f32[2,16,32], index: 1, kind: input, shape index: {}]
  %s2 = inlined_call_operand.vmem [shape: f32[2,1,8], index: 2, kind: input, shape index: {}]
  %s3 = inlined_call_operand.vmem [shape: bf16[32,96], index: 3, kind: input, shape index: {}]
  %s4 = inlined_call_operand.vmem [shape: f32[1,96], index: 4, kind: input, shape index: {}]
  %s5 = inlined_call_operand.vmem [shape: bf16[32,32], index: 5, kind: input, shape index: {}]
  %s6 = inlined_call_operand.vmem [shape: f32[1,32], index: 6, kind: input, shape index: {}]
  %s7 = inlined_call_operand.vmem [shape: f32[1,32], index: 7, kind: input, shape index: {}]
  %s8 = inlined_call_operand.vmem [shape: f32[1,32], index: 8, kind: input, shape index: {}]
  %s9 = inlined_call_operand.vmem [shape: bf16[32,32], index: 9, kind: input, shape index: {}]
  %s10 = inlined_call_operand.vmem [shape: f32[1,32], index: 10, kind: input, shape index: {}]
  %s11 = inlined_call_operand.vmem [shape: bf16[32,64], index: 11, kind: input, shape index: {}]
  %s12 = inlined_call_operand.vmem [shape: f32[1,64], index: 12, kind: input, shape index: {}]
  %s13 = inlined_call_operand.vmem [shape: bf16[32,32], index: 13, kind: input, shape index: {}]
  %s14 = inlined_call_operand.vmem [shape: f32[1,32], index: 14, kind: input, shape index: {}]
  %s15 = inlined_call_operand.vmem [shape: f32[1,32], index: 15, kind: input, shape index: {}]
  %s16 = inlined_call_operand.vmem [shape: f32[1,32], index: 16, kind: input, shape index: {}]
  %s17 = inlined_call_operand.vmem [shape: bf16[32,64], index: 17, kind: input, shape index: {}]
  %s18 = inlined_call_operand.vmem [shape: f32[1,64], index: 18, kind: input, shape index: {}]
  %s19 = inlined_call_operand.vmem [shape: bf16[64,32], index: 19, kind: input, shape index: {}]
  %s20 = inlined_call_operand.vmem [shape: f32[1,32], index: 20, kind: input, shape index: {}]
  %s21 = inlined_call_operand.vmem [shape: f32[1,32], index: 21, kind: input, shape index: {}]
  %s22 = inlined_call_operand.hbm [shape: f32[1,32], index: 22, kind: input, shape index: {}]
  %s23 = inlined_call_operand.vmem [shape: f32[2,8,32], index: 23, kind: output, shape index: {0}]
  %s24 = inlined_call_operand.vmem [shape: f32[2,8,16], index: 24, kind: output, shape index: {1}]
  %25 = xla_tuple %s23, %s24
  %s26 = sld [smem:[#allocation0]]
  $region137: #{transformer_forward.8} parent=0
    _
  %s28 = ssub.s32 1, %s26
  %s29 = scalar_select 0, %s28, %s26
  $region1: #{transformer_forward.8} parent=0
    #allocation2 [shape = 'u8[512]{0}', space=vmem, size = 0x400, scoped, tag = 'input window, operand 22, single buffered']
    #allocation3 [shape = 's32[2]{0}', space=sflag, size = 0x8, scoped, tag = 'scoped memory for transformer_forward.8']
    %30 = vsyncpa [#allocation3], 0
    loop: start=0, step=1, limit=4
    $region2: #{transformer_forward.8} parent=1 // loop_pre_header
      _
    $region3: #{transformer_forward.8} parent=1 // loop_header
      %s32 = sphi 0, %s36
      %p33 = scmp.ge.s32.totalorder %s32, 4
      %s42 = sphi 0, %s44
      %s45 = sphi 0, %s42
      %s46 = sphi 0, %s45
      %s62 = sphi 0, %s46
      %s68 = sphi 0, %s70
      %s71 = sphi 0, %s68
      %s72 = sphi 0, %s71
      %s88 = sphi 0, %s72
      %s94 = sphi 0, %s96
      %s97 = sphi 0, %s94
      %s98 = sphi 0, %s97
      %s114 = sphi 0, %s98
      %s118 = sphi 0, %s118
      %s120 = sphi 0, %s118
      %s121 = sphi 0, %s120
      %s135 = sphi 0, %s121
      %s139 = sphi 0, %s139
      %s141 = sphi 0, %s139
      %s142 = sphi 0, %s141
      %s156 = sphi 0, %s142
      %s160 = sphi 0, %s160
      %s162 = sphi 0, %s160
      %s163 = sphi 0, %s162
      %s177 = sphi 0, %s163
      %s181 = sphi 0, %s181
      %s183 = sphi 0, %s181
      %s184 = sphi 0, %s183
      %s198 = sphi 0, %s184
      %s202 = sphi 0, %s202
      %s204 = sphi 0, %s202
      %s205 = sphi 0, %s204
      %s219 = sphi 0, %s205
      %s223 = sphi 0, %s223
      %s225 = sphi 0, %s223
      %s226 = sphi 0, %s225
      %s240 = sphi 0, %s226
      %s244 = sphi 0, %s244
      %s246 = sphi 0, %s244
      %s247 = sphi 0, %s246
      %s261 = sphi 0, %s247
      %s265 = sphi 0, %s265
      %s267 = sphi 0, %s265
      %s268 = sphi 0, %s267
      %s282 = sphi 0, %s268
      %s286 = sphi 0, %s286
      %s288 = sphi 0, %s286
      %s289 = sphi 0, %s288
      %s303 = sphi 0, %s289
      %s307 = sphi 0, %s307
      %s309 = sphi 0, %s307
      %s310 = sphi 0, %s309
      %s324 = sphi 0, %s310
      %s328 = sphi 0, %s328
      %s330 = sphi 0, %s328
      %s331 = sphi 0, %s330
      %s345 = sphi 0, %s331
      %s349 = sphi 0, %s349
      %s351 = sphi 0, %s349
      %s352 = sphi 0, %s351
      %s366 = sphi 0, %s352
      %s370 = sphi 0, %s370
      %s372 = sphi 0, %s370
      %s373 = sphi 0, %s372
      %s387 = sphi 0, %s373
      %s391 = sphi 0, %s391
      %s393 = sphi 0, %s391
      %s394 = sphi 0, %s393
      %s408 = sphi 0, %s394
      %s412 = sphi 0, %s412
      %s414 = sphi 0, %s412
      %s415 = sphi 0, %s414
      %s429 = sphi 0, %s415
      %s433 = sphi 0, %s433
      %s435 = sphi 0, %s433
      %s436 = sphi 0, %s435
      %s450 = sphi 0, %s436
      %s454 = sphi 0, %s454
      %s456 = sphi 0, %s454
      %s457 = sphi 0, %s456
      %s471 = sphi 0, %s457
      %s475 = sphi 0, %s475
      %s477 = sphi 0, %s475
      %s478 = sphi 0, %s477
      %s492 = sphi 0, %s478
      %s496 = sphi 0, %s496
      %s498 = sphi 0, %s496
      %s499 = sphi 0, %s498
      %s513 = sphi 0, %s499
      %s517 = sphi 0, %s517
      %s519 = sphi 0, %s517
      %s520 = sphi 0, %s519
      %s534 = sphi 0, %s520
      %s540 = sphi 0, %s542
      %s543 = sphi 0, %s540
      %s544 = sphi 0, %s543
      %s560 = sphi 0, %s544
      %s566 = sphi 0, %s568
      %s569 = sphi 0, %s566
      %s570 = sphi 0, %s569
      %s586 = sphi 0, %s570
    $region4: #{transformer_forward.8} parent=1 // loop_header_branch
      %35 = sbr.rel (%p33) target = $region8
    $region5: #{transformer_forward.8} parent=1 // loop_body
      %s37 = ssub.s32 %s32, 1
      %s38 = ssub.s32 %s32, 2
      %s39 = sadd.s32 %s32, 1
      %s40 = ssub.s32 %s32, %s39
      %p41 = scmp.eq.s32.totalorder %s40, 0
      %s43 = sadd.s32 %s42, 1
      %s44 = scalar_select %p41, %s42, %s43
      %p47 = pneg %p41
      %p48 = scmp.eq.s32.totalorder %s32, 1
      %p49 = por %p47, %p48
      %p50 = scmp.ne.s32.totalorder %s42, %s45
      %p51 = scmp.eq.s32.totalorder %s32, 0
      %p52 = por %p50, %p51
      %p53 = scmp.ne.s32.totalorder %s42, %s45
      %p54 = scmp.eq.s32.totalorder %s37, 1
      %p55 = por %p53, %p54
      %p56 = scmp.ne.s32.totalorder %s45, %s46
      %p57 = scmp.eq.s32.totalorder %s37, 0
      %p58 = por %p56, %p57
      %p59 = scmp.ne.s32.totalorder %s45, %s46
      %p60 = scmp.eq.s32.totalorder %s38, 1
      %p61 = por %p59, %p60
      %p63 = scmp.ne.s32.totalorder %s46, %s62
      %p64 = scmp.eq.s32.totalorder %s38, 0
      %p65 = por %p63, %p64
      %s66 = ssub.s32 %s32, %s39
      %p67 = scmp.eq.s32.totalorder %s66, 0
      %s69 = sadd.s32 %s68, 1
      %s70 = scalar_select %p67, %s68, %s69
      %p73 = pneg %p67
      %p74 = scmp.eq.s32.totalorder %s32, 1
      %p75 = por %p73, %p74
      %p76 = scmp.ne.s32.totalorder %s68, %s71
      %p77 = scmp.eq.s32.totalorder %s32, 0
      %p78 = por %p76, %p77
      %p79 = scmp.ne.s32.totalorder %s68, %s71
      %p80 = scmp.eq.s32.totalorder %s37, 1
      %p81 = por %p79, %p80
      %p82 = scmp.ne.s32.totalorder %s71, %s72
      %p83 = scmp.eq.s32.totalorder %s37, 0
      %p84 = por %p82, %p83
      %p85 = scmp.ne.s32.totalorder %s71, %s72
      %p86 = scmp.eq.s32.totalorder %s38, 1
      %p87 = por %p85, %p86
      %p89 = scmp.ne.s32.totalorder %s72, %s88
      %p90 = scmp.eq.s32.totalorder %s38, 0
      %p91 = por %p89, %p90
      %s92 = ssub.s32 %s32, %s39
      %p93 = scmp.eq.s32.totalorder %s92, 0
      %s95 = sadd.s32 %s94, 1
      %s96 = scalar_select %p93, %s94, %s95
      %p99 = pneg %p93
      %p100 = scmp.eq.s32.totalorder %s32, 1
      %p101 = por %p99, %p100
      %p102 = scmp.ne.s32.totalorder %s94, %s97
      %p103 = scmp.eq.s32.totalorder %s32, 0
      %p104 = por %p102, %p103
      %p105 = scmp.ne.s32.totalorder %s94, %s97
      %p106 = scmp.eq.s32.totalorder %s37, 1
      %p107 = por %p105, %p106
      %p108 = scmp.ne.s32.totalorder %s97, %s98
      %p109 = scmp.eq.s32.totalorder %s37, 0
      %p110 = por %p108, %p109
      %p111 = scmp.ne.s32.totalorder %s97, %s98
      %p112 = scmp.eq.s32.totalorder %s38, 1
      %p113 = por %p111, %p112
      %p115 = scmp.ne.s32.totalorder %s98, %s114
      %p116 = scmp.eq.s32.totalorder %s38, 0
      %p117 = por %p115, %p116
      %s119 = sadd.s32 %s118, 1
      %p122 = scmp.eq.s32.totalorder %s32, 1
      %p123 = scmp.ne.s32.totalorder %s118, %s120
      %p124 = scmp.eq.s32.totalorder %s32, 0
      %p125 = por %p123, %p124
      %p126 = scmp.ne.s32.totalorder %s118, %s120
      %p127 = scmp.eq.s32.totalorder %s37, 1
      %p128 = por %p126, %p127
      %p129 = scmp.ne.s32.totalorder %s120, %s121
      %p130 = scmp.eq.s32.totalorder %s37, 0
      %p131 = por %p129, %p130
      %p132 = scmp.ne.s32.totalorder %s120, %s121
      %p133 = scmp.eq.s32.totalorder %s38, 1
      %p134 = por %p132, %p133
      %p136 = scmp.ne.s32.totalorder %s121, %s135
      %p137 = scmp.eq.s32.totalorder %s38, 0
      %p138 = por %p136, %p137
      %s140 = sadd.s32 %s139, 1
      %p143 = scmp.eq.s32.totalorder %s32, 1
      %p144 = scmp.ne.s32.totalorder %s139, %s141
      %p145 = scmp.eq.s32.totalorder %s32, 0
      %p146 = por %p144, %p145
      %p147 = scmp.ne.s32.totalorder %s139, %s141
      %p148 = scmp.eq.s32.totalorder %s37, 1
      %p149 = por %p147, %p148
      %p150 = scmp.ne.s32.totalorder %s141, %s142
      %p151 = scmp.eq.s32.totalorder %s37, 0
      %p152 = por %p150, %p151
      %p153 = scmp.ne.s32.totalorder %s141, %s142
      %p154 = scmp.eq.s32.totalorder %s38, 1
      %p155 = por %p153, %p154
      %p157 = scmp.ne.s32.totalorder %s142, %s156
      %p158 = scmp.eq.s32.totalorder %s38, 0
      %p159 = por %p157, %p158
      %s161 = sadd.s32 %s160, 1
      %p164 = scmp.eq.s32.totalorder %s32, 1
      %p165 = scmp.ne.s32.totalorder %s160, %s162
      %p166 = scmp.eq.s32.totalorder %s32, 0
      %p167 = por %p165, %p166
      %p168 = scmp.ne.s32.totalorder %s160, %s162
      %p169 = scmp.eq.s32.totalorder %s37, 1
      %p170 = por %p168, %p169
      %p171 = scmp.ne.s32.totalorder %s162, %s163
      %p172 = scmp.eq.s32.totalorder %s37, 0
      %p173 = por %p171, %p172
      %p174 = scmp.ne.s32.totalorder %s162, %s163
      %p175 = scmp.eq.s32.totalorder %s38, 1
      %p176 = por %p174, %p175
      %p178 = scmp.ne.s32.totalorder %s163, %s177
      %p179 = scmp.eq.s32.totalorder %s38, 0
      %p180 = por %p178, %p179
      %s182 = sadd.s32 %s181, 1
      %p185 = scmp.eq.s32.totalorder %s32, 1
      %p186 = scmp.ne.s32.totalorder %s181, %s183
      %p187 = scmp.eq.s32.totalorder %s32, 0
      %p188 = por %p186, %p187
      %p189 = scmp.ne.s32.totalorder %s181, %s183
      %p190 = scmp.eq.s32.totalorder %s37, 1
      %p191 = por %p189, %p190
      %p192 = scmp.ne.s32.totalorder %s183, %s184
      %p193 = scmp.eq.s32.totalorder %s37, 0
      %p194 = por %p192, %p193
      %p195 = scmp.ne.s32.totalorder %s183, %s184
      %p196 = scmp.eq.s32.totalorder %s38, 1
      %p197 = por %p195, %p196
      %p199 = scmp.ne.s32.totalorder %s184, %s198
      %p200 = scmp.eq.s32.totalorder %s38, 0
      %p201 = por %p199, %p200
      %s203 = sadd.s32 %s202, 1
      %p206 = scmp.eq.s32.totalorder %s32, 1
      %p207 = scmp.ne.s32.totalorder %s202, %s204
      %p208 = scmp.eq.s32.totalorder %s32, 0
      %p209 = por %p207, %p208
      %p210 = scmp.ne.s32.totalorder %s202, %s204
      %p211 = scmp.eq.s32.totalorder %s37, 1
      %p212 = por %p210, %p211
      %p213 = scmp.ne.s32.totalorder %s204, %s205
      %p214 = scmp.eq.s32.totalorder %s37, 0
      %p215 = por %p213, %p214
      %p216 = scmp.ne.s32.totalorder %s204, %s205
      %p217 = scmp.eq.s32.totalorder %s38, 1
      %p218 = por %p216, %p217
      %p220 = scmp.ne.s32.totalorder %s205, %s219
      %p221 = scmp.eq.s32.totalorder %s38, 0
      %p222 = por %p220, %p221
      %s224 = sadd.s32 %s223, 1
      %p227 = scmp.eq.s32.totalorder %s32, 1
      %p228 = scmp.ne.s32.totalorder %s223, %s225
      %p229 = scmp.eq.s32.totalorder %s32, 0
      %p230 = por %p228, %p229
      %p231 = scmp.ne.s32.totalorder %s223, %s225
      %p232 = scmp.eq.s32.totalorder %s37, 1
      %p233 = por %p231, %p232
      %p234 = scmp.ne.s32.totalorder %s225, %s226
      %p235 = scmp.eq.s32.totalorder %s37, 0
      %p236 = por %p234, %p235
      %p237 = scmp.ne.s32.totalorder %s225, %s226
      %p238 = scmp.eq.s32.totalorder %s38, 1
      %p239 = por %p237, %p238
      %p241 = scmp.ne.s32.totalorder %s226, %s240
      %p242 = scmp.eq.s32.totalorder %s38, 0
      %p243 = por %p241, %p242
      %s245 = sadd.s32 %s244, 1
      %p248 = scmp.eq.s32.totalorder %s32, 1
      %p249 = scmp.ne.s32.totalorder %s244, %s246
      %p250 = scmp.eq.s32.totalorder %s32, 0
      %p251 = por %p249, %p250
      %p252 = scmp.ne.s32.totalorder %s244, %s246
      %p253 = scmp.eq.s32.totalorder %s37, 1
      %p254 = por %p252, %p253
      %p255 = scmp.ne.s32.totalorder %s246, %s247
      %p256 = scmp.eq.s32.totalorder %s37, 0
      %p257 = por %p255, %p256
      %p258 = scmp.ne.s32.totalorder %s246, %s247
      %p259 = scmp.eq.s32.totalorder %s38, 1
      %p260 = por %p258, %p259
      %p262 = scmp.ne.s32.totalorder %s247, %s261
      %p263 = scmp.eq.s32.totalorder %s38, 0
      %p264 = por %p262, %p263
      %s266 = sadd.s32 %s265, 1
      %p269 = scmp.eq.s32.totalorder %s32, 1
      %p270 = scmp.ne.s32.totalorder %s265, %s267
      %p271 = scmp.eq.s32.totalorder %s32, 0
      %p272 = por %p270, %p271
      %p273 = scmp.ne.s32.totalorder %s265, %s267
      %p274 = scmp.eq.s32.totalorder %s37, 1
      %p275 = por %p273, %p274
      %p276 = scmp.ne.s32.totalorder %s267, %s268
      %p277 = scmp.eq.s32.totalorder %s37, 0
      %p278 = por %p276, %p277
      %p279 = scmp.ne.s32.totalorder %s267, %s268
      %p280 = scmp.eq.s32.totalorder %s38, 1
      %p281 = por %p279, %p280
      %p283 = scmp.ne.s32.totalorder %s268, %s282
      %p284 = scmp.eq.s32.totalorder %s38, 0
      %p285 = por %p283, %p284
      %s287 = sadd.s32 %s286, 1
      %p290 = scmp.eq.s32.totalorder %s32, 1
      %p291 = scmp.ne.s32.totalorder %s286, %s288
      %p292 = scmp.eq.s32.totalorder %s32, 0
      %p293 = por %p291, %p292
      %p294 = scmp.ne.s32.totalorder %s286, %s288
      %p295 = scmp.eq.s32.totalorder %s37, 1
      %p296 = por %p294, %p295
      %p297 = scmp.ne.s32.totalorder %s288, %s289
      %p298 = scmp.eq.s32.totalorder %s37, 0
      %p299 = por %p297, %p298
      %p300 = scmp.ne.s32.totalorder %s288, %s289
      %p301 = scmp.eq.s32.totalorder %s38, 1
      %p302 = por %p300, %p301
      %p304 = scmp.ne.s32.totalorder %s289, %s303
      %p305 = scmp.eq.s32.totalorder %s38, 0
      %p306 = por %p304, %p305
      %s308 = sadd.s32 %s307, 1
      %p311 = scmp.eq.s32.totalorder %s32, 1
      %p312 = scmp.ne.s32.totalorder %s307, %s309
      %p313 = scmp.eq.s32.totalorder %s32, 0
      %p314 = por %p312, %p313
      %p315 = scmp.ne.s32.totalorder %s307, %s309
      %p316 = scmp.eq.s32.totalorder %s37, 1
      %p317 = por %p315, %p316
      %p318 = scmp.ne.s32.totalorder %s309, %s310
      %p319 = scmp.eq.s32.totalorder %s37, 0
      %p320 = por %p318, %p319
      %p321 = scmp.ne.s32.totalorder %s309, %s310
      %p322 = scmp.eq.s32.totalorder %s38, 1
      %p323 = por %p321, %p322
      %p325 = scmp.ne.s32.totalorder %s310, %s324
      %p326 = scmp.eq.s32.totalorder %s38, 0
      %p327 = por %p325, %p326
      %s329 = sadd.s32 %s328, 1
      %p332 = scmp.eq.s32.totalorder %s32, 1
      %p333 = scmp.ne.s32.totalorder %s328, %s330
      %p334 = scmp.eq.s32.totalorder %s32, 0
      %p335 = por %p333, %p334
      %p336 = scmp.ne.s32.totalorder %s328, %s330
      %p337 = scmp.eq.s32.totalorder %s37, 1
      %p338 = por %p336, %p337
      %p339 = scmp.ne.s32.totalorder %s330, %s331
      %p340 = scmp.eq.s32.totalorder %s37, 0
      %p341 = por %p339, %p340
      %p342 = scmp.ne.s32.totalorder %s330, %s331
      %p343 = scmp.eq.s32.totalorder %s38, 1
      %p344 = por %p342, %p343
      %p346 = scmp.ne.s32.totalorder %s331, %s345
      %p347 = scmp.eq.s32.totalorder %s38, 0
      %p348 = por %p346, %p347
      %s350 = sadd.s32 %s349, 1
      %p353 = scmp.eq.s32.totalorder %s32, 1
      %p354 = scmp.ne.s32.totalorder %s349, %s351
      %p355 = scmp.eq.s32.totalorder %s32, 0
      %p356 = por %p354, %p355
      %p357 = scmp.ne.s32.totalorder %s349, %s351
      %p358 = scmp.eq.s32.totalorder %s37, 1
      %p359 = por %p357, %p358
      %p360 = scmp.ne.s32.totalorder %s351, %s352
      %p361 = scmp.eq.s32.totalorder %s37, 0
      %p362 = por %p360, %p361
      %p363 = scmp.ne.s32.totalorder %s351, %s352
      %p364 = scmp.eq.s32.totalorder %s38, 1
      %p365 = por %p363, %p364
      %p367 = scmp.ne.s32.totalorder %s352, %s366
      %p368 = scmp.eq.s32.totalorder %s38, 0
      %p369 = por %p367, %p368
      %s371 = sadd.s32 %s370, 1
      %p374 = scmp.eq.s32.totalorder %s32, 1
      %p375 = scmp.ne.s32.totalorder %s370, %s372
      %p376 = scmp.eq.s32.totalorder %s32, 0
      %p377 = por %p375, %p376
      %p378 = scmp.ne.s32.totalorder %s370, %s372
      %p379 = scmp.eq.s32.totalorder %s37, 1
      %p380 = por %p378, %p379
      %p381 = scmp.ne.s32.totalorder %s372, %s373
      %p382 = scmp.eq.s32.totalorder %s37, 0
      %p383 = por %p381, %p382
      %p384 = scmp.ne.s32.totalorder %s372, %s373
      %p385 = scmp.eq.s32.totalorder %s38, 1
      %p386 = por %p384, %p385
      %p388 = scmp.ne.s32.totalorder %s373, %s387
      %p389 = scmp.eq.s32.totalorder %s38, 0
      %p390 = por %p388, %p389
      %s392 = sadd.s32 %s391, 1
      %p395 = scmp.eq.s32.totalorder %s32, 1
      %p396 = scmp.ne.s32.totalorder %s391, %s393
      %p397 = scmp.eq.s32.totalorder %s32, 0
      %p398 = por %p396, %p397
      %p399 = scmp.ne.s32.totalorder %s391, %s393
      %p400 = scmp.eq.s32.totalorder %s37, 1
      %p401 = por %p399, %p400
      %p402 = scmp.ne.s32.totalorder %s393, %s394
      %p403 = scmp.eq.s32.totalorder %s37, 0
      %p404 = por %p402, %p403
      %p405 = scmp.ne.s32.totalorder %s393, %s394
      %p406 = scmp.eq.s32.totalorder %s38, 1
      %p407 = por %p405, %p406
      %p409 = scmp.ne.s32.totalorder %s394, %s408
      %p410 = scmp.eq.s32.totalorder %s38, 0
      %p411 = por %p409, %p410
      %s413 = sadd.s32 %s412, 1
      %p416 = scmp.eq.s32.totalorder %s32, 1
      %p417 = scmp.ne.s32.totalorder %s412, %s414
      %p418 = scmp.eq.s32.totalorder %s32, 0
      %p419 = por %p417, %p418
      %p420 = scmp.ne.s32.totalorder %s412, %s414
      %p421 = scmp.eq.s32.totalorder %s37, 1
      %p422 = por %p420, %p421
      %p423 = scmp.ne.s32.totalorder %s414, %s415
      %p424 = scmp.eq.s32.totalorder %s37, 0
      %p425 = por %p423, %p424
      %p426 = scmp.ne.s32.totalorder %s414, %s415
      %p427 = scmp.eq.s32.totalorder %s38, 1
      %p428 = por %p426, %p427
      %p430 = scmp.ne.s32.totalorder %s415, %s429
      %p431 = scmp.eq.s32.totalorder %s38, 0
      %p432 = por %p430, %p431
      %s434 = sadd.s32 %s433, 1
      %p437 = scmp.eq.s32.totalorder %s32, 1
      %p438 = scmp.ne.s32.totalorder %s433, %s435
      %p439 = scmp.eq.s32.totalorder %s32, 0
      %p440 = por %p438, %p439
      %p441 = scmp.ne.s32.totalorder %s433, %s435
      %p442 = scmp.eq.s32.totalorder %s37, 1
      %p443 = por %p441, %p442
      %p444 = scmp.ne.s32.totalorder %s435, %s436
      %p445 = scmp.eq.s32.totalorder %s37, 0
      %p446 = por %p444, %p445
      %p447 = scmp.ne.s32.totalorder %s435, %s436
      %p448 = scmp.eq.s32.totalorder %s38, 1
      %p449 = por %p447, %p448
      %p451 = scmp.ne.s32.totalorder %s436, %s450
      %p452 = scmp.eq.s32.totalorder %s38, 0
      %p453 = por %p451, %p452
      %s455 = sadd.s32 %s454, 1
      %p458 = scmp.eq.s32.totalorder %s32, 1
      %p459 = scmp.ne.s32.totalorder %s454, %s456
      %p460 = scmp.eq.s32.totalorder %s32, 0
      %p461 = por %p459, %p460
      %p462 = scmp.ne.s32.totalorder %s454, %s456
      %p463 = scmp.eq.s32.totalorder %s37, 1
      %p464 = por %p462, %p463
      %p465 = scmp.ne.s32.totalorder %s456, %s457
      %p466 = scmp.eq.s32.totalorder %s37, 0
      %p467 = por %p465, %p466
      %p468 = scmp.ne.s32.totalorder %s456, %s457
      %p469 = scmp.eq.s32.totalorder %s38, 1
      %p470 = por %p468, %p469
      %p472 = scmp.ne.s32.totalorder %s457, %s471
      %p473 = scmp.eq.s32.totalorder %s38, 0
      %p474 = por %p472, %p473
      %s476 = sadd.s32 %s475, 1
      %p479 = scmp.eq.s32.totalorder %s32, 1
      %p480 = scmp.ne.s32.totalorder %s475, %s477
      %p481 = scmp.eq.s32.totalorder %s32, 0
      %p482 = por %p480, %p481
      %p483 = scmp.ne.s32.totalorder %s475, %s477
      %p484 = scmp.eq.s32.totalorder %s37, 1
      %p485 = por %p483, %p484
      %p486 = scmp.ne.s32.totalorder %s477, %s478
      %p487 = scmp.eq.s32.totalorder %s37, 0
      %p488 = por %p486, %p487
      %p489 = scmp.ne.s32.totalorder %s477, %s478
      %p490 = scmp.eq.s32.totalorder %s38, 1
      %p491 = por %p489, %p490
      %p493 = scmp.ne.s32.totalorder %s478, %s492
      %p494 = scmp.eq.s32.totalorder %s38, 0
      %p495 = por %p493, %p494
      %s497 = sadd.s32 %s496, 1
      %p500 = scmp.eq.s32.totalorder %s32, 1
      %p501 = scmp.ne.s32.totalorder %s496, %s498
      %p502 = scmp.eq.s32.totalorder %s32, 0
      %p503 = por %p501, %p502
      %p504 = scmp.ne.s32.totalorder %s496, %s498
      %p505 = scmp.eq.s32.totalorder %s37, 1
      %p506 = por %p504, %p505
      %p507 = scmp.ne.s32.totalorder %s498, %s499
      %p508 = scmp.eq.s32.totalorder %s37, 0
      %p509 = por %p507, %p508
      %p510 = scmp.ne.s32.totalorder %s498, %s499
      %p511 = scmp.eq.s32.totalorder %s38, 1
      %p512 = por %p510, %p511
      %p514 = scmp.ne.s32.totalorder %s499, %s513
      %p515 = scmp.eq.s32.totalorder %s38, 0
      %p516 = por %p514, %p515
      %s518 = sadd.s32 %s517, 1
      %p521 = scmp.eq.s32.totalorder %s32, 1
      %p522 = scmp.ne.s32.totalorder %s517, %s519
      %p523 = scmp.eq.s32.totalorder %s32, 0
      %p524 = por %p522, %p523
      %p525 = scmp.ne.s32.totalorder %s517, %s519
      %p526 = scmp.eq.s32.totalorder %s37, 1
      %p527 = por %p525, %p526
      %p528 = scmp.ne.s32.totalorder %s519, %s520
      %p529 = scmp.eq.s32.totalorder %s37, 0
      %p530 = por %p528, %p529
      %p531 = scmp.ne.s32.totalorder %s519, %s520
      %p532 = scmp.eq.s32.totalorder %s38, 1
      %p533 = por %p531, %p532
      %p535 = scmp.ne.s32.totalorder %s520, %s534
      %p536 = scmp.eq.s32.totalorder %s38, 0
      %p537 = por %p535, %p536
      %s538 = ssub.s32 %s32, %s39
      %p539 = scmp.eq.s32.totalorder %s538, 0
      %s541 = sadd.s32 %s540, 1
      %s542 = scalar_select %p539, %s540, %s541
      %p545 = pneg %p539
      %p546 = scmp.eq.s32.totalorder %s32, 1
      %p547 = por %p545, %p546
      %p548 = scmp.ne.s32.totalorder %s540, %s543
      %p549 = scmp.eq.s32.totalorder %s32, 0
      %p550 = por %p548, %p549
      %p551 = scmp.ne.s32.totalorder %s540, %s543
      %p552 = scmp.eq.s32.totalorder %s37, 1
      %p553 = por %p551, %p552
      %p554 = scmp.ne.s32.totalorder %s543, %s544
      %p555 = scmp.eq.s32.totalorder %s37, 0
      %p556 = por %p554, %p555
      %p557 = scmp.ne.s32.totalorder %s543, %s544
      %p558 = scmp.eq.s32.totalorder %s38, 1
      %p559 = por %p557, %p558
      %p561 = scmp.ne.s32.totalorder %s544, %s560
      %p562 = scmp.eq.s32.totalorder %s38, 0
      %p563 = por %p561, %p562
      %s564 = ssub.s32 %s32, %s39
      %p565 = scmp.eq.s32.totalorder %s564, 0
      %s567 = sadd.s32 %s566, 1
      %s568 = scalar_select %p565, %s566, %s567
      %p571 = pneg %p565
      %p572 = scmp.eq.s32.totalorder %s32, 1
      %p573 = por %p571, %p572
      %p574 = scmp.ne.s32.totalorder %s566, %s569
      %p575 = scmp.eq.s32.totalorder %s32, 0
      %p576 = por %p574, %p575
      %p577 = scmp.ne.s32.totalorder %s566, %s569
      %p578 = scmp.eq.s32.totalorder %s37, 1
      %p579 = por %p577, %p578
      %p580 = scmp.ne.s32.totalorder %s569, %s570
      %p581 = scmp.eq.s32.totalorder %s37, 0
      %p582 = por %p580, %p581
      %p583 = scmp.ne.s32.totalorder %s569, %s570
      %p584 = scmp.eq.s32.totalorder %s38, 1
      %p585 = por %p583, %p584
      %p587 = scmp.ne.s32.totalorder %s570, %s586
      %p588 = scmp.eq.s32.totalorder %s38, 0
      %p589 = por %p587, %p588
      %p590 = scmp.le.s32.totalorder 1, %s32
      %p591 = scmp.lt.s32.totalorder %s32, 3
      %p592 = pnand %p590, %p591
      %p593 = pneg %p592
      // Predicated region
      $region9: #{transformer_forward.8} parent=5 // pred_check
        _
      $region10: #{transformer_forward.8} parent=5 // pred_check_branch
        %595 = sbr.rel (%p592) target = $region12
      $region11: #{transformer_forward.8} parent=5 // pred_region
        %s596 = ssub.s32 %s32, 1
        // Predicated region
        $region13: #{transformer_forward.8} parent=11 // pred_check
          %p597 = pneg %p131
        $region14: #{transformer_forward.8} parent=11 // pred_check_branch
          %599 = sbr.rel (%p597) target = $region16
        $region15: #{transformer_forward.8} parent=11 // pred_region
          _
        $region16: #{transformer_forward.8} parent=11 // pred_fallthru
          _
        // Predicated region
        $region17: #{transformer_forward.8} parent=11 // pred_check
          %p600 = pneg %p152
        $region18: #{transformer_forward.8} parent=11 // pred_check_branch
          %602 = sbr.rel (%p600) target = $region20
        $region19: #{transformer_forward.8} parent=11 // pred_region
          _
        $region20: #{transformer_forward.8} parent=11 // pred_fallthru
          _
        // Predicated region
        $region21: #{transformer_forward.8} parent=11 // pred_check
          %p603 = pneg %p173
        $region22: #{transformer_forward.8} parent=11 // pred_check_branch
          %605 = sbr.rel (%p603) target = $region24
        $region23: #{transformer_forward.8} parent=11 // pred_region
          _
        $region24: #{transformer_forward.8} parent=11 // pred_fallthru
          _
        // Predicated region
        $region25: #{transformer_forward.8} parent=11 // pred_check
          %p606 = pneg %p194
        $region26: #{transformer_forward.8} parent=11 // pred_check_branch
          %608 = sbr.rel (%p606) target = $region28
        $region27: #{transformer_forward.8} parent=11 // pred_region
          _
        $region28: #{transformer_forward.8} parent=11 // pred_fallthru
          _
        // Predicated region
        $region29: #{transformer_forward.8} parent=11 // pred_check
          %p609 = pneg %p215
        $region30: #{transformer_forward.8} parent=11 // pred_check_branch
          %611 = sbr.rel (%p609) target = $region32
        $region31: #{transformer_forward.8} parent=11 // pred_region
          _
        $region32: #{transformer_forward.8} parent=11 // pred_fallthru
          _
        // Predicated region
        $region33: #{transformer_forward.8} parent=11 // pred_check
          %p612 = pneg %p236
        $region34: #{transformer_forward.8} parent=11 // pred_check_branch
          %614 = sbr.rel (%p612) target = $region36
        $region35: #{transformer_forward.8} parent=11 // pred_region
          _
        $region36: #{transformer_forward.8} parent=11 // pred_fallthru
          _
        // Predicated region
        $region37: #{transformer_forward.8} parent=11 // pred_check
          %p615 = pneg %p257
        $region38: #{transformer_forward.8} parent=11 // pred_check_branch
          %617 = sbr.rel (%p615) target = $region40
        $region39: #{transformer_forward.8} parent=11 // pred_region
          _
        $region40: #{transformer_forward.8} parent=11 // pred_fallthru
          _
        // Predicated region
        $region41: #{transformer_forward.8} parent=11 // pred_check
          %p618 = pneg %p278
        $region42: #{transformer_forward.8} parent=11 // pred_check_branch
          %620 = sbr.rel (%p618) target = $region44
        $region43: #{transformer_forward.8} parent=11 // pred_region
          _
        $region44: #{transformer_forward.8} parent=11 // pred_fallthru
          _
        // Predicated region
        $region45: #{transformer_forward.8} parent=11 // pred_check
          %p621 = pneg %p299
        $region46: #{transformer_forward.8} parent=11 // pred_check_branch
          %623 = sbr.rel (%p621) target = $region48
        $region47: #{transformer_forward.8} parent=11 // pred_region
          _
        $region48: #{transformer_forward.8} parent=11 // pred_fallthru
          _
        // Predicated region
        $region49: #{transformer_forward.8} parent=11 // pred_check
          %p624 = pneg %p320
        $region50: #{transformer_forward.8} parent=11 // pred_check_branch
          %626 = sbr.rel (%p624) target = $region52
        $region51: #{transformer_forward.8} parent=11 // pred_region
          _
        $region52: #{transformer_forward.8} parent=11 // pred_fallthru
          _
        // Predicated region
        $region53: #{transformer_forward.8} parent=11 // pred_check
          %p627 = pneg %p341
        $region54: #{transformer_forward.8} parent=11 // pred_check_branch
          %629 = sbr.rel (%p627) target = $region56
        $region55: #{transformer_forward.8} parent=11 // pred_region
          _
        $region56: #{transformer_forward.8} parent=11 // pred_fallthru
          _
        // Predicated region
        $region57: #{transformer_forward.8} parent=11 // pred_check
          %p630 = pneg %p362
        $region58: #{transformer_forward.8} parent=11 // pred_check_branch
          %632 = sbr.rel (%p630) target = $region60
        $region59: #{transformer_forward.8} parent=11 // pred_region
          _
        $region60: #{transformer_forward.8} parent=11 // pred_fallthru
          _
        // Predicated region
        $region61: #{transformer_forward.8} parent=11 // pred_check
          %p633 = pneg %p383
        $region62: #{transformer_forward.8} parent=11 // pred_check_branch
          %635 = sbr.rel (%p633) target = $region64
        $region63: #{transformer_forward.8} parent=11 // pred_region
          _
        $region64: #{transformer_forward.8} parent=11 // pred_fallthru
          _
        // Predicated region
        $region65: #{transformer_forward.8} parent=11 // pred_check
          %p636 = pneg %p404
        $region66: #{transformer_forward.8} parent=11 // pred_check_branch
          %638 = sbr.rel (%p636) target = $region68
        $region67: #{transformer_forward.8} parent=11 // pred_region
          _
        $region68: #{transformer_forward.8} parent=11 // pred_fallthru
          _
        // Predicated region
        $region69: #{transformer_forward.8} parent=11 // pred_check
          %p639 = pneg %p425
        $region70: #{transformer_forward.8} parent=11 // pred_check_branch
          %641 = sbr.rel (%p639) target = $region72
        $region71: #{transformer_forward.8} parent=11 // pred_region
          _
        $region72: #{transformer_forward.8} parent=11 // pred_fallthru
          _
        // Predicated region
        $region73: #{transformer_forward.8} parent=11 // pred_check
          %p642 = pneg %p446
        $region74: #{transformer_forward.8} parent=11 // pred_check_branch
          %644 = sbr.rel (%p642) target = $region76
        $region75: #{transformer_forward.8} parent=11 // pred_region
          _
        $region76: #{transformer_forward.8} parent=11 // pred_fallthru
          _
        // Predicated region
        $region77: #{transformer_forward.8} parent=11 // pred_check
          %p645 = pneg %p467
        $region78: #{transformer_forward.8} parent=11 // pred_check_branch
          %647 = sbr.rel (%p645) target = $region80
        $region79: #{transformer_forward.8} parent=11 // pred_region
          _
        $region80: #{transformer_forward.8} parent=11 // pred_fallthru
          _
        // Predicated region
        $region81: #{transformer_forward.8} parent=11 // pred_check
          %p648 = pneg %p488
        $region82: #{transformer_forward.8} parent=11 // pred_check_branch
          %650 = sbr.rel (%p648) target = $region84
        $region83: #{transformer_forward.8} parent=11 // pred_region
          _
        $region84: #{transformer_forward.8} parent=11 // pred_fallthru
          _
        // Predicated region
        $region85: #{transformer_forward.8} parent=11 // pred_check
          %p651 = pneg %p509
        $region86: #{transformer_forward.8} parent=11 // pred_check_branch
          %653 = sbr.rel (%p651) target = $region88
        $region87: #{transformer_forward.8} parent=11 // pred_region
          _
        $region88: #{transformer_forward.8} parent=11 // pred_fallthru
          _
        // Predicated region
        $region89: #{transformer_forward.8} parent=11 // pred_check
          %p654 = pneg %p530
        $region90: #{transformer_forward.8} parent=11 // pred_check_branch
          %656 = sbr.rel (%p654) target = $region92
        $region91: #{transformer_forward.8} parent=11 // pred_region
          %658 = vsyncadd [#allocation3], 0
          %s660 = sshll.u32 %s22, 4
          %s661 = int_to_ptr.hbm [resolvable:$true] %s660
          %s662 = sshll.u32 [#allocation2], 4
          %s663 = int_to_ptr.vmem [resolvable:$true] %s662
          %665 = dma.hbm_to_vmem [thread:$0]  %s661, 16, %s663, [#allocation3]
        $region92: #{transformer_forward.8} parent=11 // pred_fallthru
          _
      $region12: #{transformer_forward.8} parent=5 // pred_fallthru
        _
      %p666 = scmp.lt.s32.totalorder %s32, 2
      // Predicated region
      $region93: #{transformer_forward.8} parent=5 // pred_check
        %p667 = pneg %p666
      $region94: #{transformer_forward.8} parent=5 // pred_check_branch
        %669 = sbr.rel (%p667) target = $region96
      $region95: #{transformer_forward.8} parent=5 // pred_region
        // Predicated region
        $region97: #{transformer_forward.8} parent=95 // pred_check
          %p670 = pneg %p52
        $region98: #{transformer_forward.8} parent=95 // pred_check_branch
          %672 = sbr.rel (%p670) target = $region100
        $region99: #{transformer_forward.8} parent=95 // pred_region
          %p673 = scmp.lt.s32.totalorder %s32, 1
          %s674 = scalar_select %p673, %s32, 1
          %s675 = smul.addr %s674, 8
          %s676 = scalar_lea.vmem %s0, %s675
        $region100: #{transformer_forward.8} parent=95 // pred_fallthru
          _
        // Predicated region
        $region101: #{transformer_forward.8} parent=95 // pred_check
          %p677 = pneg %p78
        $region102: #{transformer_forward.8} parent=95 // pred_check_branch
          %679 = sbr.rel (%p677) target = $region104
        $region103: #{transformer_forward.8} parent=95 // pred_region
          %p680 = scmp.lt.s32.totalorder %s32, 1
          %s681 = scalar_select %p680, %s32, 1
          %s682 = smul.addr %s681, 2
          %s683 = smul.addr %s682, 8
          %s684 = scalar_lea.vmem %s1, %s683
        $region104: #{transformer_forward.8} parent=95 // pred_fallthru
          _
        // Predicated region
        $region105: #{transformer_forward.8} parent=95 // pred_check
          %p685 = pneg %p104
        $region106: #{transformer_forward.8} parent=95 // pred_check_branch
          %687 = sbr.rel (%p685) target = $region108
        $region107: #{transformer_forward.8} parent=95 // pred_region
          %p688 = scmp.lt.s32.totalorder %s32, 1
          %s689 = scalar_select %p688, %s32, 1
          %s690 = scalar_lea.vmem %s2, %s689
        $region108: #{transformer_forward.8} parent=95 // pred_fallthru
          _
      $region96: #{transformer_forward.8} parent=5 // pred_fallthru
        _
      %p691 = scmp.le.s32.totalorder 1, %s32
      %p692 = scmp.lt.s32.totalorder %s32, 3
      %p693 = pnand %p691, %p692
      %p694 = pneg %p693
      // Predicated region
      $region109: #{transformer_forward.8} parent=5 // pred_check
        _
      $region110: #{transformer_forward.8} parent=5 // pred_check_branch
        %696 = sbr.rel (%p693) target = $region112
      $region111: #{transformer_forward.8} parent=5 // pred_region
        %s697 = ssub.s32 %s32, 1
        // Predicated region
        $region113: #{transformer_forward.8} parent=111 // pred_check
          %p698 = pneg %p530
        $region114: #{transformer_forward.8} parent=111 // pred_check_branch
          %700 = sbr.rel (%p698) target = $region116
        $region115: #{transformer_forward.8} parent=111 // pred_region
          %702 = dma.done [#allocation3], 16
        $region116: #{transformer_forward.8} parent=111 // pred_fallthru
          _
        %p703 = scmp.lt.s32.totalorder %s37, 1
        %s704 = scalar_select %p703, %s37, 1
        %s705 = smul.addr %s704, 8
        %s706 = scalar_lea.vmem %s0, %s705
        %p707 = pneg %p58
        %p708 = pneg %p55
        %p709 = scmp.lt.s32.totalorder %s37, 1
        %s710 = scalar_select %p709, %s37, 1
        %s711 = smul.addr %s710, 2
        %s712 = smul.addr %s711, 8
        %s713 = scalar_lea.vmem %s1, %s712
        %p714 = pneg %p84
        %p715 = pneg %p81
        %p716 = scmp.lt.s32.totalorder %s37, 1
        %s717 = scalar_select %p716, %s37, 1
        %s718 = scalar_lea.vmem %s2, %s717
        %p719 = pneg %p110
        %p720 = pneg %p107
        %p721 = pneg %p131
        %p722 = pneg %p128
        %p723 = pneg %p152
        %p724 = pneg %p149
        %p725 = pneg %p173
        %p726 = pneg %p170
        %p727 = pneg %p194
        %p728 = pneg %p191
        %p729 = pneg %p215
        %p730 = pneg %p212
        %p731 = pneg %p236
        %p732 = pneg %p233
        %p733 = pneg %p257
        %p734 = pneg %p254
        %p735 = pneg %p278
        %p736 = pneg %p275
        %p737 = pneg %p299
        %p738 = pneg %p296
        %p739 = pneg %p320
        %p740 = pneg %p317
        %p741 = pneg %p341
        %p742 = pneg %p338
        %p743 = pneg %p362
        %p744 = pneg %p359
        %p745 = pneg %p383
        %p746 = pneg %p380
        %p747 = pneg %p404
        %p748 = pneg %p401
        %p749 = pneg %p425
        %p750 = pneg %p422
        %p751 = pneg %p446
        %p752 = pneg %p443
        %p753 = pneg %p467
        %p754 = pneg %p464
        %p755 = pneg %p488
        %p756 = pneg %p485
        %p757 = pneg %p509
        %p758 = pneg %p506
        %p759 = pneg %p530
        %p760 = pneg %p527
        %p761 = pneg %p556
        %p762 = pneg %p553
        %p763 = scmp.lt.s32.totalorder %s37, 1
        %s764 = scalar_select %p763, %s37, 1
        %s765 = smul.addr %s764, 8
        %s766 = scalar_lea.vmem %s23, %s765
        %p767 = pneg %p582
        %p768 = pneg %p579
        %p769 = scmp.lt.s32.totalorder %s37, 1
        %s770 = scalar_select %p769, %s37, 1
        %s771 = smul.addr %s770, 8
        %s772 = scalar_lea.vmem %s24, %s771
        %p773 = scmp.lt.s32.totalorder %s37, 1
        %s774 = scalar_select %p773, %s37, 1
        %s775 = smul.addr %s774, 8
        %s776 = scalar_lea.vmem %s0, %s775
        %p777 = scmp.lt.s32.totalorder %s37, 1
        %s778 = scalar_select %p777, %s37, 1
        %s779 = smul.addr %s778, 2
        %s780 = smul.addr %s779, 8
        %s781 = scalar_lea.vmem %s1, %s780
        %p782 = scmp.lt.s32.totalorder %s37, 1
        %s783 = scalar_select %p782, %s37, 1
        %s784 = scalar_lea.vmem %s2, %s783
        %p785 = scmp.lt.s32.totalorder %s37, 1
        %s786 = scalar_select %p785, %s37, 1
        %s787 = smul.addr %s786, 8
        %s788 = scalar_lea.vmem %s23, %s787
        %p789 = scmp.lt.s32.totalorder %s37, 1
        %s790 = scalar_select %p789, %s37, 1
        %s791 = smul.addr %s790, 8
        %s792 = scalar_lea.vmem %s24, %s791
        %v794 = vld [vmem:[%s776] sm:$0xff]
        %v795 = vld [vmem:[%s781] sm:$0xff]
        %v796 = vld [vmem:[%s781 + $0x8] sm:$0xff]
        %v797 = vld [vmem:[%s3] sm:$0xf]
        %v798 = vld [vmem:[%s3 + $0x4] sm:$0xf]
        %v799 = vld [vmem:[%s3 + $0x8] sm:$0xf]
        %v800 = vld [vmem:[%s3 + $0xc] sm:$0xf]
        %v801 = vpack.c.bf16 %v794, %v794
        %v802 = vld [vmem:[%s4] sm:$0x1]
        %v804 = vperm.slane %v802, 0
        %v810 = vunpack.c.l.b16 %v797
        %v811 = vunpack.c.l.b16 %v798
        %v812 = vunpack.c.l.b16 %v799
        %v813 = vunpack.c.l.b16 %v800
        %v814 = vpack.c.b16 %v811, %v810
        %v815 = vpack.c.b16 %v813, %v812
        %vm818 = vcmask 261120
        %v820 = vsel %vm818, %v801, 0
        %822 = vmatpush.bf16.msra.mxu0 0
        %823 = vmatpush.bf16.msra.mxu0 0
        %824 = vmatpush.bf16.msra.mxu0 0
        %825 = vmatpush.bf16.msra.mxu0 0
        %826 = vmatpush.bf16.msra.mxu0 0
        %827 = vmatpush.bf16.msra.mxu0 0
        %828 = vmatpush.bf16.msra.mxu0 %v815
        %829 = vmatpush.bf16.msra.mxu0 %v814
        %830 = vmatmul.bf16.gmra.mxu0 %v820
        %v831 = vpop.f32.mrf.mxu0
        %v832 = vadd.f32 %v804, %v831
        %v833 = vpop.f32.mrf.mxu0
        %834 = vdwg.mxu0
        %v835 = vlaneseq
        %v836 = vshrl.u32 %v835, 7
        %v837 = vlaneseq
        %v838 = vand.u32 %v837, 127
        %vm839 = vcmp.gt.s32.totalorder %v838, %v836
        %v840 = vsel %vm839, -1e+30, 0.0
        %v841 = vld [vmem:[%s784] sm:$0x1]
        %v843 = vperm.slane %v841, 0
        %v845 = vadd.f32 %v840, %v843
        %v846 = vpack.c.bf16 %v832, %v832
        %848 = vrot.lane.b32.xlu0 %v846, 96
        %v849 = vpop.permute.xlu0 %848
        %vm850 = vcmask 64512
        %v852 = vsel %vm850, %v846, 0
        %v855 = vsel %vm850, %v849, 0
        %857 = vmatpush.bf16.xpose.msra.mxu0 0
        %858 = vmatpush.bf16.xpose.msra.mxu0 0
        %859 = vmatpush.bf16.xpose.msra.mxu0 0
        %860 = vmatpush.bf16.xpose.msra.mxu0 0
        %861 = vmatpush.bf16.xpose.msra.mxu0 0
        %862 = vmatpush.bf16.xpose.msra.mxu0 0
        %863 = vmatpush.bf16.xpose.msra.mxu0 0
        %864 = vmatpush.bf16.xpose.msra.mxu0 %v855
        %865 = vmatmul.bf16.gmra.mxu0 %v852
        %v866 = vpop.f32.mrf.mxu0
        %v867 = vadd.f32 0.0, %v866
        %v868 = vpop.f32.mrf.mxu0
        %869 = vdwg.mxu0
        %v870 = vmul.f32 %v867, 0.35355338
        %v871 = vadd.f32 %v870, %v845
        %v872 = vsel %vm850, %v871, -inf
        %873 = vmax.xlane.f32.xlu0 %v872
        %v874 = vpop.xlane.xlu0 %873
        %v875 = vsub.f32 %v871, %v874
        %v876 = vmul.f32 %v875, 1.442695
        %v877 = vpow.pop %v876
        %v878 = vsel %vm850, %v877, 0.0
        %879 = vadd.xlane.f32.xlu0 %v878
        %v880 = vpop.xlane.xlu0 %879
        %v881 = vrcp.pop %v880
        %v882 = vmul.f32 %v877, %v881
        %v883 = vpack.c.bf16 %v882, %v882
        %884 = vrot.lane.b32.xlu0 %v846, 64
        %v885 = vpop.permute.xlu0 %884
        %v887 = vsel %vm850, %v883, 0
        %vm889 = vcmask 1043456
        %v891 = vsel %vm889, %v885, 0
        %893 = vmatpush.bf16.msra.mxu0 0
        %894 = vmatpush.bf16.msra.mxu0 0
        %895 = vmatpush.bf16.msra.mxu0 0
        %896 = vmatpush.bf16.msra.mxu0 0
        %897 = vmatpush.bf16.msra.mxu0 0
        %898 = vmatpush.bf16.msra.mxu0 0
        %899 = vmatpush.bf16.msra.mxu0 0
        %900 = vmatpush.bf16.msra.mxu0 %v891
        %901 = vmatmul.bf16.gmra.mxu0 %v887
        %v902 = vpop.f32.mrf.mxu0
        %v903 = vadd.f32 0.0, %v902
        %v904 = vpop.f32.mrf.mxu0
        %905 = vdwg.mxu0
        %906 = vrot.lane.b32.xlu0 %v846, 120
        %v907 = vpop.permute.xlu0 %906
        %908 = vrot.lane.b32.xlu0 %v846, 88
        %v909 = vpop.permute.xlu0 %908
        %v911 = vsel %vm850, %v907, 0
        %v914 = vsel %vm850, %v909, 0
        %916 = vmatpush.bf16.xpose.msra.mxu0 0
        %917 = vmatpush.bf16.xpose.msra.mxu0 0
        %918 = vmatpush.bf16.xpose.msra.mxu0 0
        %919 = vmatpush.bf16.xpose.msra.mxu0 0
        %920 = vmatpush.bf16.xpose.msra.mxu0 0
        %921 = vmatpush.bf16.xpose.msra.mxu0 0
        %922 = vmatpush.bf16.xpose.msra.mxu0 0
        %923 = vmatpush.bf16.xpose.msra.mxu0 %v914
        %924 = vmatmul.bf16.gmra.mxu0 %v911
        %v925 = vpop.f32.mrf.mxu0
        %v926 = vadd.f32 0.0, %v925
        %v927 = vpop.f32.mrf.mxu0
        %928 = vdwg.mxu0
        %v929 = vmul.f32 %v926, 0.35355338
        %v930 = vadd.f32 %v929, %v845
        %v931 = vsel %vm850, %v930, -inf
        %932 = vmax.xlane.f32.xlu0 %v931
        %v933 = vpop.xlane.xlu0 %932
        %v934 = vsub.f32 %v930, %v933
        %v935 = vmul.f32 %v934, 1.442695
        %v936 = vpow.pop %v935
        %v937 = vsel %vm850, %v936, 0.0
        %938 = vadd.xlane.f32.xlu0 %v937
        %v939 = vpop.xlane.xlu0 %938
        %v940 = vrcp.pop %v939
        %v941 = vmul.f32 %v936, %v940
        %v942 = vpack.c.bf16 %v941, %v941
        %943 = vrot.lane.b32.xlu0 %v846, 56
        %v944 = vpop.permute.xlu0 %943
        %v946 = vsel %vm850, %v942, 0
        %v949 = vsel %vm889, %v944, 0
        %951 = vmatpush.bf16.msra.mxu0 0
        %952 = vmatpush.bf16.msra.mxu0 0
        %953 = vmatpush.bf16.msra.mxu0 0
        %954 = vmatpush.bf16.msra.mxu0 0
        %955 = vmatpush.bf16.msra.mxu0 0
        %956 = vmatpush.bf16.msra.mxu0 0
        %957 = vmatpush.bf16.msra.mxu0 0
        %958 = vmatpush.bf16.msra.mxu0 %v949
        %959 = vmatmul.bf16.gmra.mxu0 %v946
        %v960 = vpop.f32.mrf.mxu0
        %v961 = vadd.f32 0.0, %v960
        %v962 = vpop.f32.mrf.mxu0
        %963 = vdwg.mxu0
        %964 = vrot.lane.b32.xlu0 %v846, 112
        %v965 = vpop.permute.xlu0 %964
        %966 = vrot.lane.b32.xlu0 %v846, 80
        %v967 = vpop.permute.xlu0 %966
        %v969 = vsel %vm850, %v965, 0
        %v972 = vsel %vm850, %v967, 0
        %974 = vmatpush.bf16.xpose.msra.mxu0 0
        %975 = vmatpush.bf16.xpose.msra.mxu0 0
        %976 = vmatpush.bf16.xpose.msra.mxu0 0
        %977 = vmatpush.bf16.xpose.msra.mxu0 0
        %978 = vmatpush.bf16.xpose.msra.mxu0 0
        %979 = vmatpush.bf16.xpose.msra.mxu0 0
        %980 = vmatpush.bf16.xpose.msra.mxu0 0
        %981 = vmatpush.bf16.xpose.msra.mxu0 %v972
        %982 = vmatmul.bf16.gmra.mxu0 %v969
        %v983 = vpop.f32.mrf.mxu0
        %v984 = vadd.f32 0.0, %v983
        %v985 = vpop.f32.mrf.mxu0
        %986 = vdwg.mxu0
        %v987 = vmul.f32 %v984, 0.35355338
        %v988 = vadd.f32 %v987, %v845
        %v989 = vsel %vm850, %v988, -inf
        %990 = vmax.xlane.f32.xlu0 %v989
        %v991 = vpop.xlane.xlu0 %990
        %v992 = vsub.f32 %v988, %v991
        %v993 = vmul.f32 %v992, 1.442695
        %v994 = vpow.pop %v993
        %v995 = vsel %vm850, %v994, 0.0
        %996 = vadd.xlane.f32.xlu0 %v995
        %v997 = vpop.xlane.xlu0 %996
        %v998 = vrcp.pop %v997
        %v999 = vmul.f32 %v994, %v998
        %v1000 = vpack.c.bf16 %v999, %v999
        %1001 = vrot.lane.b32.xlu0 %v846, 48
        %v1002 = vpop.permute.xlu0 %1001
        %v1004 = vsel %vm850, %v1000, 0
        %v1007 = vsel %vm889, %v1002, 0
        %1009 = vmatpush.bf16.msra.mxu0 0
        %1010 = vmatpush.bf16.msra.mxu0 0
        %1011 = vmatpush.bf16.msra.mxu0 0
        %1012 = vmatpush.bf16.msra.mxu0 0
        %1013 = vmatpush.bf16.msra.mxu0 0
        %1014 = vmatpush.bf16.msra.mxu0 0
        %1015 = vmatpush.bf16.msra.mxu0 0
        %1016 = vmatpush.bf16.msra.mxu0 %v1007
        %1017 = vmatmul.bf16.gmra.mxu0 %v1004
        %v1018 = vpop.f32.mrf.mxu0
        %v1019 = vadd.f32 0.0, %v1018
        %v1020 = vpop.f32.mrf.mxu0
        %1021 = vdwg.mxu0
        %1022 = vrot.lane.b32.xlu0 %v846, 104
        %v1023 = vpop.permute.xlu0 %1022
        %1024 = vrot.lane.b32.xlu0 %v846, 72
        %v1025 = vpop.permute.xlu0 %1024
        %v1027 = vsel %vm850, %v1023, 0
        %v1030 = vsel %vm850, %v1025, 0
        %1032 = vmatpush.bf16.xpose.msra.mxu0 0
        %1033 = vmatpush.bf16.xpose.msra.mxu0 0
        %1034 = vmatpush.bf16.xpose.msra.mxu0 0
        %1035 = vmatpush.bf16.xpose.msra.mxu0 0
        %1036 = vmatpush.bf16.xpose.msra.mxu0 0
        %1037 = vmatpush.bf16.xpose.msra.mxu0 0
        %1038 = vmatpush.bf16.xpose.msra.mxu0 0
        %1039 = vmatpush.bf16.xpose.msra.mxu0 %v1030
        %1040 = vmatmul.bf16.gmra.mxu0 %v1027
        %v1041 = vpop.f32.mrf.mxu0
        %v1042 = vadd.f32 0.0, %v1041
        %v1043 = vpop.f32.mrf.mxu0
        %1044 = vdwg.mxu0
        %v1045 = vmul.f32 %v1042, 0.35355338
        %v1046 = vadd.f32 %v1045, %v845
        %v1047 = vsel %vm850, %v1046, -inf
        %1048 = vmax.xlane.f32.xlu0 %v1047
        %v1049 = vpop.xlane.xlu0 %1048
        %v1050 = vsub.f32 %v1046, %v1049
        %v1051 = vmul.f32 %v1050, 1.442695
        %v1052 = vpow.pop %v1051
        %v1053 = vsel %vm850, %v1052, 0.0
        %1054 = vadd.xlane.f32.xlu0 %v1053
        %v1055 = vpop.xlane.xlu0 %1054
        %v1056 = vrcp.pop %v1055
        %v1057 = vmul.f32 %v1052, %v1056
        %v1058 = vpack.c.bf16 %v1057, %v1057
        %1059 = vrot.lane.b32.xlu0 %v846, 40
        %v1060 = vpop.permute.xlu0 %1059
        %v1062 = vsel %vm850, %v1058, 0
        %v1065 = vsel %vm889, %v1060, 0
        %1067 = vmatpush.bf16.msra.mxu0 0
        %1068 = vmatpush.bf16.msra.mxu0 0
        %1069 = vmatpush.bf16.msra.mxu0 0
        %1070 = vmatpush.bf16.msra.mxu0 0
        %1071 = vmatpush.bf16.msra.mxu0 0
        %1072 = vmatpush.bf16.msra.mxu0 0
        %1073 = vmatpush.bf16.msra.mxu0 0
        %1074 = vmatpush.bf16.msra.mxu0 %v1065
        %1075 = vmatmul.bf16.gmra.mxu0 %v1062
        %v1076 = vpop.f32.mrf.mxu0
        %v1077 = vadd.f32 0.0, %v1076
        %v1078 = vpop.f32.mrf.mxu0
        %1079 = vdwg.mxu0
        %1081 = vrot.lane.b32.xlu0 %v961, 8
        %v1082 = vpop.permute.xlu0 %1081
        %1085 = vrot.lane.b32.xlu0 %v1019, 16
        %v1086 = vpop.permute.xlu0 %1085
        %1089 = vrot.lane.b32.xlu0 %v1077, 24
        %v1090 = vpop.permute.xlu0 %1089
        %v1092 = vsel %vm850, %v903, %v1082
        %vm1093 = vcmask 130048
        %v1094 = vsel %vm1093, %v1092, %v1086
        %vm1095 = vcmask 195584
        %v1096 = vsel %vm1095, %v1094, %v1090
        %v1097 = vld [vmem:[%s5] sm:$0xf]
        %v1098 = vld [vmem:[%s5 + $0x4] sm:$0xf]
        %v1099 = vld [vmem:[%s5 + $0x8] sm:$0xf]
        %v1100 = vld [vmem:[%s5 + $0xc] sm:$0xf]
        %v1101 = vpack.c.bf16 %v1096, %v1096
        %v1102 = vld [vmem:[%s6] sm:$0x1]
        %v1104 = vperm.slane %v1102, 0
        %v1110 = vunpack.c.l.b16 %v1097
        %v1111 = vunpack.c.l.b16 %v1098
        %v1112 = vunpack.c.l.b16 %v1099
        %v1113 = vunpack.c.l.b16 %v1100
        %v1114 = vpack.c.b16 %v1111, %v1110
        %v1115 = vpack.c.b16 %v1113, %v1112
        %v1119 = vsel %vm818, %v1101, 0
        %1121 = vmatpush.bf16.msra.mxu0 0
        %1122 = vmatpush.bf16.msra.mxu0 0
        %1123 = vmatpush.bf16.msra.mxu0 0
        %1124 = vmatpush.bf16.msra.mxu0 0
        %1125 = vmatpush.bf16.msra.mxu0 0
        %1126 = vmatpush.bf16.msra.mxu0 0
        %1127 = vmatpush.bf16.msra.mxu0 %v1115
        %1128 = vmatpush.bf16.msra.mxu0 %v1114
        %1129 = vmatmul.bf16.gmra.mxu0 %v1119
        %v1130 = vpop.f32.mrf.mxu0
        %v1131 = vadd.f32 %v1104, %v1130
        %v1132 = vpop.f32.mrf.mxu0
        %1133 = vdwg.mxu0
        %v1134 = vadd.f32 %v1131, %v794
        %v1135 = vld [vmem:[%s7] sm:$0x1]
        %v1136 = vld [vmem:[%s8] sm:$0x1]
        %v1137 = vsel %vm818, %v1134, 0.0
        %1138 = vadd.xlane.f32.xlu0 %v1137
        %v1139 = vpop.xlane.xlu0 %1138
        %v1140 = vrcp.pop 32.0
        %v1141 = vmul.f32 32.0, %v1140
        %v1142 = vsub.f32 1.0, %v1141
        %v1143 = vmul.f32 %v1140, %v1142
        %v1144 = vadd.f32 %v1140, %v1143
        %vm1145 = vweird.f32 %v1140
        %v1146 = vsel %vm1145, %v1140, %v1144
        %v1147 = vmul.f32 %v1139, %v1146
        %v1148 = vsub.f32 %v1134, %v1147
        %v1149 = vmul.f32 %v1148, %v1148
        %v1150 = vsel %vm818, %v1149, 0.0
        %1151 = vadd.xlane.f32.xlu0 %v1150
        %v1152 = vpop.xlane.xlu0 %1151
        %v1153 = vmul.f32 %v1152, %v1146
        %v1154 = vadd.f32 %v1153, 1e-05
        %v1155 = vrsqrt.pop %v1154
        %v1156 = vmul.f32 %v1155, %v1154
        %v1157 = vmul.f32 %v1156, %v1155
        %v1158 = vmul.f32 0.5, %v1157
        %v1159 = vsub.f32 1.5, %v1158
        %v1160 = vmul.f32 %v1155, %v1159
        %vm1161 = vweird.f32 %v1154
        %vm1162 = vweird.f32 %v1155
        %vm1163 = vmor %vm1161, %vm1162
        %v1164 = vsel %vm1163, %v1155, %v1160
        %v1165 = vmul.f32 %v1148, %v1164
        %v1167 = vperm.slane %v1135, 0
        %v1169 = vmul.f32 %v1165, %v1167
        %v1171 = vperm.slane %v1136, 0
        %v1173 = vadd.f32 %v1169, %v1171
        %v1174 = vld [vmem:[%s9] sm:$0xf]
        %v1175 = vld [vmem:[%s9 + $0x4] sm:$0xf]
        %v1176 = vld [vmem:[%s9 + $0x8] sm:$0xf]
        %v1177 = vld [vmem:[%s9 + $0xc] sm:$0xf]
        %v1178 = vpack.c.bf16 %v1173, %v1173
        %v1179 = vld [vmem:[%s10] sm:$0x1]
        %v1181 = vperm.slane %v1179, 0
        %v1187 = vunpack.c.l.b16 %v1174
        %v1188 = vunpack.c.l.b16 %v1175
        %v1189 = vunpack.c.l.b16 %v1176
        %v1190 = vunpack.c.l.b16 %v1177
        %v1191 = vpack.c.b16 %v1188, %v1187
        %v1192 = vpack.c.b16 %v1190, %v1189
        %v1196 = vsel %vm818, %v1178, 0
        %1198 = vmatpush.bf16.msra.mxu0 0
        %1199 = vmatpush.bf16.msra.mxu0 0
        %1200 = vmatpush.bf16.msra.mxu0 0
        %1201 = vmatpush.bf16.msra.mxu0 0
        %1202 = vmatpush.bf16.msra.mxu0 0
        %1203 = vmatpush.bf16.msra.mxu0 0
        %1204 = vmatpush.bf16.msra.mxu0 %v1192
        %1205 = vmatpush.bf16.msra.mxu0 %v1191
        %1206 = vmatmul.bf16.gmra.mxu0 %v1196
        %v1207 = vpop.f32.mrf.mxu0
        %v1208 = vadd.f32 %v1181, %v1207
        %v1209 = vpop.f32.mrf.mxu0
        %1210 = vdwg.mxu0
        %v1211 = vld [vmem:[%s11] sm:$0xf]
        %v1212 = vld [vmem:[%s11 + $0x4] sm:$0xf]
        %v1213 = vld [vmem:[%s11 + $0x8] sm:$0xf]
        %v1214 = vld [vmem:[%s11 + $0xc] sm:$0xf]
        %v1215 = vpack.c.bf16 %v796, %v795
        %v1216 = vld [vmem:[%s12] sm:$0x1]
        %v1218 = vperm.slane %v1216, 0
        %v1224 = vunpack.c.l.b16 %v1211
        %v1225 = vunpack.c.l.b16 %v1212
        %v1226 = vunpack.c.l.b16 %v1213
        %v1227 = vunpack.c.l.b16 %v1214
        %v1228 = vpack.c.b16 %v1225, %v1224
        %v1229 = vpack.c.b16 %v1227, %v1226
        %v1233 = vsel %vm818, %v1215, 0
        %1235 = vmatpush.bf16.msra.mxu0 0
        %1236 = vmatpush.bf16.msra.mxu0 0
        %1237 = vmatpush.bf16.msra.mxu0 0
        %1238 = vmatpush.bf16.msra.mxu0 0
        %1239 = vmatpush.bf16.msra.mxu0 0
        %1240 = vmatpush.bf16.msra.mxu0 0
        %1241 = vmatpush.bf16.msra.mxu0 %v1229
        %1242 = vmatpush.bf16.msra.mxu0 %v1228
        %1243 = vmatmul.bf16.gmra.mxu0 %v1233
        %v1244 = vpop.f32.mrf.mxu0
        %v1245 = vadd.f32 %v1218, %v1244
        %v1246 = vpop.f32.mrf.mxu0
        %v1247 = vadd.f32 %v1218, %v1246
        %1248 = vdwg.mxu0
        %v1249 = vpack.c.bf16 %v1208, %v1208
        %v1250 = vpack.c.bf16 %v1247, %v1245
        %v1252 = vsel %vm850, %v1249, 0
        %v1255 = vsel %vm850, %v1250, 0
        %1257 = vmatpush.bf16.xpose.msra.mxu0 0
        %1258 = vmatpush.bf16.xpose.msra.mxu0 0
        %1259 = vmatpush.bf16.xpose.msra.mxu0 0
        %1260 = vmatpush.bf16.xpose.msra.mxu0 0
        %1261 = vmatpush.bf16.xpose.msra.mxu0 0
        %1262 = vmatpush.bf16.xpose.msra.mxu0 0
        %1263 = vmatpush.bf16.xpose.msra.mxu0 0
        %1264 = vmatpush.bf16.xpose.msra.mxu0 %v1255
        %1265 = vmatmul.bf16.gmra.mxu0 %v1252
        %v1266 = vpop.f32.mrf.mxu0
        %v1267 = vadd.f32 0.0, %v1266
        %v1268 = vpop.f32.mrf.mxu0
        %1269 = vdwg.mxu0
        %v1270 = vmul.f32 %v1267, 0.35355338
        %v1271 = vsel %vm1093, %v1270, -inf
        %1272 = vmax.xlane.f32.xlu0 %v1271
        %v1273 = vpop.xlane.xlu0 %1272
        %v1274 = vsub.f32 %v1270, %v1273
        %v1275 = vmul.f32 %v1274, 1.442695
        %v1276 = vpow.pop %v1275
        %v1277 = vsel %vm1093, %v1276, 0.0
        %1278 = vadd.xlane.f32.xlu0 %v1277
        %v1279 = vpop.xlane.xlu0 %1278
        %v1280 = vrcp.pop %v1279
        %v1281 = vmul.f32 %v1276, %v1280
        %v1282 = vpack.c.bf16 %v1281, %v1281
        %1284 = vrot.lane.b32.xlu0 %v1250, 96
        %v1285 = vpop.permute.xlu0 %1284
        %v1288 = vsel %vm1093, %v1282, 0
        %1290 = vmatpush.bf16.msra.mxu0 0
        %1291 = vmatpush.bf16.msra.mxu0 0
        %1292 = vmatpush.bf16.msra.mxu0 0
        %1293 = vmatpush.bf16.msra.mxu0 0
        %1294 = vmatpush.bf16.msra.mxu0 0
        %1295 = vmatpush.bf16.msra.mxu0 0
        %1296 = vmatpush.bf16.msra.mxu0 0
        %1297 = vmatpush.bf16.msra.mxu0 %v1285
        %1298 = vmatmul.bf16.gmra.mxu0 %v1288
        %v1299 = vpop.f32.mrf.mxu0
        %v1300 = vadd.f32 0.0, %v1299
        %v1301 = vpop.f32.mrf.mxu0
        %1302 = vdwg.mxu0
        %1304 = vrot.lane.b32.xlu0 %v1249, 120
        %v1305 = vpop.permute.xlu0 %1304
        %1306 = vrot.lane.b32.xlu0 %v1250, 120
        %v1307 = vpop.permute.xlu0 %1306
        %v1309 = vsel %vm850, %v1305, 0
        %v1312 = vsel %vm850, %v1307, 0
        %1314 = vmatpush.bf16.xpose.msra.mxu0 0
        %1315 = vmatpush.bf16.xpose.msra.mxu0 0
        %1316 = vmatpush.bf16.xpose.msra.mxu0 0
        %1317 = vmatpush.bf16.xpose.msra.mxu0 0
        %1318 = vmatpush.bf16.xpose.msra.mxu0 0
        %1319 = vmatpush.bf16.xpose.msra.mxu0 0
        %1320 = vmatpush.bf16.xpose.msra.mxu0 0
        %1321 = vmatpush.bf16.xpose.msra.mxu0 %v1312
        %1322 = vmatmul.bf16.gmra.mxu0 %v1309
        %v1323 = vpop.f32.mrf.mxu0
        %v1324 = vadd.f32 0.0, %v1323
        %v1325 = vpop.f32.mrf.mxu0
        %1326 = vdwg.mxu0
        %v1327 = vmul.f32 %v1324, 0.35355338
        %v1328 = vsel %vm1093, %v1327, -inf
        %1329 = vmax.xlane.f32.xlu0 %v1328
        %v1330 = vpop.xlane.xlu0 %1329
        %v1331 = vsub.f32 %v1327, %v1330
        %v1332 = vmul.f32 %v1331, 1.442695
        %v1333 = vpow.pop %v1332
        %v1334 = vsel %vm1093, %v1333, 0.0
        %1335 = vadd.xlane.f32.xlu0 %v1334
        %v1336 = vpop.xlane.xlu0 %1335
        %v1337 = vrcp.pop %v1336
        %v1338 = vmul.f32 %v1333, %v1337
        %v1339 = vpack.c.bf16 %v1338, %v1338
        %1340 = vrot.lane.b32.xlu0 %v1250, 88
        %v1341 = vpop.permute.xlu0 %1340
        %v1344 = vsel %vm1093, %v1339, 0
        %1346 = vmatpush.bf16.msra.mxu0 0
        %1347 = vmatpush.bf16.msra.mxu0 0
        %1348 = vmatpush.bf16.msra.mxu0 0
        %1349 = vmatpush.bf16.msra.mxu0 0
        %1350 = vmatpush.bf16.msra.mxu0 0
        %1351 = vmatpush.bf16.msra.mxu0 0
        %1352 = vmatpush.bf16.msra.mxu0 0
        %1353 = vmatpush.bf16.msra.mxu0 %v1341
        %1354 = vmatmul.bf16.gmra.mxu0 %v1344
        %v1355 = vpop.f32.mrf.mxu0
        %v1356 = vadd.f32 0.0, %v1355
        %v1357 = vpop.f32.mrf.mxu0
        %1358 = vdwg.mxu0
        %v1359 = vadd.f32 %v1281, %v1338
        %1360 = vrot.lane.b32.xlu0 %v1249, 112
        %v1361 = vpop.permute.xlu0 %1360
        %1362 = vrot.lane.b32.xlu0 %v1250, 112
        %v1363 = vpop.permute.xlu0 %1362
        %v1365 = vsel %vm850, %v1361, 0
        %v1368 = vsel %vm850, %v1363, 0
        %1370 = vmatpush.bf16.xpose.msra.mxu0 0
        %1371 = vmatpush.bf16.xpose.msra.mxu0 0
        %1372 = vmatpush.bf16.xpose.msra.mxu0 0
        %1373 = vmatpush.bf16.xpose.msra.mxu0 0
        %1374 = vmatpush.bf16.xpose.msra.mxu0 0
        %1375 = vmatpush.bf16.xpose.msra.mxu0 0
        %1376 = vmatpush.bf16.xpose.msra.mxu0 0
        %1377 = vmatpush.bf16.xpose.msra.mxu0 %v1368
        %1378 = vmatmul.bf16.gmra.mxu0 %v1365
        %v1379 = vpop.f32.mrf.mxu0
        %v1380 = vadd.f32 0.0, %v1379
        %v1381 = vpop.f32.mrf.mxu0
        %1382 = vdwg.mxu0
        %v1383 = vmul.f32 %v1380, 0.35355338
        %v1384 = vsel %vm1093, %v1383, -inf
        %1385 = vmax.xlane.f32.xlu0 %v1384
        %v1386 = vpop.xlane.xlu0 %1385
        %v1387 = vsub.f32 %v1383, %v1386
        %v1388 = vmul.f32 %v1387, 1.442695
        %v1389 = vpow.pop %v1388
        %v1390 = vsel %vm1093, %v1389, 0.0
        %1391 = vadd.xlane.f32.xlu0 %v1390
        %v1392 = vpop.xlane.xlu0 %1391
        %v1393 = vrcp.pop %v1392
        %v1394 = vmul.f32 %v1389, %v1393
        %v1395 = vpack.c.bf16 %v1394, %v1394
        %1396 = vrot.lane.b32.xlu0 %v1250, 80
        %v1397 = vpop.permute.xlu0 %1396
        %v1400 = vsel %vm1093, %v1395, 0
        %1402 = vmatpush.bf16.msra.mxu0 0
        %1403 = vmatpush.bf16.msra.mxu0 0
        %1404 = vmatpush.bf16.msra.mxu0 0
        %1405 = vmatpush.bf16.msra.mxu0 0
        %1406 = vmatpush.bf16.msra.mxu0 0
        %1407 = vmatpush.bf16.msra.mxu0 0
        %1408 = vmatpush.bf16.msra.mxu0 0
        %1409 = vmatpush.bf16.msra.mxu0 %v1397
        %1410 = vmatmul.bf16.gmra.mxu0 %v1400
        %v1411 = vpop.f32.mrf.mxu0
        %v1412 = vadd.f32 0.0, %v1411
        %v1413 = vpop.f32.mrf.mxu0
        %1414 = vdwg.mxu0
        %v1415 = vadd.f32 %v1359, %v1394
        %1416 = vrot.lane.b32.xlu0 %v1249, 104
        %v1417 = vpop.permute.xlu0 %1416
        %1418 = vrot.lane.b32.xlu0 %v1250, 104
        %v1419 = vpop.permute.xlu0 %1418
        %v1421 = vsel %vm850, %v1417, 0
        %v1424 = vsel %vm850, %v1419, 0
        %1426 = vmatpush.bf16.xpose.msra.mxu0 0
        %1427 = vmatpush.bf16.xpose.msra.mxu0 0
        %1428 = vmatpush.bf16.xpose.msra.mxu0 0
        %1429 = vmatpush.bf16.xpose.msra.mxu0 0
        %1430 = vmatpush.bf16.xpose.msra.mxu0 0
        %1431 = vmatpush.bf16.xpose.msra.mxu0 0
        %1432 = vmatpush.bf16.xpose.msra.mxu0 0
        %1433 = vmatpush.bf16.xpose.msra.mxu0 %v1424
        %1434 = vmatmul.bf16.gmra.mxu0 %v1421
        %v1435 = vpop.f32.mrf.mxu0
        %v1436 = vadd.f32 0.0, %v1435
        %v1437 = vpop.f32.mrf.mxu0
        %1438 = vdwg.mxu0
        %v1439 = vmul.f32 %v1436, 0.35355338
        %v1440 = vsel %vm1093, %v1439, -inf
        %1441 = vmax.xlane.f32.xlu0 %v1440
        %v1442 = vpop.xlane.xlu0 %1441
        %v1443 = vsub.f32 %v1439, %v1442
        %v1444 = vmul.f32 %v1443, 1.442695
        %v1445 = vpow.pop %v1444
        %v1446 = vsel %vm1093, %v1445, 0.0
        %1447 = vadd.xlane.f32.xlu0 %v1446
        %v1448 = vpop.xlane.xlu0 %1447
        %v1449 = vrcp.pop %v1448
        %v1450 = vmul.f32 %v1445, %v1449
        %v1451 = vpack.c.bf16 %v1450, %v1450
        %1452 = vrot.lane.b32.xlu0 %v1250, 72
        %v1453 = vpop.permute.xlu0 %1452
        %v1456 = vsel %vm1093, %v1451, 0
        %1458 = vmatpush.bf16.msra.mxu0 0
        %1459 = vmatpush.bf16.msra.mxu0 0
        %1460 = vmatpush.bf16.msra.mxu0 0
        %1461 = vmatpush.bf16.msra.mxu0 0
        %1462 = vmatpush.bf16.msra.mxu0 0
        %1463 = vmatpush.bf16.msra.mxu0 0
        %1464 = vmatpush.bf16.msra.mxu0 0
        %1465 = vmatpush.bf16.msra.mxu0 %v1453
        %1466 = vmatmul.bf16.gmra.mxu0 %v1456
        %v1467 = vpop.f32.mrf.mxu0
        %v1468 = vadd.f32 0.0, %v1467
        %v1469 = vpop.f32.mrf.mxu0
        %1470 = vdwg.mxu0
        %v1471 = vadd.f32 %v1415, %v1450
        %1473 = vrot.lane.b32.xlu0 %v1356, 8
        %v1474 = vpop.permute.xlu0 %1473
        %1477 = vrot.lane.b32.xlu0 %v1412, 16
        %v1478 = vpop.permute.xlu0 %1477
        %1481 = vrot.lane.b32.xlu0 %v1468, 24
        %v1482 = vpop.permute.xlu0 %1481
        %v1484 = vsel %vm850, %v1300, %v1474
        %v1485 = vsel %vm1093, %v1484, %v1478
        %v1486 = vsel %vm1095, %v1485, %v1482
        %v1487 = vmul.f32 %v1471, 0.25
        %v1488 = vld [vmem:[%s13] sm:$0xf]
        %v1489 = vld [vmem:[%s13 + $0x4] sm:$0xf]
        %v1490 = vld [vmem:[%s13 + $0x8] sm:$0xf]
        %v1491 = vld [vmem:[%s13 + $0xc] sm:$0xf]
        %v1492 = vpack.c.bf16 %v1486, %v1486
        %v1493 = vld [vmem:[%s14] sm:$0x1]
        %v1495 = vperm.slane %v1493, 0
        %v1501 = vunpack.c.l.b16 %v1488
        %v1502 = vunpack.c.l.b16 %v1489
        %v1503 = vunpack.c.l.b16 %v1490
        %v1504 = vunpack.c.l.b16 %v1491
        %v1505 = vpack.c.b16 %v1502, %v1501
        %v1506 = vpack.c.b16 %v1504, %v1503
        %v1510 = vsel %vm818, %v1492, 0
        %1512 = vmatpush.bf16.msra.mxu0 0
        %1513 = vmatpush.bf16.msra.mxu0 0
        %1514 = vmatpush.bf16.msra.mxu0 0
        %1515 = vmatpush.bf16.msra.mxu0 0
        %1516 = vmatpush.bf16.msra.mxu0 0
        %1517 = vmatpush.bf16.msra.mxu0 0
        %1518 = vmatpush.bf16.msra.mxu0 %v1506
        %1519 = vmatpush.bf16.msra.mxu0 %v1505
        %1520 = vmatmul.bf16.gmra.mxu0 %v1510
        %v1521 = vpop.f32.mrf.mxu0
        %v1522 = vadd.f32 %v1495, %v1521
        %v1523 = vpop.f32.mrf.mxu0
        %1524 = vdwg.mxu0
        %v1525 = vadd.f32 %v1522, %v1173
        %v1526 = vld [vmem:[%s15] sm:$0x1]
        %v1527 = vld [vmem:[%s16] sm:$0x1]
        %v1528 = vsel %vm818, %v1525, 0.0
        %1529 = vadd.xlane.f32.xlu0 %v1528
        %v1530 = vpop.xlane.xlu0 %1529
        %v1531 = vmul.f32 %v1530, %v1146
        %v1532 = vsub.f32 %v1525, %v1531
        %v1533 = vmul.f32 %v1532, %v1532
        %v1534 = vsel %vm818, %v1533, 0.0
        %1535 = vadd.xlane.f32.xlu0 %v1534
        %v1536 = vpop.xlane.xlu0 %1535
        %v1537 = vmul.f32 %v1536, %v1146
        %v1538 = vadd.f32 %v1537, 1e-05
        %v1539 = vrsqrt.pop %v1538
        %v1540 = vmul.f32 %v1539, %v1538
        %v1541 = vmul.f32 %v1540, %v1539
        %v1542 = vmul.f32 0.5, %v1541
        %v1543 = vsub.f32 1.5, %v1542
        %v1544 = vmul.f32 %v1539, %v1543
        %vm1545 = vweird.f32 %v1538
        %vm1546 = vweird.f32 %v1539
        %vm1547 = vmor %vm1545, %vm1546
        %v1548 = vsel %vm1547, %v1539, %v1544
        %v1549 = vmul.f32 %v1532, %v1548
        %v1551 = vperm.slane %v1526, 0
        %v1553 = vmul.f32 %v1549, %v1551
        %v1555 = vperm.slane %v1527, 0
        %v1557 = vadd.f32 %v1553, %v1555
        %v1558 = vld [vmem:[%s17] sm:$0xf]
        %v1559 = vld [vmem:[%s17 + $0x4] sm:$0xf]
        %v1560 = vld [vmem:[%s17 + $0x8] sm:$0xf]
        %v1561 = vld [vmem:[%s17 + $0xc] sm:$0xf]
        %v1562 = vpack.c.bf16 %v1557, %v1557
        %v1563 = vld [vmem:[%s18] sm:$0x1]
        %v1565 = vperm.slane %v1563, 0
        %v1571 = vunpack.c.l.b16 %v1558
        %v1572 = vunpack.c.l.b16 %v1559
        %v1573 = vunpack.c.l.b16 %v1560
        %v1574 = vunpack.c.l.b16 %v1561
        %v1575 = vpack.c.b16 %v1572, %v1571
        %v1576 = vpack.c.b16 %v1574, %v1573
        %v1580 = vsel %vm818, %v1562, 0
        %1582 = vmatpush.bf16.msra.mxu0 0
        %1583 = vmatpush.bf16.msra.mxu0 0
        %1584 = vmatpush.bf16.msra.mxu0 0
        %1585 = vmatpush.bf16.msra.mxu0 0
        %1586 = vmatpush.bf16.msra.mxu0 0
        %1587 = vmatpush.bf16.msra.mxu0 0
        %1588 = vmatpush.bf16.msra.mxu0 %v1576
        %1589 = vmatpush.bf16.msra.mxu0 %v1575
        %1590 = vmatmul.bf16.gmra.mxu0 %v1580
        %v1591 = vpop.f32.mrf.mxu0
        %v1592 = vadd.f32 %v1565, %v1591
        %v1593 = vpop.f32.mrf.mxu0
        %1594 = vdwg.mxu0
        %v1595 = vmax.f32 %v1592, 0.0
        %v1596 = vld [vmem:[%s19] sm:$0xf]
        %v1597 = vld [vmem:[%s19 + $0x4] sm:$0xf]
        %v1598 = vld [vmem:[%s19 + $0x8] sm:$0xf]
        %v1599 = vld [vmem:[%s19 + $0xc] sm:$0xf]
        %v1600 = vld [vmem:[%s19 + $0x10] sm:$0xf]
        %v1601 = vld [vmem:[%s19 + $0x14] sm:$0xf]
        %v1602 = vld [vmem:[%s19 + $0x18] sm:$0xf]
        %v1603 = vld [vmem:[%s19 + $0x1c] sm:$0xf]
        %v1604 = vpack.c.bf16 %v1595, %v1595
        %v1605 = vld [vmem:[%s20] sm:$0x1]
        %v1607 = vperm.slane %v1605, 0
        %v1617 = vunpack.c.l.b16 %v1596
        %v1618 = vunpack.c.l.b16 %v1597
        %v1619 = vunpack.c.l.b16 %v1598
        %v1620 = vunpack.c.l.b16 %v1599
        %v1621 = vunpack.c.l.b16 %v1600
        %v1622 = vunpack.c.l.b16 %v1601
        %v1623 = vunpack.c.l.b16 %v1602
        %v1624 = vunpack.c.l.b16 %v1603
        %v1625 = vpack.c.b16 %v1618, %v1617
        %v1626 = vpack.c.b16 %v1620, %v1619
        %v1627 = vpack.c.b16 %v1622, %v1621
        %v1628 = vpack.c.b16 %v1624, %v1623
        %vm1633 = vcmask 523264
        %v1635 = vsel %vm1633, %v1604, 0
        %1637 = vmatpush.bf16.msra.mxu0 0
        %1638 = vmatpush.bf16.msra.mxu0 0
        %1639 = vmatpush.bf16.msra.mxu0 0
        %1640 = vmatpush.bf16.msra.mxu0 0
        %1641 = vmatpush.bf16.msra.mxu0 %v1628
        %1642 = vmatpush.bf16.msra.mxu0 %v1627
        %1643 = vmatpush.bf16.msra.mxu0 %v1626
        %1644 = vmatpush.bf16.msra.mxu0 %v1625
        %1645 = vmatmul.bf16.gmra.mxu0 %v1635
        %v1646 = vpop.f32.mrf.mxu0
        %v1647 = vadd.f32 %v1607, %v1646
        %v1648 = vpop.f32.mrf.mxu0
        %1649 = vdwg.mxu0
        %v1650 = vadd.f32 %v1647, %v1557
        %v1651 = vld [vmem:[%s21] sm:$0x1]
        %v1652 = vld [vmem:[#allocation2] sm:$0x1]
        %v1653 = vsel %vm818, %v1650, 0.0
        %1654 = vadd.xlane.f32.xlu0 %v1653
        %v1655 = vpop.xlane.xlu0 %1654
        %v1656 = vmul.f32 %v1655, %v1146
        %v1657 = vsub.f32 %v1650, %v1656
        %v1658 = vmul.f32 %v1657, %v1657
        %v1659 = vsel %vm818, %v1658, 0.0
        %1660 = vadd.xlane.f32.xlu0 %v1659
        %v1661 = vpop.xlane.xlu0 %1660
        %v1662 = vmul.f32 %v1661, %v1146
        %v1663 = vadd.f32 %v1662, 1e-05
        %v1664 = vrsqrt.pop %v1663
        %v1665 = vmul.f32 %v1664, %v1663
        %v1666 = vmul.f32 %v1665, %v1664
        %v1667 = vmul.f32 0.5, %v1666
        %v1668 = vsub.f32 1.5, %v1667
        %v1669 = vmul.f32 %v1664, %v1668
        %vm1670 = vweird.f32 %v1663
        %vm1671 = vweird.f32 %v1664
        %vm1672 = vmor %vm1670, %vm1671
        %v1673 = vsel %vm1672, %v1664, %v1669
        %v1674 = vmul.f32 %v1657, %v1673
        %v1676 = vperm.slane %v1651, 0
        %v1678 = vmul.f32 %v1674, %v1676
        %v1680 = vperm.slane %v1652, 0
        %v1682 = vadd.f32 %v1678, %v1680
        %1683 = vst.msk [vmem:[%s788] sm:$0xff] %vm818, %v1682
        %1684 = vst.msk [vmem:[%s792] sm:$0xff] %vm1093, %v1487
        %p1685 = scmp.lt.s32.totalorder %s37, 1
        %s1686 = scalar_select %p1685, %s37, 1
        %s1687 = smul.addr %s1686, 8
        %s1688 = scalar_lea.vmem %s23, %s1687
        %p1689 = scmp.lt.s32.totalorder %s37, 1
        %s1690 = scalar_select %p1689, %s37, 1
        %s1691 = smul.addr %s1690, 8
        %s1692 = scalar_lea.vmem %s24, %s1691
        // Predicated region
        $region117: #{transformer_forward.8} parent=111 // pred_check
          %p1693 = pneg %p553
        $region118: #{transformer_forward.8} parent=111 // pred_check_branch
          %1695 = sbr.rel (%p1693) target = $region120
        $region119: #{transformer_forward.8} parent=111 // pred_region
          _
        $region120: #{transformer_forward.8} parent=111 // pred_fallthru
          _
        // Predicated region
        $region121: #{transformer_forward.8} parent=111 // pred_check
          %p1696 = pneg %p579
        $region122: #{transformer_forward.8} parent=111 // pred_check_branch
          %1698 = sbr.rel (%p1696) target = $region124
        $region123: #{transformer_forward.8} parent=111 // pred_region
          _
        $region124: #{transformer_forward.8} parent=111 // pred_fallthru
          _
      $region112: #{transformer_forward.8} parent=5 // pred_fallthru
        _
      %p1699 = scmp.le.s32.totalorder 2, %s32
      // Predicated region
      $region125: #{transformer_forward.8} parent=5 // pred_check
        %p1700 = pneg %p1699
      $region126: #{transformer_forward.8} parent=5 // pred_check_branch
        %1702 = sbr.rel (%p1700) target = $region128
      $region127: #{transformer_forward.8} parent=5 // pred_region
        %s1703 = ssub.s32 %s32, 2
        // Predicated region
        $region129: #{transformer_forward.8} parent=127 // pred_check
          %p1704 = pneg %p559
        $region130: #{transformer_forward.8} parent=127 // pred_check_branch
          %1706 = sbr.rel (%p1704) target = $region132
        $region131: #{transformer_forward.8} parent=127 // pred_region
          %p1707 = scmp.lt.s32.totalorder %s38, 1
          %s1708 = scalar_select %p1707, %s38, 1
          %s1709 = smul.addr %s1708, 8
          %s1710 = scalar_lea.vmem %s23, %s1709
        $region132: #{transformer_forward.8} parent=127 // pred_fallthru
          _
        // Predicated region
        $region133: #{transformer_forward.8} parent=127 // pred_check
          %p1711 = pneg %p585
        $region134: #{transformer_forward.8} parent=127 // pred_check_branch
          %1713 = sbr.rel (%p1711) target = $region136
        $region135: #{transformer_forward.8} parent=127 // pred_region
          %p1714 = scmp.lt.s32.totalorder %s38, 1
          %s1715 = scalar_select %p1714, %s38, 1
          %s1716 = smul.addr %s1715, 8
          %s1717 = scalar_lea.vmem %s24, %s1716
        $region136: #{transformer_forward.8} parent=127 // pred_fallthru
          _
      $region128: #{transformer_forward.8} parent=5 // pred_fallthru
        _
    $region6: #{transformer_forward.8} parent=1 // loop_footer
      %s36 = sadd.s32 1, %s32
    $region7: #{transformer_forward.8} parent=1 // loop_footer_branch
      %31 = sbr.rel target = $region3
    $region8: #{transformer_forward.8} parent=1 // loop_exit
      _
    %1718 = vsyncpa [#allocation3], 1
    %s1719 = scalar_lea.sflag [#allocation3], 1
    %1720 = vsyncpa %s1719, 1

// kernel: transformer_forward.9
$region0: #{transformer_forward.9}
  #allocation0 [shape = 'u32[]', space=smem, size = 0x4, offset = 0x4, fixed_abs, tag = 'smem constant byte address 0x4 - core index']
  #allocation1 [shape = 'u32[72,128]{1,0:T(1,128)}', space=vmem, size = 0x9000, scoped, tag = 'internal scratch']
  %s0 = inlined_call_operand.vmem [shape: f32[16,32], index: 0, kind: input, shape index: {}]
  %s1 = inlined_call_operand.vmem [shape: bf16[32,64], index: 1, kind: input, shape index: {}]
  %s2 = inlined_call_operand.hbm [shape: f32[16,64], index: 2, kind: output, shape index: {}]
  %s3 = sld [smem:[#allocation0]]
  $region41: #{transformer_forward.9} parent=0
    _
  %s5 = ssub.s32 1, %s3
  %s6 = scalar_select 0, %s5, %s3
  $region1: #{transformer_forward.9} parent=0
    #allocation2 [shape = 'u8[8192]{0}', space=vmem, size = 0x2000, scoped, tag = 'output window, operand 0']
    #allocation3 [shape = 's32[2]{0}', space=sflag, size = 0x8, scoped, tag = 'scoped memory for transformer_forward.9']
    %7 = vsyncpa [#allocation3], 0
    %s8 = scalar_lea.sflag [#allocation3], 1
    %9 = vsyncpa %s8, 0
    loop: start=0, step=1, limit=4
    $region2: #{transformer_forward.9} parent=1 // loop_pre_header
      _
    $region3: #{transformer_forward.9} parent=1 // loop_header
      %s11 = sphi 0, %s15
      %p12 = scmp.ge.s32.totalorder %s11, 4
      %s21 = sphi 0, %s23
      %s24 = sphi 0, %s21
      %s25 = sphi 0, %s24
      %s41 = sphi 0, %s25
      %s45 = sphi 0, %s45
      %s47 = sphi 0, %s45
      %s48 = sphi 0, %s47
      %s62 = sphi 0, %s48
      %s68 = sphi 0, %s70
      %s71 = sphi 0, %s68
      %s72 = sphi 0, %s71
      %s88 = sphi 0, %s72
    $region4: #{transformer_forward.9} parent=1 // loop_header_branch
      %14 = sbr.rel (%p12) target = $region8
    $region5: #{transformer_forward.9} parent=1 // loop_body
      %s16 = ssub.s32 %s11, 1
      %s17 = ssub.s32 %s11, 2
      %s18 = sadd.s32 %s11, 1
      %s19 = ssub.s32 %s11, %s18
      %p20 = scmp.eq.s32.totalorder %s19, 0
      %s22 = sadd.s32 %s21, 1
      %s23 = scalar_select %p20, %s21, %s22
      %p26 = pneg %p20
      %p27 = scmp.eq.s32.totalorder %s11, 1
      %p28 = por %p26, %p27
      %p29 = scmp.ne.s32.totalorder %s21, %s24
      %p30 = scmp.eq.s32.totalorder %s11, 0
      %p31 = por %p29, %p30
      %p32 = scmp.ne.s32.totalorder %s21, %s24
      %p33 = scmp.eq.s32.totalorder %s16, 1
      %p34 = por %p32, %p33
      %p35 = scmp.ne.s32.totalorder %s24, %s25
      %p36 = scmp.eq.s32.totalorder %s16, 0
      %p37 = por %p35, %p36
      %p38 = scmp.ne.s32.totalorder %s24, %s25
      %p39 = scmp.eq.s32.totalorder %s17, 1
      %p40 = por %p38, %p39
      %p42 = scmp.ne.s32.totalorder %s25, %s41
      %p43 = scmp.eq.s32.totalorder %s17, 0
      %p44 = por %p42, %p43
      %s46 = sadd.s32 %s45, 1
      %p49 = scmp.eq.s32.totalorder %s11, 1
      %p50 = scmp.ne.s32.totalorder %s45, %s47
      %p51 = scmp.eq.s32.totalorder %s11, 0
      %p52 = por %p50, %p51
      %p53 = scmp.ne.s32.totalorder %s45, %s47
      %p54 = scmp.eq.s32.totalorder %s16, 1
      %p55 = por %p53, %p54
      %p56 = scmp.ne.s32.totalorder %s47, %s48
      %p57 = scmp.eq.s32.totalorder %s16, 0
      %p58 = por %p56, %p57
      %p59 = scmp.ne.s32.totalorder %s47, %s48
      %p60 = scmp.eq.s32.totalorder %s17, 1
      %p61 = por %p59, %p60
      %p63 = scmp.ne.s32.totalorder %s48, %s62
      %p64 = scmp.eq.s32.totalorder %s17, 0
      %p65 = por %p63, %p64
      %s66 = ssub.s32 %s11, %s18
      %p67 = scmp.eq.s32.totalorder %s66, 0
      %s69 = sadd.s32 %s68, 1
      %s70 = scalar_select %p67, %s68, %s69
      %p73 = pneg %p67
      %p74 = scmp.eq.s32.totalorder %s11, 1
      %p75 = por %p73, %p74
      %p76 = scmp.ne.s32.totalorder %s68, %s71
      %p77 = scmp.eq.s32.totalorder %s11, 0
      %p78 = por %p76, %p77
      %p79 = scmp.ne.s32.totalorder %s68, %s71
      %p80 = scmp.eq.s32.totalorder %s16, 1
      %p81 = por %p79, %p80
      %p82 = scmp.ne.s32.totalorder %s71, %s72
      %p83 = scmp.eq.s32.totalorder %s16, 0
      %p84 = por %p82, %p83
      %p85 = scmp.ne.s32.totalorder %s71, %s72
      %p86 = scmp.eq.s32.totalorder %s17, 1
      %p87 = por %p85, %p86
      %p89 = scmp.ne.s32.totalorder %s72, %s88
      %p90 = scmp.eq.s32.totalorder %s17, 0
      %p91 = por %p89, %p90
      %p92 = scmp.le.s32.totalorder 1, %s11
      %p93 = scmp.lt.s32.totalorder %s11, 3
      %p94 = pnand %p92, %p93
      %p95 = pneg %p94
      // Predicated region
      $region9: #{transformer_forward.9} parent=5 // pred_check
        _
      $region10: #{transformer_forward.9} parent=5 // pred_check_branch
        %97 = sbr.rel (%p94) target = $region12
      $region11: #{transformer_forward.9} parent=5 // pred_region
        %s98 = ssub.s32 %s11, 1
        // Predicated region
        $region13: #{transformer_forward.9} parent=11 // pred_check
          %p99 = pneg %p58
        $region14: #{transformer_forward.9} parent=11 // pred_check_branch
          %101 = sbr.rel (%p99) target = $region16
        $region15: #{transformer_forward.9} parent=11 // pred_region
          _
        $region16: #{transformer_forward.9} parent=11 // pred_fallthru
          _
      $region12: #{transformer_forward.9} parent=5 // pred_fallthru
        _
      %p102 = scmp.lt.s32.totalorder %s11, 2
      // Predicated region
      $region17: #{transformer_forward.9} parent=5 // pred_check
        %p103 = pneg %p102
      $region18: #{transformer_forward.9} parent=5 // pred_check_branch
        %105 = sbr.rel (%p103) target = $region20
      $region19: #{transformer_forward.9} parent=5 // pred_region
        // Predicated region
        $region21: #{transformer_forward.9} parent=19 // pred_check
          %p106 = pneg %p31
        $region22: #{transformer_forward.9} parent=19 // pred_check_branch
          %108 = sbr.rel (%p106) target = $region24
        $region23: #{transformer_forward.9} parent=19 // pred_region
          %p109 = scmp.lt.s32.totalorder %s11, 1
          %s110 = scalar_select %p109, %s11, 1
          %s111 = smul.addr %s110, 8
          %s112 = scalar_lea.vmem %s0, %s111
        $region24: #{transformer_forward.9} parent=19 // pred_fallthru
          _
      $region20: #{transformer_forward.9} parent=5 // pred_fallthru
        _
      %p113 = scmp.le.s32.totalorder 1, %s11
      %p114 = scmp.lt.s32.totalorder %s11, 3
      %p115 = pnand %p113, %p114
      %p116 = pneg %p115
      // Predicated region
      $region25: #{transformer_forward.9} parent=5 // pred_check
        _
      $region26: #{transformer_forward.9} parent=5 // pred_check_branch
        %118 = sbr.rel (%p115) target = $region28
      $region27: #{transformer_forward.9} parent=5 // pred_region
        %s119 = ssub.s32 %s11, 1
        %p120 = scmp.lt.s32.totalorder %s16, 1
        %s121 = scalar_select %p120, %s16, 1
        %s122 = smul.addr %s121, 8
        %s123 = scalar_lea.vmem %s0, %s122
        %p124 = pneg %p37
        %p125 = pneg %p34
        %p126 = pneg %p58
        %p127 = pneg %p55
        %p128 = pneg %p84
        %p129 = pneg %p81
        %s130 = sand.u32 %s71, 1
        %s131 = scalar_lea.sflag [#allocation3], %s130
        %s132 = sand.u32 %s71, 1
        %s133 = smul.addr %s132, 8
        %s134 = scalar_lea.vmem [#allocation2], %s133
        %p135 = scmp.lt.s32.totalorder %s16, 1
        %s136 = scalar_select %p135, %s16, 1
        %s137 = smul.addr %s136, 8
        %s138 = scalar_lea.vmem %s0, %s137
        %v140 = vld [vmem:[%s138] sm:$0xff]
        %v141 = vpack.c.bf16 %v140, %v140
        %v142 = vld [vmem:[%s1] sm:$0xf]
        %v143 = vld [vmem:[%s1 + $0x4] sm:$0xf]
        %v144 = vld [vmem:[%s1 + $0x8] sm:$0xf]
        %v145 = vld [vmem:[%s1 + $0xc] sm:$0xf]
        %v150 = vunpack.c.l.b16 %v142
        %v151 = vunpack.c.l.b16 %v143
        %v152 = vunpack.c.l.b16 %v144
        %v153 = vunpack.c.l.b16 %v145
        %v154 = vpack.c.b16 %v151, %v150
        %v155 = vpack.c.b16 %v153, %v152
        %vm158 = vcmask 261120
        %v160 = vsel %vm158, %v141, 0
        %162 = vmatpush.bf16.msra.mxu0 0
        %163 = vmatpush.bf16.msra.mxu0 0
        %164 = vmatpush.bf16.msra.mxu0 0
        %165 = vmatpush.bf16.msra.mxu0 0
        %166 = vmatpush.bf16.msra.mxu0 0
        %167 = vmatpush.bf16.msra.mxu0 0
        %168 = vmatpush.bf16.msra.mxu0 %v155
        %169 = vmatpush.bf16.msra.mxu0 %v154
        %170 = vmatmul.bf16.gmra.mxu0 %v160
        %v171 = vpop.f32.mrf.mxu0
        %v172 = vadd.f32 0.0, %v171
        %v173 = vpop.f32.mrf.mxu0
        %174 = vdwg.mxu0
        %vm175 = vcmask 523264
        %176 = vst.msk [vmem:[%s134] sm:$0xff] %vm175, %v172
        %s177 = sand.u32 %s71, 1
        %s178 = scalar_lea.sflag [#allocation3], %s177
        %s179 = sand.u32 %s71, 1
        %s180 = smul.addr %s179, 8
        %s181 = scalar_lea.vmem [#allocation2], %s180
        // Predicated region
        $region29: #{transformer_forward.9} parent=27 // pred_check
          %p182 = pneg %p81
        $region30: #{transformer_forward.9} parent=27 // pred_check_branch
          %184 = sbr.rel (%p182) target = $region32
        $region31: #{transformer_forward.9} parent=27 // pred_region
          %186 = vsyncadd %s178, 0
          %s187 = smul.addr %s16, 8
          %s188 = scalar_lea.hbm %s2, %s187
          %s190 = sshll.u32 %s181, 4
          %s191 = int_to_ptr.vmem [resolvable:$true] %s190
          %s192 = sshll.u32 %s188, 4
          %s193 = int_to_ptr.hbm [resolvable:$true] %s192
          %195 = dma.vmem_to_hbm [thread:$0]  %s191, 128, %s193, %s178
        $region32: #{transformer_forward.9} parent=27 // pred_fallthru
          _
      $region28: #{transformer_forward.9} parent=5 // pred_fallthru
        _
      %p196 = scmp.le.s32.totalorder 2, %s11
      // Predicated region
      $region33: #{transformer_forward.9} parent=5 // pred_check
        %p197 = pneg %p196
      $region34: #{transformer_forward.9} parent=5 // pred_check_branch
        %199 = sbr.rel (%p197) target = $region36
      $region35: #{transformer_forward.9} parent=5 // pred_region
        %s200 = ssub.s32 %s11, 2
        // Predicated region
        $region37: #{transformer_forward.9} parent=35 // pred_check
          %p201 = pneg %p87
        $region38: #{transformer_forward.9} parent=35 // pred_check_branch
          %203 = sbr.rel (%p201) target = $region40
        $region39: #{transformer_forward.9} parent=35 // pred_region
          %s204 = sand.u32 %s72, 1
          %s205 = scalar_lea.sflag [#allocation3], %s204
          %s206 = sand.u32 %s72, 1
          %s207 = smul.addr %s206, 8
          %s208 = scalar_lea.vmem [#allocation2], %s207
          %210 = dma.done %s205, 128
        $region40: #{transformer_forward.9} parent=35 // pred_fallthru
          _
      $region36: #{transformer_forward.9} parent=5 // pred_fallthru
        _
    $region6: #{transformer_forward.9} parent=1 // loop_footer
      %s15 = sadd.s32 1, %s11
    $region7: #{transformer_forward.9} parent=1 // loop_footer_branch
      %10 = sbr.rel target = $region3
    $region8: #{transformer_forward.9} parent=1 // loop_exit
      _
    %211 = vsyncpa [#allocation3], 1
    %s212 = scalar_lea.sflag [#allocation3], 1
    %213 = vsyncpa %s212, 1

</llo_original>
